<compile_context>
chip_gen: v7x
topology: tpu7x:2x2x1
jax: 0.10.0
libtpu: 0.0.40
codegen_flags: <defaults>
</compile_context>

<pallas_src>
import functools
import math

import jax
import jax.numpy as jnp
import numpy as np
from jax.experimental import pallas as pl
from jax.experimental.pallas import tpu as pltpu


# ----------------------------- Fused block kernel -----------------------------
def _transformer_block_kernel(
    xv_ref, xq_ref,
    wvt_ref, wot_ref, bo_ref,
    g1_ref, b1_ref,
    w1t_ref, bf1_ref, w2t_ref, bf2_ref,
    g2_ref, b2_ref,
    o_ref,
    *, eps,
):
    """One (row_tile, E) slab of the fused block (heads == 1 semantics).

    heads == 1 makes the module's attention degenerate: `energy` is a single
    scalar per position and softmax over that singleton axis is identically 1
    (masked or not), so `attention @ V == values_projection` exactly.  The q/k
    projections, the mask, and the softmax are dead code and the whole block is
    a purely row-wise map over the N*L positions.
    """
    E = xq_ref.shape[-1]
    inv_e = 1.0 / E

    xq = xq_ref[...].astype(jnp.float32)   # raw query, reused for the residual
    xv = xv_ref[...]

    def mm(a, w_ref):
        # MXU matmul; operands cast to the (possibly bf16) weight dtype, f32 accumulate.
        return jnp.dot(a.astype(w_ref.dtype), w_ref[...],
                       preferred_element_type=jnp.float32)

    def layer_norm(x, g_ref, b_ref):
        # Single-pass mean/var: the two reductions are independent (no mu->var chain).
        s1 = jnp.sum(x, axis=-1, keepdims=True)
        s2 = jnp.sum(x * x, axis=-1, keepdims=True)
        mu = s1 * inv_e
        var = s2 * inv_e - mu * mu
        return (x - mu) * jax.lax.rsqrt(var + eps) * g_ref[...] + b_ref[...]

    # --- attention (degenerate, heads == 1): context == values projection --------
    ctx = mm(xv, wvt_ref)                                   # (tm, E)
    attn_out = mm(ctx, wot_ref) + bo_ref[...]               # fc_out

    # --- residual + LayerNorm1 (dropout == identity at inference) ----------------
    x = layer_norm(attn_out + xq, g1_ref, b1_ref)

    # --- feed-forward: Linear(E, F*E) -> ReLU -> Linear(F*E, E) ------------------
    h = jnp.maximum(mm(x, w1t_ref) + bf1_ref[...], 0.0)     # (tm, F*E)
    f = mm(h, w2t_ref) + bf2_ref[...]                       # (tm, E)

    # --- residual + LayerNorm2 (dropout == identity) -----------------------------
    o_ref[...] = layer_norm(f + x, g2_ref, b2_ref).astype(o_ref.dtype)
    # TODO(synk): training-mode nn.Dropout would use pltpu.prng_seed /
    # pltpu.prng_random_bits; treated as identity (inference) here.


# --------------------------- One-time parameter prep ---------------------------
def prepare_block_params(params, *, embed_size, heads, compute_dtype=jnp.float32):
    """One-time layout prep, hoisted out of the per-call path.

    Weights are transposed (every in-kernel matmul is x @ W^T) and cast to
    `compute_dtype` (bf16 halves weight DMA bytes and boosts MXU throughput).
    Bias / LayerNorm parameters stay f32 and become lane-dense (1, dim) rows.
    Wq / Wk are dropped: for heads == 1 they provably do not affect the output.
    """
    assert heads == 1 and tuple(params['Wv'].shape) == (embed_size, embed_size), (
        "The PyTorch TransformerBlock forward only type-checks for heads == 1 "
        "(nn.Linear(head_dim, head_dim) is applied to embed_size-wide inputs).")
    # TODO(synk): a hypothetical heads > 1 variant (per-position HxH head mixing)
    # cannot be executed by the original module, so it is not implemented here.
    f32 = jnp.float32
    cd = compute_dtype
    return dict(
        wvt=jnp.asarray(params['Wv'], f32).T.astype(cd),
        wot=jnp.asarray(params['Wo'], f32).T.astype(cd),
        w1t=jnp.asarray(params['W1'], f32).T.astype(cd),
        w2t=jnp.asarray(params['W2'], f32).T.astype(cd),
        bo=jnp.asarray(params['bo'], f32).reshape(1, -1),
        bf1=jnp.asarray(params['bf1'], f32).reshape(1, -1),
        bf2=jnp.asarray(params['bf2'], f32).reshape(1, -1),
        g1=jnp.asarray(params['g1'], f32).reshape(1, -1),
        b1=jnp.asarray(params['b1'], f32).reshape(1, -1),
        g2=jnp.asarray(params['g2'], f32).reshape(1, -1),
        b2=jnp.asarray(params['b2'], f32).reshape(1, -1),
    )


# ------------------------------- Wrapper --------------------------------------
def transformer_block_pallas(value, key, query, mask, prep, *,
                             block_rows=256, eps=1e-5):
    """Fused TransformerBlock forward in a single pallas_call.

    `key` and `mask` are accepted for interface parity with the PyTorch module
    but are provably unused when heads == 1 (softmax over a singleton axis is 1),
    so they are never DMA'd into the kernel.
    """
    del key, mask
    N, L, E = query.shape
    R = N * L
    tm = R if R <= block_rows else block_rows
    assert tm == R or tm % 8 == 0, "row tile must be sublane-aligned"
    grid = (pl.cdiv(R, tm),)

    # Row-flattened views: the heads==1 block is purely row-wise, so tiling the
    # flat (N*L, E) row axis keeps matmul M >= block_rows and bounds per-step
    # VMEM (the (tm, 4E) FFN hidden never depends on L).
    xv = value.reshape(R, E)
    xq = query.reshape(R, E)

    weights = (prep['wvt'], prep['wot'], prep['bo'], prep['g1'], prep['b1'],
               prep['w1t'], prep['bf1'], prep['w2t'], prep['bf2'],
               prep['g2'], prep['b2'])

    def build(single_buffer_weights):
        row_spec = pl.BlockSpec((tm, E), lambda r: (r, 0))

        def resident(arr):
            # Constant index_map: block never changes -> VMEM-resident across
            # grid steps; single-buffer it to halve its VMEM footprint.
            kwargs = {}
            if single_buffer_weights:
                kwargs['pipeline_mode'] = pl.Buffered(1)
            return pl.BlockSpec(arr.shape, lambda r: (0, 0), **kwargs)

        return pl.pallas_call(
            functools.partial(_transformer_block_kernel, eps=eps),
            out_shape=jax.ShapeDtypeStruct((R, E), query.dtype),
            grid=grid,
            in_specs=[row_spec, row_spec] + [resident(w) for w in weights],
            out_specs=row_spec,
            compiler_params=pltpu.CompilerParams(
                dimension_semantics=("parallel",),
                vmem_limit_bytes=32 * 1024 * 1024),
        )

    try:
        out = build(True)(xv, xq, *weights)
    except Exception:
        # TODO(synk): pl.Buffered(1) is a VMEM-footprint-only optimization; fall
        # back to default double buffering if this jax/Mosaic build rejects it.
        out = build(False)(xv, xq, *weights)
    return out.reshape(N, L, E)


# ---------------------------- Pure-JAX reference -------------------------------
def _layer_norm_ref(x, gamma, beta, eps):
    mu = jnp.mean(x, axis=-1, keepdims=True)
    var = jnp.mean(jnp.square(x - mu), axis=-1, keepdims=True)
    return (x - mu) / jnp.sqrt(var + eps) * gamma + beta


def transformer_block_reference(value, key, query, mask, p, *,
                                embed_size, heads, eps=1e-5):
    """Literal JAX transcription of the PyTorch module (full attention path)."""
    N, L, _ = query.shape
    head_dim = embed_size // heads
    with jax.default_matmul_precision("highest"):
        v = value @ p['Wv'].T
        k = key @ p['Wk'].T
        q = query @ p['Wq'].T
        v = v.reshape(N, L, heads, head_dim).transpose(0, 2, 1, 3)
        k = k.reshape(N, L, heads, head_dim).transpose(0, 2, 1, 3)
        q = q.reshape(N, L, heads, head_dim).transpose(0, 2, 1, 3)
        energy = jnp.einsum('nqhd,nkhd->nhqk', q, k)
        energy = jnp.where(mask == 0, jnp.float32(-1e20), energy)
        attention = jax.nn.softmax(energy / (embed_size ** 0.5), axis=3)
        out = jnp.einsum('nhql,nlhd->nqhd', attention, v).reshape(
            N, L, heads * head_dim)
        attn_out = out @ p['Wo'].T + p['bo']
        x = _layer_norm_ref(attn_out + query, p['g1'], p['b1'], eps)
        h = jnp.maximum(x @ p['W1'].T + p['bf1'], 0.0)
        f = h @ p['W2'].T + p['bf2']
        return _layer_norm_ref(f + x, p['g2'], p['b2'], eps)


# ---------------------------------- Demo ---------------------------------------
if __name__ == "__main__":
    N, L = 4, 128
    heads = 1                      # only value for which the PyTorch forward runs
    embed_size = 128               # lane-dense (multiple of the 128-lane vreg)
    head_dim = embed_size // heads
    forward_expansion = 4
    hidden = forward_expansion * embed_size
    eps = 1e-5

    root = jax.random.PRNGKey(0)
    ks = jax.random.split(root, 17)

    value = jax.random.normal(ks[0], (N, L, embed_size), jnp.float32)
    key_in = jax.random.normal(ks[1], (N, L, embed_size), jnp.float32)
    query = jax.random.normal(ks[2], (N, L, embed_size), jnp.float32)
    mask = jax.random.bernoulli(ks[3], 0.9, (N, L, heads, heads)).astype(jnp.int32)

    def uni(k, shape, fan_in):
        b = 1.0 / math.sqrt(fan_in)
        return jax.random.uniform(k, shape, jnp.float32, -b, b)

    params = dict(
        Wv=uni(ks[4], (head_dim, head_dim), head_dim),
        Wk=uni(ks[5], (head_dim, head_dim), head_dim),
        Wq=uni(ks[6], (head_dim, head_dim), head_dim),
        Wo=uni(ks[7], (embed_size, heads * head_dim), heads * head_dim),
        bo=uni(ks[8], (embed_size,), heads * head_dim),
        g1=1.0 + 0.05 * jax.random.normal(ks[9], (embed_size,), jnp.float32),
        b1=0.05 * jax.random.normal(ks[10], (embed_size,), jnp.float32),
        W1=uni(ks[11], (hidden, embed_size), embed_size),
        bf1=uni(ks[12], (hidden,), embed_size),
        W2=uni(ks[13], (embed_size, hidden), hidden),
        bf2=uni(ks[14], (embed_size,), hidden),
        g2=1.0 + 0.05 * jax.random.normal(ks[15], (embed_size,), jnp.float32),
        b2=0.05 * jax.random.normal(ks[16], (embed_size,), jnp.float32),
    )

    ref = transformer_block_reference(value, key_in, query, mask, params,
                                      embed_size=embed_size, heads=heads, eps=eps)

    # f32 path: strict parity with the reference (the eliminated softmax is
    # identically 1, so the simplification is numerically exact).
    prep_f32 = prepare_block_params(params, embed_size=embed_size, heads=heads,
                                    compute_dtype=jnp.float32)
    out_f32 = jax.block_until_ready(
        transformer_block_pallas(value, key_in, query, mask, prep_f32,
                                 block_rows=256, eps=eps))
    np.testing.assert_allclose(np.asarray(out_f32), np.asarray(ref),
                               rtol=5e-4, atol=5e-4)

    # bf16-matmul path (f32 accumulation + f32 LayerNorm/elementwise): higher MXU
    # throughput and half the weight/input DMA bytes; looser tolerance reflects
    # bf16 operand rounding only, not a semantic difference.
    prep_bf16 = prepare_block_params(params, embed_size=embed_size, heads=heads,
                                     compute_dtype=jnp.bfloat16)
    out_bf16 = jax.block_until_ready(
        transformer_block_pallas(value, key_in, query, mask, prep_bf16,
                                 block_rows=256, eps=eps))
    np.testing.assert_allclose(np.asarray(out_bf16), np.asarray(ref),
                               rtol=5e-2, atol=5e-2)

    print("KERNEL_OK")
</pallas_src>

<mosaic_0001>
module attributes {stable_mosaic.version = 11 : i64} {
  func.func @_transformer_block_kernel(%arg0: i32, %arg1: memref<256x128xf32, #tpu.memory_space<vmem>>, %arg2: memref<256x128xf32, #tpu.memory_space<vmem>>, %arg3: memref<128x128xf32, #tpu.memory_space<vmem>>, %arg4: memref<128x128xf32, #tpu.memory_space<vmem>>, %arg5: memref<1x128xf32, #tpu.memory_space<vmem>>, %arg6: memref<1x128xf32, #tpu.memory_space<vmem>>, %arg7: memref<1x128xf32, #tpu.memory_space<vmem>>, %arg8: memref<128x512xf32, #tpu.memory_space<vmem>>, %arg9: memref<1x512xf32, #tpu.memory_space<vmem>>, %arg10: memref<512x128xf32, #tpu.memory_space<vmem>>, %arg11: memref<1x128xf32, #tpu.memory_space<vmem>>, %arg12: memref<1x128xf32, #tpu.memory_space<vmem>>, %arg13: memref<1x128xf32, #tpu.memory_space<vmem>>, %arg14: memref<256x128xf32, #tpu.memory_space<vmem>>) attributes {dimension_semantics = [#tpu.dimension_semantics<parallel>], iteration_bounds = array<i64: 2>, scalar_prefetch = 0 : i64, scratch_operands = 0 : i64, tpu.core_type = #tpu.core_type<tc>, window_params = [{transform_indices = @transform_0, window_bounds = array<i64: 256, 128>}, {transform_indices = @transform_1, window_bounds = array<i64: 256, 128>}, {pipeline_mode = #tpu.pipeline_mode<synchronous>, transform_indices = @transform_2, window_bounds = array<i64: 128, 128>}, {pipeline_mode = #tpu.pipeline_mode<synchronous>, transform_indices = @transform_3, window_bounds = array<i64: 128, 128>}, {pipeline_mode = #tpu.pipeline_mode<synchronous>, transform_indices = @transform_4, window_bounds = array<i64: 1, 128>}, {pipeline_mode = #tpu.pipeline_mode<synchronous>, transform_indices = @transform_5, window_bounds = array<i64: 1, 128>}, {pipeline_mode = #tpu.pipeline_mode<synchronous>, transform_indices = @transform_6, window_bounds = array<i64: 1, 128>}, {pipeline_mode = #tpu.pipeline_mode<synchronous>, transform_indices = @transform_7, window_bounds = array<i64: 128, 512>}, {pipeline_mode = #tpu.pipeline_mode<synchronous>, transform_indices = @transform_8, window_bounds = array<i64: 1, 512>}, {pipeline_mode = #tpu.pipeline_mode<synchronous>, transform_indices = @transform_9, window_bounds = array<i64: 512, 128>}, {pipeline_mode = #tpu.pipeline_mode<synchronous>, transform_indices = @transform_10, window_bounds = array<i64: 1, 128>}, {pipeline_mode = #tpu.pipeline_mode<synchronous>, transform_indices = @transform_11, window_bounds = array<i64: 1, 128>}, {pipeline_mode = #tpu.pipeline_mode<synchronous>, transform_indices = @transform_12, window_bounds = array<i64: 1, 128>}, {transform_indices = @transform_13, window_bounds = array<i64: 256, 128>}]} {
    %c0 = arith.constant 0 : index
    %c0_0 = arith.constant 0 : index
    %0 = vector.load %arg2[%c0, %c0_0] : memref<256x128xf32, #tpu.memory_space<vmem>>, vector<256x128xf32>
    %c0_1 = arith.constant 0 : index
    %c0_2 = arith.constant 0 : index
    %1 = vector.load %arg1[%c0_1, %c0_2] : memref<256x128xf32, #tpu.memory_space<vmem>>, vector<256x128xf32>
    %c0_3 = arith.constant 0 : index
    %c0_4 = arith.constant 0 : index
    %2 = vector.load %arg3[%c0_3, %c0_4] : memref<128x128xf32, #tpu.memory_space<vmem>>, vector<128x128xf32>
    %cst = arith.constant dense<0.000000e+00> : vector<256x128xf32>
    %3 = tpu.matmul %1, %2, %cst {dimension_numbers = #tpu.dot_dimension_numbers<[1], [0], [0], [1], [0, 0, 1, 1], [], []>} : vector<256x128xf32>, vector<128x128xf32>, vector<256x128xf32> -> vector<256x128xf32>
    %c0_5 = arith.constant 0 : index
    %c0_6 = arith.constant 0 : index
    %4 = vector.load %arg4[%c0_5, %c0_6] : memref<128x128xf32, #tpu.memory_space<vmem>>, vector<128x128xf32>
    %cst_7 = arith.constant dense<0.000000e+00> : vector<256x128xf32>
    %5 = tpu.matmul %3, %4, %cst_7 {dimension_numbers = #tpu.dot_dimension_numbers<[1], [0], [0], [1], [0, 0, 1, 1], [], []>} : vector<256x128xf32>, vector<128x128xf32>, vector<256x128xf32> -> vector<256x128xf32>
    %c0_8 = arith.constant 0 : index
    %c0_9 = arith.constant 0 : index
    %6 = vector.load %arg5[%c0_8, %c0_9] : memref<1x128xf32, #tpu.memory_space<vmem>>, vector<1x128xf32>
    %7 = vector.broadcast %6 : vector<1x128xf32> to vector<256x128xf32>
    %8 = arith.addf %5, %7 : vector<256x128xf32>
    %9 = arith.addf %8, %0 : vector<256x128xf32>
    %cst_10 = arith.constant dense<0.000000e+00> : vector<256xf32>
    %10 = vector.multi_reduction <add>, %9, %cst_10 [1] : vector<256x128xf32> to vector<256xf32>
    %11 = vector.shape_cast %10 : vector<256xf32> to vector<256x1xf32>
    %12 = arith.mulf %9, %9 : vector<256x128xf32>
    %cst_11 = arith.constant dense<0.000000e+00> : vector<256xf32>
    %13 = vector.multi_reduction <add>, %12, %cst_11 [1] : vector<256x128xf32> to vector<256xf32>
    %14 = vector.shape_cast %13 : vector<256xf32> to vector<256x1xf32>
    %cst_12 = arith.constant 7.812500e-03 : f32
    %15 = vector.broadcast %cst_12 : f32 to vector<256x1xf32>
    %16 = arith.mulf %11, %15 : vector<256x1xf32>
    %cst_13 = arith.constant 7.812500e-03 : f32
    %17 = vector.broadcast %cst_13 : f32 to vector<256x1xf32>
    %18 = arith.mulf %14, %17 : vector<256x1xf32>
    %19 = arith.mulf %16, %16 : vector<256x1xf32>
    %20 = arith.subf %18, %19 : vector<256x1xf32>
    %21 = vector.broadcast %16 : vector<256x1xf32> to vector<256x128xf32>
    %22 = arith.subf %9, %21 : vector<256x128xf32>
    %cst_14 = arith.constant 9.99999974E-6 : f32
    %23 = vector.broadcast %cst_14 : f32 to vector<256x1xf32>
    %24 = arith.addf %20, %23 : vector<256x1xf32>
    %25 = math.rsqrt %24 : vector<256x1xf32>
    %26 = vector.broadcast %25 : vector<256x1xf32> to vector<256x128xf32>
    %27 = arith.mulf %22, %26 : vector<256x128xf32>
    %c0_15 = arith.constant 0 : index
    %c0_16 = arith.constant 0 : index
    %28 = vector.load %arg6[%c0_15, %c0_16] : memref<1x128xf32, #tpu.memory_space<vmem>>, vector<1x128xf32>
    %29 = vector.broadcast %28 : vector<1x128xf32> to vector<256x128xf32>
    %30 = arith.mulf %27, %29 : vector<256x128xf32>
    %c0_17 = arith.constant 0 : index
    %c0_18 = arith.constant 0 : index
    %31 = vector.load %arg7[%c0_17, %c0_18] : memref<1x128xf32, #tpu.memory_space<vmem>>, vector<1x128xf32>
    %32 = vector.broadcast %31 : vector<1x128xf32> to vector<256x128xf32>
    %33 = arith.addf %30, %32 : vector<256x128xf32>
    %c0_19 = arith.constant 0 : index
    %c0_20 = arith.constant 0 : index
    %34 = vector.load %arg8[%c0_19, %c0_20] : memref<128x512xf32, #tpu.memory_space<vmem>>, vector<128x512xf32>
    %cst_21 = arith.constant dense<0.000000e+00> : vector<256x512xf32>
    %35 = tpu.matmul %33, %34, %cst_21 {dimension_numbers = #tpu.dot_dimension_numbers<[1], [0], [0], [1], [0, 0, 1, 1], [], []>} : vector<256x128xf32>, vector<128x512xf32>, vector<256x512xf32> -> vector<256x512xf32>
    %c0_22 = arith.constant 0 : index
    %c0_23 = arith.constant 0 : index
    %36 = vector.load %arg9[%c0_22, %c0_23] : memref<1x512xf32, #tpu.memory_space<vmem>>, vector<1x512xf32>
    %37 = vector.broadcast %36 : vector<1x512xf32> to vector<256x512xf32>
    %38 = arith.addf %35, %37 : vector<256x512xf32>
    %cst_24 = arith.constant 0.000000e+00 : f32
    %39 = vector.broadcast %cst_24 : f32 to vector<256x512xf32>
    %40 = arith.maximumf %38, %39 : vector<256x512xf32>
    %c0_25 = arith.constant 0 : index
    %c0_26 = arith.constant 0 : index
    %41 = vector.load %arg10[%c0_25, %c0_26] : memref<512x128xf32, #tpu.memory_space<vmem>>, vector<512x128xf32>
    %cst_27 = arith.constant dense<0.000000e+00> : vector<256x128xf32>
    %42 = tpu.matmul %40, %41, %cst_27 {dimension_numbers = #tpu.dot_dimension_numbers<[1], [0], [0], [1], [0, 0, 1, 1], [], []>} : vector<256x512xf32>, vector<512x128xf32>, vector<256x128xf32> -> vector<256x128xf32>
    %c0_28 = arith.constant 0 : index
    %c0_29 = arith.constant 0 : index
    %43 = vector.load %arg11[%c0_28, %c0_29] : memref<1x128xf32, #tpu.memory_space<vmem>>, vector<1x128xf32>
    %44 = vector.broadcast %43 : vector<1x128xf32> to vector<256x128xf32>
    %45 = arith.addf %42, %44 : vector<256x128xf32>
    %46 = arith.addf %45, %33 : vector<256x128xf32>
    %cst_30 = arith.constant dense<0.000000e+00> : vector<256xf32>
    %47 = vector.multi_reduction <add>, %46, %cst_30 [1] : vector<256x128xf32> to vector<256xf32>
    %48 = vector.shape_cast %47 : vector<256xf32> to vector<256x1xf32>
    %49 = arith.mulf %46, %46 : vector<256x128xf32>
    %cst_31 = arith.constant dense<0.000000e+00> : vector<256xf32>
    %50 = vector.multi_reduction <add>, %49, %cst_31 [1] : vector<256x128xf32> to vector<256xf32>
    %51 = vector.shape_cast %50 : vector<256xf32> to vector<256x1xf32>
    %cst_32 = arith.constant 7.812500e-03 : f32
    %52 = vector.broadcast %cst_32 : f32 to vector<256x1xf32>
    %53 = arith.mulf %48, %52 : vector<256x1xf32>
    %cst_33 = arith.constant 7.812500e-03 : f32
    %54 = vector.broadcast %cst_33 : f32 to vector<256x1xf32>
    %55 = arith.mulf %51, %54 : vector<256x1xf32>
    %56 = arith.mulf %53, %53 : vector<256x1xf32>
    %57 = arith.subf %55, %56 : vector<256x1xf32>
    %58 = vector.broadcast %53 : vector<256x1xf32> to vector<256x128xf32>
    %59 = arith.subf %46, %58 : vector<256x128xf32>
    %cst_34 = arith.constant 9.99999974E-6 : f32
    %60 = vector.broadcast %cst_34 : f32 to vector<256x1xf32>
    %61 = arith.addf %57, %60 : vector<256x1xf32>
    %62 = math.rsqrt %61 : vector<256x1xf32>
    %63 = vector.broadcast %62 : vector<256x1xf32> to vector<256x128xf32>
    %64 = arith.mulf %59, %63 : vector<256x128xf32>
    %c0_35 = arith.constant 0 : index
    %c0_36 = arith.constant 0 : index
    %65 = vector.load %arg12[%c0_35, %c0_36] : memref<1x128xf32, #tpu.memory_space<vmem>>, vector<1x128xf32>
    %66 = vector.broadcast %65 : vector<1x128xf32> to vector<256x128xf32>
    %67 = arith.mulf %64, %66 : vector<256x128xf32>
    %c0_37 = arith.constant 0 : index
    %c0_38 = arith.constant 0 : index
    %68 = vector.load %arg13[%c0_37, %c0_38] : memref<1x128xf32, #tpu.memory_space<vmem>>, vector<1x128xf32>
    %69 = vector.broadcast %68 : vector<1x128xf32> to vector<256x128xf32>
    %70 = arith.addf %67, %69 : vector<256x128xf32>
    %c0_39 = arith.constant 0 : index
    %c0_40 = arith.constant 0 : index
    %71 = vector.load %arg14[%c0_39, %c0_40] : memref<256x128xf32, #tpu.memory_space<vmem>>, vector<256x128xf32>
    tpu.vector_store %arg14[%c0_39, %c0_40], %70 {strides = array<i32>} : memref<256x128xf32, #tpu.memory_space<vmem>>, vector<256x128xf32>,
    return
  }
  func.func @transform_0(%arg0: i32) -> (i32, i32) {
    %c0_i32 = arith.constant 0 : i32
    %c0_i32_0 = arith.constant 0 : i32
    return %arg0, %c0_i32 : i32, i32
  }
  func.func @transform_1(%arg0: i32) -> (i32, i32) {
    %c0_i32 = arith.constant 0 : i32
    %c0_i32_0 = arith.constant 0 : i32
    return %arg0, %c0_i32 : i32, i32
  }
  func.func @transform_2(%arg0: i32) -> (i32, i32) {
    %c0_i32 = arith.constant 0 : i32
    %c0_i32_0 = arith.constant 0 : i32
    %c0_i32_1 = arith.constant 0 : i32
    return %c0_i32, %c0_i32_0 : i32, i32
  }
  func.func @transform_3(%arg0: i32) -> (i32, i32) {
    %c0_i32 = arith.constant 0 : i32
    %c0_i32_0 = arith.constant 0 : i32
    %c0_i32_1 = arith.constant 0 : i32
    return %c0_i32, %c0_i32_0 : i32, i32
  }
  func.func @transform_4(%arg0: i32) -> (i32, i32) {
    %c0_i32 = arith.constant 0 : i32
    %c0_i32_0 = arith.constant 0 : i32
    %c0_i32_1 = arith.constant 0 : i32
    return %c0_i32, %c0_i32_0 : i32, i32
  }
  func.func @transform_5(%arg0: i32) -> (i32, i32) {
    %c0_i32 = arith.constant 0 : i32
    %c0_i32_0 = arith.constant 0 : i32
    %c0_i32_1 = arith.constant 0 : i32
    return %c0_i32, %c0_i32_0 : i32, i32
  }
  func.func @transform_6(%arg0: i32) -> (i32, i32) {
    %c0_i32 = arith.constant 0 : i32
    %c0_i32_0 = arith.constant 0 : i32
    %c0_i32_1 = arith.constant 0 : i32
    return %c0_i32, %c0_i32_0 : i32, i32
  }
  func.func @transform_7(%arg0: i32) -> (i32, i32) {
    %c0_i32 = arith.constant 0 : i32
    %c0_i32_0 = arith.constant 0 : i32
    %c0_i32_1 = arith.constant 0 : i32
    return %c0_i32, %c0_i32_0 : i32, i32
  }
  func.func @transform_8(%arg0: i32) -> (i32, i32) {
    %c0_i32 = arith.constant 0 : i32
    %c0_i32_0 = arith.constant 0 : i32
    %c0_i32_1 = arith.constant 0 : i32
    return %c0_i32, %c0_i32_0 : i32, i32
  }
  func.func @transform_9(%arg0: i32) -> (i32, i32) {
    %c0_i32 = arith.constant 0 : i32
    %c0_i32_0 = arith.constant 0 : i32
    %c0_i32_1 = arith.constant 0 : i32
    return %c0_i32, %c0_i32_0 : i32, i32
  }
  func.func @transform_10(%arg0: i32) -> (i32, i32) {
    %c0_i32 = arith.constant 0 : i32
    %c0_i32_0 = arith.constant 0 : i32
    %c0_i32_1 = arith.constant 0 : i32
    return %c0_i32, %c0_i32_0 : i32, i32
  }
  func.func @transform_11(%arg0: i32) -> (i32, i32) {
    %c0_i32 = arith.constant 0 : i32
    %c0_i32_0 = arith.constant 0 : i32
    %c0_i32_1 = arith.constant 0 : i32
    return %c0_i32, %c0_i32_0 : i32, i32
  }
  func.func @transform_12(%arg0: i32) -> (i32, i32) {
    %c0_i32 = arith.constant 0 : i32
    %c0_i32_0 = arith.constant 0 : i32
    %c0_i32_1 = arith.constant 0 : i32
    return %c0_i32, %c0_i32_0 : i32, i32
  }
  func.func @transform_13(%arg0: i32) -> (i32, i32) {
    %c0_i32 = arith.constant 0 : i32
    %c0_i32_0 = arith.constant 0 : i32
    return %arg0, %c0_i32 : i32, i32
  }
}

module attributes {stable_mosaic.version = 11 : i64} {
  func.func @_transformer_block_kernel(%arg0: i32, %arg1: memref<256x128xf32, #tpu.memory_space<vmem>>, %arg2: memref<256x128xf32, #tpu.memory_space<vmem>>, %arg3: memref<128x128xf32, #tpu.memory_space<vmem>>, %arg4: memref<128x128xf32, #tpu.memory_space<vmem>>, %arg5: memref<1x128xf32, #tpu.memory_space<vmem>>, %arg6: memref<1x128xf32, #tpu.memory_space<vmem>>, %arg7: memref<1x128xf32, #tpu.memory_space<vmem>>, %arg8: memref<128x512xf32, #tpu.memory_space<vmem>>, %arg9: memref<1x512xf32, #tpu.memory_space<vmem>>, %arg10: memref<512x128xf32, #tpu.memory_space<vmem>>, %arg11: memref<1x128xf32, #tpu.memory_space<vmem>>, %arg12: memref<1x128xf32, #tpu.memory_space<vmem>>, %arg13: memref<1x128xf32, #tpu.memory_space<vmem>>, %arg14: memref<256x128xf32, #tpu.memory_space<vmem>>) attributes {dimension_semantics = [#tpu.dimension_semantics<parallel>], iteration_bounds = array<i64: 2>, scalar_prefetch = 0 : i64, scratch_operands = 0 : i64, tpu.core_type = #tpu.core_type<tc>, window_params = [{transform_indices = @transform_0, window_bounds = array<i64: 256, 128>}, {transform_indices = @transform_1, window_bounds = array<i64: 256, 128>}, {pipeline_mode = #tpu.pipeline_mode<synchronous>, transform_indices = @transform_2, window_bounds = array<i64: 128, 128>}, {pipeline_mode = #tpu.pipeline_mode<synchronous>, transform_indices = @transform_3, window_bounds = array<i64: 128, 128>}, {pipeline_mode = #tpu.pipeline_mode<synchronous>, transform_indices = @transform_4, window_bounds = array<i64: 1, 128>}, {pipeline_mode = #tpu.pipeline_mode<synchronous>, transform_indices = @transform_5, window_bounds = array<i64: 1, 128>}, {pipeline_mode = #tpu.pipeline_mode<synchronous>, transform_indices = @transform_6, window_bounds = array<i64: 1, 128>}, {pipeline_mode = #tpu.pipeline_mode<synchronous>, transform_indices = @transform_7, window_bounds = array<i64: 128, 512>}, {pipeline_mode = #tpu.pipeline_mode<synchronous>, transform_indices = @transform_8, window_bounds = array<i64: 1, 512>}, {pipeline_mode = #tpu.pipeline_mode<synchronous>, transform_indices = @transform_9, window_bounds = array<i64: 512, 128>}, {pipeline_mode = #tpu.pipeline_mode<synchronous>, transform_indices = @transform_10, window_bounds = array<i64: 1, 128>}, {pipeline_mode = #tpu.pipeline_mode<synchronous>, transform_indices = @transform_11, window_bounds = array<i64: 1, 128>}, {pipeline_mode = #tpu.pipeline_mode<synchronous>, transform_indices = @transform_12, window_bounds = array<i64: 1, 128>}, {transform_indices = @transform_13, window_bounds = array<i64: 256, 128>}]} {
    %c0 = arith.constant 0 : index
    %c0_0 = arith.constant 0 : index
    %0 = vector.load %arg2[%c0, %c0_0] : memref<256x128xf32, #tpu.memory_space<vmem>>, vector<256x128xf32>
    %c0_1 = arith.constant 0 : index
    %c0_2 = arith.constant 0 : index
    %1 = vector.load %arg1[%c0_1, %c0_2] : memref<256x128xf32, #tpu.memory_space<vmem>>, vector<256x128xf32>
    %c0_3 = arith.constant 0 : index
    %c0_4 = arith.constant 0 : index
    %2 = vector.load %arg3[%c0_3, %c0_4] : memref<128x128xf32, #tpu.memory_space<vmem>>, vector<128x128xf32>
    %cst = arith.constant dense<0.000000e+00> : vector<256x128xf32>
    %3 = tpu.matmul %1, %2, %cst {dimension_numbers = #tpu.dot_dimension_numbers<[1], [0], [0], [1], [0, 0, 1, 1], [], []>} : vector<256x128xf32>, vector<128x128xf32>, vector<256x128xf32> -> vector<256x128xf32>
    %c0_5 = arith.constant 0 : index
    %c0_6 = arith.constant 0 : index
    %4 = vector.load %arg4[%c0_5, %c0_6] : memref<128x128xf32, #tpu.memory_space<vmem>>, vector<128x128xf32>
    %cst_7 = arith.constant dense<0.000000e+00> : vector<256x128xf32>
    %5 = tpu.matmul %3, %4, %cst_7 {dimension_numbers = #tpu.dot_dimension_numbers<[1], [0], [0], [1], [0, 0, 1, 1], [], []>} : vector<256x128xf32>, vector<128x128xf32>, vector<256x128xf32> -> vector<256x128xf32>
    %c0_8 = arith.constant 0 : index
    %c0_9 = arith.constant 0 : index
    %6 = vector.load %arg5[%c0_8, %c0_9] : memref<1x128xf32, #tpu.memory_space<vmem>>, vector<1x128xf32>
    %7 = vector.broadcast %6 : vector<1x128xf32> to vector<256x128xf32>
    %8 = arith.addf %5, %7 : vector<256x128xf32>
    %9 = arith.addf %8, %0 : vector<256x128xf32>
    %cst_10 = arith.constant dense<0.000000e+00> : vector<256xf32>
    %10 = vector.multi_reduction <add>, %9, %cst_10 [1] : vector<256x128xf32> to vector<256xf32>
    %11 = vector.shape_cast %10 : vector<256xf32> to vector<256x1xf32>
    %12 = arith.mulf %9, %9 : vector<256x128xf32>
    %cst_11 = arith.constant dense<0.000000e+00> : vector<256xf32>
    %13 = vector.multi_reduction <add>, %12, %cst_11 [1] : vector<256x128xf32> to vector<256xf32>
    %14 = vector.shape_cast %13 : vector<256xf32> to vector<256x1xf32>
    %cst_12 = arith.constant 7.812500e-03 : f32
    %15 = vector.broadcast %cst_12 : f32 to vector<256x1xf32>
    %16 = arith.mulf %11, %15 : vector<256x1xf32>
    %cst_13 = arith.constant 7.812500e-03 : f32
    %17 = vector.broadcast %cst_13 : f32 to vector<256x1xf32>
    %18 = arith.mulf %14, %17 : vector<256x1xf32>
    %19 = arith.mulf %16, %16 : vector<256x1xf32>
    %20 = arith.subf %18, %19 : vector<256x1xf32>
    %21 = vector.broadcast %16 : vector<256x1xf32> to vector<256x128xf32>
    %22 = arith.subf %9, %21 : vector<256x128xf32>
    %cst_14 = arith.constant 9.99999974E-6 : f32
    %23 = vector.broadcast %cst_14 : f32 to vector<256x1xf32>
    %24 = arith.addf %20, %23 : vector<256x1xf32>
    %25 = math.rsqrt %24 : vector<256x1xf32>
    %26 = vector.broadcast %25 : vector<256x1xf32> to vector<256x128xf32>
    %27 = arith.mulf %22, %26 : vector<256x128xf32>
    %c0_15 = arith.constant 0 : index
    %c0_16 = arith.constant 0 : index
    %28 = vector.load %arg6[%c0_15, %c0_16] : memref<1x128xf32, #tpu.memory_space<vmem>>, vector<1x128xf32>
    %29 = vector.broadcast %28 : vector<1x128xf32> to vector<256x128xf32>
    %30 = arith.mulf %27, %29 : vector<256x128xf32>
    %c0_17 = arith.constant 0 : index
    %c0_18 = arith.constant 0 : index
    %31 = vector.load %arg7[%c0_17, %c0_18] : memref<1x128xf32, #tpu.memory_space<vmem>>, vector<1x128xf32>
    %32 = vector.broadcast %31 : vector<1x128xf32> to vector<256x128xf32>
    %33 = arith.addf %30, %32 : vector<256x128xf32>
    %c0_19 = arith.constant 0 : index
    %c0_20 = arith.constant 0 : index
    %34 = vector.load %arg8[%c0_19, %c0_20] : memref<128x512xf32, #tpu.memory_space<vmem>>, vector<128x512xf32>
    %cst_21 = arith.constant dense<0.000000e+00> : vector<256x512xf32>
    %35 = tpu.matmul %33, %34, %cst_21 {dimension_numbers = #tpu.dot_dimension_numbers<[1], [0], [0], [1], [0, 0, 1, 1], [], []>} : vector<256x128xf32>, vector<128x512xf32>, vector<256x512xf32> -> vector<256x512xf32>
    %c0_22 = arith.constant 0 : index
    %c0_23 = arith.constant 0 : index
    %36 = vector.load %arg9[%c0_22, %c0_23] : memref<1x512xf32, #tpu.memory_space<vmem>>, vector<1x512xf32>
    %37 = vector.broadcast %36 : vector<1x512xf32> to vector<256x512xf32>
    %38 = arith.addf %35, %37 : vector<256x512xf32>
    %cst_24 = arith.constant 0.000000e+00 : f32
    %39 = vector.broadcast %cst_24 : f32 to vector<256x512xf32>
    %40 = arith.maximumf %38, %39 : vector<256x512xf32>
    %c0_25 = arith.constant 0 : index
    %c0_26 = arith.constant 0 : index
    %41 = vector.load %arg10[%c0_25, %c0_26] : memref<512x128xf32, #tpu.memory_space<vmem>>, vector<512x128xf32>
    %cst_27 = arith.constant dense<0.000000e+00> : vector<256x128xf32>
    %42 = tpu.matmul %40, %41, %cst_27 {dimension_numbers = #tpu.dot_dimension_numbers<[1], [0], [0], [1], [0, 0, 1, 1], [], []>} : vector<256x512xf32>, vector<512x128xf32>, vector<256x128xf32> -> vector<256x128xf32>
    %c0_28 = arith.constant 0 : index
    %c0_29 = arith.constant 0 : index
    %43 = vector.load %arg11[%c0_28, %c0_29] : memref<1x128xf32, #tpu.memory_space<vmem>>, vector<1x128xf32>
    %44 = vector.broadcast %43 : vector<1x128xf32> to vector<256x128xf32>
    %45 = arith.addf %42, %44 : vector<256x128xf32>
    %46 = arith.addf %45, %33 : vector<256x128xf32>
    %cst_30 = arith.constant dense<0.000000e+00> : vector<256xf32>
    %47 = vector.multi_reduction <add>, %46, %cst_30 [1] : vector<256x128xf32> to vector<256xf32>
    %48 = vector.shape_cast %47 : vector<256xf32> to vector<256x1xf32>
    %49 = arith.mulf %46, %46 : vector<256x128xf32>
    %cst_31 = arith.constant dense<0.000000e+00> : vector<256xf32>
    %50 = vector.multi_reduction <add>, %49, %cst_31 [1] : vector<256x128xf32> to vector<256xf32>
    %51 = vector.shape_cast %50 : vector<256xf32> to vector<256x1xf32>
    %cst_32 = arith.constant 7.812500e-03 : f32
    %52 = vector.broadcast %cst_32 : f32 to vector<256x1xf32>
    %53 = arith.mulf %48, %52 : vector<256x1xf32>
    %cst_33 = arith.constant 7.812500e-03 : f32
    %54 = vector.broadcast %cst_33 : f32 to vector<256x1xf32>
    %55 = arith.mulf %51, %54 : vector<256x1xf32>
    %56 = arith.mulf %53, %53 : vector<256x1xf32>
    %57 = arith.subf %55, %56 : vector<256x1xf32>
    %58 = vector.broadcast %53 : vector<256x1xf32> to vector<256x128xf32>
    %59 = arith.subf %46, %58 : vector<256x128xf32>
    %cst_34 = arith.constant 9.99999974E-6 : f32
    %60 = vector.broadcast %cst_34 : f32 to vector<256x1xf32>
    %61 = arith.addf %57, %60 : vector<256x1xf32>
    %62 = math.rsqrt %61 : vector<256x1xf32>
    %63 = vector.broadcast %62 : vector<256x1xf32> to vector<256x128xf32>
    %64 = arith.mulf %59, %63 : vector<256x128xf32>
    %c0_35 = arith.constant 0 : index
    %c0_36 = arith.constant 0 : index
    %65 = vector.load %arg12[%c0_35, %c0_36] : memref<1x128xf32, #tpu.memory_space<vmem>>, vector<1x128xf32>
    %66 = vector.broadcast %65 : vector<1x128xf32> to vector<256x128xf32>
    %67 = arith.mulf %64, %66 : vector<256x128xf32>
    %c0_37 = arith.constant 0 : index
    %c0_38 = arith.constant 0 : index
    %68 = vector.load %arg13[%c0_37, %c0_38] : memref<1x128xf32, #tpu.memory_space<vmem>>, vector<1x128xf32>
    %69 = vector.broadcast %68 : vector<1x128xf32> to vector<256x128xf32>
    %70 = arith.addf %67, %69 : vector<256x128xf32>
    %c0_39 = arith.constant 0 : index
    %c0_40 = arith.constant 0 : index
    %71 = vector.load %arg14[%c0_39, %c0_40] : memref<256x128xf32, #tpu.memory_space<vmem>>, vector<256x128xf32>
    tpu.vector_store %arg14[%c0_39, %c0_40], %70 {strides = array<i32>} : memref<256x128xf32, #tpu.memory_space<vmem>>, vector<256x128xf32>,
    return
  }
  func.func @transform_0(%arg0: i32) -> (i32, i32) {
    %c0_i32 = arith.constant 0 : i32
    %c0_i32_0 = arith.constant 0 : i32
    return %arg0, %c0_i32 : i32, i32
  }
  func.func @transform_1(%arg0: i32) -> (i32, i32) {
    %c0_i32 = arith.constant 0 : i32
    %c0_i32_0 = arith.constant 0 : i32
    return %arg0, %c0_i32 : i32, i32
  }
  func.func @transform_2(%arg0: i32) -> (i32, i32) {
    %c0_i32 = arith.constant 0 : i32
    %c0_i32_0 = arith.constant 0 : i32
    %c0_i32_1 = arith.constant 0 : i32
    return %c0_i32, %c0_i32_0 : i32, i32
  }
  func.func @transform_3(%arg0: i32) -> (i32, i32) {
    %c0_i32 = arith.constant 0 : i32
    %c0_i32_0 = arith.constant 0 : i32
    %c0_i32_1 = arith.constant 0 : i32
    return %c0_i32, %c0_i32_0 : i32, i32
  }
  func.func @transform_4(%arg0: i32) -> (i32, i32) {
    %c0_i32 = arith.constant 0 : i32
    %c0_i32_0 = arith.constant 0 : i32
    %c0_i32_1 = arith.constant 0 : i32
    return %c0_i32, %c0_i32_0 : i32, i32
  }
  func.func @transform_5(%arg0: i32) -> (i32, i32) {
    %c0_i32 = arith.constant 0 : i32
    %c0_i32_0 = arith.constant 0 : i32
    %c0_i32_1 = arith.constant 0 : i32
    return %c0_i32, %c0_i32_0 : i32, i32
  }
  func.func @transform_6(%arg0: i32) -> (i32, i32) {
    %c0_i32 = arith.constant 0 : i32
    %c0_i32_0 = arith.constant 0 : i32
    %c0_i32_1 = arith.constant 0 : i32
    return %c0_i32, %c0_i32_0 : i32, i32
  }
  func.func @transform_7(%arg0: i32) -> (i32, i32) {
    %c0_i32 = arith.constant 0 : i32
    %c0_i32_0 = arith.constant 0 : i32
    %c0_i32_1 = arith.constant 0 : i32
    return %c0_i32, %c0_i32_0 : i32, i32
  }
  func.func @transform_8(%arg0: i32) -> (i32, i32) {
    %c0_i32 = arith.constant 0 : i32
    %c0_i32_0 = arith.constant 0 : i32
    %c0_i32_1 = arith.constant 0 : i32
    return %c0_i32, %c0_i32_0 : i32, i32
  }
  func.func @transform_9(%arg0: i32) -> (i32, i32) {
    %c0_i32 = arith.constant 0 : i32
    %c0_i32_0 = arith.constant 0 : i32
    %c0_i32_1 = arith.constant 0 : i32
    return %c0_i32, %c0_i32_0 : i32, i32
  }
  func.func @transform_10(%arg0: i32) -> (i32, i32) {
    %c0_i32 = arith.constant 0 : i32
    %c0_i32_0 = arith.constant 0 : i32
    %c0_i32_1 = arith.constant 0 : i32
    return %c0_i32, %c0_i32_0 : i32, i32
  }
  func.func @transform_11(%arg0: i32) -> (i32, i32) {
    %c0_i32 = arith.constant 0 : i32
    %c0_i32_0 = arith.constant 0 : i32
    %c0_i32_1 = arith.constant 0 : i32
    return %c0_i32, %c0_i32_0 : i32, i32
  }
  func.func @transform_12(%arg0: i32) -> (i32, i32) {
    %c0_i32 = arith.constant 0 : i32
    %c0_i32_0 = arith.constant 0 : i32
    %c0_i32_1 = arith.constant 0 : i32
    return %c0_i32, %c0_i32_0 : i32, i32
  }
  func.func @transform_13(%arg0: i32) -> (i32, i32) {
    %c0_i32 = arith.constant 0 : i32
    %c0_i32_0 = arith.constant 0 : i32
    return %arg0, %c0_i32 : i32, i32
  }
}

</mosaic_0001>

<llo_original>
// kernel: tpu_custom_call.1
$region0: #{tpu_custom_call.1}
  #allocation0 [shape = 'u32[]', space=smem, size = 0x4, offset = 0x4, fixed_abs, tag = 'smem constant byte address 0x4 - core index']
  #allocation1 [shape = 'u32[144,128]{1,0:T(1,128)}', space=vmem, size = 0x12000, scoped, tag = 'internal scratch']
  %s0 = inlined_call_operand.hbm [shape: f32[512,128], index: 0, kind: input, shape index: {}]
  %s1 = inlined_call_operand.hbm [shape: f32[512,128], index: 1, kind: input, shape index: {}]
  %s2 = inlined_call_operand.hbm [shape: f32[128,128], index: 2, kind: input, shape index: {}]
  %s3 = inlined_call_operand.hbm [shape: f32[128,128], index: 3, kind: input, shape index: {}]
  %s4 = inlined_call_operand.vmem [shape: f32[1,128], index: 4, kind: input, shape index: {}]
  %s5 = inlined_call_operand.vmem [shape: f32[1,128], index: 5, kind: input, shape index: {}]
  %s6 = inlined_call_operand.vmem [shape: f32[1,128], index: 6, kind: input, shape index: {}]
  %s7 = inlined_call_operand.hbm [shape: f32[128,512], index: 7, kind: input, shape index: {}]
  %s8 = inlined_call_operand.vmem [shape: f32[1,512], index: 8, kind: input, shape index: {}]
  %s9 = inlined_call_operand.hbm [shape: f32[512,128], index: 9, kind: input, shape index: {}]
  %s10 = inlined_call_operand.vmem [shape: f32[1,128], index: 10, kind: input, shape index: {}]
  %s11 = inlined_call_operand.vmem [shape: f32[1,128], index: 11, kind: input, shape index: {}]
  %s12 = inlined_call_operand.vmem [shape: f32[1,128], index: 12, kind: input, shape index: {}]
  %s13 = inlined_call_operand.hbm [shape: f32[512,128], index: 13, kind: output, shape index: {}]
  %s14 = sld [smem:[#allocation0]]
  $region109: #{tpu_custom_call.1} parent=0
    _
  %s16 = ssub.s32 1, %s14
  %s17 = scalar_select 0, %s16, %s14
  $region1: #{tpu_custom_call.1} parent=0
    #allocation2 [shape = 'u8[262144]{0}', space=vmem, size = 0x40000, scoped, tag = 'input window, operand 0']
    #allocation3 [shape = 's32[2]{0}', space=sflag, size = 0x8, scoped, tag = 'scoped memory for tpu_custom_call.1']
    #allocation4 [shape = 's32[2]{0}', space=sflag, size = 0x8, scoped, tag = 'scoped memory for tpu_custom_call.1']
    #allocation5 [shape = 'u8[262144]{0}', space=vmem, size = 0x40000, scoped, tag = 'input window, operand 1']
    #allocation6 [shape = 's32[2]{0}', space=sflag, size = 0x8, scoped, tag = 'scoped memory for tpu_custom_call.1']
    #allocation7 [shape = 'u8[65536]{0}', space=vmem, size = 0x10000, scoped, tag = 'input window, operand 2, single buffered']
    #allocation8 [shape = 'u8[65536]{0}', space=vmem, size = 0x10000, scoped, tag = 'input window, operand 3, single buffered']
    #allocation9 [shape = 's32[1]{0}', space=sflag, size = 0x4, scoped, tag = 'scoped memory for tpu_custom_call.1']
    #allocation10 [shape = 'u8[262144]{0}', space=vmem, size = 0x40000, scoped, tag = 'input window, operand 7, single buffered']
    #allocation11 [shape = 'u8[262144]{0}', space=vmem, size = 0x40000, scoped, tag = 'input window, operand 9, single buffered']
    #allocation12 [shape = 's32[1]{0}', space=sflag, size = 0x4, scoped, tag = 'scoped memory for tpu_custom_call.1']
    #allocation13 [shape = 'u8[262144]{0}', space=vmem, size = 0x40000, scoped, tag = 'output window, operand 0']
    %18 = vsyncpa [#allocation3], 0
    %s19 = scalar_lea.sflag [#allocation3], 1
    %20 = vsyncpa %s19, 0
    %21 = vsyncpa [#allocation6], 0
    %s22 = scalar_lea.sflag [#allocation6], 1
    %23 = vsyncpa %s22, 0
    %24 = vsyncpa [#allocation9], 0
    %25 = vsyncpa [#allocation12], 0
    %26 = vsyncpa [#allocation4], 0
    %s27 = scalar_lea.sflag [#allocation4], 1
    %28 = vsyncpa %s27, 0
    loop: start=0, step=1, limit=4
    $region2: #{tpu_custom_call.1} parent=1 // loop_pre_header
      _
    $region3: #{tpu_custom_call.1} parent=1 // loop_header
      %s30 = sphi 0, %s34
      %p31 = scmp.ge.s32.totalorder %s30, 4
      %s40 = sphi 0, %s42
      %s43 = sphi 0, %s40
      %s44 = sphi 0, %s43
      %s60 = sphi 0, %s44
      %s66 = sphi 0, %s68
      %s69 = sphi 0, %s66
      %s70 = sphi 0, %s69
      %s86 = sphi 0, %s70
      %s90 = sphi 0, %s90
      %s92 = sphi 0, %s90
      %s93 = sphi 0, %s92
      %s107 = sphi 0, %s93
      %s111 = sphi 0, %s111
      %s113 = sphi 0, %s111
      %s114 = sphi 0, %s113
      %s128 = sphi 0, %s114
      %s132 = sphi 0, %s132
      %s134 = sphi 0, %s132
      %s135 = sphi 0, %s134
      %s149 = sphi 0, %s135
      %s153 = sphi 0, %s153
      %s155 = sphi 0, %s153
      %s156 = sphi 0, %s155
      %s170 = sphi 0, %s156
      %s174 = sphi 0, %s174
      %s176 = sphi 0, %s174
      %s177 = sphi 0, %s176
      %s191 = sphi 0, %s177
      %s195 = sphi 0, %s195
      %s197 = sphi 0, %s195
      %s198 = sphi 0, %s197
      %s212 = sphi 0, %s198
      %s216 = sphi 0, %s216
      %s218 = sphi 0, %s216
      %s219 = sphi 0, %s218
      %s233 = sphi 0, %s219
      %s237 = sphi 0, %s237
      %s239 = sphi 0, %s237
      %s240 = sphi 0, %s239
      %s254 = sphi 0, %s240
      %s258 = sphi 0, %s258
      %s260 = sphi 0, %s258
      %s261 = sphi 0, %s260
      %s275 = sphi 0, %s261
      %s279 = sphi 0, %s279
      %s281 = sphi 0, %s279
      %s282 = sphi 0, %s281
      %s296 = sphi 0, %s282
      %s300 = sphi 0, %s300
      %s302 = sphi 0, %s300
      %s303 = sphi 0, %s302
      %s317 = sphi 0, %s303
      %s323 = sphi 0, %s325
      %s326 = sphi 0, %s323
      %s327 = sphi 0, %s326
      %s343 = sphi 0, %s327
    $region4: #{tpu_custom_call.1} parent=1 // loop_header_branch
      %33 = sbr.rel (%p31) target = $region8
    $region5: #{tpu_custom_call.1} parent=1 // loop_body
      %s35 = ssub.s32 %s30, 1
      %s36 = ssub.s32 %s30, 2
      %s37 = sadd.s32 %s30, 1
      %s38 = ssub.s32 %s30, %s37
      %p39 = scmp.eq.s32.totalorder %s38, 0
      %s41 = sadd.s32 %s40, 1
      %s42 = scalar_select %p39, %s40, %s41
      %p45 = pneg %p39
      %p46 = scmp.eq.s32.totalorder %s30, 1
      %p47 = por %p45, %p46
      %p48 = scmp.ne.s32.totalorder %s40, %s43
      %p49 = scmp.eq.s32.totalorder %s30, 0
      %p50 = por %p48, %p49
      %p51 = scmp.ne.s32.totalorder %s40, %s43
      %p52 = scmp.eq.s32.totalorder %s35, 1
      %p53 = por %p51, %p52
      %p54 = scmp.ne.s32.totalorder %s43, %s44
      %p55 = scmp.eq.s32.totalorder %s35, 0
      %p56 = por %p54, %p55
      %p57 = scmp.ne.s32.totalorder %s43, %s44
      %p58 = scmp.eq.s32.totalorder %s36, 1
      %p59 = por %p57, %p58
      %p61 = scmp.ne.s32.totalorder %s44, %s60
      %p62 = scmp.eq.s32.totalorder %s36, 0
      %p63 = por %p61, %p62
      %s64 = ssub.s32 %s30, %s37
      %p65 = scmp.eq.s32.totalorder %s64, 0
      %s67 = sadd.s32 %s66, 1
      %s68 = scalar_select %p65, %s66, %s67
      %p71 = pneg %p65
      %p72 = scmp.eq.s32.totalorder %s30, 1
      %p73 = por %p71, %p72
      %p74 = scmp.ne.s32.totalorder %s66, %s69
      %p75 = scmp.eq.s32.totalorder %s30, 0
      %p76 = por %p74, %p75
      %p77 = scmp.ne.s32.totalorder %s66, %s69
      %p78 = scmp.eq.s32.totalorder %s35, 1
      %p79 = por %p77, %p78
      %p80 = scmp.ne.s32.totalorder %s69, %s70
      %p81 = scmp.eq.s32.totalorder %s35, 0
      %p82 = por %p80, %p81
      %p83 = scmp.ne.s32.totalorder %s69, %s70
      %p84 = scmp.eq.s32.totalorder %s36, 1
      %p85 = por %p83, %p84
      %p87 = scmp.ne.s32.totalorder %s70, %s86
      %p88 = scmp.eq.s32.totalorder %s36, 0
      %p89 = por %p87, %p88
      %s91 = sadd.s32 %s90, 1
      %p94 = scmp.eq.s32.totalorder %s30, 1
      %p95 = scmp.ne.s32.totalorder %s90, %s92
      %p96 = scmp.eq.s32.totalorder %s30, 0
      %p97 = por %p95, %p96
      %p98 = scmp.ne.s32.totalorder %s90, %s92
      %p99 = scmp.eq.s32.totalorder %s35, 1
      %p100 = por %p98, %p99
      %p101 = scmp.ne.s32.totalorder %s92, %s93
      %p102 = scmp.eq.s32.totalorder %s35, 0
      %p103 = por %p101, %p102
      %p104 = scmp.ne.s32.totalorder %s92, %s93
      %p105 = scmp.eq.s32.totalorder %s36, 1
      %p106 = por %p104, %p105
      %p108 = scmp.ne.s32.totalorder %s93, %s107
      %p109 = scmp.eq.s32.totalorder %s36, 0
      %p110 = por %p108, %p109
      %s112 = sadd.s32 %s111, 1
      %p115 = scmp.eq.s32.totalorder %s30, 1
      %p116 = scmp.ne.s32.totalorder %s111, %s113
      %p117 = scmp.eq.s32.totalorder %s30, 0
      %p118 = por %p116, %p117
      %p119 = scmp.ne.s32.totalorder %s111, %s113
      %p120 = scmp.eq.s32.totalorder %s35, 1
      %p121 = por %p119, %p120
      %p122 = scmp.ne.s32.totalorder %s113, %s114
      %p123 = scmp.eq.s32.totalorder %s35, 0
      %p124 = por %p122, %p123
      %p125 = scmp.ne.s32.totalorder %s113, %s114
      %p126 = scmp.eq.s32.totalorder %s36, 1
      %p127 = por %p125, %p126
      %p129 = scmp.ne.s32.totalorder %s114, %s128
      %p130 = scmp.eq.s32.totalorder %s36, 0
      %p131 = por %p129, %p130
      %s133 = sadd.s32 %s132, 1
      %p136 = scmp.eq.s32.totalorder %s30, 1
      %p137 = scmp.ne.s32.totalorder %s132, %s134
      %p138 = scmp.eq.s32.totalorder %s30, 0
      %p139 = por %p137, %p138
      %p140 = scmp.ne.s32.totalorder %s132, %s134
      %p141 = scmp.eq.s32.totalorder %s35, 1
      %p142 = por %p140, %p141
      %p143 = scmp.ne.s32.totalorder %s134, %s135
      %p144 = scmp.eq.s32.totalorder %s35, 0
      %p145 = por %p143, %p144
      %p146 = scmp.ne.s32.totalorder %s134, %s135
      %p147 = scmp.eq.s32.totalorder %s36, 1
      %p148 = por %p146, %p147
      %p150 = scmp.ne.s32.totalorder %s135, %s149
      %p151 = scmp.eq.s32.totalorder %s36, 0
      %p152 = por %p150, %p151
      %s154 = sadd.s32 %s153, 1
      %p157 = scmp.eq.s32.totalorder %s30, 1
      %p158 = scmp.ne.s32.totalorder %s153, %s155
      %p159 = scmp.eq.s32.totalorder %s30, 0
      %p160 = por %p158, %p159
      %p161 = scmp.ne.s32.totalorder %s153, %s155
      %p162 = scmp.eq.s32.totalorder %s35, 1
      %p163 = por %p161, %p162
      %p164 = scmp.ne.s32.totalorder %s155, %s156
      %p165 = scmp.eq.s32.totalorder %s35, 0
      %p166 = por %p164, %p165
      %p167 = scmp.ne.s32.totalorder %s155, %s156
      %p168 = scmp.eq.s32.totalorder %s36, 1
      %p169 = por %p167, %p168
      %p171 = scmp.ne.s32.totalorder %s156, %s170
      %p172 = scmp.eq.s32.totalorder %s36, 0
      %p173 = por %p171, %p172
      %s175 = sadd.s32 %s174, 1
      %p178 = scmp.eq.s32.totalorder %s30, 1
      %p179 = scmp.ne.s32.totalorder %s174, %s176
      %p180 = scmp.eq.s32.totalorder %s30, 0
      %p181 = por %p179, %p180
      %p182 = scmp.ne.s32.totalorder %s174, %s176
      %p183 = scmp.eq.s32.totalorder %s35, 1
      %p184 = por %p182, %p183
      %p185 = scmp.ne.s32.totalorder %s176, %s177
      %p186 = scmp.eq.s32.totalorder %s35, 0
      %p187 = por %p185, %p186
      %p188 = scmp.ne.s32.totalorder %s176, %s177
      %p189 = scmp.eq.s32.totalorder %s36, 1
      %p190 = por %p188, %p189
      %p192 = scmp.ne.s32.totalorder %s177, %s191
      %p193 = scmp.eq.s32.totalorder %s36, 0
      %p194 = por %p192, %p193
      %s196 = sadd.s32 %s195, 1
      %p199 = scmp.eq.s32.totalorder %s30, 1
      %p200 = scmp.ne.s32.totalorder %s195, %s197
      %p201 = scmp.eq.s32.totalorder %s30, 0
      %p202 = por %p200, %p201
      %p203 = scmp.ne.s32.totalorder %s195, %s197
      %p204 = scmp.eq.s32.totalorder %s35, 1
      %p205 = por %p203, %p204
      %p206 = scmp.ne.s32.totalorder %s197, %s198
      %p207 = scmp.eq.s32.totalorder %s35, 0
      %p208 = por %p206, %p207
      %p209 = scmp.ne.s32.totalorder %s197, %s198
      %p210 = scmp.eq.s32.totalorder %s36, 1
      %p211 = por %p209, %p210
      %p213 = scmp.ne.s32.totalorder %s198, %s212
      %p214 = scmp.eq.s32.totalorder %s36, 0
      %p215 = por %p213, %p214
      %s217 = sadd.s32 %s216, 1
      %p220 = scmp.eq.s32.totalorder %s30, 1
      %p221 = scmp.ne.s32.totalorder %s216, %s218
      %p222 = scmp.eq.s32.totalorder %s30, 0
      %p223 = por %p221, %p222
      %p224 = scmp.ne.s32.totalorder %s216, %s218
      %p225 = scmp.eq.s32.totalorder %s35, 1
      %p226 = por %p224, %p225
      %p227 = scmp.ne.s32.totalorder %s218, %s219
      %p228 = scmp.eq.s32.totalorder %s35, 0
      %p229 = por %p227, %p228
      %p230 = scmp.ne.s32.totalorder %s218, %s219
      %p231 = scmp.eq.s32.totalorder %s36, 1
      %p232 = por %p230, %p231
      %p234 = scmp.ne.s32.totalorder %s219, %s233
      %p235 = scmp.eq.s32.totalorder %s36, 0
      %p236 = por %p234, %p235
      %s238 = sadd.s32 %s237, 1
      %p241 = scmp.eq.s32.totalorder %s30, 1
      %p242 = scmp.ne.s32.totalorder %s237, %s239
      %p243 = scmp.eq.s32.totalorder %s30, 0
      %p244 = por %p242, %p243
      %p245 = scmp.ne.s32.totalorder %s237, %s239
      %p246 = scmp.eq.s32.totalorder %s35, 1
      %p247 = por %p245, %p246
      %p248 = scmp.ne.s32.totalorder %s239, %s240
      %p249 = scmp.eq.s32.totalorder %s35, 0
      %p250 = por %p248, %p249
      %p251 = scmp.ne.s32.totalorder %s239, %s240
      %p252 = scmp.eq.s32.totalorder %s36, 1
      %p253 = por %p251, %p252
      %p255 = scmp.ne.s32.totalorder %s240, %s254
      %p256 = scmp.eq.s32.totalorder %s36, 0
      %p257 = por %p255, %p256
      %s259 = sadd.s32 %s258, 1
      %p262 = scmp.eq.s32.totalorder %s30, 1
      %p263 = scmp.ne.s32.totalorder %s258, %s260
      %p264 = scmp.eq.s32.totalorder %s30, 0
      %p265 = por %p263, %p264
      %p266 = scmp.ne.s32.totalorder %s258, %s260
      %p267 = scmp.eq.s32.totalorder %s35, 1
      %p268 = por %p266, %p267
      %p269 = scmp.ne.s32.totalorder %s260, %s261
      %p270 = scmp.eq.s32.totalorder %s35, 0
      %p271 = por %p269, %p270
      %p272 = scmp.ne.s32.totalorder %s260, %s261
      %p273 = scmp.eq.s32.totalorder %s36, 1
      %p274 = por %p272, %p273
      %p276 = scmp.ne.s32.totalorder %s261, %s275
      %p277 = scmp.eq.s32.totalorder %s36, 0
      %p278 = por %p276, %p277
      %s280 = sadd.s32 %s279, 1
      %p283 = scmp.eq.s32.totalorder %s30, 1
      %p284 = scmp.ne.s32.totalorder %s279, %s281
      %p285 = scmp.eq.s32.totalorder %s30, 0
      %p286 = por %p284, %p285
      %p287 = scmp.ne.s32.totalorder %s279, %s281
      %p288 = scmp.eq.s32.totalorder %s35, 1
      %p289 = por %p287, %p288
      %p290 = scmp.ne.s32.totalorder %s281, %s282
      %p291 = scmp.eq.s32.totalorder %s35, 0
      %p292 = por %p290, %p291
      %p293 = scmp.ne.s32.totalorder %s281, %s282
      %p294 = scmp.eq.s32.totalorder %s36, 1
      %p295 = por %p293, %p294
      %p297 = scmp.ne.s32.totalorder %s282, %s296
      %p298 = scmp.eq.s32.totalorder %s36, 0
      %p299 = por %p297, %p298
      %s301 = sadd.s32 %s300, 1
      %p304 = scmp.eq.s32.totalorder %s30, 1
      %p305 = scmp.ne.s32.totalorder %s300, %s302
      %p306 = scmp.eq.s32.totalorder %s30, 0
      %p307 = por %p305, %p306
      %p308 = scmp.ne.s32.totalorder %s300, %s302
      %p309 = scmp.eq.s32.totalorder %s35, 1
      %p310 = por %p308, %p309
      %p311 = scmp.ne.s32.totalorder %s302, %s303
      %p312 = scmp.eq.s32.totalorder %s35, 0
      %p313 = por %p311, %p312
      %p314 = scmp.ne.s32.totalorder %s302, %s303
      %p315 = scmp.eq.s32.totalorder %s36, 1
      %p316 = por %p314, %p315
      %p318 = scmp.ne.s32.totalorder %s303, %s317
      %p319 = scmp.eq.s32.totalorder %s36, 0
      %p320 = por %p318, %p319
      %s321 = ssub.s32 %s30, %s37
      %p322 = scmp.eq.s32.totalorder %s321, 0
      %s324 = sadd.s32 %s323, 1
      %s325 = scalar_select %p322, %s323, %s324
      %p328 = pneg %p322
      %p329 = scmp.eq.s32.totalorder %s30, 1
      %p330 = por %p328, %p329
      %p331 = scmp.ne.s32.totalorder %s323, %s326
      %p332 = scmp.eq.s32.totalorder %s30, 0
      %p333 = por %p331, %p332
      %p334 = scmp.ne.s32.totalorder %s323, %s326
      %p335 = scmp.eq.s32.totalorder %s35, 1
      %p336 = por %p334, %p335
      %p337 = scmp.ne.s32.totalorder %s326, %s327
      %p338 = scmp.eq.s32.totalorder %s35, 0
      %p339 = por %p337, %p338
      %p340 = scmp.ne.s32.totalorder %s326, %s327
      %p341 = scmp.eq.s32.totalorder %s36, 1
      %p342 = por %p340, %p341
      %p344 = scmp.ne.s32.totalorder %s327, %s343
      %p345 = scmp.eq.s32.totalorder %s36, 0
      %p346 = por %p344, %p345
      %p347 = scmp.le.s32.totalorder 1, %s30
      %p348 = scmp.lt.s32.totalorder %s30, 3
      %p349 = pnand %p347, %p348
      %p350 = pneg %p349
      // Predicated region
      $region9: #{tpu_custom_call.1} parent=5 // pred_check
        _
      $region10: #{tpu_custom_call.1} parent=5 // pred_check_branch
        %352 = sbr.rel (%p349) target = $region12
      $region11: #{tpu_custom_call.1} parent=5 // pred_region
        %s353 = ssub.s32 %s30, 1
        // Predicated region
        $region13: #{tpu_custom_call.1} parent=11 // pred_check
          %p354 = pneg %p103
        $region14: #{tpu_custom_call.1} parent=11 // pred_check_branch
          %356 = sbr.rel (%p354) target = $region16
        $region15: #{tpu_custom_call.1} parent=11 // pred_region
          %s358 = ssub.s32 2048, 2048
          %359 = vsyncadd [#allocation6], %s358
          %s360 = sshll.u32 [#allocation7], 4
          %s361 = int_to_ptr.vmem [resolvable:$true] %s360
          %366 = dma.hbm_to_vmem [thread:$0]  %s2, 2048, %s361, [#allocation6], 128, 128, 8
        $region16: #{tpu_custom_call.1} parent=11 // pred_fallthru
          _
        // Predicated region
        $region17: #{tpu_custom_call.1} parent=11 // pred_check
          %p367 = pneg %p124
        $region18: #{tpu_custom_call.1} parent=11 // pred_check_branch
          %369 = sbr.rel (%p367) target = $region20
        $region19: #{tpu_custom_call.1} parent=11 // pred_region
          %s371 = ssub.s32 2048, 2048
          %372 = vsyncadd [#allocation9], %s371
          %s373 = sshll.u32 [#allocation8], 4
          %s374 = int_to_ptr.vmem [resolvable:$true] %s373
          %379 = dma.hbm_to_vmem [thread:$0]  %s3, 2048, %s374, [#allocation9], 128, 128, 8
        $region20: #{tpu_custom_call.1} parent=11 // pred_fallthru
          _
        // Predicated region
        $region21: #{tpu_custom_call.1} parent=11 // pred_check
          %p380 = pneg %p145
        $region22: #{tpu_custom_call.1} parent=11 // pred_check_branch
          %382 = sbr.rel (%p380) target = $region24
        $region23: #{tpu_custom_call.1} parent=11 // pred_region
          _
        $region24: #{tpu_custom_call.1} parent=11 // pred_fallthru
          _
        // Predicated region
        $region25: #{tpu_custom_call.1} parent=11 // pred_check
          %p383 = pneg %p166
        $region26: #{tpu_custom_call.1} parent=11 // pred_check_branch
          %385 = sbr.rel (%p383) target = $region28
        $region27: #{tpu_custom_call.1} parent=11 // pred_region
          _
        $region28: #{tpu_custom_call.1} parent=11 // pred_fallthru
          _
        // Predicated region
        $region29: #{tpu_custom_call.1} parent=11 // pred_check
          %p386 = pneg %p187
        $region30: #{tpu_custom_call.1} parent=11 // pred_check_branch
          %388 = sbr.rel (%p386) target = $region32
        $region31: #{tpu_custom_call.1} parent=11 // pred_region
          _
        $region32: #{tpu_custom_call.1} parent=11 // pred_fallthru
          _
        // Predicated region
        $region33: #{tpu_custom_call.1} parent=11 // pred_check
          %p389 = pneg %p208
        $region34: #{tpu_custom_call.1} parent=11 // pred_check_branch
          %391 = sbr.rel (%p389) target = $region36
        $region35: #{tpu_custom_call.1} parent=11 // pred_region
          %s393 = ssub.s32 8192, 8192
          %394 = vsyncadd [#allocation9], %s393
          %s395 = sshll.u32 [#allocation10], 4
          %s396 = int_to_ptr.vmem [resolvable:$true] %s395
          %401 = dma.hbm_to_vmem [thread:$0]  %s7, 8192, %s396, [#allocation9], 512, 512, 32
        $region36: #{tpu_custom_call.1} parent=11 // pred_fallthru
          _
        // Predicated region
        $region37: #{tpu_custom_call.1} parent=11 // pred_check
          %p402 = pneg %p229
        $region38: #{tpu_custom_call.1} parent=11 // pred_check_branch
          %404 = sbr.rel (%p402) target = $region40
        $region39: #{tpu_custom_call.1} parent=11 // pred_region
          _
        $region40: #{tpu_custom_call.1} parent=11 // pred_fallthru
          _
        // Predicated region
        $region41: #{tpu_custom_call.1} parent=11 // pred_check
          %p405 = pneg %p250
        $region42: #{tpu_custom_call.1} parent=11 // pred_check_branch
          %407 = sbr.rel (%p405) target = $region44
        $region43: #{tpu_custom_call.1} parent=11 // pred_region
          %s409 = ssub.s32 8192, 8192
          %410 = vsyncadd [#allocation12], %s409
          %s411 = sshll.u32 [#allocation11], 4
          %s412 = int_to_ptr.vmem [resolvable:$true] %s411
          %417 = dma.hbm_to_vmem [thread:$0]  %s9, 8192, %s412, [#allocation12], 128, 128, 8
        $region44: #{tpu_custom_call.1} parent=11 // pred_fallthru
          _
        // Predicated region
        $region45: #{tpu_custom_call.1} parent=11 // pred_check
          %p418 = pneg %p271
        $region46: #{tpu_custom_call.1} parent=11 // pred_check_branch
          %420 = sbr.rel (%p418) target = $region48
        $region47: #{tpu_custom_call.1} parent=11 // pred_region
          _
        $region48: #{tpu_custom_call.1} parent=11 // pred_fallthru
          _
        // Predicated region
        $region49: #{tpu_custom_call.1} parent=11 // pred_check
          %p421 = pneg %p292
        $region50: #{tpu_custom_call.1} parent=11 // pred_check_branch
          %423 = sbr.rel (%p421) target = $region52
        $region51: #{tpu_custom_call.1} parent=11 // pred_region
          _
        $region52: #{tpu_custom_call.1} parent=11 // pred_fallthru
          _
        // Predicated region
        $region53: #{tpu_custom_call.1} parent=11 // pred_check
          %p424 = pneg %p313
        $region54: #{tpu_custom_call.1} parent=11 // pred_check_branch
          %426 = sbr.rel (%p424) target = $region56
        $region55: #{tpu_custom_call.1} parent=11 // pred_region
          _
        $region56: #{tpu_custom_call.1} parent=11 // pred_fallthru
          _
      $region12: #{tpu_custom_call.1} parent=5 // pred_fallthru
        _
      %p427 = scmp.lt.s32.totalorder %s30, 2
      // Predicated region
      $region57: #{tpu_custom_call.1} parent=5 // pred_check
        %p428 = pneg %p427
      $region58: #{tpu_custom_call.1} parent=5 // pred_check_branch
        %430 = sbr.rel (%p428) target = $region60
      $region59: #{tpu_custom_call.1} parent=5 // pred_region
        // Predicated region
        $region61: #{tpu_custom_call.1} parent=59 // pred_check
          %p431 = pneg %p50
        $region62: #{tpu_custom_call.1} parent=59 // pred_check_branch
          %433 = sbr.rel (%p431) target = $region64
        $region63: #{tpu_custom_call.1} parent=59 // pred_region
          %s434 = sand.u32 %s40, 1
          %s435 = scalar_lea.sflag [#allocation3], %s434
          %s436 = sand.u32 %s40, 1
          %s437 = smul.addr %s436, 256
          %s438 = scalar_lea.vmem [#allocation2], %s437
          %s439 = smul.u32 32, %s30
          %s441 = ssub.s32 4096, 4096
          %442 = vsyncadd %s435, %s441
          %s443 = smul.addr %s439, 128
          %s444 = scalar_lea.hbm %s0, %s443
          %s445 = sshll.u32 %s438, 4
          %s446 = int_to_ptr.vmem [resolvable:$true] %s445
          %451 = dma.hbm_to_vmem [thread:$0]  %s444, 4096, %s446, %s435, 128, 128, 8
        $region64: #{tpu_custom_call.1} parent=59 // pred_fallthru
          _
        // Predicated region
        $region65: #{tpu_custom_call.1} parent=59 // pred_check
          %p452 = pneg %p76
        $region66: #{tpu_custom_call.1} parent=59 // pred_check_branch
          %454 = sbr.rel (%p452) target = $region68
        $region67: #{tpu_custom_call.1} parent=59 // pred_region
          %s455 = sand.u32 %s30, 1
          %s456 = scalar_lea.sflag [#allocation6], %s455
          %s457 = sand.u32 %s66, 1
          %s458 = smul.addr %s457, 256
          %s459 = scalar_lea.vmem [#allocation5], %s458
          %s460 = smul.u32 32, %s30
          %s462 = ssub.s32 4096, 4096
          %463 = vsyncadd %s456, %s462
          %s464 = smul.addr %s460, 128
          %s465 = scalar_lea.hbm %s1, %s464
          %s466 = sshll.u32 %s459, 4
          %s467 = int_to_ptr.vmem [resolvable:$true] %s466
          %472 = dma.hbm_to_vmem [thread:$0]  %s465, 4096, %s467, %s456, 128, 128, 8
        $region68: #{tpu_custom_call.1} parent=59 // pred_fallthru
          _
      $region60: #{tpu_custom_call.1} parent=5 // pred_fallthru
        _
      %p473 = scmp.le.s32.totalorder 1, %s30
      %p474 = scmp.lt.s32.totalorder %s30, 3
      %p475 = pnand %p473, %p474
      %p476 = pneg %p475
      // Predicated region
      $region69: #{tpu_custom_call.1} parent=5 // pred_check
        _
      $region70: #{tpu_custom_call.1} parent=5 // pred_check_branch
        %478 = sbr.rel (%p475) target = $region72
      $region71: #{tpu_custom_call.1} parent=5 // pred_region
        %s479 = ssub.s32 %s30, 1
        %s480 = sand.u32 %s43, 1
        %s481 = scalar_lea.sflag [#allocation3], %s480
        %s482 = sand.u32 %s43, 1
        %s483 = smul.addr %s482, 256
        %s484 = scalar_lea.vmem [#allocation2], %s483
        // Predicated region
        $region73: #{tpu_custom_call.1} parent=71 // pred_check
          %p485 = pneg %p56
        $region74: #{tpu_custom_call.1} parent=71 // pred_check_branch
          %487 = sbr.rel (%p485) target = $region76
        $region75: #{tpu_custom_call.1} parent=71 // pred_region
          %488 = dma.done %s481, 4096
        $region76: #{tpu_custom_call.1} parent=71 // pred_fallthru
          _
        %s489 = sand.u32 %s35, 1
        %s490 = scalar_lea.sflag [#allocation6], %s489
        %s491 = sand.u32 %s69, 1
        %s492 = smul.addr %s491, 256
        %s493 = scalar_lea.vmem [#allocation5], %s492
        // Predicated region
        $region77: #{tpu_custom_call.1} parent=71 // pred_check
          %p494 = pneg %p82
        $region78: #{tpu_custom_call.1} parent=71 // pred_check_branch
          %496 = sbr.rel (%p494) target = $region80
        $region79: #{tpu_custom_call.1} parent=71 // pred_region
          %497 = dma.done %s490, 4096
        $region80: #{tpu_custom_call.1} parent=71 // pred_fallthru
          _
        // Predicated region
        $region81: #{tpu_custom_call.1} parent=71 // pred_check
          %p498 = pneg %p103
        $region82: #{tpu_custom_call.1} parent=71 // pred_check_branch
          %500 = sbr.rel (%p498) target = $region84
        $region83: #{tpu_custom_call.1} parent=71 // pred_region
          %501 = dma.done [#allocation6], 2048
        $region84: #{tpu_custom_call.1} parent=71 // pred_fallthru
          _
        // Predicated region
        $region85: #{tpu_custom_call.1} parent=71 // pred_check
          %p502 = pneg %p124
        $region86: #{tpu_custom_call.1} parent=71 // pred_check_branch
          %504 = sbr.rel (%p502) target = $region88
        $region87: #{tpu_custom_call.1} parent=71 // pred_region
          %505 = dma.done [#allocation9], 2048
        $region88: #{tpu_custom_call.1} parent=71 // pred_fallthru
          _
        // Predicated region
        $region89: #{tpu_custom_call.1} parent=71 // pred_check
          %p506 = pneg %p208
        $region90: #{tpu_custom_call.1} parent=71 // pred_check_branch
          %508 = sbr.rel (%p506) target = $region92
        $region91: #{tpu_custom_call.1} parent=71 // pred_region
          %509 = dma.done [#allocation9], 8192
        $region92: #{tpu_custom_call.1} parent=71 // pred_fallthru
          _
        // Predicated region
        $region93: #{tpu_custom_call.1} parent=71 // pred_check
          %p510 = pneg %p250
        $region94: #{tpu_custom_call.1} parent=71 // pred_check_branch
          %512 = sbr.rel (%p510) target = $region96
        $region95: #{tpu_custom_call.1} parent=71 // pred_region
          %513 = dma.done [#allocation12], 8192
        $region96: #{tpu_custom_call.1} parent=71 // pred_fallthru
          _
        %s514 = sand.u32 %s43, 1
        %s515 = scalar_lea.sflag [#allocation3], %s514
        %s516 = sand.u32 %s43, 1
        %s517 = smul.addr %s516, 256
        %s518 = scalar_lea.vmem [#allocation2], %s517
        %p519 = pneg %p56
        %p520 = pneg %p53
        %s521 = sand.u32 %s35, 1
        %s522 = scalar_lea.sflag [#allocation6], %s521
        %s523 = sand.u32 %s69, 1
        %s524 = smul.addr %s523, 256
        %s525 = scalar_lea.vmem [#allocation5], %s524
        %p526 = pneg %p82
        %p527 = pneg %p79
        %p528 = pneg %p103
        %p529 = pneg %p100
        %p530 = pneg %p124
        %p531 = pneg %p121
        %p532 = pneg %p145
        %p533 = pneg %p142
        %p534 = pneg %p166
        %p535 = pneg %p163
        %p536 = pneg %p187
        %p537 = pneg %p184
        %p538 = pneg %p208
        %p539 = pneg %p205
        %p540 = pneg %p229
        %p541 = pneg %p226
        %p542 = pneg %p250
        %p543 = pneg %p247
        %p544 = pneg %p271
        %p545 = pneg %p268
        %p546 = pneg %p292
        %p547 = pneg %p289
        %p548 = pneg %p313
        %p549 = pneg %p310
        %p550 = pneg %p339
        %p551 = pneg %p336
        %s552 = sand.u32 %s326, 1
        %s553 = scalar_lea.sflag [#allocation4], %s552
        %s554 = sand.u32 %s326, 1
        %s555 = smul.addr %s554, 256
        %s556 = scalar_lea.vmem [#allocation13], %s555
        %s557 = smul.u32 32, %s35
        %s558 = smul.u32 32, %s35
        %s559 = smul.u32 32, %s35
        %v560 = vld [vmem:[%s493] sm:$0xff]
        %v561 = vld [vmem:[%s493 + $0x8] sm:$0xff]
        %v562 = vld [vmem:[%s493 + $0x10] sm:$0xff]
        %v563 = vld [vmem:[%s493 + $0x18] sm:$0xff]
        %v564 = vld [vmem:[%s493 + $0x20] sm:$0xff]
        %v565 = vld [vmem:[%s493 + $0x28] sm:$0xff]
        %v566 = vld [vmem:[%s493 + $0x30] sm:$0xff]
        %v567 = vld [vmem:[%s493 + $0x38] sm:$0xff]
        %v568 = vld [vmem:[%s493 + $0x40] sm:$0xff]
        %v569 = vld [vmem:[%s493 + $0x48] sm:$0xff]
        %v570 = vld [vmem:[%s493 + $0x50] sm:$0xff]
        %v571 = vld [vmem:[%s493 + $0x58] sm:$0xff]
        %v572 = vld [vmem:[%s493 + $0x60] sm:$0xff]
        %v573 = vld [vmem:[%s493 + $0x68] sm:$0xff]
        %v574 = vld [vmem:[%s493 + $0x70] sm:$0xff]
        %v575 = vld [vmem:[%s493 + $0x78] sm:$0xff]
        %v576 = vld [vmem:[%s493 + $0x80] sm:$0xff]
        %v577 = vld [vmem:[%s493 + $0x88] sm:$0xff]
        %v578 = vld [vmem:[%s493 + $0x90] sm:$0xff]
        %v579 = vld [vmem:[%s493 + $0x98] sm:$0xff]
        %v580 = vld [vmem:[%s493 + $0xa0] sm:$0xff]
        %v581 = vld [vmem:[%s493 + $0xa8] sm:$0xff]
        %v582 = vld [vmem:[%s493 + $0xb0] sm:$0xff]
        %v583 = vld [vmem:[%s493 + $0xb8] sm:$0xff]
        %v584 = vld [vmem:[%s493 + $0xc0] sm:$0xff]
        %v585 = vld [vmem:[%s493 + $0xc8] sm:$0xff]
        %v586 = vld [vmem:[%s493 + $0xd0] sm:$0xff]
        %v587 = vld [vmem:[%s493 + $0xd8] sm:$0xff]
        %v588 = vld [vmem:[%s493 + $0xe0] sm:$0xff]
        %v589 = vld [vmem:[%s493 + $0xe8] sm:$0xff]
        %v590 = vld [vmem:[%s493 + $0xf0] sm:$0xff]
        %v591 = vld [vmem:[%s493 + $0xf8] sm:$0xff]
        %v592 = vld [vmem:[%s484] sm:$0xff]
        %v593 = vld [vmem:[%s484 + $0x8] sm:$0xff]
        %v594 = vld [vmem:[%s484 + $0x10] sm:$0xff]
        %v595 = vld [vmem:[%s484 + $0x18] sm:$0xff]
        %v596 = vld [vmem:[%s484 + $0x20] sm:$0xff]
        %v597 = vld [vmem:[%s484 + $0x28] sm:$0xff]
        %v598 = vld [vmem:[%s484 + $0x30] sm:$0xff]
        %v599 = vld [vmem:[%s484 + $0x38] sm:$0xff]
        %v600 = vld [vmem:[%s484 + $0x40] sm:$0xff]
        %v601 = vld [vmem:[%s484 + $0x48] sm:$0xff]
        %v602 = vld [vmem:[%s484 + $0x50] sm:$0xff]
        %v603 = vld [vmem:[%s484 + $0x58] sm:$0xff]
        %v604 = vld [vmem:[%s484 + $0x60] sm:$0xff]
        %v605 = vld [vmem:[%s484 + $0x68] sm:$0xff]
        %v606 = vld [vmem:[%s484 + $0x70] sm:$0xff]
        %v607 = vld [vmem:[%s484 + $0x78] sm:$0xff]
        %v608 = vld [vmem:[%s484 + $0x80] sm:$0xff]
        %v609 = vld [vmem:[%s484 + $0x88] sm:$0xff]
        %v610 = vld [vmem:[%s484 + $0x90] sm:$0xff]
        %v611 = vld [vmem:[%s484 + $0x98] sm:$0xff]
        %v612 = vld [vmem:[%s484 + $0xa0] sm:$0xff]
        %v613 = vld [vmem:[%s484 + $0xa8] sm:$0xff]
        %v614 = vld [vmem:[%s484 + $0xb0] sm:$0xff]
        %v615 = vld [vmem:[%s484 + $0xb8] sm:$0xff]
        %v616 = vld [vmem:[%s484 + $0xc0] sm:$0xff]
        %v617 = vld [vmem:[%s484 + $0xc8] sm:$0xff]
        %v618 = vld [vmem:[%s484 + $0xd0] sm:$0xff]
        %v619 = vld [vmem:[%s484 + $0xd8] sm:$0xff]
        %v620 = vld [vmem:[%s484 + $0xe0] sm:$0xff]
        %v621 = vld [vmem:[%s484 + $0xe8] sm:$0xff]
        %v622 = vld [vmem:[%s484 + $0xf0] sm:$0xff]
        %v623 = vld [vmem:[%s484 + $0xf8] sm:$0xff]
        %v624 = vld [vmem:[#allocation7] sm:$0xff]
        %v625 = vld [vmem:[#allocation7 + $0x8] sm:$0xff]
        %v626 = vld [vmem:[#allocation7 + $0x10] sm:$0xff]
        %v627 = vld [vmem:[#allocation7 + $0x18] sm:$0xff]
        %v628 = vld [vmem:[#allocation7 + $0x20] sm:$0xff]
        %v629 = vld [vmem:[#allocation7 + $0x28] sm:$0xff]
        %v630 = vld [vmem:[#allocation7 + $0x30] sm:$0xff]
        %v631 = vld [vmem:[#allocation7 + $0x38] sm:$0xff]
        %v632 = vld [vmem:[#allocation7 + $0x40] sm:$0xff]
        %v633 = vld [vmem:[#allocation7 + $0x48] sm:$0xff]
        %v634 = vld [vmem:[#allocation7 + $0x50] sm:$0xff]
        %v635 = vld [vmem:[#allocation7 + $0x58] sm:$0xff]
        %v636 = vld [vmem:[#allocation7 + $0x60] sm:$0xff]
        %v637 = vld [vmem:[#allocation7 + $0x68] sm:$0xff]
        %v638 = vld [vmem:[#allocation7 + $0x70] sm:$0xff]
        %v639 = vld [vmem:[#allocation7 + $0x78] sm:$0xff]
        %640 = vmatprep.subr.mxu0 0.0
        %641 = vmatpush1.msra.mxu0 %v624
        %642 = vmatprep.subr.mxu0 0.0
        %643 = vmatpush1.msra.mxu0 %v625
        %644 = vmatprep.subr.mxu0 0.0
        %645 = vmatpush1.msra.mxu0 %v626
        %646 = vmatprep.subr.mxu0 0.0
        %647 = vmatpush1.msra.mxu0 %v627
        %648 = vmatprep.subr.mxu0 0.0
        %649 = vmatpush1.msra.mxu0 %v628
        %650 = vmatprep.subr.mxu0 0.0
        %651 = vmatpush1.msra.mxu0 %v629
        %652 = vmatprep.subr.mxu0 0.0
        %653 = vmatpush1.msra.mxu0 %v630
        %654 = vmatprep.subr.mxu0 0.0
        %655 = vmatpush1.msra.mxu0 %v631
        %656 = vmatprep.subr.mxu0 0.0
        %657 = vmatpush1.msra.mxu0 %v632
        %658 = vmatprep.subr.mxu0 0.0
        %659 = vmatpush1.msra.mxu0 %v633
        %660 = vmatprep.subr.mxu0 0.0
        %661 = vmatpush1.msra.mxu0 %v634
        %662 = vmatprep.subr.mxu0 0.0
        %663 = vmatpush1.msra.mxu0 %v635
        %664 = vmatprep.subr.mxu0 0.0
        %665 = vmatpush1.msra.mxu0 %v636
        %666 = vmatprep.subr.mxu0 0.0
        %667 = vmatpush1.msra.mxu0 %v637
        %668 = vmatprep.subr.mxu0 0.0
        %669 = vmatpush1.msra.mxu0 %v638
        %670 = vmatprep.subr.mxu0 0.0
        %671 = vmatpush1.msra.mxu0 %v639
        %672 = vmatprep.subr.mxu0 0.0
        %673 = vmatpush1.msra.mxu0 0.0
        %674 = vmatprep.subr.mxu0 0.0
        %675 = vmatpush1.msra.mxu0 0.0
        %676 = vmatprep.subr.mxu0 0.0
        %677 = vmatpush1.msra.mxu0 0.0
        %678 = vmatprep.subr.mxu0 0.0
        %679 = vmatpush1.msra.mxu0 0.0
        %680 = vmatprep.subr.mxu0 0.0
        %681 = vmatpush1.msra.mxu0 0.0
        %682 = vmatprep.subr.mxu0 0.0
        %683 = vmatpush1.msra.mxu0 0.0
        %684 = vmatprep.subr.mxu0 0.0
        %685 = vmatpush1.msra.mxu0 0.0
        %686 = vmatprep.subr.mxu0 0.0
        %687 = vmatpush1.msra.mxu0 0.0
        %688 = vmatprep.subr.mxu0 0.0
        %689 = vmatpush1.msra.mxu0 0.0
        %690 = vmatprep.subr.mxu0 0.0
        %691 = vmatpush1.msra.mxu0 0.0
        %692 = vmatprep.subr.mxu0 0.0
        %693 = vmatpush1.msra.mxu0 0.0
        %694 = vmatprep.subr.mxu0 0.0
        %695 = vmatpush1.msra.mxu0 0.0
        %696 = vmatprep.subr.mxu0 0.0
        %697 = vmatpush1.msra.mxu0 0.0
        %698 = vmatprep.subr.mxu0 0.0
        %699 = vmatpush1.msra.mxu0 0.0
        %700 = vmatprep.subr.mxu0 0.0
        %701 = vmatpush1.msra.mxu0 0.0
        %702 = vmatprep.subr.mxu0 0.0
        %703 = vmatpush1.msra.mxu0 0.0
        %704 = vmatprep.mubr.f32.mxu0 0.0
        %705 = vmatmul.mubr.f32.gmra.mrb[0].mxu0 %v592
        %v706 = vpop.f32.mrb[0].mxu0
        %v707 = vadd.f32 0.0, %v706
        %v708 = vpop.f32.mrb[0].mxu0
        %709 = vmatprep.mubr.f32.mxu0 0.0
        %710 = vmatmul.mubr.f32.gmra.mrb[0].mxu0 %v593
        %v711 = vpop.f32.mrb[0].mxu0
        %v712 = vadd.f32 0.0, %v711
        %v713 = vpop.f32.mrb[0].mxu0
        %714 = vmatprep.mubr.f32.mxu0 0.0
        %715 = vmatmul.mubr.f32.gmra.mrb[0].mxu0 %v594
        %v716 = vpop.f32.mrb[0].mxu0
        %v717 = vadd.f32 0.0, %v716
        %v718 = vpop.f32.mrb[0].mxu0
        %719 = vmatprep.mubr.f32.mxu0 0.0
        %720 = vmatmul.mubr.f32.gmra.mrb[0].mxu0 %v595
        %v721 = vpop.f32.mrb[0].mxu0
        %v722 = vadd.f32 0.0, %v721
        %v723 = vpop.f32.mrb[0].mxu0
        %724 = vmatprep.mubr.f32.mxu0 0.0
        %725 = vmatmul.mubr.f32.gmra.mrb[0].mxu0 %v596
        %v726 = vpop.f32.mrb[0].mxu0
        %v727 = vadd.f32 0.0, %v726
        %v728 = vpop.f32.mrb[0].mxu0
        %729 = vmatprep.mubr.f32.mxu0 0.0
        %730 = vmatmul.mubr.f32.gmra.mrb[0].mxu0 %v597
        %v731 = vpop.f32.mrb[0].mxu0
        %v732 = vadd.f32 0.0, %v731
        %v733 = vpop.f32.mrb[0].mxu0
        %734 = vmatprep.mubr.f32.mxu0 0.0
        %735 = vmatmul.mubr.f32.gmra.mrb[0].mxu0 %v598
        %v736 = vpop.f32.mrb[0].mxu0
        %v737 = vadd.f32 0.0, %v736
        %v738 = vpop.f32.mrb[0].mxu0
        %739 = vmatprep.mubr.f32.mxu0 0.0
        %740 = vmatmul.mubr.f32.gmra.mrb[0].mxu0 %v599
        %v741 = vpop.f32.mrb[0].mxu0
        %v742 = vadd.f32 0.0, %v741
        %v743 = vpop.f32.mrb[0].mxu0
        %744 = vmatprep.mubr.f32.mxu0 0.0
        %745 = vmatmul.mubr.f32.gmra.mrb[0].mxu0 %v600
        %v746 = vpop.f32.mrb[0].mxu0
        %v747 = vadd.f32 0.0, %v746
        %v748 = vpop.f32.mrb[0].mxu0
        %749 = vmatprep.mubr.f32.mxu0 0.0
        %750 = vmatmul.mubr.f32.gmra.mrb[0].mxu0 %v601
        %v751 = vpop.f32.mrb[0].mxu0
        %v752 = vadd.f32 0.0, %v751
        %v753 = vpop.f32.mrb[0].mxu0
        %754 = vmatprep.mubr.f32.mxu0 0.0
        %755 = vmatmul.mubr.f32.gmra.mrb[0].mxu0 %v602
        %v756 = vpop.f32.mrb[0].mxu0
        %v757 = vadd.f32 0.0, %v756
        %v758 = vpop.f32.mrb[0].mxu0
        %759 = vmatprep.mubr.f32.mxu0 0.0
        %760 = vmatmul.mubr.f32.gmra.mrb[0].mxu0 %v603
        %v761 = vpop.f32.mrb[0].mxu0
        %v762 = vadd.f32 0.0, %v761
        %v763 = vpop.f32.mrb[0].mxu0
        %764 = vmatprep.mubr.f32.mxu0 0.0
        %765 = vmatmul.mubr.f32.gmra.mrb[0].mxu0 %v604
        %v766 = vpop.f32.mrb[0].mxu0
        %v767 = vadd.f32 0.0, %v766
        %v768 = vpop.f32.mrb[0].mxu0
        %769 = vmatprep.mubr.f32.mxu0 0.0
        %770 = vmatmul.mubr.f32.gmra.mrb[0].mxu0 %v605
        %v771 = vpop.f32.mrb[0].mxu0
        %v772 = vadd.f32 0.0, %v771
        %v773 = vpop.f32.mrb[0].mxu0
        %774 = vmatprep.mubr.f32.mxu0 0.0
        %775 = vmatmul.mubr.f32.gmra.mrb[0].mxu0 %v606
        %v776 = vpop.f32.mrb[0].mxu0
        %v777 = vadd.f32 0.0, %v776
        %v778 = vpop.f32.mrb[0].mxu0
        %779 = vmatprep.mubr.f32.mxu0 0.0
        %780 = vmatmul.mubr.f32.gmra.mrb[0].mxu0 %v607
        %v781 = vpop.f32.mrb[0].mxu0
        %v782 = vadd.f32 0.0, %v781
        %v783 = vpop.f32.mrb[0].mxu0
        %784 = vmatprep.mubr.f32.mxu0 0.0
        %785 = vmatmul.mubr.f32.gmra.mrb[0].mxu0 %v608
        %v786 = vpop.f32.mrb[0].mxu0
        %v787 = vadd.f32 0.0, %v786
        %v788 = vpop.f32.mrb[0].mxu0
        %789 = vmatprep.mubr.f32.mxu0 0.0
        %790 = vmatmul.mubr.f32.gmra.mrb[0].mxu0 %v609
        %v791 = vpop.f32.mrb[0].mxu0
        %v792 = vadd.f32 0.0, %v791
        %v793 = vpop.f32.mrb[0].mxu0
        %794 = vmatprep.mubr.f32.mxu0 0.0
        %795 = vmatmul.mubr.f32.gmra.mrb[0].mxu0 %v610
        %v796 = vpop.f32.mrb[0].mxu0
        %v797 = vadd.f32 0.0, %v796
        %v798 = vpop.f32.mrb[0].mxu0
        %799 = vmatprep.mubr.f32.mxu0 0.0
        %800 = vmatmul.mubr.f32.gmra.mrb[0].mxu0 %v611
        %v801 = vpop.f32.mrb[0].mxu0
        %v802 = vadd.f32 0.0, %v801
        %v803 = vpop.f32.mrb[0].mxu0
        %804 = vmatprep.mubr.f32.mxu0 0.0
        %805 = vmatmul.mubr.f32.gmra.mrb[0].mxu0 %v612
        %v806 = vpop.f32.mrb[0].mxu0
        %v807 = vadd.f32 0.0, %v806
        %v808 = vpop.f32.mrb[0].mxu0
        %809 = vmatprep.mubr.f32.mxu0 0.0
        %810 = vmatmul.mubr.f32.gmra.mrb[0].mxu0 %v613
        %v811 = vpop.f32.mrb[0].mxu0
        %v812 = vadd.f32 0.0, %v811
        %v813 = vpop.f32.mrb[0].mxu0
        %814 = vmatprep.mubr.f32.mxu0 0.0
        %815 = vmatmul.mubr.f32.gmra.mrb[0].mxu0 %v614
        %v816 = vpop.f32.mrb[0].mxu0
        %v817 = vadd.f32 0.0, %v816
        %v818 = vpop.f32.mrb[0].mxu0
        %819 = vmatprep.mubr.f32.mxu0 0.0
        %820 = vmatmul.mubr.f32.gmra.mrb[0].mxu0 %v615
        %v821 = vpop.f32.mrb[0].mxu0
        %v822 = vadd.f32 0.0, %v821
        %v823 = vpop.f32.mrb[0].mxu0
        %824 = vmatprep.mubr.f32.mxu0 0.0
        %825 = vmatmul.mubr.f32.gmra.mrb[0].mxu0 %v616
        %v826 = vpop.f32.mrb[0].mxu0
        %v827 = vadd.f32 0.0, %v826
        %v828 = vpop.f32.mrb[0].mxu0
        %829 = vmatprep.mubr.f32.mxu0 0.0
        %830 = vmatmul.mubr.f32.gmra.mrb[0].mxu0 %v617
        %v831 = vpop.f32.mrb[0].mxu0
        %v832 = vadd.f32 0.0, %v831
        %v833 = vpop.f32.mrb[0].mxu0
        %834 = vmatprep.mubr.f32.mxu0 0.0
        %835 = vmatmul.mubr.f32.gmra.mrb[0].mxu0 %v618
        %v836 = vpop.f32.mrb[0].mxu0
        %v837 = vadd.f32 0.0, %v836
        %v838 = vpop.f32.mrb[0].mxu0
        %839 = vmatprep.mubr.f32.mxu0 0.0
        %840 = vmatmul.mubr.f32.gmra.mrb[0].mxu0 %v619
        %v841 = vpop.f32.mrb[0].mxu0
        %v842 = vadd.f32 0.0, %v841
        %v843 = vpop.f32.mrb[0].mxu0
        %844 = vmatprep.mubr.f32.mxu0 0.0
        %845 = vmatmul.mubr.f32.gmra.mrb[0].mxu0 %v620
        %v846 = vpop.f32.mrb[0].mxu0
        %v847 = vadd.f32 0.0, %v846
        %v848 = vpop.f32.mrb[0].mxu0
        %849 = vmatprep.mubr.f32.mxu0 0.0
        %850 = vmatmul.mubr.f32.gmra.mrb[0].mxu0 %v621
        %v851 = vpop.f32.mrb[0].mxu0
        %v852 = vadd.f32 0.0, %v851
        %v853 = vpop.f32.mrb[0].mxu0
        %854 = vmatprep.mubr.f32.mxu0 0.0
        %855 = vmatmul.mubr.f32.gmra.mrb[0].mxu0 %v622
        %v856 = vpop.f32.mrb[0].mxu0
        %v857 = vadd.f32 0.0, %v856
        %v858 = vpop.f32.mrb[0].mxu0
        %859 = vmatprep.mubr.f32.mxu0 0.0
        %860 = vmatmul.mubr.f32.gmra.mrb[0].mxu0 %v623
        %v861 = vpop.f32.mrb[0].mxu0
        %v862 = vadd.f32 0.0, %v861
        %v863 = vpop.f32.mrb[0].mxu0
        %864 = vdwg.mxu0
        %v865 = vld [vmem:[#allocation8] sm:$0xff]
        %v866 = vld [vmem:[#allocation8 + $0x8] sm:$0xff]
        %v867 = vld [vmem:[#allocation8 + $0x10] sm:$0xff]
        %v868 = vld [vmem:[#allocation8 + $0x18] sm:$0xff]
        %v869 = vld [vmem:[#allocation8 + $0x20] sm:$0xff]
        %v870 = vld [vmem:[#allocation8 + $0x28] sm:$0xff]
        %v871 = vld [vmem:[#allocation8 + $0x30] sm:$0xff]
        %v872 = vld [vmem:[#allocation8 + $0x38] sm:$0xff]
        %v873 = vld [vmem:[#allocation8 + $0x40] sm:$0xff]
        %v874 = vld [vmem:[#allocation8 + $0x48] sm:$0xff]
        %v875 = vld [vmem:[#allocation8 + $0x50] sm:$0xff]
        %v876 = vld [vmem:[#allocation8 + $0x58] sm:$0xff]
        %v877 = vld [vmem:[#allocation8 + $0x60] sm:$0xff]
        %v878 = vld [vmem:[#allocation8 + $0x68] sm:$0xff]
        %v879 = vld [vmem:[#allocation8 + $0x70] sm:$0xff]
        %v880 = vld [vmem:[#allocation8 + $0x78] sm:$0xff]
        %v881 = vld [vmem:[%s4] sm:$0x1]
        %v883 = vlaneseq
        %v884 = vshrl.u32 %v883, 7
        %v885 = vsub.s32 0, %v884
        %v886 = vrot.slane %v881, %v885
        %888 = vmatprep.subr.mxu0 0.0
        %889 = vmatpush1.msra.mxu0 %v865
        %890 = vmatprep.subr.mxu0 0.0
        %891 = vmatpush1.msra.mxu0 %v866
        %892 = vmatprep.subr.mxu0 0.0
        %893 = vmatpush1.msra.mxu0 %v867
        %894 = vmatprep.subr.mxu0 0.0
        %895 = vmatpush1.msra.mxu0 %v868
        %896 = vmatprep.subr.mxu0 0.0
        %897 = vmatpush1.msra.mxu0 %v869
        %898 = vmatprep.subr.mxu0 0.0
        %899 = vmatpush1.msra.mxu0 %v870
        %900 = vmatprep.subr.mxu0 0.0
        %901 = vmatpush1.msra.mxu0 %v871
        %902 = vmatprep.subr.mxu0 0.0
        %903 = vmatpush1.msra.mxu0 %v872
        %904 = vmatprep.subr.mxu0 0.0
        %905 = vmatpush1.msra.mxu0 %v873
        %906 = vmatprep.subr.mxu0 0.0
        %907 = vmatpush1.msra.mxu0 %v874
        %908 = vmatprep.subr.mxu0 0.0
        %909 = vmatpush1.msra.mxu0 %v875
        %910 = vmatprep.subr.mxu0 0.0
        %911 = vmatpush1.msra.mxu0 %v876
        %912 = vmatprep.subr.mxu0 0.0
        %913 = vmatpush1.msra.mxu0 %v877
        %914 = vmatprep.subr.mxu0 0.0
        %915 = vmatpush1.msra.mxu0 %v878
        %916 = vmatprep.subr.mxu0 0.0
        %917 = vmatpush1.msra.mxu0 %v879
        %918 = vmatprep.subr.mxu0 0.0
        %919 = vmatpush1.msra.mxu0 %v880
        %920 = vmatprep.subr.mxu0 0.0
        %921 = vmatpush1.msra.mxu0 0.0
        %922 = vmatprep.subr.mxu0 0.0
        %923 = vmatpush1.msra.mxu0 0.0
        %924 = vmatprep.subr.mxu0 0.0
        %925 = vmatpush1.msra.mxu0 0.0
        %926 = vmatprep.subr.mxu0 0.0
        %927 = vmatpush1.msra.mxu0 0.0
        %928 = vmatprep.subr.mxu0 0.0
        %929 = vmatpush1.msra.mxu0 0.0
        %930 = vmatprep.subr.mxu0 0.0
        %931 = vmatpush1.msra.mxu0 0.0
        %932 = vmatprep.subr.mxu0 0.0
        %933 = vmatpush1.msra.mxu0 0.0
        %934 = vmatprep.subr.mxu0 0.0
        %935 = vmatpush1.msra.mxu0 0.0
        %936 = vmatprep.subr.mxu0 0.0
        %937 = vmatpush1.msra.mxu0 0.0
        %938 = vmatprep.subr.mxu0 0.0
        %939 = vmatpush1.msra.mxu0 0.0
        %940 = vmatprep.subr.mxu0 0.0
        %941 = vmatpush1.msra.mxu0 0.0
        %942 = vmatprep.subr.mxu0 0.0
        %943 = vmatpush1.msra.mxu0 0.0
        %944 = vmatprep.subr.mxu0 0.0
        %945 = vmatpush1.msra.mxu0 0.0
        %946 = vmatprep.subr.mxu0 0.0
        %947 = vmatpush1.msra.mxu0 0.0
        %948 = vmatprep.subr.mxu0 0.0
        %949 = vmatpush1.msra.mxu0 0.0
        %950 = vmatprep.subr.mxu0 0.0
        %951 = vmatpush1.msra.mxu0 0.0
        %952 = vmatprep.mubr.f32.mxu0 0.0
        %953 = vmatmul.mubr.f32.gmra.mrb[0].mxu0 %v707
        %v954 = vpop.f32.mrb[0].mxu0
        %v955 = vadd.f32 %v886, %v954
        %v956 = vpop.f32.mrb[0].mxu0
        %957 = vmatprep.mubr.f32.mxu0 0.0
        %958 = vmatmul.mubr.f32.gmra.mrb[0].mxu0 %v712
        %v959 = vpop.f32.mrb[0].mxu0
        %v960 = vadd.f32 %v886, %v959
        %v961 = vpop.f32.mrb[0].mxu0
        %962 = vmatprep.mubr.f32.mxu0 0.0
        %963 = vmatmul.mubr.f32.gmra.mrb[0].mxu0 %v717
        %v964 = vpop.f32.mrb[0].mxu0
        %v965 = vadd.f32 %v886, %v964
        %v966 = vpop.f32.mrb[0].mxu0
        %967 = vmatprep.mubr.f32.mxu0 0.0
        %968 = vmatmul.mubr.f32.gmra.mrb[0].mxu0 %v722
        %v969 = vpop.f32.mrb[0].mxu0
        %v970 = vadd.f32 %v886, %v969
        %v971 = vpop.f32.mrb[0].mxu0
        %972 = vmatprep.mubr.f32.mxu0 0.0
        %973 = vmatmul.mubr.f32.gmra.mrb[0].mxu0 %v727
        %v974 = vpop.f32.mrb[0].mxu0
        %v975 = vadd.f32 %v886, %v974
        %v976 = vpop.f32.mrb[0].mxu0
        %977 = vmatprep.mubr.f32.mxu0 0.0
        %978 = vmatmul.mubr.f32.gmra.mrb[0].mxu0 %v732
        %v979 = vpop.f32.mrb[0].mxu0
        %v980 = vadd.f32 %v886, %v979
        %v981 = vpop.f32.mrb[0].mxu0
        %982 = vmatprep.mubr.f32.mxu0 0.0
        %983 = vmatmul.mubr.f32.gmra.mrb[0].mxu0 %v737
        %v984 = vpop.f32.mrb[0].mxu0
        %v985 = vadd.f32 %v886, %v984
        %v986 = vpop.f32.mrb[0].mxu0
        %987 = vmatprep.mubr.f32.mxu0 0.0
        %988 = vmatmul.mubr.f32.gmra.mrb[0].mxu0 %v742
        %v989 = vpop.f32.mrb[0].mxu0
        %v990 = vadd.f32 %v886, %v989
        %v991 = vpop.f32.mrb[0].mxu0
        %992 = vmatprep.mubr.f32.mxu0 0.0
        %993 = vmatmul.mubr.f32.gmra.mrb[0].mxu0 %v747
        %v994 = vpop.f32.mrb[0].mxu0
        %v995 = vadd.f32 %v886, %v994
        %v996 = vpop.f32.mrb[0].mxu0
        %997 = vmatprep.mubr.f32.mxu0 0.0
        %998 = vmatmul.mubr.f32.gmra.mrb[0].mxu0 %v752
        %v999 = vpop.f32.mrb[0].mxu0
        %v1000 = vadd.f32 %v886, %v999
        %v1001 = vpop.f32.mrb[0].mxu0
        %1002 = vmatprep.mubr.f32.mxu0 0.0
        %1003 = vmatmul.mubr.f32.gmra.mrb[0].mxu0 %v757
        %v1004 = vpop.f32.mrb[0].mxu0
        %v1005 = vadd.f32 %v886, %v1004
        %v1006 = vpop.f32.mrb[0].mxu0
        %1007 = vmatprep.mubr.f32.mxu0 0.0
        %1008 = vmatmul.mubr.f32.gmra.mrb[0].mxu0 %v762
        %v1009 = vpop.f32.mrb[0].mxu0
        %v1010 = vadd.f32 %v886, %v1009
        %v1011 = vpop.f32.mrb[0].mxu0
        %1012 = vmatprep.mubr.f32.mxu0 0.0
        %1013 = vmatmul.mubr.f32.gmra.mrb[0].mxu0 %v767
        %v1014 = vpop.f32.mrb[0].mxu0
        %v1015 = vadd.f32 %v886, %v1014
        %v1016 = vpop.f32.mrb[0].mxu0
        %1017 = vmatprep.mubr.f32.mxu0 0.0
        %1018 = vmatmul.mubr.f32.gmra.mrb[0].mxu0 %v772
        %v1019 = vpop.f32.mrb[0].mxu0
        %v1020 = vadd.f32 %v886, %v1019
        %v1021 = vpop.f32.mrb[0].mxu0
        %1022 = vmatprep.mubr.f32.mxu0 0.0
        %1023 = vmatmul.mubr.f32.gmra.mrb[0].mxu0 %v777
        %v1024 = vpop.f32.mrb[0].mxu0
        %v1025 = vadd.f32 %v886, %v1024
        %v1026 = vpop.f32.mrb[0].mxu0
        %1027 = vmatprep.mubr.f32.mxu0 0.0
        %1028 = vmatmul.mubr.f32.gmra.mrb[0].mxu0 %v782
        %v1029 = vpop.f32.mrb[0].mxu0
        %v1030 = vadd.f32 %v886, %v1029
        %v1031 = vpop.f32.mrb[0].mxu0
        %1032 = vmatprep.mubr.f32.mxu0 0.0
        %1033 = vmatmul.mubr.f32.gmra.mrb[0].mxu0 %v787
        %v1034 = vpop.f32.mrb[0].mxu0
        %v1035 = vadd.f32 %v886, %v1034
        %v1036 = vpop.f32.mrb[0].mxu0
        %1037 = vmatprep.mubr.f32.mxu0 0.0
        %1038 = vmatmul.mubr.f32.gmra.mrb[0].mxu0 %v792
        %v1039 = vpop.f32.mrb[0].mxu0
        %v1040 = vadd.f32 %v886, %v1039
        %v1041 = vpop.f32.mrb[0].mxu0
        %1042 = vmatprep.mubr.f32.mxu0 0.0
        %1043 = vmatmul.mubr.f32.gmra.mrb[0].mxu0 %v797
        %v1044 = vpop.f32.mrb[0].mxu0
        %v1045 = vadd.f32 %v886, %v1044
        %v1046 = vpop.f32.mrb[0].mxu0
        %1047 = vmatprep.mubr.f32.mxu0 0.0
        %1048 = vmatmul.mubr.f32.gmra.mrb[0].mxu0 %v802
        %v1049 = vpop.f32.mrb[0].mxu0
        %v1050 = vadd.f32 %v886, %v1049
        %v1051 = vpop.f32.mrb[0].mxu0
        %1052 = vmatprep.mubr.f32.mxu0 0.0
        %1053 = vmatmul.mubr.f32.gmra.mrb[0].mxu0 %v807
        %v1054 = vpop.f32.mrb[0].mxu0
        %v1055 = vadd.f32 %v886, %v1054
        %v1056 = vpop.f32.mrb[0].mxu0
        %1057 = vmatprep.mubr.f32.mxu0 0.0
        %1058 = vmatmul.mubr.f32.gmra.mrb[0].mxu0 %v812
        %v1059 = vpop.f32.mrb[0].mxu0
        %v1060 = vadd.f32 %v886, %v1059
        %v1061 = vpop.f32.mrb[0].mxu0
        %1062 = vmatprep.mubr.f32.mxu0 0.0
        %1063 = vmatmul.mubr.f32.gmra.mrb[0].mxu0 %v817
        %v1064 = vpop.f32.mrb[0].mxu0
        %v1065 = vadd.f32 %v886, %v1064
        %v1066 = vpop.f32.mrb[0].mxu0
        %1067 = vmatprep.mubr.f32.mxu0 0.0
        %1068 = vmatmul.mubr.f32.gmra.mrb[0].mxu0 %v822
        %v1069 = vpop.f32.mrb[0].mxu0
        %v1070 = vadd.f32 %v886, %v1069
        %v1071 = vpop.f32.mrb[0].mxu0
        %1072 = vmatprep.mubr.f32.mxu0 0.0
        %1073 = vmatmul.mubr.f32.gmra.mrb[0].mxu0 %v827
        %v1074 = vpop.f32.mrb[0].mxu0
        %v1075 = vadd.f32 %v886, %v1074
        %v1076 = vpop.f32.mrb[0].mxu0
        %1077 = vmatprep.mubr.f32.mxu0 0.0
        %1078 = vmatmul.mubr.f32.gmra.mrb[0].mxu0 %v832
        %v1079 = vpop.f32.mrb[0].mxu0
        %v1080 = vadd.f32 %v886, %v1079
        %v1081 = vpop.f32.mrb[0].mxu0
        %1082 = vmatprep.mubr.f32.mxu0 0.0
        %1083 = vmatmul.mubr.f32.gmra.mrb[0].mxu0 %v837
        %v1084 = vpop.f32.mrb[0].mxu0
        %v1085 = vadd.f32 %v886, %v1084
        %v1086 = vpop.f32.mrb[0].mxu0
        %1087 = vmatprep.mubr.f32.mxu0 0.0
        %1088 = vmatmul.mubr.f32.gmra.mrb[0].mxu0 %v842
        %v1089 = vpop.f32.mrb[0].mxu0
        %v1090 = vadd.f32 %v886, %v1089
        %v1091 = vpop.f32.mrb[0].mxu0
        %1092 = vmatprep.mubr.f32.mxu0 0.0
        %1093 = vmatmul.mubr.f32.gmra.mrb[0].mxu0 %v847
        %v1094 = vpop.f32.mrb[0].mxu0
        %v1095 = vadd.f32 %v886, %v1094
        %v1096 = vpop.f32.mrb[0].mxu0
        %1097 = vmatprep.mubr.f32.mxu0 0.0
        %1098 = vmatmul.mubr.f32.gmra.mrb[0].mxu0 %v852
        %v1099 = vpop.f32.mrb[0].mxu0
        %v1100 = vadd.f32 %v886, %v1099
        %v1101 = vpop.f32.mrb[0].mxu0
        %1102 = vmatprep.mubr.f32.mxu0 0.0
        %1103 = vmatmul.mubr.f32.gmra.mrb[0].mxu0 %v857
        %v1104 = vpop.f32.mrb[0].mxu0
        %v1105 = vadd.f32 %v886, %v1104
        %v1106 = vpop.f32.mrb[0].mxu0
        %1107 = vmatprep.mubr.f32.mxu0 0.0
        %1108 = vmatmul.mubr.f32.gmra.mrb[0].mxu0 %v862
        %v1109 = vpop.f32.mrb[0].mxu0
        %v1110 = vadd.f32 %v886, %v1109
        %v1111 = vpop.f32.mrb[0].mxu0
        %1112 = vdwg.mxu0
        %v1113 = vadd.f32 %v955, %v560
        %v1114 = vadd.f32 %v960, %v561
        %v1115 = vadd.f32 %v965, %v562
        %v1116 = vadd.f32 %v970, %v563
        %v1117 = vadd.f32 %v975, %v564
        %v1118 = vadd.f32 %v980, %v565
        %v1119 = vadd.f32 %v985, %v566
        %v1120 = vadd.f32 %v990, %v567
        %v1121 = vadd.f32 %v995, %v568
        %v1122 = vadd.f32 %v1000, %v569
        %v1123 = vadd.f32 %v1005, %v570
        %v1124 = vadd.f32 %v1010, %v571
        %v1125 = vadd.f32 %v1015, %v572
        %v1126 = vadd.f32 %v1020, %v573
        %v1127 = vadd.f32 %v1025, %v574
        %v1128 = vadd.f32 %v1030, %v575
        %v1129 = vadd.f32 %v1035, %v576
        %v1130 = vadd.f32 %v1040, %v577
        %v1131 = vadd.f32 %v1045, %v578
        %v1132 = vadd.f32 %v1050, %v579
        %v1133 = vadd.f32 %v1055, %v580
        %v1134 = vadd.f32 %v1060, %v581
        %v1135 = vadd.f32 %v1065, %v582
        %v1136 = vadd.f32 %v1070, %v583
        %v1137 = vadd.f32 %v1075, %v584
        %v1138 = vadd.f32 %v1080, %v585
        %v1139 = vadd.f32 %v1085, %v586
        %v1140 = vadd.f32 %v1090, %v587
        %v1141 = vadd.f32 %v1095, %v588
        %v1142 = vadd.f32 %v1100, %v589
        %v1143 = vadd.f32 %v1105, %v590
        %v1144 = vadd.f32 %v1110, %v591
        %1145 = vadd.xlane.f32.xlu0 %v1113
        %v1146 = vpop.xlane.xlu0 %1145
        %1147 = vadd.xlane.f32.xlu0 %v1114
        %v1148 = vpop.xlane.xlu0 %1147
        %1149 = vadd.xlane.f32.xlu0 %v1115
        %v1150 = vpop.xlane.xlu0 %1149
        %1151 = vadd.xlane.f32.xlu0 %v1116
        %v1152 = vpop.xlane.xlu0 %1151
        %1153 = vadd.xlane.f32.xlu0 %v1117
        %v1154 = vpop.xlane.xlu0 %1153
        %1155 = vadd.xlane.f32.xlu0 %v1118
        %v1156 = vpop.xlane.xlu0 %1155
        %1157 = vadd.xlane.f32.xlu0 %v1119
        %v1158 = vpop.xlane.xlu0 %1157
        %1159 = vadd.xlane.f32.xlu0 %v1120
        %v1160 = vpop.xlane.xlu0 %1159
        %1161 = vadd.xlane.f32.xlu0 %v1121
        %v1162 = vpop.xlane.xlu0 %1161
        %1163 = vadd.xlane.f32.xlu0 %v1122
        %v1164 = vpop.xlane.xlu0 %1163
        %1165 = vadd.xlane.f32.xlu0 %v1123
        %v1166 = vpop.xlane.xlu0 %1165
        %1167 = vadd.xlane.f32.xlu0 %v1124
        %v1168 = vpop.xlane.xlu0 %1167
        %1169 = vadd.xlane.f32.xlu0 %v1125
        %v1170 = vpop.xlane.xlu0 %1169
        %1171 = vadd.xlane.f32.xlu0 %v1126
        %v1172 = vpop.xlane.xlu0 %1171
        %1173 = vadd.xlane.f32.xlu0 %v1127
        %v1174 = vpop.xlane.xlu0 %1173
        %1175 = vadd.xlane.f32.xlu0 %v1128
        %v1176 = vpop.xlane.xlu0 %1175
        %1177 = vadd.xlane.f32.xlu0 %v1129
        %v1178 = vpop.xlane.xlu0 %1177
        %1179 = vadd.xlane.f32.xlu0 %v1130
        %v1180 = vpop.xlane.xlu0 %1179
        %1181 = vadd.xlane.f32.xlu0 %v1131
        %v1182 = vpop.xlane.xlu0 %1181
        %1183 = vadd.xlane.f32.xlu0 %v1132
        %v1184 = vpop.xlane.xlu0 %1183
        %1185 = vadd.xlane.f32.xlu0 %v1133
        %v1186 = vpop.xlane.xlu0 %1185
        %1187 = vadd.xlane.f32.xlu0 %v1134
        %v1188 = vpop.xlane.xlu0 %1187
        %1189 = vadd.xlane.f32.xlu0 %v1135
        %v1190 = vpop.xlane.xlu0 %1189
        %1191 = vadd.xlane.f32.xlu0 %v1136
        %v1192 = vpop.xlane.xlu0 %1191
        %1193 = vadd.xlane.f32.xlu0 %v1137
        %v1194 = vpop.xlane.xlu0 %1193
        %1195 = vadd.xlane.f32.xlu0 %v1138
        %v1196 = vpop.xlane.xlu0 %1195
        %1197 = vadd.xlane.f32.xlu0 %v1139
        %v1198 = vpop.xlane.xlu0 %1197
        %1199 = vadd.xlane.f32.xlu0 %v1140
        %v1200 = vpop.xlane.xlu0 %1199
        %1201 = vadd.xlane.f32.xlu0 %v1141
        %v1202 = vpop.xlane.xlu0 %1201
        %1203 = vadd.xlane.f32.xlu0 %v1142
        %v1204 = vpop.xlane.xlu0 %1203
        %1205 = vadd.xlane.f32.xlu0 %v1143
        %v1206 = vpop.xlane.xlu0 %1205
        %1207 = vadd.xlane.f32.xlu0 %v1144
        %v1208 = vpop.xlane.xlu0 %1207
        %v1209 = vmul.f32 %v1113, %v1113
        %v1210 = vmul.f32 %v1114, %v1114
        %v1211 = vmul.f32 %v1115, %v1115
        %v1212 = vmul.f32 %v1116, %v1116
        %v1213 = vmul.f32 %v1117, %v1117
        %v1214 = vmul.f32 %v1118, %v1118
        %v1215 = vmul.f32 %v1119, %v1119
        %v1216 = vmul.f32 %v1120, %v1120
        %v1217 = vmul.f32 %v1121, %v1121
        %v1218 = vmul.f32 %v1122, %v1122
        %v1219 = vmul.f32 %v1123, %v1123
        %v1220 = vmul.f32 %v1124, %v1124
        %v1221 = vmul.f32 %v1125, %v1125
        %v1222 = vmul.f32 %v1126, %v1126
        %v1223 = vmul.f32 %v1127, %v1127
        %v1224 = vmul.f32 %v1128, %v1128
        %v1225 = vmul.f32 %v1129, %v1129
        %v1226 = vmul.f32 %v1130, %v1130
        %v1227 = vmul.f32 %v1131, %v1131
        %v1228 = vmul.f32 %v1132, %v1132
        %v1229 = vmul.f32 %v1133, %v1133
        %v1230 = vmul.f32 %v1134, %v1134
        %v1231 = vmul.f32 %v1135, %v1135
        %v1232 = vmul.f32 %v1136, %v1136
        %v1233 = vmul.f32 %v1137, %v1137
        %v1234 = vmul.f32 %v1138, %v1138
        %v1235 = vmul.f32 %v1139, %v1139
        %v1236 = vmul.f32 %v1140, %v1140
        %v1237 = vmul.f32 %v1141, %v1141
        %v1238 = vmul.f32 %v1142, %v1142
        %v1239 = vmul.f32 %v1143, %v1143
        %v1240 = vmul.f32 %v1144, %v1144
        %1241 = vadd.xlane.f32.xlu0 %v1209
        %v1242 = vpop.xlane.xlu0 %1241
        %1243 = vadd.xlane.f32.xlu0 %v1210
        %v1244 = vpop.xlane.xlu0 %1243
        %1245 = vadd.xlane.f32.xlu0 %v1211
        %v1246 = vpop.xlane.xlu0 %1245
        %1247 = vadd.xlane.f32.xlu0 %v1212
        %v1248 = vpop.xlane.xlu0 %1247
        %1249 = vadd.xlane.f32.xlu0 %v1213
        %v1250 = vpop.xlane.xlu0 %1249
        %1251 = vadd.xlane.f32.xlu0 %v1214
        %v1252 = vpop.xlane.xlu0 %1251
        %1253 = vadd.xlane.f32.xlu0 %v1215
        %v1254 = vpop.xlane.xlu0 %1253
        %1255 = vadd.xlane.f32.xlu0 %v1216
        %v1256 = vpop.xlane.xlu0 %1255
        %1257 = vadd.xlane.f32.xlu0 %v1217
        %v1258 = vpop.xlane.xlu0 %1257
        %1259 = vadd.xlane.f32.xlu0 %v1218
        %v1260 = vpop.xlane.xlu0 %1259
        %1261 = vadd.xlane.f32.xlu0 %v1219
        %v1262 = vpop.xlane.xlu0 %1261
        %1263 = vadd.xlane.f32.xlu0 %v1220
        %v1264 = vpop.xlane.xlu0 %1263
        %1265 = vadd.xlane.f32.xlu0 %v1221
        %v1266 = vpop.xlane.xlu0 %1265
        %1267 = vadd.xlane.f32.xlu0 %v1222
        %v1268 = vpop.xlane.xlu0 %1267
        %1269 = vadd.xlane.f32.xlu0 %v1223
        %v1270 = vpop.xlane.xlu0 %1269
        %1271 = vadd.xlane.f32.xlu0 %v1224
        %v1272 = vpop.xlane.xlu0 %1271
        %1273 = vadd.xlane.f32.xlu0 %v1225
        %v1274 = vpop.xlane.xlu0 %1273
        %1275 = vadd.xlane.f32.xlu0 %v1226
        %v1276 = vpop.xlane.xlu0 %1275
        %1277 = vadd.xlane.f32.xlu0 %v1227
        %v1278 = vpop.xlane.xlu0 %1277
        %1279 = vadd.xlane.f32.xlu0 %v1228
        %v1280 = vpop.xlane.xlu0 %1279
        %1281 = vadd.xlane.f32.xlu0 %v1229
        %v1282 = vpop.xlane.xlu0 %1281
        %1283 = vadd.xlane.f32.xlu0 %v1230
        %v1284 = vpop.xlane.xlu0 %1283
        %1285 = vadd.xlane.f32.xlu0 %v1231
        %v1286 = vpop.xlane.xlu0 %1285
        %1287 = vadd.xlane.f32.xlu0 %v1232
        %v1288 = vpop.xlane.xlu0 %1287
        %1289 = vadd.xlane.f32.xlu0 %v1233
        %v1290 = vpop.xlane.xlu0 %1289
        %1291 = vadd.xlane.f32.xlu0 %v1234
        %v1292 = vpop.xlane.xlu0 %1291
        %1293 = vadd.xlane.f32.xlu0 %v1235
        %v1294 = vpop.xlane.xlu0 %1293
        %1295 = vadd.xlane.f32.xlu0 %v1236
        %v1296 = vpop.xlane.xlu0 %1295
        %1297 = vadd.xlane.f32.xlu0 %v1237
        %v1298 = vpop.xlane.xlu0 %1297
        %1299 = vadd.xlane.f32.xlu0 %v1238
        %v1300 = vpop.xlane.xlu0 %1299
        %1301 = vadd.xlane.f32.xlu0 %v1239
        %v1302 = vpop.xlane.xlu0 %1301
        %1303 = vadd.xlane.f32.xlu0 %v1240
        %v1304 = vpop.xlane.xlu0 %1303
        %v1305 = vmul.f32 %v1146, 0.0078125
        %v1306 = vmul.f32 %v1148, 0.0078125
        %v1307 = vmul.f32 %v1150, 0.0078125
        %v1308 = vmul.f32 %v1152, 0.0078125
        %v1309 = vmul.f32 %v1154, 0.0078125
        %v1310 = vmul.f32 %v1156, 0.0078125
        %v1311 = vmul.f32 %v1158, 0.0078125
        %v1312 = vmul.f32 %v1160, 0.0078125
        %v1313 = vmul.f32 %v1162, 0.0078125
        %v1314 = vmul.f32 %v1164, 0.0078125
        %v1315 = vmul.f32 %v1166, 0.0078125
        %v1316 = vmul.f32 %v1168, 0.0078125
        %v1317 = vmul.f32 %v1170, 0.0078125
        %v1318 = vmul.f32 %v1172, 0.0078125
        %v1319 = vmul.f32 %v1174, 0.0078125
        %v1320 = vmul.f32 %v1176, 0.0078125
        %v1321 = vmul.f32 %v1178, 0.0078125
        %v1322 = vmul.f32 %v1180, 0.0078125
        %v1323 = vmul.f32 %v1182, 0.0078125
        %v1324 = vmul.f32 %v1184, 0.0078125
        %v1325 = vmul.f32 %v1186, 0.0078125
        %v1326 = vmul.f32 %v1188, 0.0078125
        %v1327 = vmul.f32 %v1190, 0.0078125
        %v1328 = vmul.f32 %v1192, 0.0078125
        %v1329 = vmul.f32 %v1194, 0.0078125
        %v1330 = vmul.f32 %v1196, 0.0078125
        %v1331 = vmul.f32 %v1198, 0.0078125
        %v1332 = vmul.f32 %v1200, 0.0078125
        %v1333 = vmul.f32 %v1202, 0.0078125
        %v1334 = vmul.f32 %v1204, 0.0078125
        %v1335 = vmul.f32 %v1206, 0.0078125
        %v1336 = vmul.f32 %v1208, 0.0078125
        %v1337 = vmul.f32 %v1242, 0.0078125
        %v1338 = vmul.f32 %v1244, 0.0078125
        %v1339 = vmul.f32 %v1246, 0.0078125
        %v1340 = vmul.f32 %v1248, 0.0078125
        %v1341 = vmul.f32 %v1250, 0.0078125
        %v1342 = vmul.f32 %v1252, 0.0078125
        %v1343 = vmul.f32 %v1254, 0.0078125
        %v1344 = vmul.f32 %v1256, 0.0078125
        %v1345 = vmul.f32 %v1258, 0.0078125
        %v1346 = vmul.f32 %v1260, 0.0078125
        %v1347 = vmul.f32 %v1262, 0.0078125
        %v1348 = vmul.f32 %v1264, 0.0078125
        %v1349 = vmul.f32 %v1266, 0.0078125
        %v1350 = vmul.f32 %v1268, 0.0078125
        %v1351 = vmul.f32 %v1270, 0.0078125
        %v1352 = vmul.f32 %v1272, 0.0078125
        %v1353 = vmul.f32 %v1274, 0.0078125
        %v1354 = vmul.f32 %v1276, 0.0078125
        %v1355 = vmul.f32 %v1278, 0.0078125
        %v1356 = vmul.f32 %v1280, 0.0078125
        %v1357 = vmul.f32 %v1282, 0.0078125
        %v1358 = vmul.f32 %v1284, 0.0078125
        %v1359 = vmul.f32 %v1286, 0.0078125
        %v1360 = vmul.f32 %v1288, 0.0078125
        %v1361 = vmul.f32 %v1290, 0.0078125
        %v1362 = vmul.f32 %v1292, 0.0078125
        %v1363 = vmul.f32 %v1294, 0.0078125
        %v1364 = vmul.f32 %v1296, 0.0078125
        %v1365 = vmul.f32 %v1298, 0.0078125
        %v1366 = vmul.f32 %v1300, 0.0078125
        %v1367 = vmul.f32 %v1302, 0.0078125
        %v1368 = vmul.f32 %v1304, 0.0078125
        %v1369 = vmul.f32 %v1305, %v1305
        %v1370 = vmul.f32 %v1306, %v1306
        %v1371 = vmul.f32 %v1307, %v1307
        %v1372 = vmul.f32 %v1308, %v1308
        %v1373 = vmul.f32 %v1309, %v1309
        %v1374 = vmul.f32 %v1310, %v1310
        %v1375 = vmul.f32 %v1311, %v1311
        %v1376 = vmul.f32 %v1312, %v1312
        %v1377 = vmul.f32 %v1313, %v1313
        %v1378 = vmul.f32 %v1314, %v1314
        %v1379 = vmul.f32 %v1315, %v1315
        %v1380 = vmul.f32 %v1316, %v1316
        %v1381 = vmul.f32 %v1317, %v1317
        %v1382 = vmul.f32 %v1318, %v1318
        %v1383 = vmul.f32 %v1319, %v1319
        %v1384 = vmul.f32 %v1320, %v1320
        %v1385 = vmul.f32 %v1321, %v1321
        %v1386 = vmul.f32 %v1322, %v1322
        %v1387 = vmul.f32 %v1323, %v1323
        %v1388 = vmul.f32 %v1324, %v1324
        %v1389 = vmul.f32 %v1325, %v1325
        %v1390 = vmul.f32 %v1326, %v1326
        %v1391 = vmul.f32 %v1327, %v1327
        %v1392 = vmul.f32 %v1328, %v1328
        %v1393 = vmul.f32 %v1329, %v1329
        %v1394 = vmul.f32 %v1330, %v1330
        %v1395 = vmul.f32 %v1331, %v1331
        %v1396 = vmul.f32 %v1332, %v1332
        %v1397 = vmul.f32 %v1333, %v1333
        %v1398 = vmul.f32 %v1334, %v1334
        %v1399 = vmul.f32 %v1335, %v1335
        %v1400 = vmul.f32 %v1336, %v1336
        %v1401 = vsub.f32 %v1337, %v1369
        %v1402 = vsub.f32 %v1338, %v1370
        %v1403 = vsub.f32 %v1339, %v1371
        %v1404 = vsub.f32 %v1340, %v1372
        %v1405 = vsub.f32 %v1341, %v1373
        %v1406 = vsub.f32 %v1342, %v1374
        %v1407 = vsub.f32 %v1343, %v1375
        %v1408 = vsub.f32 %v1344, %v1376
        %v1409 = vsub.f32 %v1345, %v1377
        %v1410 = vsub.f32 %v1346, %v1378
        %v1411 = vsub.f32 %v1347, %v1379
        %v1412 = vsub.f32 %v1348, %v1380
        %v1413 = vsub.f32 %v1349, %v1381
        %v1414 = vsub.f32 %v1350, %v1382
        %v1415 = vsub.f32 %v1351, %v1383
        %v1416 = vsub.f32 %v1352, %v1384
        %v1417 = vsub.f32 %v1353, %v1385
        %v1418 = vsub.f32 %v1354, %v1386
        %v1419 = vsub.f32 %v1355, %v1387
        %v1420 = vsub.f32 %v1356, %v1388
        %v1421 = vsub.f32 %v1357, %v1389
        %v1422 = vsub.f32 %v1358, %v1390
        %v1423 = vsub.f32 %v1359, %v1391
        %v1424 = vsub.f32 %v1360, %v1392
        %v1425 = vsub.f32 %v1361, %v1393
        %v1426 = vsub.f32 %v1362, %v1394
        %v1427 = vsub.f32 %v1363, %v1395
        %v1428 = vsub.f32 %v1364, %v1396
        %v1429 = vsub.f32 %v1365, %v1397
        %v1430 = vsub.f32 %v1366, %v1398
        %v1431 = vsub.f32 %v1367, %v1399
        %v1432 = vsub.f32 %v1368, %v1400
        %v1433 = vsub.f32 %v1113, %v1305
        %v1434 = vsub.f32 %v1114, %v1306
        %v1435 = vsub.f32 %v1115, %v1307
        %v1436 = vsub.f32 %v1116, %v1308
        %v1437 = vsub.f32 %v1117, %v1309
        %v1438 = vsub.f32 %v1118, %v1310
        %v1439 = vsub.f32 %v1119, %v1311
        %v1440 = vsub.f32 %v1120, %v1312
        %v1441 = vsub.f32 %v1121, %v1313
        %v1442 = vsub.f32 %v1122, %v1314
        %v1443 = vsub.f32 %v1123, %v1315
        %v1444 = vsub.f32 %v1124, %v1316
        %v1445 = vsub.f32 %v1125, %v1317
        %v1446 = vsub.f32 %v1126, %v1318
        %v1447 = vsub.f32 %v1127, %v1319
        %v1448 = vsub.f32 %v1128, %v1320
        %v1449 = vsub.f32 %v1129, %v1321
        %v1450 = vsub.f32 %v1130, %v1322
        %v1451 = vsub.f32 %v1131, %v1323
        %v1452 = vsub.f32 %v1132, %v1324
        %v1453 = vsub.f32 %v1133, %v1325
        %v1454 = vsub.f32 %v1134, %v1326
        %v1455 = vsub.f32 %v1135, %v1327
        %v1456 = vsub.f32 %v1136, %v1328
        %v1457 = vsub.f32 %v1137, %v1329
        %v1458 = vsub.f32 %v1138, %v1330
        %v1459 = vsub.f32 %v1139, %v1331
        %v1460 = vsub.f32 %v1140, %v1332
        %v1461 = vsub.f32 %v1141, %v1333
        %v1462 = vsub.f32 %v1142, %v1334
        %v1463 = vsub.f32 %v1143, %v1335
        %v1464 = vsub.f32 %v1144, %v1336
        %v1465 = vadd.f32 %v1401, 1e-05
        %v1466 = vadd.f32 %v1402, 1e-05
        %v1467 = vadd.f32 %v1403, 1e-05
        %v1468 = vadd.f32 %v1404, 1e-05
        %v1469 = vadd.f32 %v1405, 1e-05
        %v1470 = vadd.f32 %v1406, 1e-05
        %v1471 = vadd.f32 %v1407, 1e-05
        %v1472 = vadd.f32 %v1408, 1e-05
        %v1473 = vadd.f32 %v1409, 1e-05
        %v1474 = vadd.f32 %v1410, 1e-05
        %v1475 = vadd.f32 %v1411, 1e-05
        %v1476 = vadd.f32 %v1412, 1e-05
        %v1477 = vadd.f32 %v1413, 1e-05
        %v1478 = vadd.f32 %v1414, 1e-05
        %v1479 = vadd.f32 %v1415, 1e-05
        %v1480 = vadd.f32 %v1416, 1e-05
        %v1481 = vadd.f32 %v1417, 1e-05
        %v1482 = vadd.f32 %v1418, 1e-05
        %v1483 = vadd.f32 %v1419, 1e-05
        %v1484 = vadd.f32 %v1420, 1e-05
        %v1485 = vadd.f32 %v1421, 1e-05
        %v1486 = vadd.f32 %v1422, 1e-05
        %v1487 = vadd.f32 %v1423, 1e-05
        %v1488 = vadd.f32 %v1424, 1e-05
        %v1489 = vadd.f32 %v1425, 1e-05
        %v1490 = vadd.f32 %v1426, 1e-05
        %v1491 = vadd.f32 %v1427, 1e-05
        %v1492 = vadd.f32 %v1428, 1e-05
        %v1493 = vadd.f32 %v1429, 1e-05
        %v1494 = vadd.f32 %v1430, 1e-05
        %v1495 = vadd.f32 %v1431, 1e-05
        %v1496 = vadd.f32 %v1432, 1e-05
        %v1497 = vrsqrt.pop %v1465
        %v1498 = vrsqrt.pop %v1466
        %v1499 = vrsqrt.pop %v1467
        %v1500 = vrsqrt.pop %v1468
        %v1501 = vrsqrt.pop %v1469
        %v1502 = vrsqrt.pop %v1470
        %v1503 = vrsqrt.pop %v1471
        %v1504 = vrsqrt.pop %v1472
        %v1505 = vrsqrt.pop %v1473
        %v1506 = vrsqrt.pop %v1474
        %v1507 = vrsqrt.pop %v1475
        %v1508 = vrsqrt.pop %v1476
        %v1509 = vrsqrt.pop %v1477
        %v1510 = vrsqrt.pop %v1478
        %v1511 = vrsqrt.pop %v1479
        %v1512 = vrsqrt.pop %v1480
        %v1513 = vrsqrt.pop %v1481
        %v1514 = vrsqrt.pop %v1482
        %v1515 = vrsqrt.pop %v1483
        %v1516 = vrsqrt.pop %v1484
        %v1517 = vrsqrt.pop %v1485
        %v1518 = vrsqrt.pop %v1486
        %v1519 = vrsqrt.pop %v1487
        %v1520 = vrsqrt.pop %v1488
        %v1521 = vrsqrt.pop %v1489
        %v1522 = vrsqrt.pop %v1490
        %v1523 = vrsqrt.pop %v1491
        %v1524 = vrsqrt.pop %v1492
        %v1525 = vrsqrt.pop %v1493
        %v1526 = vrsqrt.pop %v1494
        %v1527 = vrsqrt.pop %v1495
        %v1528 = vrsqrt.pop %v1496
        %v1529 = vmul.f32 %v1433, %v1497
        %v1530 = vmul.f32 %v1434, %v1498
        %v1531 = vmul.f32 %v1435, %v1499
        %v1532 = vmul.f32 %v1436, %v1500
        %v1533 = vmul.f32 %v1437, %v1501
        %v1534 = vmul.f32 %v1438, %v1502
        %v1535 = vmul.f32 %v1439, %v1503
        %v1536 = vmul.f32 %v1440, %v1504
        %v1537 = vmul.f32 %v1441, %v1505
        %v1538 = vmul.f32 %v1442, %v1506
        %v1539 = vmul.f32 %v1443, %v1507
        %v1540 = vmul.f32 %v1444, %v1508
        %v1541 = vmul.f32 %v1445, %v1509
        %v1542 = vmul.f32 %v1446, %v1510
        %v1543 = vmul.f32 %v1447, %v1511
        %v1544 = vmul.f32 %v1448, %v1512
        %v1545 = vmul.f32 %v1449, %v1513
        %v1546 = vmul.f32 %v1450, %v1514
        %v1547 = vmul.f32 %v1451, %v1515
        %v1548 = vmul.f32 %v1452, %v1516
        %v1549 = vmul.f32 %v1453, %v1517
        %v1550 = vmul.f32 %v1454, %v1518
        %v1551 = vmul.f32 %v1455, %v1519
        %v1552 = vmul.f32 %v1456, %v1520
        %v1553 = vmul.f32 %v1457, %v1521
        %v1554 = vmul.f32 %v1458, %v1522
        %v1555 = vmul.f32 %v1459, %v1523
        %v1556 = vmul.f32 %v1460, %v1524
        %v1557 = vmul.f32 %v1461, %v1525
        %v1558 = vmul.f32 %v1462, %v1526
        %v1559 = vmul.f32 %v1463, %v1527
        %v1560 = vmul.f32 %v1464, %v1528
        %v1561 = vld [vmem:[%s5] sm:$0x1]
        %v1563 = vlaneseq
        %v1564 = vshrl.u32 %v1563, 7
        %v1565 = vsub.s32 0, %v1564
        %v1566 = vrot.slane %v1561, %v1565
        %v1568 = vmul.f32 %v1529, %v1566
        %v1569 = vmul.f32 %v1530, %v1566
        %v1570 = vmul.f32 %v1531, %v1566
        %v1571 = vmul.f32 %v1532, %v1566
        %v1572 = vmul.f32 %v1533, %v1566
        %v1573 = vmul.f32 %v1534, %v1566
        %v1574 = vmul.f32 %v1535, %v1566
        %v1575 = vmul.f32 %v1536, %v1566
        %v1576 = vmul.f32 %v1537, %v1566
        %v1577 = vmul.f32 %v1538, %v1566
        %v1578 = vmul.f32 %v1539, %v1566
        %v1579 = vmul.f32 %v1540, %v1566
        %v1580 = vmul.f32 %v1541, %v1566
        %v1581 = vmul.f32 %v1542, %v1566
        %v1582 = vmul.f32 %v1543, %v1566
        %v1583 = vmul.f32 %v1544, %v1566
        %v1584 = vmul.f32 %v1545, %v1566
        %v1585 = vmul.f32 %v1546, %v1566
        %v1586 = vmul.f32 %v1547, %v1566
        %v1587 = vmul.f32 %v1548, %v1566
        %v1588 = vmul.f32 %v1549, %v1566
        %v1589 = vmul.f32 %v1550, %v1566
        %v1590 = vmul.f32 %v1551, %v1566
        %v1591 = vmul.f32 %v1552, %v1566
        %v1592 = vmul.f32 %v1553, %v1566
        %v1593 = vmul.f32 %v1554, %v1566
        %v1594 = vmul.f32 %v1555, %v1566
        %v1595 = vmul.f32 %v1556, %v1566
        %v1596 = vmul.f32 %v1557, %v1566
        %v1597 = vmul.f32 %v1558, %v1566
        %v1598 = vmul.f32 %v1559, %v1566
        %v1599 = vmul.f32 %v1560, %v1566
        %v1600 = vld [vmem:[%s6] sm:$0x1]
        %v1602 = vlaneseq
        %v1603 = vshrl.u32 %v1602, 7
        %v1604 = vsub.s32 0, %v1603
        %v1605 = vrot.slane %v1600, %v1604
        %v1607 = vadd.f32 %v1568, %v1605
        %v1608 = vadd.f32 %v1569, %v1605
        %v1609 = vadd.f32 %v1570, %v1605
        %v1610 = vadd.f32 %v1571, %v1605
        %v1611 = vadd.f32 %v1572, %v1605
        %v1612 = vadd.f32 %v1573, %v1605
        %v1613 = vadd.f32 %v1574, %v1605
        %v1614 = vadd.f32 %v1575, %v1605
        %v1615 = vadd.f32 %v1576, %v1605
        %v1616 = vadd.f32 %v1577, %v1605
        %v1617 = vadd.f32 %v1578, %v1605
        %v1618 = vadd.f32 %v1579, %v1605
        %v1619 = vadd.f32 %v1580, %v1605
        %v1620 = vadd.f32 %v1581, %v1605
        %v1621 = vadd.f32 %v1582, %v1605
        %v1622 = vadd.f32 %v1583, %v1605
        %v1623 = vadd.f32 %v1584, %v1605
        %v1624 = vadd.f32 %v1585, %v1605
        %v1625 = vadd.f32 %v1586, %v1605
        %v1626 = vadd.f32 %v1587, %v1605
        %v1627 = vadd.f32 %v1588, %v1605
        %v1628 = vadd.f32 %v1589, %v1605
        %v1629 = vadd.f32 %v1590, %v1605
        %v1630 = vadd.f32 %v1591, %v1605
        %v1631 = vadd.f32 %v1592, %v1605
        %v1632 = vadd.f32 %v1593, %v1605
        %v1633 = vadd.f32 %v1594, %v1605
        %v1634 = vadd.f32 %v1595, %v1605
        %v1635 = vadd.f32 %v1596, %v1605
        %v1636 = vadd.f32 %v1597, %v1605
        %v1637 = vadd.f32 %v1598, %v1605
        %v1638 = vadd.f32 %v1599, %v1605
        %v1639 = vld [vmem:[#allocation10] sm:$0xff]
        %v1640 = vld [vmem:[#allocation10 + $0x8] sm:$0xff]
        %v1641 = vld [vmem:[#allocation10 + $0x10] sm:$0xff]
        %v1642 = vld [vmem:[#allocation10 + $0x18] sm:$0xff]
        %v1643 = vld [vmem:[#allocation10 + $0x20] sm:$0xff]
        %v1644 = vld [vmem:[#allocation10 + $0x28] sm:$0xff]
        %v1645 = vld [vmem:[#allocation10 + $0x30] sm:$0xff]
        %v1646 = vld [vmem:[#allocation10 + $0x38] sm:$0xff]
        %v1647 = vld [vmem:[#allocation10 + $0x40] sm:$0xff]
        %v1648 = vld [vmem:[#allocation10 + $0x48] sm:$0xff]
        %v1649 = vld [vmem:[#allocation10 + $0x50] sm:$0xff]
        %v1650 = vld [vmem:[#allocation10 + $0x58] sm:$0xff]
        %v1651 = vld [vmem:[#allocation10 + $0x60] sm:$0xff]
        %v1652 = vld [vmem:[#allocation10 + $0x68] sm:$0xff]
        %v1653 = vld [vmem:[#allocation10 + $0x70] sm:$0xff]
        %v1654 = vld [vmem:[#allocation10 + $0x78] sm:$0xff]
        %v1655 = vld [vmem:[#allocation10 + $0x80] sm:$0xff]
        %v1656 = vld [vmem:[#allocation10 + $0x88] sm:$0xff]
        %v1657 = vld [vmem:[#allocation10 + $0x90] sm:$0xff]
        %v1658 = vld [vmem:[#allocation10 + $0x98] sm:$0xff]
        %v1659 = vld [vmem:[#allocation10 + $0xa0] sm:$0xff]
        %v1660 = vld [vmem:[#allocation10 + $0xa8] sm:$0xff]
        %v1661 = vld [vmem:[#allocation10 + $0xb0] sm:$0xff]
        %v1662 = vld [vmem:[#allocation10 + $0xb8] sm:$0xff]
        %v1663 = vld [vmem:[#allocation10 + $0xc0] sm:$0xff]
        %v1664 = vld [vmem:[#allocation10 + $0xc8] sm:$0xff]
        %v1665 = vld [vmem:[#allocation10 + $0xd0] sm:$0xff]
        %v1666 = vld [vmem:[#allocation10 + $0xd8] sm:$0xff]
        %v1667 = vld [vmem:[#allocation10 + $0xe0] sm:$0xff]
        %v1668 = vld [vmem:[#allocation10 + $0xe8] sm:$0xff]
        %v1669 = vld [vmem:[#allocation10 + $0xf0] sm:$0xff]
        %v1670 = vld [vmem:[#allocation10 + $0xf8] sm:$0xff]
        %v1671 = vld [vmem:[#allocation10 + $0x100] sm:$0xff]
        %v1672 = vld [vmem:[#allocation10 + $0x108] sm:$0xff]
        %v1673 = vld [vmem:[#allocation10 + $0x110] sm:$0xff]
        %v1674 = vld [vmem:[#allocation10 + $0x118] sm:$0xff]
        %v1675 = vld [vmem:[#allocation10 + $0x120] sm:$0xff]
        %v1676 = vld [vmem:[#allocation10 + $0x128] sm:$0xff]
        %v1677 = vld [vmem:[#allocation10 + $0x130] sm:$0xff]
        %v1678 = vld [vmem:[#allocation10 + $0x138] sm:$0xff]
        %v1679 = vld [vmem:[#allocation10 + $0x140] sm:$0xff]
        %v1680 = vld [vmem:[#allocation10 + $0x148] sm:$0xff]
        %v1681 = vld [vmem:[#allocation10 + $0x150] sm:$0xff]
        %v1682 = vld [vmem:[#allocation10 + $0x158] sm:$0xff]
        %v1683 = vld [vmem:[#allocation10 + $0x160] sm:$0xff]
        %v1684 = vld [vmem:[#allocation10 + $0x168] sm:$0xff]
        %v1685 = vld [vmem:[#allocation10 + $0x170] sm:$0xff]
        %v1686 = vld [vmem:[#allocation10 + $0x178] sm:$0xff]
        %v1687 = vld [vmem:[#allocation10 + $0x180] sm:$0xff]
        %v1688 = vld [vmem:[#allocation10 + $0x188] sm:$0xff]
        %v1689 = vld [vmem:[#allocation10 + $0x190] sm:$0xff]
        %v1690 = vld [vmem:[#allocation10 + $0x198] sm:$0xff]
        %v1691 = vld [vmem:[#allocation10 + $0x1a0] sm:$0xff]
        %v1692 = vld [vmem:[#allocation10 + $0x1a8] sm:$0xff]
        %v1693 = vld [vmem:[#allocation10 + $0x1b0] sm:$0xff]
        %v1694 = vld [vmem:[#allocation10 + $0x1b8] sm:$0xff]
        %v1695 = vld [vmem:[#allocation10 + $0x1c0] sm:$0xff]
        %v1696 = vld [vmem:[#allocation10 + $0x1c8] sm:$0xff]
        %v1697 = vld [vmem:[#allocation10 + $0x1d0] sm:$0xff]
        %v1698 = vld [vmem:[#allocation10 + $0x1d8] sm:$0xff]
        %v1699 = vld [vmem:[#allocation10 + $0x1e0] sm:$0xff]
        %v1700 = vld [vmem:[#allocation10 + $0x1e8] sm:$0xff]
        %v1701 = vld [vmem:[#allocation10 + $0x1f0] sm:$0xff]
        %v1702 = vld [vmem:[#allocation10 + $0x1f8] sm:$0xff]
        %v1703 = vld [vmem:[%s8] sm:$0xf]
        %v1705 = vlaneseq
        %v1706 = vshrl.u32 %v1705, 7
        %v1707 = vsub.s32 0, %v1706
        %v1708 = vrot.slane %v1703, %v1707
        %v1709 = vlaneseq
        %v1710 = vshrl.u32 %v1709, 7
        %v1711 = vsub.s32 1, %v1710
        %v1712 = vrot.slane %v1703, %v1711
        %v1713 = vlaneseq
        %v1714 = vshrl.u32 %v1713, 7
        %v1715 = vsub.s32 2, %v1714
        %v1716 = vrot.slane %v1703, %v1715
        %v1717 = vlaneseq
        %v1718 = vshrl.u32 %v1717, 7
        %v1719 = vsub.s32 3, %v1718
        %v1720 = vrot.slane %v1703, %v1719
        %1725 = vmatprep.subr.mxu0 %v1640
        %1726 = vmatpush1.msra.mxu0 %v1639
        %1727 = vmatprep.subr.mxu0 %v1644
        %1728 = vmatpush1.msra.mxu0 %v1643
        %1729 = vmatprep.subr.mxu0 %v1648
        %1730 = vmatpush1.msra.mxu0 %v1647
        %1731 = vmatprep.subr.mxu0 %v1652
        %1732 = vmatpush1.msra.mxu0 %v1651
        %1733 = vmatprep.subr.mxu0 %v1656
        %1734 = vmatpush1.msra.mxu0 %v1655
        %1735 = vmatprep.subr.mxu0 %v1660
        %1736 = vmatpush1.msra.mxu0 %v1659
        %1737 = vmatprep.subr.mxu0 %v1664
        %1738 = vmatpush1.msra.mxu0 %v1663
        %1739 = vmatprep.subr.mxu0 %v1668
        %1740 = vmatpush1.msra.mxu0 %v1667
        %1741 = vmatprep.subr.mxu0 %v1672
        %1742 = vmatpush1.msra.mxu0 %v1671
        %1743 = vmatprep.subr.mxu0 %v1676
        %1744 = vmatpush1.msra.mxu0 %v1675
        %1745 = vmatprep.subr.mxu0 %v1680
        %1746 = vmatpush1.msra.mxu0 %v1679
        %1747 = vmatprep.subr.mxu0 %v1684
        %1748 = vmatpush1.msra.mxu0 %v1683
        %1749 = vmatprep.subr.mxu0 %v1688
        %1750 = vmatpush1.msra.mxu0 %v1687
        %1751 = vmatprep.subr.mxu0 %v1692
        %1752 = vmatpush1.msra.mxu0 %v1691
        %1753 = vmatprep.subr.mxu0 %v1696
        %1754 = vmatpush1.msra.mxu0 %v1695
        %1755 = vmatprep.subr.mxu0 %v1700
        %1756 = vmatpush1.msra.mxu0 %v1699
        %1757 = vmatprep.subr.mxu0 0.0
        %1758 = vmatpush1.msra.mxu0 0.0
        %1759 = vmatprep.subr.mxu0 0.0
        %1760 = vmatpush1.msra.mxu0 0.0
        %1761 = vmatprep.subr.mxu0 0.0
        %1762 = vmatpush1.msra.mxu0 0.0
        %1763 = vmatprep.subr.mxu0 0.0
        %1764 = vmatpush1.msra.mxu0 0.0
        %1765 = vmatprep.subr.mxu0 0.0
        %1766 = vmatpush1.msra.mxu0 0.0
        %1767 = vmatprep.subr.mxu0 0.0
        %1768 = vmatpush1.msra.mxu0 0.0
        %1769 = vmatprep.subr.mxu0 0.0
        %1770 = vmatpush1.msra.mxu0 0.0
        %1771 = vmatprep.subr.mxu0 0.0
        %1772 = vmatpush1.msra.mxu0 0.0
        %1773 = vmatprep.subr.mxu0 0.0
        %1774 = vmatpush1.msra.mxu0 0.0
        %1775 = vmatprep.subr.mxu0 0.0
        %1776 = vmatpush1.msra.mxu0 0.0
        %1777 = vmatprep.subr.mxu0 0.0
        %1778 = vmatpush1.msra.mxu0 0.0
        %1779 = vmatprep.subr.mxu0 0.0
        %1780 = vmatpush1.msra.mxu0 0.0
        %1781 = vmatprep.subr.mxu0 0.0
        %1782 = vmatpush1.msra.mxu0 0.0
        %1783 = vmatprep.subr.mxu0 0.0
        %1784 = vmatpush1.msra.mxu0 0.0
        %1785 = vmatprep.subr.mxu0 0.0
        %1786 = vmatpush1.msra.mxu0 0.0
        %1787 = vmatprep.subr.mxu0 0.0
        %1788 = vmatpush1.msra.mxu0 0.0
        %1789 = vmatprep.mubr.f32.mxu0 0.0
        %1790 = vmatmul.mubr.f32.gmra.mrb[0].mxu0 %v1607
        %v1791 = vpop.f32.mrb[0].mxu0
        %v1792 = vadd.f32 %v1708, %v1791
        %v1793 = vpop.f32.mrb[0].mxu0
        %v1794 = vadd.f32 %v1712, %v1793
        %1795 = vmatprep.mubr.f32.mxu0 0.0
        %1796 = vmatmul.mubr.f32.gmra.mrb[0].mxu0 %v1608
        %v1797 = vpop.f32.mrb[0].mxu0
        %v1798 = vadd.f32 %v1708, %v1797
        %v1799 = vpop.f32.mrb[0].mxu0
        %v1800 = vadd.f32 %v1712, %v1799
        %1801 = vmatprep.mubr.f32.mxu0 0.0
        %1802 = vmatmul.mubr.f32.gmra.mrb[0].mxu0 %v1609
        %v1803 = vpop.f32.mrb[0].mxu0
        %v1804 = vadd.f32 %v1708, %v1803
        %v1805 = vpop.f32.mrb[0].mxu0
        %v1806 = vadd.f32 %v1712, %v1805
        %1807 = vmatprep.mubr.f32.mxu0 0.0
        %1808 = vmatmul.mubr.f32.gmra.mrb[0].mxu0 %v1610
        %v1809 = vpop.f32.mrb[0].mxu0
        %v1810 = vadd.f32 %v1708, %v1809
        %v1811 = vpop.f32.mrb[0].mxu0
        %v1812 = vadd.f32 %v1712, %v1811
        %1813 = vmatprep.mubr.f32.mxu0 0.0
        %1814 = vmatmul.mubr.f32.gmra.mrb[0].mxu0 %v1611
        %v1815 = vpop.f32.mrb[0].mxu0
        %v1816 = vadd.f32 %v1708, %v1815
        %v1817 = vpop.f32.mrb[0].mxu0
        %v1818 = vadd.f32 %v1712, %v1817
        %1819 = vmatprep.mubr.f32.mxu0 0.0
        %1820 = vmatmul.mubr.f32.gmra.mrb[0].mxu0 %v1612
        %v1821 = vpop.f32.mrb[0].mxu0
        %v1822 = vadd.f32 %v1708, %v1821
        %v1823 = vpop.f32.mrb[0].mxu0
        %v1824 = vadd.f32 %v1712, %v1823
        %1825 = vmatprep.mubr.f32.mxu0 0.0
        %1826 = vmatmul.mubr.f32.gmra.mrb[0].mxu0 %v1613
        %v1827 = vpop.f32.mrb[0].mxu0
        %v1828 = vadd.f32 %v1708, %v1827
        %v1829 = vpop.f32.mrb[0].mxu0
        %v1830 = vadd.f32 %v1712, %v1829
        %1831 = vmatprep.mubr.f32.mxu0 0.0
        %1832 = vmatmul.mubr.f32.gmra.mrb[0].mxu0 %v1614
        %v1833 = vpop.f32.mrb[0].mxu0
        %v1834 = vadd.f32 %v1708, %v1833
        %v1835 = vpop.f32.mrb[0].mxu0
        %v1836 = vadd.f32 %v1712, %v1835
        %1837 = vmatprep.mubr.f32.mxu0 0.0
        %1838 = vmatmul.mubr.f32.gmra.mrb[0].mxu0 %v1615
        %v1839 = vpop.f32.mrb[0].mxu0
        %v1840 = vadd.f32 %v1708, %v1839
        %v1841 = vpop.f32.mrb[0].mxu0
        %v1842 = vadd.f32 %v1712, %v1841
        %1843 = vmatprep.mubr.f32.mxu0 0.0
        %1844 = vmatmul.mubr.f32.gmra.mrb[0].mxu0 %v1616
        %v1845 = vpop.f32.mrb[0].mxu0
        %v1846 = vadd.f32 %v1708, %v1845
        %v1847 = vpop.f32.mrb[0].mxu0
        %v1848 = vadd.f32 %v1712, %v1847
        %1849 = vmatprep.mubr.f32.mxu0 0.0
        %1850 = vmatmul.mubr.f32.gmra.mrb[0].mxu0 %v1617
        %v1851 = vpop.f32.mrb[0].mxu0
        %v1852 = vadd.f32 %v1708, %v1851
        %v1853 = vpop.f32.mrb[0].mxu0
        %v1854 = vadd.f32 %v1712, %v1853
        %1855 = vmatprep.mubr.f32.mxu0 0.0
        %1856 = vmatmul.mubr.f32.gmra.mrb[0].mxu0 %v1618
        %v1857 = vpop.f32.mrb[0].mxu0
        %v1858 = vadd.f32 %v1708, %v1857
        %v1859 = vpop.f32.mrb[0].mxu0
        %v1860 = vadd.f32 %v1712, %v1859
        %1861 = vmatprep.mubr.f32.mxu0 0.0
        %1862 = vmatmul.mubr.f32.gmra.mrb[0].mxu0 %v1619
        %v1863 = vpop.f32.mrb[0].mxu0
        %v1864 = vadd.f32 %v1708, %v1863
        %v1865 = vpop.f32.mrb[0].mxu0
        %v1866 = vadd.f32 %v1712, %v1865
        %1867 = vmatprep.mubr.f32.mxu0 0.0
        %1868 = vmatmul.mubr.f32.gmra.mrb[0].mxu0 %v1620
        %v1869 = vpop.f32.mrb[0].mxu0
        %v1870 = vadd.f32 %v1708, %v1869
        %v1871 = vpop.f32.mrb[0].mxu0
        %v1872 = vadd.f32 %v1712, %v1871
        %1873 = vmatprep.mubr.f32.mxu0 0.0
        %1874 = vmatmul.mubr.f32.gmra.mrb[0].mxu0 %v1621
        %v1875 = vpop.f32.mrb[0].mxu0
        %v1876 = vadd.f32 %v1708, %v1875
        %v1877 = vpop.f32.mrb[0].mxu0
        %v1878 = vadd.f32 %v1712, %v1877
        %1879 = vmatprep.mubr.f32.mxu0 0.0
        %1880 = vmatmul.mubr.f32.gmra.mrb[0].mxu0 %v1622
        %v1881 = vpop.f32.mrb[0].mxu0
        %v1882 = vadd.f32 %v1708, %v1881
        %v1883 = vpop.f32.mrb[0].mxu0
        %v1884 = vadd.f32 %v1712, %v1883
        %1885 = vmatprep.mubr.f32.mxu0 0.0
        %1886 = vmatmul.mubr.f32.gmra.mrb[0].mxu0 %v1623
        %v1887 = vpop.f32.mrb[0].mxu0
        %v1888 = vadd.f32 %v1708, %v1887
        %v1889 = vpop.f32.mrb[0].mxu0
        %v1890 = vadd.f32 %v1712, %v1889
        %1891 = vmatprep.mubr.f32.mxu0 0.0
        %1892 = vmatmul.mubr.f32.gmra.mrb[0].mxu0 %v1624
        %v1893 = vpop.f32.mrb[0].mxu0
        %v1894 = vadd.f32 %v1708, %v1893
        %v1895 = vpop.f32.mrb[0].mxu0
        %v1896 = vadd.f32 %v1712, %v1895
        %1897 = vmatprep.mubr.f32.mxu0 0.0
        %1898 = vmatmul.mubr.f32.gmra.mrb[0].mxu0 %v1625
        %v1899 = vpop.f32.mrb[0].mxu0
        %v1900 = vadd.f32 %v1708, %v1899
        %v1901 = vpop.f32.mrb[0].mxu0
        %v1902 = vadd.f32 %v1712, %v1901
        %1903 = vmatprep.mubr.f32.mxu0 0.0
        %1904 = vmatmul.mubr.f32.gmra.mrb[0].mxu0 %v1626
        %v1905 = vpop.f32.mrb[0].mxu0
        %v1906 = vadd.f32 %v1708, %v1905
        %v1907 = vpop.f32.mrb[0].mxu0
        %v1908 = vadd.f32 %v1712, %v1907
        %1909 = vmatprep.mubr.f32.mxu0 0.0
        %1910 = vmatmul.mubr.f32.gmra.mrb[0].mxu0 %v1627
        %v1911 = vpop.f32.mrb[0].mxu0
        %v1912 = vadd.f32 %v1708, %v1911
        %v1913 = vpop.f32.mrb[0].mxu0
        %v1914 = vadd.f32 %v1712, %v1913
        %1915 = vmatprep.mubr.f32.mxu0 0.0
        %1916 = vmatmul.mubr.f32.gmra.mrb[0].mxu0 %v1628
        %v1917 = vpop.f32.mrb[0].mxu0
        %v1918 = vadd.f32 %v1708, %v1917
        %v1919 = vpop.f32.mrb[0].mxu0
        %v1920 = vadd.f32 %v1712, %v1919
        %1921 = vmatprep.mubr.f32.mxu0 0.0
        %1922 = vmatmul.mubr.f32.gmra.mrb[0].mxu0 %v1629
        %v1923 = vpop.f32.mrb[0].mxu0
        %v1924 = vadd.f32 %v1708, %v1923
        %v1925 = vpop.f32.mrb[0].mxu0
        %v1926 = vadd.f32 %v1712, %v1925
        %1927 = vmatprep.mubr.f32.mxu0 0.0
        %1928 = vmatmul.mubr.f32.gmra.mrb[0].mxu0 %v1630
        %v1929 = vpop.f32.mrb[0].mxu0
        %v1930 = vadd.f32 %v1708, %v1929
        %v1931 = vpop.f32.mrb[0].mxu0
        %v1932 = vadd.f32 %v1712, %v1931
        %1933 = vmatprep.mubr.f32.mxu0 0.0
        %1934 = vmatmul.mubr.f32.gmra.mrb[0].mxu0 %v1631
        %v1935 = vpop.f32.mrb[0].mxu0
        %v1936 = vadd.f32 %v1708, %v1935
        %v1937 = vpop.f32.mrb[0].mxu0
        %v1938 = vadd.f32 %v1712, %v1937
        %1939 = vmatprep.mubr.f32.mxu0 0.0
        %1940 = vmatmul.mubr.f32.gmra.mrb[0].mxu0 %v1632
        %v1941 = vpop.f32.mrb[0].mxu0
        %v1942 = vadd.f32 %v1708, %v1941
        %v1943 = vpop.f32.mrb[0].mxu0
        %v1944 = vadd.f32 %v1712, %v1943
        %1945 = vmatprep.mubr.f32.mxu0 0.0
        %1946 = vmatmul.mubr.f32.gmra.mrb[0].mxu0 %v1633
        %v1947 = vpop.f32.mrb[0].mxu0
        %v1948 = vadd.f32 %v1708, %v1947
        %v1949 = vpop.f32.mrb[0].mxu0
        %v1950 = vadd.f32 %v1712, %v1949
        %1951 = vmatprep.mubr.f32.mxu0 0.0
        %1952 = vmatmul.mubr.f32.gmra.mrb[0].mxu0 %v1634
        %v1953 = vpop.f32.mrb[0].mxu0
        %v1954 = vadd.f32 %v1708, %v1953
        %v1955 = vpop.f32.mrb[0].mxu0
        %v1956 = vadd.f32 %v1712, %v1955
        %1957 = vmatprep.mubr.f32.mxu0 0.0
        %1958 = vmatmul.mubr.f32.gmra.mrb[0].mxu0 %v1635
        %v1959 = vpop.f32.mrb[0].mxu0
        %v1960 = vadd.f32 %v1708, %v1959
        %v1961 = vpop.f32.mrb[0].mxu0
        %v1962 = vadd.f32 %v1712, %v1961
        %1963 = vmatprep.mubr.f32.mxu0 0.0
        %1964 = vmatmul.mubr.f32.gmra.mrb[0].mxu0 %v1636
        %v1965 = vpop.f32.mrb[0].mxu0
        %v1966 = vadd.f32 %v1708, %v1965
        %v1967 = vpop.f32.mrb[0].mxu0
        %v1968 = vadd.f32 %v1712, %v1967
        %1969 = vmatprep.mubr.f32.mxu0 0.0
        %1970 = vmatmul.mubr.f32.gmra.mrb[0].mxu0 %v1637
        %v1971 = vpop.f32.mrb[0].mxu0
        %v1972 = vadd.f32 %v1708, %v1971
        %v1973 = vpop.f32.mrb[0].mxu0
        %v1974 = vadd.f32 %v1712, %v1973
        %1975 = vmatprep.mubr.f32.mxu0 0.0
        %1976 = vmatmul.mubr.f32.gmra.mrb[0].mxu0 %v1638
        %v1977 = vpop.f32.mrb[0].mxu0
        %v1978 = vadd.f32 %v1708, %v1977
        %v1979 = vpop.f32.mrb[0].mxu0
        %v1980 = vadd.f32 %v1712, %v1979
        %1981 = vdwg.mxu0
        %1982 = vmatprep.subr.mxu0 %v1642
        %1983 = vmatpush1.msra.mxu0 %v1641
        %1984 = vmatprep.subr.mxu0 %v1646
        %1985 = vmatpush1.msra.mxu0 %v1645
        %1986 = vmatprep.subr.mxu0 %v1650
        %1987 = vmatpush1.msra.mxu0 %v1649
        %1988 = vmatprep.subr.mxu0 %v1654
        %1989 = vmatpush1.msra.mxu0 %v1653
        %1990 = vmatprep.subr.mxu0 %v1658
        %1991 = vmatpush1.msra.mxu0 %v1657
        %1992 = vmatprep.subr.mxu0 %v1662
        %1993 = vmatpush1.msra.mxu0 %v1661
        %1994 = vmatprep.subr.mxu0 %v1666
        %1995 = vmatpush1.msra.mxu0 %v1665
        %1996 = vmatprep.subr.mxu0 %v1670
        %1997 = vmatpush1.msra.mxu0 %v1669
        %1998 = vmatprep.subr.mxu0 %v1674
        %1999 = vmatpush1.msra.mxu0 %v1673
        %2000 = vmatprep.subr.mxu0 %v1678
        %2001 = vmatpush1.msra.mxu0 %v1677
        %2002 = vmatprep.subr.mxu0 %v1682
        %2003 = vmatpush1.msra.mxu0 %v1681
        %2004 = vmatprep.subr.mxu0 %v1686
        %2005 = vmatpush1.msra.mxu0 %v1685
        %2006 = vmatprep.subr.mxu0 %v1690
        %2007 = vmatpush1.msra.mxu0 %v1689
        %2008 = vmatprep.subr.mxu0 %v1694
        %2009 = vmatpush1.msra.mxu0 %v1693
        %2010 = vmatprep.subr.mxu0 %v1698
        %2011 = vmatpush1.msra.mxu0 %v1697
        %2012 = vmatprep.subr.mxu0 %v1702
        %2013 = vmatpush1.msra.mxu0 %v1701
        %2014 = vmatprep.subr.mxu0 0.0
        %2015 = vmatpush1.msra.mxu0 0.0
        %2016 = vmatprep.subr.mxu0 0.0
        %2017 = vmatpush1.msra.mxu0 0.0
        %2018 = vmatprep.subr.mxu0 0.0
        %2019 = vmatpush1.msra.mxu0 0.0
        %2020 = vmatprep.subr.mxu0 0.0
        %2021 = vmatpush1.msra.mxu0 0.0
        %2022 = vmatprep.subr.mxu0 0.0
        %2023 = vmatpush1.msra.mxu0 0.0
        %2024 = vmatprep.subr.mxu0 0.0
        %2025 = vmatpush1.msra.mxu0 0.0
        %2026 = vmatprep.subr.mxu0 0.0
        %2027 = vmatpush1.msra.mxu0 0.0
        %2028 = vmatprep.subr.mxu0 0.0
        %2029 = vmatpush1.msra.mxu0 0.0
        %2030 = vmatprep.subr.mxu0 0.0
        %2031 = vmatpush1.msra.mxu0 0.0
        %2032 = vmatprep.subr.mxu0 0.0
        %2033 = vmatpush1.msra.mxu0 0.0
        %2034 = vmatprep.subr.mxu0 0.0
        %2035 = vmatpush1.msra.mxu0 0.0
        %2036 = vmatprep.subr.mxu0 0.0
        %2037 = vmatpush1.msra.mxu0 0.0
        %2038 = vmatprep.subr.mxu0 0.0
        %2039 = vmatpush1.msra.mxu0 0.0
        %2040 = vmatprep.subr.mxu0 0.0
        %2041 = vmatpush1.msra.mxu0 0.0
        %2042 = vmatprep.subr.mxu0 0.0
        %2043 = vmatpush1.msra.mxu0 0.0
        %2044 = vmatprep.subr.mxu0 0.0
        %2045 = vmatpush1.msra.mxu0 0.0
        %2046 = vmatprep.mubr.f32.mxu0 0.0
        %2047 = vmatmul.mubr.f32.gmra.mrb[0].mxu0 %v1607
        %v2048 = vpop.f32.mrb[0].mxu0
        %v2049 = vadd.f32 %v1716, %v2048
        %v2050 = vpop.f32.mrb[0].mxu0
        %v2051 = vadd.f32 %v1720, %v2050
        %2052 = vmatprep.mubr.f32.mxu0 0.0
        %2053 = vmatmul.mubr.f32.gmra.mrb[0].mxu0 %v1608
        %v2054 = vpop.f32.mrb[0].mxu0
        %v2055 = vadd.f32 %v1716, %v2054
        %v2056 = vpop.f32.mrb[0].mxu0
        %v2057 = vadd.f32 %v1720, %v2056
        %2058 = vmatprep.mubr.f32.mxu0 0.0
        %2059 = vmatmul.mubr.f32.gmra.mrb[0].mxu0 %v1609
        %v2060 = vpop.f32.mrb[0].mxu0
        %v2061 = vadd.f32 %v1716, %v2060
        %v2062 = vpop.f32.mrb[0].mxu0
        %v2063 = vadd.f32 %v1720, %v2062
        %2064 = vmatprep.mubr.f32.mxu0 0.0
        %2065 = vmatmul.mubr.f32.gmra.mrb[0].mxu0 %v1610
        %v2066 = vpop.f32.mrb[0].mxu0
        %v2067 = vadd.f32 %v1716, %v2066
        %v2068 = vpop.f32.mrb[0].mxu0
        %v2069 = vadd.f32 %v1720, %v2068
        %2070 = vmatprep.mubr.f32.mxu0 0.0
        %2071 = vmatmul.mubr.f32.gmra.mrb[0].mxu0 %v1611
        %v2072 = vpop.f32.mrb[0].mxu0
        %v2073 = vadd.f32 %v1716, %v2072
        %v2074 = vpop.f32.mrb[0].mxu0
        %v2075 = vadd.f32 %v1720, %v2074
        %2076 = vmatprep.mubr.f32.mxu0 0.0
        %2077 = vmatmul.mubr.f32.gmra.mrb[0].mxu0 %v1612
        %v2078 = vpop.f32.mrb[0].mxu0
        %v2079 = vadd.f32 %v1716, %v2078
        %v2080 = vpop.f32.mrb[0].mxu0
        %v2081 = vadd.f32 %v1720, %v2080
        %2082 = vmatprep.mubr.f32.mxu0 0.0
        %2083 = vmatmul.mubr.f32.gmra.mrb[0].mxu0 %v1613
        %v2084 = vpop.f32.mrb[0].mxu0
        %v2085 = vadd.f32 %v1716, %v2084
        %v2086 = vpop.f32.mrb[0].mxu0
        %v2087 = vadd.f32 %v1720, %v2086
        %2088 = vmatprep.mubr.f32.mxu0 0.0
        %2089 = vmatmul.mubr.f32.gmra.mrb[0].mxu0 %v1614
        %v2090 = vpop.f32.mrb[0].mxu0
        %v2091 = vadd.f32 %v1716, %v2090
        %v2092 = vpop.f32.mrb[0].mxu0
        %v2093 = vadd.f32 %v1720, %v2092
        %2094 = vmatprep.mubr.f32.mxu0 0.0
        %2095 = vmatmul.mubr.f32.gmra.mrb[0].mxu0 %v1615
        %v2096 = vpop.f32.mrb[0].mxu0
        %v2097 = vadd.f32 %v1716, %v2096
        %v2098 = vpop.f32.mrb[0].mxu0
        %v2099 = vadd.f32 %v1720, %v2098
        %2100 = vmatprep.mubr.f32.mxu0 0.0
        %2101 = vmatmul.mubr.f32.gmra.mrb[0].mxu0 %v1616
        %v2102 = vpop.f32.mrb[0].mxu0
        %v2103 = vadd.f32 %v1716, %v2102
        %v2104 = vpop.f32.mrb[0].mxu0
        %v2105 = vadd.f32 %v1720, %v2104
        %2106 = vmatprep.mubr.f32.mxu0 0.0
        %2107 = vmatmul.mubr.f32.gmra.mrb[0].mxu0 %v1617
        %v2108 = vpop.f32.mrb[0].mxu0
        %v2109 = vadd.f32 %v1716, %v2108
        %v2110 = vpop.f32.mrb[0].mxu0
        %v2111 = vadd.f32 %v1720, %v2110
        %2112 = vmatprep.mubr.f32.mxu0 0.0
        %2113 = vmatmul.mubr.f32.gmra.mrb[0].mxu0 %v1618
        %v2114 = vpop.f32.mrb[0].mxu0
        %v2115 = vadd.f32 %v1716, %v2114
        %v2116 = vpop.f32.mrb[0].mxu0
        %v2117 = vadd.f32 %v1720, %v2116
        %2118 = vmatprep.mubr.f32.mxu0 0.0
        %2119 = vmatmul.mubr.f32.gmra.mrb[0].mxu0 %v1619
        %v2120 = vpop.f32.mrb[0].mxu0
        %v2121 = vadd.f32 %v1716, %v2120
        %v2122 = vpop.f32.mrb[0].mxu0
        %v2123 = vadd.f32 %v1720, %v2122
        %2124 = vmatprep.mubr.f32.mxu0 0.0
        %2125 = vmatmul.mubr.f32.gmra.mrb[0].mxu0 %v1620
        %v2126 = vpop.f32.mrb[0].mxu0
        %v2127 = vadd.f32 %v1716, %v2126
        %v2128 = vpop.f32.mrb[0].mxu0
        %v2129 = vadd.f32 %v1720, %v2128
        %2130 = vmatprep.mubr.f32.mxu0 0.0
        %2131 = vmatmul.mubr.f32.gmra.mrb[0].mxu0 %v1621
        %v2132 = vpop.f32.mrb[0].mxu0
        %v2133 = vadd.f32 %v1716, %v2132
        %v2134 = vpop.f32.mrb[0].mxu0
        %v2135 = vadd.f32 %v1720, %v2134
        %2136 = vmatprep.mubr.f32.mxu0 0.0
        %2137 = vmatmul.mubr.f32.gmra.mrb[0].mxu0 %v1622
        %v2138 = vpop.f32.mrb[0].mxu0
        %v2139 = vadd.f32 %v1716, %v2138
        %v2140 = vpop.f32.mrb[0].mxu0
        %v2141 = vadd.f32 %v1720, %v2140
        %2142 = vmatprep.mubr.f32.mxu0 0.0
        %2143 = vmatmul.mubr.f32.gmra.mrb[0].mxu0 %v1623
        %v2144 = vpop.f32.mrb[0].mxu0
        %v2145 = vadd.f32 %v1716, %v2144
        %v2146 = vpop.f32.mrb[0].mxu0
        %v2147 = vadd.f32 %v1720, %v2146
        %2148 = vmatprep.mubr.f32.mxu0 0.0
        %2149 = vmatmul.mubr.f32.gmra.mrb[0].mxu0 %v1624
        %v2150 = vpop.f32.mrb[0].mxu0
        %v2151 = vadd.f32 %v1716, %v2150
        %v2152 = vpop.f32.mrb[0].mxu0
        %v2153 = vadd.f32 %v1720, %v2152
        %2154 = vmatprep.mubr.f32.mxu0 0.0
        %2155 = vmatmul.mubr.f32.gmra.mrb[0].mxu0 %v1625
        %v2156 = vpop.f32.mrb[0].mxu0
        %v2157 = vadd.f32 %v1716, %v2156
        %v2158 = vpop.f32.mrb[0].mxu0
        %v2159 = vadd.f32 %v1720, %v2158
        %2160 = vmatprep.mubr.f32.mxu0 0.0
        %2161 = vmatmul.mubr.f32.gmra.mrb[0].mxu0 %v1626
        %v2162 = vpop.f32.mrb[0].mxu0
        %v2163 = vadd.f32 %v1716, %v2162
        %v2164 = vpop.f32.mrb[0].mxu0
        %v2165 = vadd.f32 %v1720, %v2164
        %2166 = vmatprep.mubr.f32.mxu0 0.0
        %2167 = vmatmul.mubr.f32.gmra.mrb[0].mxu0 %v1627
        %v2168 = vpop.f32.mrb[0].mxu0
        %v2169 = vadd.f32 %v1716, %v2168
        %v2170 = vpop.f32.mrb[0].mxu0
        %v2171 = vadd.f32 %v1720, %v2170
        %2172 = vmatprep.mubr.f32.mxu0 0.0
        %2173 = vmatmul.mubr.f32.gmra.mrb[0].mxu0 %v1628
        %v2174 = vpop.f32.mrb[0].mxu0
        %v2175 = vadd.f32 %v1716, %v2174
        %v2176 = vpop.f32.mrb[0].mxu0
        %v2177 = vadd.f32 %v1720, %v2176
        %2178 = vmatprep.mubr.f32.mxu0 0.0
        %2179 = vmatmul.mubr.f32.gmra.mrb[0].mxu0 %v1629
        %v2180 = vpop.f32.mrb[0].mxu0
        %v2181 = vadd.f32 %v1716, %v2180
        %v2182 = vpop.f32.mrb[0].mxu0
        %v2183 = vadd.f32 %v1720, %v2182
        %2184 = vmatprep.mubr.f32.mxu0 0.0
        %2185 = vmatmul.mubr.f32.gmra.mrb[0].mxu0 %v1630
        %v2186 = vpop.f32.mrb[0].mxu0
        %v2187 = vadd.f32 %v1716, %v2186
        %v2188 = vpop.f32.mrb[0].mxu0
        %v2189 = vadd.f32 %v1720, %v2188
        %2190 = vmatprep.mubr.f32.mxu0 0.0
        %2191 = vmatmul.mubr.f32.gmra.mrb[0].mxu0 %v1631
        %v2192 = vpop.f32.mrb[0].mxu0
        %v2193 = vadd.f32 %v1716, %v2192
        %v2194 = vpop.f32.mrb[0].mxu0
        %v2195 = vadd.f32 %v1720, %v2194
        %2196 = vmatprep.mubr.f32.mxu0 0.0
        %2197 = vmatmul.mubr.f32.gmra.mrb[0].mxu0 %v1632
        %v2198 = vpop.f32.mrb[0].mxu0
        %v2199 = vadd.f32 %v1716, %v2198
        %v2200 = vpop.f32.mrb[0].mxu0
        %v2201 = vadd.f32 %v1720, %v2200
        %2202 = vmatprep.mubr.f32.mxu0 0.0
        %2203 = vmatmul.mubr.f32.gmra.mrb[0].mxu0 %v1633
        %v2204 = vpop.f32.mrb[0].mxu0
        %v2205 = vadd.f32 %v1716, %v2204
        %v2206 = vpop.f32.mrb[0].mxu0
        %v2207 = vadd.f32 %v1720, %v2206
        %2208 = vmatprep.mubr.f32.mxu0 0.0
        %2209 = vmatmul.mubr.f32.gmra.mrb[0].mxu0 %v1634
        %v2210 = vpop.f32.mrb[0].mxu0
        %v2211 = vadd.f32 %v1716, %v2210
        %v2212 = vpop.f32.mrb[0].mxu0
        %v2213 = vadd.f32 %v1720, %v2212
        %2214 = vmatprep.mubr.f32.mxu0 0.0
        %2215 = vmatmul.mubr.f32.gmra.mrb[0].mxu0 %v1635
        %v2216 = vpop.f32.mrb[0].mxu0
        %v2217 = vadd.f32 %v1716, %v2216
        %v2218 = vpop.f32.mrb[0].mxu0
        %v2219 = vadd.f32 %v1720, %v2218
        %2220 = vmatprep.mubr.f32.mxu0 0.0
        %2221 = vmatmul.mubr.f32.gmra.mrb[0].mxu0 %v1636
        %v2222 = vpop.f32.mrb[0].mxu0
        %v2223 = vadd.f32 %v1716, %v2222
        %v2224 = vpop.f32.mrb[0].mxu0
        %v2225 = vadd.f32 %v1720, %v2224
        %2226 = vmatprep.mubr.f32.mxu0 0.0
        %2227 = vmatmul.mubr.f32.gmra.mrb[0].mxu0 %v1637
        %v2228 = vpop.f32.mrb[0].mxu0
        %v2229 = vadd.f32 %v1716, %v2228
        %v2230 = vpop.f32.mrb[0].mxu0
        %v2231 = vadd.f32 %v1720, %v2230
        %2232 = vmatprep.mubr.f32.mxu0 0.0
        %2233 = vmatmul.mubr.f32.gmra.mrb[0].mxu0 %v1638
        %v2234 = vpop.f32.mrb[0].mxu0
        %v2235 = vadd.f32 %v1716, %v2234
        %v2236 = vpop.f32.mrb[0].mxu0
        %v2237 = vadd.f32 %v1720, %v2236
        %2238 = vdwg.mxu0
        %v2239 = vmax.f32 %v1792, 0.0
        %v2240 = vmax.f32 %v1794, 0.0
        %v2241 = vmax.f32 %v2049, 0.0
        %v2242 = vmax.f32 %v2051, 0.0
        %v2243 = vmax.f32 %v1798, 0.0
        %v2244 = vmax.f32 %v1800, 0.0
        %v2245 = vmax.f32 %v2055, 0.0
        %v2246 = vmax.f32 %v2057, 0.0
        %v2247 = vmax.f32 %v1804, 0.0
        %v2248 = vmax.f32 %v1806, 0.0
        %v2249 = vmax.f32 %v2061, 0.0
        %v2250 = vmax.f32 %v2063, 0.0
        %v2251 = vmax.f32 %v1810, 0.0
        %v2252 = vmax.f32 %v1812, 0.0
        %v2253 = vmax.f32 %v2067, 0.0
        %v2254 = vmax.f32 %v2069, 0.0
        %v2255 = vmax.f32 %v1816, 0.0
        %v2256 = vmax.f32 %v1818, 0.0
        %v2257 = vmax.f32 %v2073, 0.0
        %v2258 = vmax.f32 %v2075, 0.0
        %v2259 = vmax.f32 %v1822, 0.0
        %v2260 = vmax.f32 %v1824, 0.0
        %v2261 = vmax.f32 %v2079, 0.0
        %v2262 = vmax.f32 %v2081, 0.0
        %v2263 = vmax.f32 %v1828, 0.0
        %v2264 = vmax.f32 %v1830, 0.0
        %v2265 = vmax.f32 %v2085, 0.0
        %v2266 = vmax.f32 %v2087, 0.0
        %v2267 = vmax.f32 %v1834, 0.0
        %v2268 = vmax.f32 %v1836, 0.0
        %v2269 = vmax.f32 %v2091, 0.0
        %v2270 = vmax.f32 %v2093, 0.0
        %v2271 = vmax.f32 %v1840, 0.0
        %v2272 = vmax.f32 %v1842, 0.0
        %v2273 = vmax.f32 %v2097, 0.0
        %v2274 = vmax.f32 %v2099, 0.0
        %v2275 = vmax.f32 %v1846, 0.0
        %v2276 = vmax.f32 %v1848, 0.0
        %v2277 = vmax.f32 %v2103, 0.0
        %v2278 = vmax.f32 %v2105, 0.0
        %v2279 = vmax.f32 %v1852, 0.0
        %v2280 = vmax.f32 %v1854, 0.0
        %v2281 = vmax.f32 %v2109, 0.0
        %v2282 = vmax.f32 %v2111, 0.0
        %v2283 = vmax.f32 %v1858, 0.0
        %v2284 = vmax.f32 %v1860, 0.0
        %v2285 = vmax.f32 %v2115, 0.0
        %v2286 = vmax.f32 %v2117, 0.0
        %v2287 = vmax.f32 %v1864, 0.0
        %v2288 = vmax.f32 %v1866, 0.0
        %v2289 = vmax.f32 %v2121, 0.0
        %v2290 = vmax.f32 %v2123, 0.0
        %v2291 = vmax.f32 %v1870, 0.0
        %v2292 = vmax.f32 %v1872, 0.0
        %v2293 = vmax.f32 %v2127, 0.0
        %v2294 = vmax.f32 %v2129, 0.0
        %v2295 = vmax.f32 %v1876, 0.0
        %v2296 = vmax.f32 %v1878, 0.0
        %v2297 = vmax.f32 %v2133, 0.0
        %v2298 = vmax.f32 %v2135, 0.0
        %v2299 = vmax.f32 %v1882, 0.0
        %v2300 = vmax.f32 %v1884, 0.0
        %v2301 = vmax.f32 %v2139, 0.0
        %v2302 = vmax.f32 %v2141, 0.0
        %v2303 = vmax.f32 %v1888, 0.0
        %v2304 = vmax.f32 %v1890, 0.0
        %v2305 = vmax.f32 %v2145, 0.0
        %v2306 = vmax.f32 %v2147, 0.0
        %v2307 = vmax.f32 %v1894, 0.0
        %v2308 = vmax.f32 %v1896, 0.0
        %v2309 = vmax.f32 %v2151, 0.0
        %v2310 = vmax.f32 %v2153, 0.0
        %v2311 = vmax.f32 %v1900, 0.0
        %v2312 = vmax.f32 %v1902, 0.0
        %v2313 = vmax.f32 %v2157, 0.0
        %v2314 = vmax.f32 %v2159, 0.0
        %v2315 = vmax.f32 %v1906, 0.0
        %v2316 = vmax.f32 %v1908, 0.0
        %v2317 = vmax.f32 %v2163, 0.0
        %v2318 = vmax.f32 %v2165, 0.0
        %v2319 = vmax.f32 %v1912, 0.0
        %v2320 = vmax.f32 %v1914, 0.0
        %v2321 = vmax.f32 %v2169, 0.0
        %v2322 = vmax.f32 %v2171, 0.0
        %v2323 = vmax.f32 %v1918, 0.0
        %v2324 = vmax.f32 %v1920, 0.0
        %v2325 = vmax.f32 %v2175, 0.0
        %v2326 = vmax.f32 %v2177, 0.0
        %v2327 = vmax.f32 %v1924, 0.0
        %v2328 = vmax.f32 %v1926, 0.0
        %v2329 = vmax.f32 %v2181, 0.0
        %v2330 = vmax.f32 %v2183, 0.0
        %v2331 = vmax.f32 %v1930, 0.0
        %v2332 = vmax.f32 %v1932, 0.0
        %v2333 = vmax.f32 %v2187, 0.0
        %v2334 = vmax.f32 %v2189, 0.0
        %v2335 = vmax.f32 %v1936, 0.0
        %v2336 = vmax.f32 %v1938, 0.0
        %v2337 = vmax.f32 %v2193, 0.0
        %v2338 = vmax.f32 %v2195, 0.0
        %v2339 = vmax.f32 %v1942, 0.0
        %v2340 = vmax.f32 %v1944, 0.0
        %v2341 = vmax.f32 %v2199, 0.0
        %v2342 = vmax.f32 %v2201, 0.0
        %v2343 = vmax.f32 %v1948, 0.0
        %v2344 = vmax.f32 %v1950, 0.0
        %v2345 = vmax.f32 %v2205, 0.0
        %v2346 = vmax.f32 %v2207, 0.0
        %v2347 = vmax.f32 %v1954, 0.0
        %v2348 = vmax.f32 %v1956, 0.0
        %v2349 = vmax.f32 %v2211, 0.0
        %v2350 = vmax.f32 %v2213, 0.0
        %v2351 = vmax.f32 %v1960, 0.0
        %v2352 = vmax.f32 %v1962, 0.0
        %v2353 = vmax.f32 %v2217, 0.0
        %v2354 = vmax.f32 %v2219, 0.0
        %v2355 = vmax.f32 %v1966, 0.0
        %v2356 = vmax.f32 %v1968, 0.0
        %v2357 = vmax.f32 %v2223, 0.0
        %v2358 = vmax.f32 %v2225, 0.0
        %v2359 = vmax.f32 %v1972, 0.0
        %v2360 = vmax.f32 %v1974, 0.0
        %v2361 = vmax.f32 %v2229, 0.0
        %v2362 = vmax.f32 %v2231, 0.0
        %v2363 = vmax.f32 %v1978, 0.0
        %v2364 = vmax.f32 %v1980, 0.0
        %v2365 = vmax.f32 %v2235, 0.0
        %v2366 = vmax.f32 %v2237, 0.0
        %v2367 = vld [vmem:[#allocation11] sm:$0xff]
        %v2368 = vld [vmem:[#allocation11 + $0x8] sm:$0xff]
        %v2369 = vld [vmem:[#allocation11 + $0x10] sm:$0xff]
        %v2370 = vld [vmem:[#allocation11 + $0x18] sm:$0xff]
        %v2371 = vld [vmem:[#allocation11 + $0x20] sm:$0xff]
        %v2372 = vld [vmem:[#allocation11 + $0x28] sm:$0xff]
        %v2373 = vld [vmem:[#allocation11 + $0x30] sm:$0xff]
        %v2374 = vld [vmem:[#allocation11 + $0x38] sm:$0xff]
        %v2375 = vld [vmem:[#allocation11 + $0x40] sm:$0xff]
        %v2376 = vld [vmem:[#allocation11 + $0x48] sm:$0xff]
        %v2377 = vld [vmem:[#allocation11 + $0x50] sm:$0xff]
        %v2378 = vld [vmem:[#allocation11 + $0x58] sm:$0xff]
        %v2379 = vld [vmem:[#allocation11 + $0x60] sm:$0xff]
        %v2380 = vld [vmem:[#allocation11 + $0x68] sm:$0xff]
        %v2381 = vld [vmem:[#allocation11 + $0x70] sm:$0xff]
        %v2382 = vld [vmem:[#allocation11 + $0x78] sm:$0xff]
        %v2383 = vld [vmem:[#allocation11 + $0x80] sm:$0xff]
        %v2384 = vld [vmem:[#allocation11 + $0x88] sm:$0xff]
        %v2385 = vld [vmem:[#allocation11 + $0x90] sm:$0xff]
        %v2386 = vld [vmem:[#allocation11 + $0x98] sm:$0xff]
        %v2387 = vld [vmem:[#allocation11 + $0xa0] sm:$0xff]
        %v2388 = vld [vmem:[#allocation11 + $0xa8] sm:$0xff]
        %v2389 = vld [vmem:[#allocation11 + $0xb0] sm:$0xff]
        %v2390 = vld [vmem:[#allocation11 + $0xb8] sm:$0xff]
        %v2391 = vld [vmem:[#allocation11 + $0xc0] sm:$0xff]
        %v2392 = vld [vmem:[#allocation11 + $0xc8] sm:$0xff]
        %v2393 = vld [vmem:[#allocation11 + $0xd0] sm:$0xff]
        %v2394 = vld [vmem:[#allocation11 + $0xd8] sm:$0xff]
        %v2395 = vld [vmem:[#allocation11 + $0xe0] sm:$0xff]
        %v2396 = vld [vmem:[#allocation11 + $0xe8] sm:$0xff]
        %v2397 = vld [vmem:[#allocation11 + $0xf0] sm:$0xff]
        %v2398 = vld [vmem:[#allocation11 + $0xf8] sm:$0xff]
        %v2399 = vld [vmem:[#allocation11 + $0x100] sm:$0xff]
        %v2400 = vld [vmem:[#allocation11 + $0x108] sm:$0xff]
        %v2401 = vld [vmem:[#allocation11 + $0x110] sm:$0xff]
        %v2402 = vld [vmem:[#allocation11 + $0x118] sm:$0xff]
        %v2403 = vld [vmem:[#allocation11 + $0x120] sm:$0xff]
        %v2404 = vld [vmem:[#allocation11 + $0x128] sm:$0xff]
        %v2405 = vld [vmem:[#allocation11 + $0x130] sm:$0xff]
        %v2406 = vld [vmem:[#allocation11 + $0x138] sm:$0xff]
        %v2407 = vld [vmem:[#allocation11 + $0x140] sm:$0xff]
        %v2408 = vld [vmem:[#allocation11 + $0x148] sm:$0xff]
        %v2409 = vld [vmem:[#allocation11 + $0x150] sm:$0xff]
        %v2410 = vld [vmem:[#allocation11 + $0x158] sm:$0xff]
        %v2411 = vld [vmem:[#allocation11 + $0x160] sm:$0xff]
        %v2412 = vld [vmem:[#allocation11 + $0x168] sm:$0xff]
        %v2413 = vld [vmem:[#allocation11 + $0x170] sm:$0xff]
        %v2414 = vld [vmem:[#allocation11 + $0x178] sm:$0xff]
        %v2415 = vld [vmem:[#allocation11 + $0x180] sm:$0xff]
        %v2416 = vld [vmem:[#allocation11 + $0x188] sm:$0xff]
        %v2417 = vld [vmem:[#allocation11 + $0x190] sm:$0xff]
        %v2418 = vld [vmem:[#allocation11 + $0x198] sm:$0xff]
        %v2419 = vld [vmem:[#allocation11 + $0x1a0] sm:$0xff]
        %v2420 = vld [vmem:[#allocation11 + $0x1a8] sm:$0xff]
        %v2421 = vld [vmem:[#allocation11 + $0x1b0] sm:$0xff]
        %v2422 = vld [vmem:[#allocation11 + $0x1b8] sm:$0xff]
        %v2423 = vld [vmem:[#allocation11 + $0x1c0] sm:$0xff]
        %v2424 = vld [vmem:[#allocation11 + $0x1c8] sm:$0xff]
        %v2425 = vld [vmem:[#allocation11 + $0x1d0] sm:$0xff]
        %v2426 = vld [vmem:[#allocation11 + $0x1d8] sm:$0xff]
        %v2427 = vld [vmem:[#allocation11 + $0x1e0] sm:$0xff]
        %v2428 = vld [vmem:[#allocation11 + $0x1e8] sm:$0xff]
        %v2429 = vld [vmem:[#allocation11 + $0x1f0] sm:$0xff]
        %v2430 = vld [vmem:[#allocation11 + $0x1f8] sm:$0xff]
        %v2431 = vld [vmem:[%s10] sm:$0x1]
        %v2433 = vlaneseq
        %v2434 = vshrl.u32 %v2433, 7
        %v2435 = vsub.s32 0, %v2434
        %v2436 = vrot.slane %v2431, %v2435
        %2438 = vmatprep.subr.mxu0 0.0
        %2439 = vmatpush1.msra.mxu0 %v2367
        %2440 = vmatprep.subr.mxu0 0.0
        %2441 = vmatpush1.msra.mxu0 %v2368
        %2442 = vmatprep.subr.mxu0 0.0
        %2443 = vmatpush1.msra.mxu0 %v2369
        %2444 = vmatprep.subr.mxu0 0.0
        %2445 = vmatpush1.msra.mxu0 %v2370
        %2446 = vmatprep.subr.mxu0 0.0
        %2447 = vmatpush1.msra.mxu0 %v2371
        %2448 = vmatprep.subr.mxu0 0.0
        %2449 = vmatpush1.msra.mxu0 %v2372
        %2450 = vmatprep.subr.mxu0 0.0
        %2451 = vmatpush1.msra.mxu0 %v2373
        %2452 = vmatprep.subr.mxu0 0.0
        %2453 = vmatpush1.msra.mxu0 %v2374
        %2454 = vmatprep.subr.mxu0 0.0
        %2455 = vmatpush1.msra.mxu0 %v2375
        %2456 = vmatprep.subr.mxu0 0.0
        %2457 = vmatpush1.msra.mxu0 %v2376
        %2458 = vmatprep.subr.mxu0 0.0
        %2459 = vmatpush1.msra.mxu0 %v2377
        %2460 = vmatprep.subr.mxu0 0.0
        %2461 = vmatpush1.msra.mxu0 %v2378
        %2462 = vmatprep.subr.mxu0 0.0
        %2463 = vmatpush1.msra.mxu0 %v2379
        %2464 = vmatprep.subr.mxu0 0.0
        %2465 = vmatpush1.msra.mxu0 %v2380
        %2466 = vmatprep.subr.mxu0 0.0
        %2467 = vmatpush1.msra.mxu0 %v2381
        %2468 = vmatprep.subr.mxu0 0.0
        %2469 = vmatpush1.msra.mxu0 %v2382
        %2470 = vmatprep.subr.mxu0 0.0
        %2471 = vmatpush1.msra.mxu0 %v2383
        %2472 = vmatprep.subr.mxu0 0.0
        %2473 = vmatpush1.msra.mxu0 %v2384
        %2474 = vmatprep.subr.mxu0 0.0
        %2475 = vmatpush1.msra.mxu0 %v2385
        %2476 = vmatprep.subr.mxu0 0.0
        %2477 = vmatpush1.msra.mxu0 %v2386
        %2478 = vmatprep.subr.mxu0 0.0
        %2479 = vmatpush1.msra.mxu0 %v2387
        %2480 = vmatprep.subr.mxu0 0.0
        %2481 = vmatpush1.msra.mxu0 %v2388
        %2482 = vmatprep.subr.mxu0 0.0
        %2483 = vmatpush1.msra.mxu0 %v2389
        %2484 = vmatprep.subr.mxu0 0.0
        %2485 = vmatpush1.msra.mxu0 %v2390
        %2486 = vmatprep.subr.mxu0 0.0
        %2487 = vmatpush1.msra.mxu0 %v2391
        %2488 = vmatprep.subr.mxu0 0.0
        %2489 = vmatpush1.msra.mxu0 %v2392
        %2490 = vmatprep.subr.mxu0 0.0
        %2491 = vmatpush1.msra.mxu0 %v2393
        %2492 = vmatprep.subr.mxu0 0.0
        %2493 = vmatpush1.msra.mxu0 %v2394
        %2494 = vmatprep.subr.mxu0 0.0
        %2495 = vmatpush1.msra.mxu0 %v2395
        %2496 = vmatprep.subr.mxu0 0.0
        %2497 = vmatpush1.msra.mxu0 %v2396
        %2498 = vmatprep.subr.mxu0 0.0
        %2499 = vmatpush1.msra.mxu0 %v2397
        %2500 = vmatprep.subr.mxu0 0.0
        %2501 = vmatpush1.msra.mxu0 %v2398
        %2502 = vmatprep.mubr.f32.mxu0 %v2240
        %2503 = vmatmul.mubr.f32.gmra.mrb[0].mxu0 %v2239
        %v2504 = vpop.f32.mrb[0].mxu0
        %v2505 = vadd.f32 %v2436, %v2504
        %v2506 = vpop.f32.mrb[0].mxu0
        %2507 = vmatprep.mubr.f32.mxu0 %v2244
        %2508 = vmatmul.mubr.f32.gmra.mrb[0].mxu0 %v2243
        %v2509 = vpop.f32.mrb[0].mxu0
        %v2510 = vadd.f32 %v2436, %v2509
        %v2511 = vpop.f32.mrb[0].mxu0
        %2512 = vmatprep.mubr.f32.mxu0 %v2248
        %2513 = vmatmul.mubr.f32.gmra.mrb[0].mxu0 %v2247
        %v2514 = vpop.f32.mrb[0].mxu0
        %v2515 = vadd.f32 %v2436, %v2514
        %v2516 = vpop.f32.mrb[0].mxu0
        %2517 = vmatprep.mubr.f32.mxu0 %v2252
        %2518 = vmatmul.mubr.f32.gmra.mrb[0].mxu0 %v2251
        %v2519 = vpop.f32.mrb[0].mxu0
        %v2520 = vadd.f32 %v2436, %v2519
        %v2521 = vpop.f32.mrb[0].mxu0
        %2522 = vmatprep.mubr.f32.mxu0 %v2256
        %2523 = vmatmul.mubr.f32.gmra.mrb[0].mxu0 %v2255
        %v2524 = vpop.f32.mrb[0].mxu0
        %v2525 = vadd.f32 %v2436, %v2524
        %v2526 = vpop.f32.mrb[0].mxu0
        %2527 = vmatprep.mubr.f32.mxu0 %v2260
        %2528 = vmatmul.mubr.f32.gmra.mrb[0].mxu0 %v2259
        %v2529 = vpop.f32.mrb[0].mxu0
        %v2530 = vadd.f32 %v2436, %v2529
        %v2531 = vpop.f32.mrb[0].mxu0
        %2532 = vmatprep.mubr.f32.mxu0 %v2264
        %2533 = vmatmul.mubr.f32.gmra.mrb[0].mxu0 %v2263
        %v2534 = vpop.f32.mrb[0].mxu0
        %v2535 = vadd.f32 %v2436, %v2534
        %v2536 = vpop.f32.mrb[0].mxu0
        %2537 = vmatprep.mubr.f32.mxu0 %v2268
        %2538 = vmatmul.mubr.f32.gmra.mrb[0].mxu0 %v2267
        %v2539 = vpop.f32.mrb[0].mxu0
        %v2540 = vadd.f32 %v2436, %v2539
        %v2541 = vpop.f32.mrb[0].mxu0
        %2542 = vmatprep.mubr.f32.mxu0 %v2272
        %2543 = vmatmul.mubr.f32.gmra.mrb[0].mxu0 %v2271
        %v2544 = vpop.f32.mrb[0].mxu0
        %v2545 = vadd.f32 %v2436, %v2544
        %v2546 = vpop.f32.mrb[0].mxu0
        %2547 = vmatprep.mubr.f32.mxu0 %v2276
        %2548 = vmatmul.mubr.f32.gmra.mrb[0].mxu0 %v2275
        %v2549 = vpop.f32.mrb[0].mxu0
        %v2550 = vadd.f32 %v2436, %v2549
        %v2551 = vpop.f32.mrb[0].mxu0
        %2552 = vmatprep.mubr.f32.mxu0 %v2280
        %2553 = vmatmul.mubr.f32.gmra.mrb[0].mxu0 %v2279
        %v2554 = vpop.f32.mrb[0].mxu0
        %v2555 = vadd.f32 %v2436, %v2554
        %v2556 = vpop.f32.mrb[0].mxu0
        %2557 = vmatprep.mubr.f32.mxu0 %v2284
        %2558 = vmatmul.mubr.f32.gmra.mrb[0].mxu0 %v2283
        %v2559 = vpop.f32.mrb[0].mxu0
        %v2560 = vadd.f32 %v2436, %v2559
        %v2561 = vpop.f32.mrb[0].mxu0
        %2562 = vmatprep.mubr.f32.mxu0 %v2288
        %2563 = vmatmul.mubr.f32.gmra.mrb[0].mxu0 %v2287
        %v2564 = vpop.f32.mrb[0].mxu0
        %v2565 = vadd.f32 %v2436, %v2564
        %v2566 = vpop.f32.mrb[0].mxu0
        %2567 = vmatprep.mubr.f32.mxu0 %v2292
        %2568 = vmatmul.mubr.f32.gmra.mrb[0].mxu0 %v2291
        %v2569 = vpop.f32.mrb[0].mxu0
        %v2570 = vadd.f32 %v2436, %v2569
        %v2571 = vpop.f32.mrb[0].mxu0
        %2572 = vmatprep.mubr.f32.mxu0 %v2296
        %2573 = vmatmul.mubr.f32.gmra.mrb[0].mxu0 %v2295
        %v2574 = vpop.f32.mrb[0].mxu0
        %v2575 = vadd.f32 %v2436, %v2574
        %v2576 = vpop.f32.mrb[0].mxu0
        %2577 = vmatprep.mubr.f32.mxu0 %v2300
        %2578 = vmatmul.mubr.f32.gmra.mrb[0].mxu0 %v2299
        %v2579 = vpop.f32.mrb[0].mxu0
        %v2580 = vadd.f32 %v2436, %v2579
        %v2581 = vpop.f32.mrb[0].mxu0
        %2582 = vmatprep.mubr.f32.mxu0 %v2304
        %2583 = vmatmul.mubr.f32.gmra.mrb[0].mxu0 %v2303
        %v2584 = vpop.f32.mrb[0].mxu0
        %v2585 = vadd.f32 %v2436, %v2584
        %v2586 = vpop.f32.mrb[0].mxu0
        %2587 = vmatprep.mubr.f32.mxu0 %v2308
        %2588 = vmatmul.mubr.f32.gmra.mrb[0].mxu0 %v2307
        %v2589 = vpop.f32.mrb[0].mxu0
        %v2590 = vadd.f32 %v2436, %v2589
        %v2591 = vpop.f32.mrb[0].mxu0
        %2592 = vmatprep.mubr.f32.mxu0 %v2312
        %2593 = vmatmul.mubr.f32.gmra.mrb[0].mxu0 %v2311
        %v2594 = vpop.f32.mrb[0].mxu0
        %v2595 = vadd.f32 %v2436, %v2594
        %v2596 = vpop.f32.mrb[0].mxu0
        %2597 = vmatprep.mubr.f32.mxu0 %v2316
        %2598 = vmatmul.mubr.f32.gmra.mrb[0].mxu0 %v2315
        %v2599 = vpop.f32.mrb[0].mxu0
        %v2600 = vadd.f32 %v2436, %v2599
        %v2601 = vpop.f32.mrb[0].mxu0
        %2602 = vmatprep.mubr.f32.mxu0 %v2320
        %2603 = vmatmul.mubr.f32.gmra.mrb[0].mxu0 %v2319
        %v2604 = vpop.f32.mrb[0].mxu0
        %v2605 = vadd.f32 %v2436, %v2604
        %v2606 = vpop.f32.mrb[0].mxu0
        %2607 = vmatprep.mubr.f32.mxu0 %v2324
        %2608 = vmatmul.mubr.f32.gmra.mrb[0].mxu0 %v2323
        %v2609 = vpop.f32.mrb[0].mxu0
        %v2610 = vadd.f32 %v2436, %v2609
        %v2611 = vpop.f32.mrb[0].mxu0
        %2612 = vmatprep.mubr.f32.mxu0 %v2328
        %2613 = vmatmul.mubr.f32.gmra.mrb[0].mxu0 %v2327
        %v2614 = vpop.f32.mrb[0].mxu0
        %v2615 = vadd.f32 %v2436, %v2614
        %v2616 = vpop.f32.mrb[0].mxu0
        %2617 = vmatprep.mubr.f32.mxu0 %v2332
        %2618 = vmatmul.mubr.f32.gmra.mrb[0].mxu0 %v2331
        %v2619 = vpop.f32.mrb[0].mxu0
        %v2620 = vadd.f32 %v2436, %v2619
        %v2621 = vpop.f32.mrb[0].mxu0
        %2622 = vmatprep.mubr.f32.mxu0 %v2336
        %2623 = vmatmul.mubr.f32.gmra.mrb[0].mxu0 %v2335
        %v2624 = vpop.f32.mrb[0].mxu0
        %v2625 = vadd.f32 %v2436, %v2624
        %v2626 = vpop.f32.mrb[0].mxu0
        %2627 = vmatprep.mubr.f32.mxu0 %v2340
        %2628 = vmatmul.mubr.f32.gmra.mrb[0].mxu0 %v2339
        %v2629 = vpop.f32.mrb[0].mxu0
        %v2630 = vadd.f32 %v2436, %v2629
        %v2631 = vpop.f32.mrb[0].mxu0
        %2632 = vmatprep.mubr.f32.mxu0 %v2344
        %2633 = vmatmul.mubr.f32.gmra.mrb[0].mxu0 %v2343
        %v2634 = vpop.f32.mrb[0].mxu0
        %v2635 = vadd.f32 %v2436, %v2634
        %v2636 = vpop.f32.mrb[0].mxu0
        %2637 = vmatprep.mubr.f32.mxu0 %v2348
        %2638 = vmatmul.mubr.f32.gmra.mrb[0].mxu0 %v2347
        %v2639 = vpop.f32.mrb[0].mxu0
        %v2640 = vadd.f32 %v2436, %v2639
        %v2641 = vpop.f32.mrb[0].mxu0
        %2642 = vmatprep.mubr.f32.mxu0 %v2352
        %2643 = vmatmul.mubr.f32.gmra.mrb[0].mxu0 %v2351
        %v2644 = vpop.f32.mrb[0].mxu0
        %v2645 = vadd.f32 %v2436, %v2644
        %v2646 = vpop.f32.mrb[0].mxu0
        %2647 = vmatprep.mubr.f32.mxu0 %v2356
        %2648 = vmatmul.mubr.f32.gmra.mrb[0].mxu0 %v2355
        %v2649 = vpop.f32.mrb[0].mxu0
        %v2650 = vadd.f32 %v2436, %v2649
        %v2651 = vpop.f32.mrb[0].mxu0
        %2652 = vmatprep.mubr.f32.mxu0 %v2360
        %2653 = vmatmul.mubr.f32.gmra.mrb[0].mxu0 %v2359
        %v2654 = vpop.f32.mrb[0].mxu0
        %v2655 = vadd.f32 %v2436, %v2654
        %v2656 = vpop.f32.mrb[0].mxu0
        %2657 = vmatprep.mubr.f32.mxu0 %v2364
        %2658 = vmatmul.mubr.f32.gmra.mrb[0].mxu0 %v2363
        %v2659 = vpop.f32.mrb[0].mxu0
        %v2660 = vadd.f32 %v2436, %v2659
        %v2661 = vpop.f32.mrb[0].mxu0
        %2662 = vdwg.mxu0
        %2663 = vmatprep.subr.mxu0 0.0
        %2664 = vmatpush1.msra.mxu0 %v2399
        %2665 = vmatprep.subr.mxu0 0.0
        %2666 = vmatpush1.msra.mxu0 %v2400
        %2667 = vmatprep.subr.mxu0 0.0
        %2668 = vmatpush1.msra.mxu0 %v2401
        %2669 = vmatprep.subr.mxu0 0.0
        %2670 = vmatpush1.msra.mxu0 %v2402
        %2671 = vmatprep.subr.mxu0 0.0
        %2672 = vmatpush1.msra.mxu0 %v2403
        %2673 = vmatprep.subr.mxu0 0.0
        %2674 = vmatpush1.msra.mxu0 %v2404
        %2675 = vmatprep.subr.mxu0 0.0
        %2676 = vmatpush1.msra.mxu0 %v2405
        %2677 = vmatprep.subr.mxu0 0.0
        %2678 = vmatpush1.msra.mxu0 %v2406
        %2679 = vmatprep.subr.mxu0 0.0
        %2680 = vmatpush1.msra.mxu0 %v2407
        %2681 = vmatprep.subr.mxu0 0.0
        %2682 = vmatpush1.msra.mxu0 %v2408
        %2683 = vmatprep.subr.mxu0 0.0
        %2684 = vmatpush1.msra.mxu0 %v2409
        %2685 = vmatprep.subr.mxu0 0.0
        %2686 = vmatpush1.msra.mxu0 %v2410
        %2687 = vmatprep.subr.mxu0 0.0
        %2688 = vmatpush1.msra.mxu0 %v2411
        %2689 = vmatprep.subr.mxu0 0.0
        %2690 = vmatpush1.msra.mxu0 %v2412
        %2691 = vmatprep.subr.mxu0 0.0
        %2692 = vmatpush1.msra.mxu0 %v2413
        %2693 = vmatprep.subr.mxu0 0.0
        %2694 = vmatpush1.msra.mxu0 %v2414
        %2695 = vmatprep.subr.mxu0 0.0
        %2696 = vmatpush1.msra.mxu0 %v2415
        %2697 = vmatprep.subr.mxu0 0.0
        %2698 = vmatpush1.msra.mxu0 %v2416
        %2699 = vmatprep.subr.mxu0 0.0
        %2700 = vmatpush1.msra.mxu0 %v2417
        %2701 = vmatprep.subr.mxu0 0.0
        %2702 = vmatpush1.msra.mxu0 %v2418
        %2703 = vmatprep.subr.mxu0 0.0
        %2704 = vmatpush1.msra.mxu0 %v2419
        %2705 = vmatprep.subr.mxu0 0.0
        %2706 = vmatpush1.msra.mxu0 %v2420
        %2707 = vmatprep.subr.mxu0 0.0
        %2708 = vmatpush1.msra.mxu0 %v2421
        %2709 = vmatprep.subr.mxu0 0.0
        %2710 = vmatpush1.msra.mxu0 %v2422
        %2711 = vmatprep.subr.mxu0 0.0
        %2712 = vmatpush1.msra.mxu0 %v2423
        %2713 = vmatprep.subr.mxu0 0.0
        %2714 = vmatpush1.msra.mxu0 %v2424
        %2715 = vmatprep.subr.mxu0 0.0
        %2716 = vmatpush1.msra.mxu0 %v2425
        %2717 = vmatprep.subr.mxu0 0.0
        %2718 = vmatpush1.msra.mxu0 %v2426
        %2719 = vmatprep.subr.mxu0 0.0
        %2720 = vmatpush1.msra.mxu0 %v2427
        %2721 = vmatprep.subr.mxu0 0.0
        %2722 = vmatpush1.msra.mxu0 %v2428
        %2723 = vmatprep.subr.mxu0 0.0
        %2724 = vmatpush1.msra.mxu0 %v2429
        %2725 = vmatprep.subr.mxu0 0.0
        %2726 = vmatpush1.msra.mxu0 %v2430
        %2727 = vmatprep.mubr.f32.mxu0 %v2242
        %2728 = vmatmul.mubr.f32.gmra.mrb[0].mxu0 %v2241
        %v2729 = vpop.f32.mrb[0].mxu0
        %v2730 = vadd.f32 %v2505, %v2729
        %v2731 = vpop.f32.mrb[0].mxu0
        %2732 = vmatprep.mubr.f32.mxu0 %v2246
        %2733 = vmatmul.mubr.f32.gmra.mrb[0].mxu0 %v2245
        %v2734 = vpop.f32.mrb[0].mxu0
        %v2735 = vadd.f32 %v2510, %v2734
        %v2736 = vpop.f32.mrb[0].mxu0
        %2737 = vmatprep.mubr.f32.mxu0 %v2250
        %2738 = vmatmul.mubr.f32.gmra.mrb[0].mxu0 %v2249
        %v2739 = vpop.f32.mrb[0].mxu0
        %v2740 = vadd.f32 %v2515, %v2739
        %v2741 = vpop.f32.mrb[0].mxu0
        %2742 = vmatprep.mubr.f32.mxu0 %v2254
        %2743 = vmatmul.mubr.f32.gmra.mrb[0].mxu0 %v2253
        %v2744 = vpop.f32.mrb[0].mxu0
        %v2745 = vadd.f32 %v2520, %v2744
        %v2746 = vpop.f32.mrb[0].mxu0
        %2747 = vmatprep.mubr.f32.mxu0 %v2258
        %2748 = vmatmul.mubr.f32.gmra.mrb[0].mxu0 %v2257
        %v2749 = vpop.f32.mrb[0].mxu0
        %v2750 = vadd.f32 %v2525, %v2749
        %v2751 = vpop.f32.mrb[0].mxu0
        %2752 = vmatprep.mubr.f32.mxu0 %v2262
        %2753 = vmatmul.mubr.f32.gmra.mrb[0].mxu0 %v2261
        %v2754 = vpop.f32.mrb[0].mxu0
        %v2755 = vadd.f32 %v2530, %v2754
        %v2756 = vpop.f32.mrb[0].mxu0
        %2757 = vmatprep.mubr.f32.mxu0 %v2266
        %2758 = vmatmul.mubr.f32.gmra.mrb[0].mxu0 %v2265
        %v2759 = vpop.f32.mrb[0].mxu0
        %v2760 = vadd.f32 %v2535, %v2759
        %v2761 = vpop.f32.mrb[0].mxu0
        %2762 = vmatprep.mubr.f32.mxu0 %v2270
        %2763 = vmatmul.mubr.f32.gmra.mrb[0].mxu0 %v2269
        %v2764 = vpop.f32.mrb[0].mxu0
        %v2765 = vadd.f32 %v2540, %v2764
        %v2766 = vpop.f32.mrb[0].mxu0
        %2767 = vmatprep.mubr.f32.mxu0 %v2274
        %2768 = vmatmul.mubr.f32.gmra.mrb[0].mxu0 %v2273
        %v2769 = vpop.f32.mrb[0].mxu0
        %v2770 = vadd.f32 %v2545, %v2769
        %v2771 = vpop.f32.mrb[0].mxu0
        %2772 = vmatprep.mubr.f32.mxu0 %v2278
        %2773 = vmatmul.mubr.f32.gmra.mrb[0].mxu0 %v2277
        %v2774 = vpop.f32.mrb[0].mxu0
        %v2775 = vadd.f32 %v2550, %v2774
        %v2776 = vpop.f32.mrb[0].mxu0
        %2777 = vmatprep.mubr.f32.mxu0 %v2282
        %2778 = vmatmul.mubr.f32.gmra.mrb[0].mxu0 %v2281
        %v2779 = vpop.f32.mrb[0].mxu0
        %v2780 = vadd.f32 %v2555, %v2779
        %v2781 = vpop.f32.mrb[0].mxu0
        %2782 = vmatprep.mubr.f32.mxu0 %v2286
        %2783 = vmatmul.mubr.f32.gmra.mrb[0].mxu0 %v2285
        %v2784 = vpop.f32.mrb[0].mxu0
        %v2785 = vadd.f32 %v2560, %v2784
        %v2786 = vpop.f32.mrb[0].mxu0
        %2787 = vmatprep.mubr.f32.mxu0 %v2290
        %2788 = vmatmul.mubr.f32.gmra.mrb[0].mxu0 %v2289
        %v2789 = vpop.f32.mrb[0].mxu0
        %v2790 = vadd.f32 %v2565, %v2789
        %v2791 = vpop.f32.mrb[0].mxu0
        %2792 = vmatprep.mubr.f32.mxu0 %v2294
        %2793 = vmatmul.mubr.f32.gmra.mrb[0].mxu0 %v2293
        %v2794 = vpop.f32.mrb[0].mxu0
        %v2795 = vadd.f32 %v2570, %v2794
        %v2796 = vpop.f32.mrb[0].mxu0
        %2797 = vmatprep.mubr.f32.mxu0 %v2298
        %2798 = vmatmul.mubr.f32.gmra.mrb[0].mxu0 %v2297
        %v2799 = vpop.f32.mrb[0].mxu0
        %v2800 = vadd.f32 %v2575, %v2799
        %v2801 = vpop.f32.mrb[0].mxu0
        %2802 = vmatprep.mubr.f32.mxu0 %v2302
        %2803 = vmatmul.mubr.f32.gmra.mrb[0].mxu0 %v2301
        %v2804 = vpop.f32.mrb[0].mxu0
        %v2805 = vadd.f32 %v2580, %v2804
        %v2806 = vpop.f32.mrb[0].mxu0
        %2807 = vmatprep.mubr.f32.mxu0 %v2306
        %2808 = vmatmul.mubr.f32.gmra.mrb[0].mxu0 %v2305
        %v2809 = vpop.f32.mrb[0].mxu0
        %v2810 = vadd.f32 %v2585, %v2809
        %v2811 = vpop.f32.mrb[0].mxu0
        %2812 = vmatprep.mubr.f32.mxu0 %v2310
        %2813 = vmatmul.mubr.f32.gmra.mrb[0].mxu0 %v2309
        %v2814 = vpop.f32.mrb[0].mxu0
        %v2815 = vadd.f32 %v2590, %v2814
        %v2816 = vpop.f32.mrb[0].mxu0
        %2817 = vmatprep.mubr.f32.mxu0 %v2314
        %2818 = vmatmul.mubr.f32.gmra.mrb[0].mxu0 %v2313
        %v2819 = vpop.f32.mrb[0].mxu0
        %v2820 = vadd.f32 %v2595, %v2819
        %v2821 = vpop.f32.mrb[0].mxu0
        %2822 = vmatprep.mubr.f32.mxu0 %v2318
        %2823 = vmatmul.mubr.f32.gmra.mrb[0].mxu0 %v2317
        %v2824 = vpop.f32.mrb[0].mxu0
        %v2825 = vadd.f32 %v2600, %v2824
        %v2826 = vpop.f32.mrb[0].mxu0
        %2827 = vmatprep.mubr.f32.mxu0 %v2322
        %2828 = vmatmul.mubr.f32.gmra.mrb[0].mxu0 %v2321
        %v2829 = vpop.f32.mrb[0].mxu0
        %v2830 = vadd.f32 %v2605, %v2829
        %v2831 = vpop.f32.mrb[0].mxu0
        %2832 = vmatprep.mubr.f32.mxu0 %v2326
        %2833 = vmatmul.mubr.f32.gmra.mrb[0].mxu0 %v2325
        %v2834 = vpop.f32.mrb[0].mxu0
        %v2835 = vadd.f32 %v2610, %v2834
        %v2836 = vpop.f32.mrb[0].mxu0
        %2837 = vmatprep.mubr.f32.mxu0 %v2330
        %2838 = vmatmul.mubr.f32.gmra.mrb[0].mxu0 %v2329
        %v2839 = vpop.f32.mrb[0].mxu0
        %v2840 = vadd.f32 %v2615, %v2839
        %v2841 = vpop.f32.mrb[0].mxu0
        %2842 = vmatprep.mubr.f32.mxu0 %v2334
        %2843 = vmatmul.mubr.f32.gmra.mrb[0].mxu0 %v2333
        %v2844 = vpop.f32.mrb[0].mxu0
        %v2845 = vadd.f32 %v2620, %v2844
        %v2846 = vpop.f32.mrb[0].mxu0
        %2847 = vmatprep.mubr.f32.mxu0 %v2338
        %2848 = vmatmul.mubr.f32.gmra.mrb[0].mxu0 %v2337
        %v2849 = vpop.f32.mrb[0].mxu0
        %v2850 = vadd.f32 %v2625, %v2849
        %v2851 = vpop.f32.mrb[0].mxu0
        %2852 = vmatprep.mubr.f32.mxu0 %v2342
        %2853 = vmatmul.mubr.f32.gmra.mrb[0].mxu0 %v2341
        %v2854 = vpop.f32.mrb[0].mxu0
        %v2855 = vadd.f32 %v2630, %v2854
        %v2856 = vpop.f32.mrb[0].mxu0
        %2857 = vmatprep.mubr.f32.mxu0 %v2346
        %2858 = vmatmul.mubr.f32.gmra.mrb[0].mxu0 %v2345
        %v2859 = vpop.f32.mrb[0].mxu0
        %v2860 = vadd.f32 %v2635, %v2859
        %v2861 = vpop.f32.mrb[0].mxu0
        %2862 = vmatprep.mubr.f32.mxu0 %v2350
        %2863 = vmatmul.mubr.f32.gmra.mrb[0].mxu0 %v2349
        %v2864 = vpop.f32.mrb[0].mxu0
        %v2865 = vadd.f32 %v2640, %v2864
        %v2866 = vpop.f32.mrb[0].mxu0
        %2867 = vmatprep.mubr.f32.mxu0 %v2354
        %2868 = vmatmul.mubr.f32.gmra.mrb[0].mxu0 %v2353
        %v2869 = vpop.f32.mrb[0].mxu0
        %v2870 = vadd.f32 %v2645, %v2869
        %v2871 = vpop.f32.mrb[0].mxu0
        %2872 = vmatprep.mubr.f32.mxu0 %v2358
        %2873 = vmatmul.mubr.f32.gmra.mrb[0].mxu0 %v2357
        %v2874 = vpop.f32.mrb[0].mxu0
        %v2875 = vadd.f32 %v2650, %v2874
        %v2876 = vpop.f32.mrb[0].mxu0
        %2877 = vmatprep.mubr.f32.mxu0 %v2362
        %2878 = vmatmul.mubr.f32.gmra.mrb[0].mxu0 %v2361
        %v2879 = vpop.f32.mrb[0].mxu0
        %v2880 = vadd.f32 %v2655, %v2879
        %v2881 = vpop.f32.mrb[0].mxu0
        %2882 = vmatprep.mubr.f32.mxu0 %v2366
        %2883 = vmatmul.mubr.f32.gmra.mrb[0].mxu0 %v2365
        %v2884 = vpop.f32.mrb[0].mxu0
        %v2885 = vadd.f32 %v2660, %v2884
        %v2886 = vpop.f32.mrb[0].mxu0
        %2887 = vdwg.mxu0
        %v2888 = vadd.f32 %v2730, %v1607
        %v2889 = vadd.f32 %v2735, %v1608
        %v2890 = vadd.f32 %v2740, %v1609
        %v2891 = vadd.f32 %v2745, %v1610
        %v2892 = vadd.f32 %v2750, %v1611
        %v2893 = vadd.f32 %v2755, %v1612
        %v2894 = vadd.f32 %v2760, %v1613
        %v2895 = vadd.f32 %v2765, %v1614
        %v2896 = vadd.f32 %v2770, %v1615
        %v2897 = vadd.f32 %v2775, %v1616
        %v2898 = vadd.f32 %v2780, %v1617
        %v2899 = vadd.f32 %v2785, %v1618
        %v2900 = vadd.f32 %v2790, %v1619
        %v2901 = vadd.f32 %v2795, %v1620
        %v2902 = vadd.f32 %v2800, %v1621
        %v2903 = vadd.f32 %v2805, %v1622
        %v2904 = vadd.f32 %v2810, %v1623
        %v2905 = vadd.f32 %v2815, %v1624
        %v2906 = vadd.f32 %v2820, %v1625
        %v2907 = vadd.f32 %v2825, %v1626
        %v2908 = vadd.f32 %v2830, %v1627
        %v2909 = vadd.f32 %v2835, %v1628
        %v2910 = vadd.f32 %v2840, %v1629
        %v2911 = vadd.f32 %v2845, %v1630
        %v2912 = vadd.f32 %v2850, %v1631
        %v2913 = vadd.f32 %v2855, %v1632
        %v2914 = vadd.f32 %v2860, %v1633
        %v2915 = vadd.f32 %v2865, %v1634
        %v2916 = vadd.f32 %v2870, %v1635
        %v2917 = vadd.f32 %v2875, %v1636
        %v2918 = vadd.f32 %v2880, %v1637
        %v2919 = vadd.f32 %v2885, %v1638
        %2920 = vadd.xlane.f32.xlu0 %v2888
        %v2921 = vpop.xlane.xlu0 %2920
        %2922 = vadd.xlane.f32.xlu0 %v2889
        %v2923 = vpop.xlane.xlu0 %2922
        %2924 = vadd.xlane.f32.xlu0 %v2890
        %v2925 = vpop.xlane.xlu0 %2924
        %2926 = vadd.xlane.f32.xlu0 %v2891
        %v2927 = vpop.xlane.xlu0 %2926
        %2928 = vadd.xlane.f32.xlu0 %v2892
        %v2929 = vpop.xlane.xlu0 %2928
        %2930 = vadd.xlane.f32.xlu0 %v2893
        %v2931 = vpop.xlane.xlu0 %2930
        %2932 = vadd.xlane.f32.xlu0 %v2894
        %v2933 = vpop.xlane.xlu0 %2932
        %2934 = vadd.xlane.f32.xlu0 %v2895
        %v2935 = vpop.xlane.xlu0 %2934
        %2936 = vadd.xlane.f32.xlu0 %v2896
        %v2937 = vpop.xlane.xlu0 %2936
        %2938 = vadd.xlane.f32.xlu0 %v2897
        %v2939 = vpop.xlane.xlu0 %2938
        %2940 = vadd.xlane.f32.xlu0 %v2898
        %v2941 = vpop.xlane.xlu0 %2940
        %2942 = vadd.xlane.f32.xlu0 %v2899
        %v2943 = vpop.xlane.xlu0 %2942
        %2944 = vadd.xlane.f32.xlu0 %v2900
        %v2945 = vpop.xlane.xlu0 %2944
        %2946 = vadd.xlane.f32.xlu0 %v2901
        %v2947 = vpop.xlane.xlu0 %2946
        %2948 = vadd.xlane.f32.xlu0 %v2902
        %v2949 = vpop.xlane.xlu0 %2948
        %2950 = vadd.xlane.f32.xlu0 %v2903
        %v2951 = vpop.xlane.xlu0 %2950
        %2952 = vadd.xlane.f32.xlu0 %v2904
        %v2953 = vpop.xlane.xlu0 %2952
        %2954 = vadd.xlane.f32.xlu0 %v2905
        %v2955 = vpop.xlane.xlu0 %2954
        %2956 = vadd.xlane.f32.xlu0 %v2906
        %v2957 = vpop.xlane.xlu0 %2956
        %2958 = vadd.xlane.f32.xlu0 %v2907
        %v2959 = vpop.xlane.xlu0 %2958
        %2960 = vadd.xlane.f32.xlu0 %v2908
        %v2961 = vpop.xlane.xlu0 %2960
        %2962 = vadd.xlane.f32.xlu0 %v2909
        %v2963 = vpop.xlane.xlu0 %2962
        %2964 = vadd.xlane.f32.xlu0 %v2910
        %v2965 = vpop.xlane.xlu0 %2964
        %2966 = vadd.xlane.f32.xlu0 %v2911
        %v2967 = vpop.xlane.xlu0 %2966
        %2968 = vadd.xlane.f32.xlu0 %v2912
        %v2969 = vpop.xlane.xlu0 %2968
        %2970 = vadd.xlane.f32.xlu0 %v2913
        %v2971 = vpop.xlane.xlu0 %2970
        %2972 = vadd.xlane.f32.xlu0 %v2914
        %v2973 = vpop.xlane.xlu0 %2972
        %2974 = vadd.xlane.f32.xlu0 %v2915
        %v2975 = vpop.xlane.xlu0 %2974
        %2976 = vadd.xlane.f32.xlu0 %v2916
        %v2977 = vpop.xlane.xlu0 %2976
        %2978 = vadd.xlane.f32.xlu0 %v2917
        %v2979 = vpop.xlane.xlu0 %2978
        %2980 = vadd.xlane.f32.xlu0 %v2918
        %v2981 = vpop.xlane.xlu0 %2980
        %2982 = vadd.xlane.f32.xlu0 %v2919
        %v2983 = vpop.xlane.xlu0 %2982
        %v2984 = vmul.f32 %v2888, %v2888
        %v2985 = vmul.f32 %v2889, %v2889
        %v2986 = vmul.f32 %v2890, %v2890
        %v2987 = vmul.f32 %v2891, %v2891
        %v2988 = vmul.f32 %v2892, %v2892
        %v2989 = vmul.f32 %v2893, %v2893
        %v2990 = vmul.f32 %v2894, %v2894
        %v2991 = vmul.f32 %v2895, %v2895
        %v2992 = vmul.f32 %v2896, %v2896
        %v2993 = vmul.f32 %v2897, %v2897
        %v2994 = vmul.f32 %v2898, %v2898
        %v2995 = vmul.f32 %v2899, %v2899
        %v2996 = vmul.f32 %v2900, %v2900
        %v2997 = vmul.f32 %v2901, %v2901
        %v2998 = vmul.f32 %v2902, %v2902
        %v2999 = vmul.f32 %v2903, %v2903
        %v3000 = vmul.f32 %v2904, %v2904
        %v3001 = vmul.f32 %v2905, %v2905
        %v3002 = vmul.f32 %v2906, %v2906
        %v3003 = vmul.f32 %v2907, %v2907
        %v3004 = vmul.f32 %v2908, %v2908
        %v3005 = vmul.f32 %v2909, %v2909
        %v3006 = vmul.f32 %v2910, %v2910
        %v3007 = vmul.f32 %v2911, %v2911
        %v3008 = vmul.f32 %v2912, %v2912
        %v3009 = vmul.f32 %v2913, %v2913
        %v3010 = vmul.f32 %v2914, %v2914
        %v3011 = vmul.f32 %v2915, %v2915
        %v3012 = vmul.f32 %v2916, %v2916
        %v3013 = vmul.f32 %v2917, %v2917
        %v3014 = vmul.f32 %v2918, %v2918
        %v3015 = vmul.f32 %v2919, %v2919
        %3016 = vadd.xlane.f32.xlu0 %v2984
        %v3017 = vpop.xlane.xlu0 %3016
        %3018 = vadd.xlane.f32.xlu0 %v2985
        %v3019 = vpop.xlane.xlu0 %3018
        %3020 = vadd.xlane.f32.xlu0 %v2986
        %v3021 = vpop.xlane.xlu0 %3020
        %3022 = vadd.xlane.f32.xlu0 %v2987
        %v3023 = vpop.xlane.xlu0 %3022
        %3024 = vadd.xlane.f32.xlu0 %v2988
        %v3025 = vpop.xlane.xlu0 %3024
        %3026 = vadd.xlane.f32.xlu0 %v2989
        %v3027 = vpop.xlane.xlu0 %3026
        %3028 = vadd.xlane.f32.xlu0 %v2990
        %v3029 = vpop.xlane.xlu0 %3028
        %3030 = vadd.xlane.f32.xlu0 %v2991
        %v3031 = vpop.xlane.xlu0 %3030
        %3032 = vadd.xlane.f32.xlu0 %v2992
        %v3033 = vpop.xlane.xlu0 %3032
        %3034 = vadd.xlane.f32.xlu0 %v2993
        %v3035 = vpop.xlane.xlu0 %3034
        %3036 = vadd.xlane.f32.xlu0 %v2994
        %v3037 = vpop.xlane.xlu0 %3036
        %3038 = vadd.xlane.f32.xlu0 %v2995
        %v3039 = vpop.xlane.xlu0 %3038
        %3040 = vadd.xlane.f32.xlu0 %v2996
        %v3041 = vpop.xlane.xlu0 %3040
        %3042 = vadd.xlane.f32.xlu0 %v2997
        %v3043 = vpop.xlane.xlu0 %3042
        %3044 = vadd.xlane.f32.xlu0 %v2998
        %v3045 = vpop.xlane.xlu0 %3044
        %3046 = vadd.xlane.f32.xlu0 %v2999
        %v3047 = vpop.xlane.xlu0 %3046
        %3048 = vadd.xlane.f32.xlu0 %v3000
        %v3049 = vpop.xlane.xlu0 %3048
        %3050 = vadd.xlane.f32.xlu0 %v3001
        %v3051 = vpop.xlane.xlu0 %3050
        %3052 = vadd.xlane.f32.xlu0 %v3002
        %v3053 = vpop.xlane.xlu0 %3052
        %3054 = vadd.xlane.f32.xlu0 %v3003
        %v3055 = vpop.xlane.xlu0 %3054
        %3056 = vadd.xlane.f32.xlu0 %v3004
        %v3057 = vpop.xlane.xlu0 %3056
        %3058 = vadd.xlane.f32.xlu0 %v3005
        %v3059 = vpop.xlane.xlu0 %3058
        %3060 = vadd.xlane.f32.xlu0 %v3006
        %v3061 = vpop.xlane.xlu0 %3060
        %3062 = vadd.xlane.f32.xlu0 %v3007
        %v3063 = vpop.xlane.xlu0 %3062
        %3064 = vadd.xlane.f32.xlu0 %v3008
        %v3065 = vpop.xlane.xlu0 %3064
        %3066 = vadd.xlane.f32.xlu0 %v3009
        %v3067 = vpop.xlane.xlu0 %3066
        %3068 = vadd.xlane.f32.xlu0 %v3010
        %v3069 = vpop.xlane.xlu0 %3068
        %3070 = vadd.xlane.f32.xlu0 %v3011
        %v3071 = vpop.xlane.xlu0 %3070
        %3072 = vadd.xlane.f32.xlu0 %v3012
        %v3073 = vpop.xlane.xlu0 %3072
        %3074 = vadd.xlane.f32.xlu0 %v3013
        %v3075 = vpop.xlane.xlu0 %3074
        %3076 = vadd.xlane.f32.xlu0 %v3014
        %v3077 = vpop.xlane.xlu0 %3076
        %3078 = vadd.xlane.f32.xlu0 %v3015
        %v3079 = vpop.xlane.xlu0 %3078
        %v3080 = vmul.f32 %v2921, 0.0078125
        %v3081 = vmul.f32 %v2923, 0.0078125
        %v3082 = vmul.f32 %v2925, 0.0078125
        %v3083 = vmul.f32 %v2927, 0.0078125
        %v3084 = vmul.f32 %v2929, 0.0078125
        %v3085 = vmul.f32 %v2931, 0.0078125
        %v3086 = vmul.f32 %v2933, 0.0078125
        %v3087 = vmul.f32 %v2935, 0.0078125
        %v3088 = vmul.f32 %v2937, 0.0078125
        %v3089 = vmul.f32 %v2939, 0.0078125
        %v3090 = vmul.f32 %v2941, 0.0078125
        %v3091 = vmul.f32 %v2943, 0.0078125
        %v3092 = vmul.f32 %v2945, 0.0078125
        %v3093 = vmul.f32 %v2947, 0.0078125
        %v3094 = vmul.f32 %v2949, 0.0078125
        %v3095 = vmul.f32 %v2951, 0.0078125
        %v3096 = vmul.f32 %v2953, 0.0078125
        %v3097 = vmul.f32 %v2955, 0.0078125
        %v3098 = vmul.f32 %v2957, 0.0078125
        %v3099 = vmul.f32 %v2959, 0.0078125
        %v3100 = vmul.f32 %v2961, 0.0078125
        %v3101 = vmul.f32 %v2963, 0.0078125
        %v3102 = vmul.f32 %v2965, 0.0078125
        %v3103 = vmul.f32 %v2967, 0.0078125
        %v3104 = vmul.f32 %v2969, 0.0078125
        %v3105 = vmul.f32 %v2971, 0.0078125
        %v3106 = vmul.f32 %v2973, 0.0078125
        %v3107 = vmul.f32 %v2975, 0.0078125
        %v3108 = vmul.f32 %v2977, 0.0078125
        %v3109 = vmul.f32 %v2979, 0.0078125
        %v3110 = vmul.f32 %v2981, 0.0078125
        %v3111 = vmul.f32 %v2983, 0.0078125
        %v3112 = vmul.f32 %v3017, 0.0078125
        %v3113 = vmul.f32 %v3019, 0.0078125
        %v3114 = vmul.f32 %v3021, 0.0078125
        %v3115 = vmul.f32 %v3023, 0.0078125
        %v3116 = vmul.f32 %v3025, 0.0078125
        %v3117 = vmul.f32 %v3027, 0.0078125
        %v3118 = vmul.f32 %v3029, 0.0078125
        %v3119 = vmul.f32 %v3031, 0.0078125
        %v3120 = vmul.f32 %v3033, 0.0078125
        %v3121 = vmul.f32 %v3035, 0.0078125
        %v3122 = vmul.f32 %v3037, 0.0078125
        %v3123 = vmul.f32 %v3039, 0.0078125
        %v3124 = vmul.f32 %v3041, 0.0078125
        %v3125 = vmul.f32 %v3043, 0.0078125
        %v3126 = vmul.f32 %v3045, 0.0078125
        %v3127 = vmul.f32 %v3047, 0.0078125
        %v3128 = vmul.f32 %v3049, 0.0078125
        %v3129 = vmul.f32 %v3051, 0.0078125
        %v3130 = vmul.f32 %v3053, 0.0078125
        %v3131 = vmul.f32 %v3055, 0.0078125
        %v3132 = vmul.f32 %v3057, 0.0078125
        %v3133 = vmul.f32 %v3059, 0.0078125
        %v3134 = vmul.f32 %v3061, 0.0078125
        %v3135 = vmul.f32 %v3063, 0.0078125
        %v3136 = vmul.f32 %v3065, 0.0078125
        %v3137 = vmul.f32 %v3067, 0.0078125
        %v3138 = vmul.f32 %v3069, 0.0078125
        %v3139 = vmul.f32 %v3071, 0.0078125
        %v3140 = vmul.f32 %v3073, 0.0078125
        %v3141 = vmul.f32 %v3075, 0.0078125
        %v3142 = vmul.f32 %v3077, 0.0078125
        %v3143 = vmul.f32 %v3079, 0.0078125
        %v3144 = vmul.f32 %v3080, %v3080
        %v3145 = vmul.f32 %v3081, %v3081
        %v3146 = vmul.f32 %v3082, %v3082
        %v3147 = vmul.f32 %v3083, %v3083
        %v3148 = vmul.f32 %v3084, %v3084
        %v3149 = vmul.f32 %v3085, %v3085
        %v3150 = vmul.f32 %v3086, %v3086
        %v3151 = vmul.f32 %v3087, %v3087
        %v3152 = vmul.f32 %v3088, %v3088
        %v3153 = vmul.f32 %v3089, %v3089
        %v3154 = vmul.f32 %v3090, %v3090
        %v3155 = vmul.f32 %v3091, %v3091
        %v3156 = vmul.f32 %v3092, %v3092
        %v3157 = vmul.f32 %v3093, %v3093
        %v3158 = vmul.f32 %v3094, %v3094
        %v3159 = vmul.f32 %v3095, %v3095
        %v3160 = vmul.f32 %v3096, %v3096
        %v3161 = vmul.f32 %v3097, %v3097
        %v3162 = vmul.f32 %v3098, %v3098
        %v3163 = vmul.f32 %v3099, %v3099
        %v3164 = vmul.f32 %v3100, %v3100
        %v3165 = vmul.f32 %v3101, %v3101
        %v3166 = vmul.f32 %v3102, %v3102
        %v3167 = vmul.f32 %v3103, %v3103
        %v3168 = vmul.f32 %v3104, %v3104
        %v3169 = vmul.f32 %v3105, %v3105
        %v3170 = vmul.f32 %v3106, %v3106
        %v3171 = vmul.f32 %v3107, %v3107
        %v3172 = vmul.f32 %v3108, %v3108
        %v3173 = vmul.f32 %v3109, %v3109
        %v3174 = vmul.f32 %v3110, %v3110
        %v3175 = vmul.f32 %v3111, %v3111
        %v3176 = vsub.f32 %v3112, %v3144
        %v3177 = vsub.f32 %v3113, %v3145
        %v3178 = vsub.f32 %v3114, %v3146
        %v3179 = vsub.f32 %v3115, %v3147
        %v3180 = vsub.f32 %v3116, %v3148
        %v3181 = vsub.f32 %v3117, %v3149
        %v3182 = vsub.f32 %v3118, %v3150
        %v3183 = vsub.f32 %v3119, %v3151
        %v3184 = vsub.f32 %v3120, %v3152
        %v3185 = vsub.f32 %v3121, %v3153
        %v3186 = vsub.f32 %v3122, %v3154
        %v3187 = vsub.f32 %v3123, %v3155
        %v3188 = vsub.f32 %v3124, %v3156
        %v3189 = vsub.f32 %v3125, %v3157
        %v3190 = vsub.f32 %v3126, %v3158
        %v3191 = vsub.f32 %v3127, %v3159
        %v3192 = vsub.f32 %v3128, %v3160
        %v3193 = vsub.f32 %v3129, %v3161
        %v3194 = vsub.f32 %v3130, %v3162
        %v3195 = vsub.f32 %v3131, %v3163
        %v3196 = vsub.f32 %v3132, %v3164
        %v3197 = vsub.f32 %v3133, %v3165
        %v3198 = vsub.f32 %v3134, %v3166
        %v3199 = vsub.f32 %v3135, %v3167
        %v3200 = vsub.f32 %v3136, %v3168
        %v3201 = vsub.f32 %v3137, %v3169
        %v3202 = vsub.f32 %v3138, %v3170
        %v3203 = vsub.f32 %v3139, %v3171
        %v3204 = vsub.f32 %v3140, %v3172
        %v3205 = vsub.f32 %v3141, %v3173
        %v3206 = vsub.f32 %v3142, %v3174
        %v3207 = vsub.f32 %v3143, %v3175
        %v3208 = vsub.f32 %v2888, %v3080
        %v3209 = vsub.f32 %v2889, %v3081
        %v3210 = vsub.f32 %v2890, %v3082
        %v3211 = vsub.f32 %v2891, %v3083
        %v3212 = vsub.f32 %v2892, %v3084
        %v3213 = vsub.f32 %v2893, %v3085
        %v3214 = vsub.f32 %v2894, %v3086
        %v3215 = vsub.f32 %v2895, %v3087
        %v3216 = vsub.f32 %v2896, %v3088
        %v3217 = vsub.f32 %v2897, %v3089
        %v3218 = vsub.f32 %v2898, %v3090
        %v3219 = vsub.f32 %v2899, %v3091
        %v3220 = vsub.f32 %v2900, %v3092
        %v3221 = vsub.f32 %v2901, %v3093
        %v3222 = vsub.f32 %v2902, %v3094
        %v3223 = vsub.f32 %v2903, %v3095
        %v3224 = vsub.f32 %v2904, %v3096
        %v3225 = vsub.f32 %v2905, %v3097
        %v3226 = vsub.f32 %v2906, %v3098
        %v3227 = vsub.f32 %v2907, %v3099
        %v3228 = vsub.f32 %v2908, %v3100
        %v3229 = vsub.f32 %v2909, %v3101
        %v3230 = vsub.f32 %v2910, %v3102
        %v3231 = vsub.f32 %v2911, %v3103
        %v3232 = vsub.f32 %v2912, %v3104
        %v3233 = vsub.f32 %v2913, %v3105
        %v3234 = vsub.f32 %v2914, %v3106
        %v3235 = vsub.f32 %v2915, %v3107
        %v3236 = vsub.f32 %v2916, %v3108
        %v3237 = vsub.f32 %v2917, %v3109
        %v3238 = vsub.f32 %v2918, %v3110
        %v3239 = vsub.f32 %v2919, %v3111
        %v3240 = vadd.f32 %v3176, 1e-05
        %v3241 = vadd.f32 %v3177, 1e-05
        %v3242 = vadd.f32 %v3178, 1e-05
        %v3243 = vadd.f32 %v3179, 1e-05
        %v3244 = vadd.f32 %v3180, 1e-05
        %v3245 = vadd.f32 %v3181, 1e-05
        %v3246 = vadd.f32 %v3182, 1e-05
        %v3247 = vadd.f32 %v3183, 1e-05
        %v3248 = vadd.f32 %v3184, 1e-05
        %v3249 = vadd.f32 %v3185, 1e-05
        %v3250 = vadd.f32 %v3186, 1e-05
        %v3251 = vadd.f32 %v3187, 1e-05
        %v3252 = vadd.f32 %v3188, 1e-05
        %v3253 = vadd.f32 %v3189, 1e-05
        %v3254 = vadd.f32 %v3190, 1e-05
        %v3255 = vadd.f32 %v3191, 1e-05
        %v3256 = vadd.f32 %v3192, 1e-05
        %v3257 = vadd.f32 %v3193, 1e-05
        %v3258 = vadd.f32 %v3194, 1e-05
        %v3259 = vadd.f32 %v3195, 1e-05
        %v3260 = vadd.f32 %v3196, 1e-05
        %v3261 = vadd.f32 %v3197, 1e-05
        %v3262 = vadd.f32 %v3198, 1e-05
        %v3263 = vadd.f32 %v3199, 1e-05
        %v3264 = vadd.f32 %v3200, 1e-05
        %v3265 = vadd.f32 %v3201, 1e-05
        %v3266 = vadd.f32 %v3202, 1e-05
        %v3267 = vadd.f32 %v3203, 1e-05
        %v3268 = vadd.f32 %v3204, 1e-05
        %v3269 = vadd.f32 %v3205, 1e-05
        %v3270 = vadd.f32 %v3206, 1e-05
        %v3271 = vadd.f32 %v3207, 1e-05
        %v3272 = vrsqrt.pop %v3240
        %v3273 = vrsqrt.pop %v3241
        %v3274 = vrsqrt.pop %v3242
        %v3275 = vrsqrt.pop %v3243
        %v3276 = vrsqrt.pop %v3244
        %v3277 = vrsqrt.pop %v3245
        %v3278 = vrsqrt.pop %v3246
        %v3279 = vrsqrt.pop %v3247
        %v3280 = vrsqrt.pop %v3248
        %v3281 = vrsqrt.pop %v3249
        %v3282 = vrsqrt.pop %v3250
        %v3283 = vrsqrt.pop %v3251
        %v3284 = vrsqrt.pop %v3252
        %v3285 = vrsqrt.pop %v3253
        %v3286 = vrsqrt.pop %v3254
        %v3287 = vrsqrt.pop %v3255
        %v3288 = vrsqrt.pop %v3256
        %v3289 = vrsqrt.pop %v3257
        %v3290 = vrsqrt.pop %v3258
        %v3291 = vrsqrt.pop %v3259
        %v3292 = vrsqrt.pop %v3260
        %v3293 = vrsqrt.pop %v3261
        %v3294 = vrsqrt.pop %v3262
        %v3295 = vrsqrt.pop %v3263
        %v3296 = vrsqrt.pop %v3264
        %v3297 = vrsqrt.pop %v3265
        %v3298 = vrsqrt.pop %v3266
        %v3299 = vrsqrt.pop %v3267
        %v3300 = vrsqrt.pop %v3268
        %v3301 = vrsqrt.pop %v3269
        %v3302 = vrsqrt.pop %v3270
        %v3303 = vrsqrt.pop %v3271
        %v3304 = vmul.f32 %v3208, %v3272
        %v3305 = vmul.f32 %v3209, %v3273
        %v3306 = vmul.f32 %v3210, %v3274
        %v3307 = vmul.f32 %v3211, %v3275
        %v3308 = vmul.f32 %v3212, %v3276
        %v3309 = vmul.f32 %v3213, %v3277
        %v3310 = vmul.f32 %v3214, %v3278
        %v3311 = vmul.f32 %v3215, %v3279
        %v3312 = vmul.f32 %v3216, %v3280
        %v3313 = vmul.f32 %v3217, %v3281
        %v3314 = vmul.f32 %v3218, %v3282
        %v3315 = vmul.f32 %v3219, %v3283
        %v3316 = vmul.f32 %v3220, %v3284
        %v3317 = vmul.f32 %v3221, %v3285
        %v3318 = vmul.f32 %v3222, %v3286
        %v3319 = vmul.f32 %v3223, %v3287
        %v3320 = vmul.f32 %v3224, %v3288
        %v3321 = vmul.f32 %v3225, %v3289
        %v3322 = vmul.f32 %v3226, %v3290
        %v3323 = vmul.f32 %v3227, %v3291
        %v3324 = vmul.f32 %v3228, %v3292
        %v3325 = vmul.f32 %v3229, %v3293
        %v3326 = vmul.f32 %v3230, %v3294
        %v3327 = vmul.f32 %v3231, %v3295
        %v3328 = vmul.f32 %v3232, %v3296
        %v3329 = vmul.f32 %v3233, %v3297
        %v3330 = vmul.f32 %v3234, %v3298
        %v3331 = vmul.f32 %v3235, %v3299
        %v3332 = vmul.f32 %v3236, %v3300
        %v3333 = vmul.f32 %v3237, %v3301
        %v3334 = vmul.f32 %v3238, %v3302
        %v3335 = vmul.f32 %v3239, %v3303
        %v3336 = vld [vmem:[%s11] sm:$0x1]
        %v3338 = vlaneseq
        %v3339 = vshrl.u32 %v3338, 7
        %v3340 = vsub.s32 0, %v3339
        %v3341 = vrot.slane %v3336, %v3340
        %v3343 = vmul.f32 %v3304, %v3341
        %v3344 = vmul.f32 %v3305, %v3341
        %v3345 = vmul.f32 %v3306, %v3341
        %v3346 = vmul.f32 %v3307, %v3341
        %v3347 = vmul.f32 %v3308, %v3341
        %v3348 = vmul.f32 %v3309, %v3341
        %v3349 = vmul.f32 %v3310, %v3341
        %v3350 = vmul.f32 %v3311, %v3341
        %v3351 = vmul.f32 %v3312, %v3341
        %v3352 = vmul.f32 %v3313, %v3341
        %v3353 = vmul.f32 %v3314, %v3341
        %v3354 = vmul.f32 %v3315, %v3341
        %v3355 = vmul.f32 %v3316, %v3341
        %v3356 = vmul.f32 %v3317, %v3341
        %v3357 = vmul.f32 %v3318, %v3341
        %v3358 = vmul.f32 %v3319, %v3341
        %v3359 = vmul.f32 %v3320, %v3341
        %v3360 = vmul.f32 %v3321, %v3341
        %v3361 = vmul.f32 %v3322, %v3341
        %v3362 = vmul.f32 %v3323, %v3341
        %v3363 = vmul.f32 %v3324, %v3341
        %v3364 = vmul.f32 %v3325, %v3341
        %v3365 = vmul.f32 %v3326, %v3341
        %v3366 = vmul.f32 %v3327, %v3341
        %v3367 = vmul.f32 %v3328, %v3341
        %v3368 = vmul.f32 %v3329, %v3341
        %v3369 = vmul.f32 %v3330, %v3341
        %v3370 = vmul.f32 %v3331, %v3341
        %v3371 = vmul.f32 %v3332, %v3341
        %v3372 = vmul.f32 %v3333, %v3341
        %v3373 = vmul.f32 %v3334, %v3341
        %v3374 = vmul.f32 %v3335, %v3341
        %v3375 = vld [vmem:[%s12] sm:$0x1]
        %v3377 = vlaneseq
        %v3378 = vshrl.u32 %v3377, 7
        %v3379 = vsub.s32 0, %v3378
        %v3380 = vrot.slane %v3375, %v3379
        %v3382 = vadd.f32 %v3343, %v3380
        %v3383 = vadd.f32 %v3344, %v3380
        %v3384 = vadd.f32 %v3345, %v3380
        %v3385 = vadd.f32 %v3346, %v3380
        %v3386 = vadd.f32 %v3347, %v3380
        %v3387 = vadd.f32 %v3348, %v3380
        %v3388 = vadd.f32 %v3349, %v3380
        %v3389 = vadd.f32 %v3350, %v3380
        %v3390 = vadd.f32 %v3351, %v3380
        %v3391 = vadd.f32 %v3352, %v3380
        %v3392 = vadd.f32 %v3353, %v3380
        %v3393 = vadd.f32 %v3354, %v3380
        %v3394 = vadd.f32 %v3355, %v3380
        %v3395 = vadd.f32 %v3356, %v3380
        %v3396 = vadd.f32 %v3357, %v3380
        %v3397 = vadd.f32 %v3358, %v3380
        %v3398 = vadd.f32 %v3359, %v3380
        %v3399 = vadd.f32 %v3360, %v3380
        %v3400 = vadd.f32 %v3361, %v3380
        %v3401 = vadd.f32 %v3362, %v3380
        %v3402 = vadd.f32 %v3363, %v3380
        %v3403 = vadd.f32 %v3364, %v3380
        %v3404 = vadd.f32 %v3365, %v3380
        %v3405 = vadd.f32 %v3366, %v3380
        %v3406 = vadd.f32 %v3367, %v3380
        %v3407 = vadd.f32 %v3368, %v3380
        %v3408 = vadd.f32 %v3369, %v3380
        %v3409 = vadd.f32 %v3370, %v3380
        %v3410 = vadd.f32 %v3371, %v3380
        %v3411 = vadd.f32 %v3372, %v3380
        %v3412 = vadd.f32 %v3373, %v3380
        %v3413 = vadd.f32 %v3374, %v3380
        %3414 = vst [vmem:[%s556] sm:$0xff] %v3382
        %3415 = vst [vmem:[%s556 + $0x8] sm:$0xff] %v3383
        %3416 = vst [vmem:[%s556 + $0x10] sm:$0xff] %v3384
        %3417 = vst [vmem:[%s556 + $0x18] sm:$0xff] %v3385
        %3418 = vst [vmem:[%s556 + $0x20] sm:$0xff] %v3386
        %3419 = vst [vmem:[%s556 + $0x28] sm:$0xff] %v3387
        %3420 = vst [vmem:[%s556 + $0x30] sm:$0xff] %v3388
        %3421 = vst [vmem:[%s556 + $0x38] sm:$0xff] %v3389
        %3422 = vst [vmem:[%s556 + $0x40] sm:$0xff] %v3390
        %3423 = vst [vmem:[%s556 + $0x48] sm:$0xff] %v3391
        %3424 = vst [vmem:[%s556 + $0x50] sm:$0xff] %v3392
        %3425 = vst [vmem:[%s556 + $0x58] sm:$0xff] %v3393
        %3426 = vst [vmem:[%s556 + $0x60] sm:$0xff] %v3394
        %3427 = vst [vmem:[%s556 + $0x68] sm:$0xff] %v3395
        %3428 = vst [vmem:[%s556 + $0x70] sm:$0xff] %v3396
        %3429 = vst [vmem:[%s556 + $0x78] sm:$0xff] %v3397
        %3430 = vst [vmem:[%s556 + $0x80] sm:$0xff] %v3398
        %3431 = vst [vmem:[%s556 + $0x88] sm:$0xff] %v3399
        %3432 = vst [vmem:[%s556 + $0x90] sm:$0xff] %v3400
        %3433 = vst [vmem:[%s556 + $0x98] sm:$0xff] %v3401
        %3434 = vst [vmem:[%s556 + $0xa0] sm:$0xff] %v3402
        %3435 = vst [vmem:[%s556 + $0xa8] sm:$0xff] %v3403
        %3436 = vst [vmem:[%s556 + $0xb0] sm:$0xff] %v3404
        %3437 = vst [vmem:[%s556 + $0xb8] sm:$0xff] %v3405
        %3438 = vst [vmem:[%s556 + $0xc0] sm:$0xff] %v3406
        %3439 = vst [vmem:[%s556 + $0xc8] sm:$0xff] %v3407
        %3440 = vst [vmem:[%s556 + $0xd0] sm:$0xff] %v3408
        %3441 = vst [vmem:[%s556 + $0xd8] sm:$0xff] %v3409
        %3442 = vst [vmem:[%s556 + $0xe0] sm:$0xff] %v3410
        %3443 = vst [vmem:[%s556 + $0xe8] sm:$0xff] %v3411
        %3444 = vst [vmem:[%s556 + $0xf0] sm:$0xff] %v3412
        %3445 = vst [vmem:[%s556 + $0xf8] sm:$0xff] %v3413
        %s3446 = sand.u32 %s326, 1
        %s3447 = scalar_lea.sflag [#allocation4], %s3446
        %s3448 = sand.u32 %s326, 1
        %s3449 = smul.addr %s3448, 256
        %s3450 = scalar_lea.vmem [#allocation13], %s3449
        // Predicated region
        $region97: #{tpu_custom_call.1} parent=71 // pred_check
          %p3451 = pneg %p336
        $region98: #{tpu_custom_call.1} parent=71 // pred_check_branch
          %3453 = sbr.rel (%p3451) target = $region100
        $region99: #{tpu_custom_call.1} parent=71 // pred_region
          %s3454 = smul.u32 32, %s35
          %s3456 = ssub.s32 4096, 4096
          %3457 = vsyncadd %s3447, %s3456
          %s3458 = smul.addr %s3454, 128
          %s3459 = scalar_lea.hbm %s13, %s3458
          %s3460 = sshll.u32 %s3450, 4
          %s3461 = int_to_ptr.vmem [resolvable:$true] %s3460
          %3466 = dma.vmem_to_hbm [thread:$0]  %s3461, 4096, %s3459, %s3447, 128, 128, 8
        $region100: #{tpu_custom_call.1} parent=71 // pred_fallthru
          _
      $region72: #{tpu_custom_call.1} parent=5 // pred_fallthru
        _
      %p3467 = scmp.le.s32.totalorder 2, %s30
      // Predicated region
      $region101: #{tpu_custom_call.1} parent=5 // pred_check
        %p3468 = pneg %p3467
      $region102: #{tpu_custom_call.1} parent=5 // pred_check_branch
        %3470 = sbr.rel (%p3468) target = $region104
      $region103: #{tpu_custom_call.1} parent=5 // pred_region
        %s3471 = ssub.s32 %s30, 2
        // Predicated region
        $region105: #{tpu_custom_call.1} parent=103 // pred_check
          %p3472 = pneg %p342
        $region106: #{tpu_custom_call.1} parent=103 // pred_check_branch
          %3474 = sbr.rel (%p3472) target = $region108
        $region107: #{tpu_custom_call.1} parent=103 // pred_region
          %s3475 = sand.u32 %s327, 1
          %s3476 = scalar_lea.sflag [#allocation4], %s3475
          %s3477 = sand.u32 %s327, 1
          %s3478 = smul.addr %s3477, 256
          %s3479 = scalar_lea.vmem [#allocation13], %s3478
          %3480 = dma.done %s3476, 4096
        $region108: #{tpu_custom_call.1} parent=103 // pred_fallthru
          _
      $region104: #{tpu_custom_call.1} parent=5 // pred_fallthru
        _
    $region6: #{tpu_custom_call.1} parent=1 // loop_footer
      %s34 = sadd.s32 1, %s30
    $region7: #{tpu_custom_call.1} parent=1 // loop_footer_branch
      %29 = sbr.rel target = $region3
    $region8: #{tpu_custom_call.1} parent=1 // loop_exit
      _
    %3481 = vsyncpa [#allocation3], 1
    %s3482 = scalar_lea.sflag [#allocation3], 1
    %3483 = vsyncpa %s3482, 1
    %3484 = vsyncpa [#allocation6], 1
    %s3485 = scalar_lea.sflag [#allocation6], 1
    %3486 = vsyncpa %s3485, 1
    %3487 = vsyncpa [#allocation9], 1
    %3488 = vsyncpa [#allocation12], 1
    %3489 = vsyncpa [#allocation4], 1
    %s3490 = scalar_lea.sflag [#allocation4], 1
    %3491 = vsyncpa %s3490, 1

// kernel: tpu_custom_call.1
$region0: #{tpu_custom_call.1}
  #allocation0 [shape = 'u32[]', space=smem, size = 0x4, offset = 0x4, fixed_abs, tag = 'smem constant byte address 0x4 - core index']
  #allocation1 [shape = 'u32[144,128]{1,0:T(1,128)}', space=vmem, size = 0x12000, scoped, tag = 'internal scratch']
  %s0 = inlined_call_operand.hbm [shape: f32[512,128], index: 0, kind: input, shape index: {}]
  %s1 = inlined_call_operand.hbm [shape: f32[512,128], index: 1, kind: input, shape index: {}]
  %s2 = inlined_call_operand.hbm [shape: f32[128,128], index: 2, kind: input, shape index: {}]
  %s3 = inlined_call_operand.hbm [shape: f32[128,128], index: 3, kind: input, shape index: {}]
  %s4 = inlined_call_operand.vmem [shape: f32[1,128], index: 4, kind: input, shape index: {}]
  %s5 = inlined_call_operand.vmem [shape: f32[1,128], index: 5, kind: input, shape index: {}]
  %s6 = inlined_call_operand.vmem [shape: f32[1,128], index: 6, kind: input, shape index: {}]
  %s7 = inlined_call_operand.hbm [shape: f32[128,512], index: 7, kind: input, shape index: {}]
  %s8 = inlined_call_operand.vmem [shape: f32[1,512], index: 8, kind: input, shape index: {}]
  %s9 = inlined_call_operand.hbm [shape: f32[512,128], index: 9, kind: input, shape index: {}]
  %s10 = inlined_call_operand.vmem [shape: f32[1,128], index: 10, kind: input, shape index: {}]
  %s11 = inlined_call_operand.vmem [shape: f32[1,128], index: 11, kind: input, shape index: {}]
  %s12 = inlined_call_operand.vmem [shape: f32[1,128], index: 12, kind: input, shape index: {}]
  %s13 = inlined_call_operand.hbm [shape: f32[512,128], index: 13, kind: output, shape index: {}]
  %s14 = sld [smem:[#allocation0]]
  $region109: #{tpu_custom_call.1} parent=0
    _
  %s16 = ssub.s32 1, %s14
  %s17 = scalar_select 0, %s16, %s14
  $region1: #{tpu_custom_call.1} parent=0
    #allocation2 [shape = 'u8[262144]{0}', space=vmem, size = 0x40000, scoped, tag = 'input window, operand 0']
    #allocation3 [shape = 's32[2]{0}', space=sflag, size = 0x8, scoped, tag = 'scoped memory for tpu_custom_call.1']
    #allocation4 [shape = 's32[2]{0}', space=sflag, size = 0x8, scoped, tag = 'scoped memory for tpu_custom_call.1']
    #allocation5 [shape = 'u8[262144]{0}', space=vmem, size = 0x40000, scoped, tag = 'input window, operand 1']
    #allocation6 [shape = 's32[2]{0}', space=sflag, size = 0x8, scoped, tag = 'scoped memory for tpu_custom_call.1']
    #allocation7 [shape = 'u8[65536]{0}', space=vmem, size = 0x10000, scoped, tag = 'input window, operand 2, single buffered']
    #allocation8 [shape = 'u8[65536]{0}', space=vmem, size = 0x10000, scoped, tag = 'input window, operand 3, single buffered']
    #allocation9 [shape = 's32[1]{0}', space=sflag, size = 0x4, scoped, tag = 'scoped memory for tpu_custom_call.1']
    #allocation10 [shape = 'u8[262144]{0}', space=vmem, size = 0x40000, scoped, tag = 'input window, operand 7, single buffered']
    #allocation11 [shape = 'u8[262144]{0}', space=vmem, size = 0x40000, scoped, tag = 'input window, operand 9, single buffered']
    #allocation12 [shape = 's32[1]{0}', space=sflag, size = 0x4, scoped, tag = 'scoped memory for tpu_custom_call.1']
    #allocation13 [shape = 'u8[262144]{0}', space=vmem, size = 0x40000, scoped, tag = 'output window, operand 0']
    %18 = vsyncpa [#allocation3], 0
    %s19 = scalar_lea.sflag [#allocation3], 1
    %20 = vsyncpa %s19, 0
    %21 = vsyncpa [#allocation6], 0
    %s22 = scalar_lea.sflag [#allocation6], 1
    %23 = vsyncpa %s22, 0
    %24 = vsyncpa [#allocation9], 0
    %25 = vsyncpa [#allocation12], 0
    %26 = vsyncpa [#allocation4], 0
    %s27 = scalar_lea.sflag [#allocation4], 1
    %28 = vsyncpa %s27, 0
    loop: start=0, step=1, limit=4
    $region2: #{tpu_custom_call.1} parent=1 // loop_pre_header
      _
    $region3: #{tpu_custom_call.1} parent=1 // loop_header
      %s30 = sphi 0, %s34
      %p31 = scmp.ge.s32.totalorder %s30, 4
      %s40 = sphi 0, %s42
      %s43 = sphi 0, %s40
      %s44 = sphi 0, %s43
      %s60 = sphi 0, %s44
      %s66 = sphi 0, %s68
      %s69 = sphi 0, %s66
      %s70 = sphi 0, %s69
      %s86 = sphi 0, %s70
      %s90 = sphi 0, %s90
      %s92 = sphi 0, %s90
      %s93 = sphi 0, %s92
      %s107 = sphi 0, %s93
      %s111 = sphi 0, %s111
      %s113 = sphi 0, %s111
      %s114 = sphi 0, %s113
      %s128 = sphi 0, %s114
      %s132 = sphi 0, %s132
      %s134 = sphi 0, %s132
      %s135 = sphi 0, %s134
      %s149 = sphi 0, %s135
      %s153 = sphi 0, %s153
      %s155 = sphi 0, %s153
      %s156 = sphi 0, %s155
      %s170 = sphi 0, %s156
      %s174 = sphi 0, %s174
      %s176 = sphi 0, %s174
      %s177 = sphi 0, %s176
      %s191 = sphi 0, %s177
      %s195 = sphi 0, %s195
      %s197 = sphi 0, %s195
      %s198 = sphi 0, %s197
      %s212 = sphi 0, %s198
      %s216 = sphi 0, %s216
      %s218 = sphi 0, %s216
      %s219 = sphi 0, %s218
      %s233 = sphi 0, %s219
      %s237 = sphi 0, %s237
      %s239 = sphi 0, %s237
      %s240 = sphi 0, %s239
      %s254 = sphi 0, %s240
      %s258 = sphi 0, %s258
      %s260 = sphi 0, %s258
      %s261 = sphi 0, %s260
      %s275 = sphi 0, %s261
      %s279 = sphi 0, %s279
      %s281 = sphi 0, %s279
      %s282 = sphi 0, %s281
      %s296 = sphi 0, %s282
      %s300 = sphi 0, %s300
      %s302 = sphi 0, %s300
      %s303 = sphi 0, %s302
      %s317 = sphi 0, %s303
      %s323 = sphi 0, %s325
      %s326 = sphi 0, %s323
      %s327 = sphi 0, %s326
      %s343 = sphi 0, %s327
    $region4: #{tpu_custom_call.1} parent=1 // loop_header_branch
      %33 = sbr.rel (%p31) target = $region8
    $region5: #{tpu_custom_call.1} parent=1 // loop_body
      %s35 = ssub.s32 %s30, 1
      %s36 = ssub.s32 %s30, 2
      %s37 = sadd.s32 %s30, 1
      %s38 = ssub.s32 %s30, %s37
      %p39 = scmp.eq.s32.totalorder %s38, 0
      %s41 = sadd.s32 %s40, 1
      %s42 = scalar_select %p39, %s40, %s41
      %p45 = pneg %p39
      %p46 = scmp.eq.s32.totalorder %s30, 1
      %p47 = por %p45, %p46
      %p48 = scmp.ne.s32.totalorder %s40, %s43
      %p49 = scmp.eq.s32.totalorder %s30, 0
      %p50 = por %p48, %p49
      %p51 = scmp.ne.s32.totalorder %s40, %s43
      %p52 = scmp.eq.s32.totalorder %s35, 1
      %p53 = por %p51, %p52
      %p54 = scmp.ne.s32.totalorder %s43, %s44
      %p55 = scmp.eq.s32.totalorder %s35, 0
      %p56 = por %p54, %p55
      %p57 = scmp.ne.s32.totalorder %s43, %s44
      %p58 = scmp.eq.s32.totalorder %s36, 1
      %p59 = por %p57, %p58
      %p61 = scmp.ne.s32.totalorder %s44, %s60
      %p62 = scmp.eq.s32.totalorder %s36, 0
      %p63 = por %p61, %p62
      %s64 = ssub.s32 %s30, %s37
      %p65 = scmp.eq.s32.totalorder %s64, 0
      %s67 = sadd.s32 %s66, 1
      %s68 = scalar_select %p65, %s66, %s67
      %p71 = pneg %p65
      %p72 = scmp.eq.s32.totalorder %s30, 1
      %p73 = por %p71, %p72
      %p74 = scmp.ne.s32.totalorder %s66, %s69
      %p75 = scmp.eq.s32.totalorder %s30, 0
      %p76 = por %p74, %p75
      %p77 = scmp.ne.s32.totalorder %s66, %s69
      %p78 = scmp.eq.s32.totalorder %s35, 1
      %p79 = por %p77, %p78
      %p80 = scmp.ne.s32.totalorder %s69, %s70
      %p81 = scmp.eq.s32.totalorder %s35, 0
      %p82 = por %p80, %p81
      %p83 = scmp.ne.s32.totalorder %s69, %s70
      %p84 = scmp.eq.s32.totalorder %s36, 1
      %p85 = por %p83, %p84
      %p87 = scmp.ne.s32.totalorder %s70, %s86
      %p88 = scmp.eq.s32.totalorder %s36, 0
      %p89 = por %p87, %p88
      %s91 = sadd.s32 %s90, 1
      %p94 = scmp.eq.s32.totalorder %s30, 1
      %p95 = scmp.ne.s32.totalorder %s90, %s92
      %p96 = scmp.eq.s32.totalorder %s30, 0
      %p97 = por %p95, %p96
      %p98 = scmp.ne.s32.totalorder %s90, %s92
      %p99 = scmp.eq.s32.totalorder %s35, 1
      %p100 = por %p98, %p99
      %p101 = scmp.ne.s32.totalorder %s92, %s93
      %p102 = scmp.eq.s32.totalorder %s35, 0
      %p103 = por %p101, %p102
      %p104 = scmp.ne.s32.totalorder %s92, %s93
      %p105 = scmp.eq.s32.totalorder %s36, 1
      %p106 = por %p104, %p105
      %p108 = scmp.ne.s32.totalorder %s93, %s107
      %p109 = scmp.eq.s32.totalorder %s36, 0
      %p110 = por %p108, %p109
      %s112 = sadd.s32 %s111, 1
      %p115 = scmp.eq.s32.totalorder %s30, 1
      %p116 = scmp.ne.s32.totalorder %s111, %s113
      %p117 = scmp.eq.s32.totalorder %s30, 0
      %p118 = por %p116, %p117
      %p119 = scmp.ne.s32.totalorder %s111, %s113
      %p120 = scmp.eq.s32.totalorder %s35, 1
      %p121 = por %p119, %p120
      %p122 = scmp.ne.s32.totalorder %s113, %s114
      %p123 = scmp.eq.s32.totalorder %s35, 0
      %p124 = por %p122, %p123
      %p125 = scmp.ne.s32.totalorder %s113, %s114
      %p126 = scmp.eq.s32.totalorder %s36, 1
      %p127 = por %p125, %p126
      %p129 = scmp.ne.s32.totalorder %s114, %s128
      %p130 = scmp.eq.s32.totalorder %s36, 0
      %p131 = por %p129, %p130
      %s133 = sadd.s32 %s132, 1
      %p136 = scmp.eq.s32.totalorder %s30, 1
      %p137 = scmp.ne.s32.totalorder %s132, %s134
      %p138 = scmp.eq.s32.totalorder %s30, 0
      %p139 = por %p137, %p138
      %p140 = scmp.ne.s32.totalorder %s132, %s134
      %p141 = scmp.eq.s32.totalorder %s35, 1
      %p142 = por %p140, %p141
      %p143 = scmp.ne.s32.totalorder %s134, %s135
      %p144 = scmp.eq.s32.totalorder %s35, 0
      %p145 = por %p143, %p144
      %p146 = scmp.ne.s32.totalorder %s134, %s135
      %p147 = scmp.eq.s32.totalorder %s36, 1
      %p148 = por %p146, %p147
      %p150 = scmp.ne.s32.totalorder %s135, %s149
      %p151 = scmp.eq.s32.totalorder %s36, 0
      %p152 = por %p150, %p151
      %s154 = sadd.s32 %s153, 1
      %p157 = scmp.eq.s32.totalorder %s30, 1
      %p158 = scmp.ne.s32.totalorder %s153, %s155
      %p159 = scmp.eq.s32.totalorder %s30, 0
      %p160 = por %p158, %p159
      %p161 = scmp.ne.s32.totalorder %s153, %s155
      %p162 = scmp.eq.s32.totalorder %s35, 1
      %p163 = por %p161, %p162
      %p164 = scmp.ne.s32.totalorder %s155, %s156
      %p165 = scmp.eq.s32.totalorder %s35, 0
      %p166 = por %p164, %p165
      %p167 = scmp.ne.s32.totalorder %s155, %s156
      %p168 = scmp.eq.s32.totalorder %s36, 1
      %p169 = por %p167, %p168
      %p171 = scmp.ne.s32.totalorder %s156, %s170
      %p172 = scmp.eq.s32.totalorder %s36, 0
      %p173 = por %p171, %p172
      %s175 = sadd.s32 %s174, 1
      %p178 = scmp.eq.s32.totalorder %s30, 1
      %p179 = scmp.ne.s32.totalorder %s174, %s176
      %p180 = scmp.eq.s32.totalorder %s30, 0
      %p181 = por %p179, %p180
      %p182 = scmp.ne.s32.totalorder %s174, %s176
      %p183 = scmp.eq.s32.totalorder %s35, 1
      %p184 = por %p182, %p183
      %p185 = scmp.ne.s32.totalorder %s176, %s177
      %p186 = scmp.eq.s32.totalorder %s35, 0
      %p187 = por %p185, %p186
      %p188 = scmp.ne.s32.totalorder %s176, %s177
      %p189 = scmp.eq.s32.totalorder %s36, 1
      %p190 = por %p188, %p189
      %p192 = scmp.ne.s32.totalorder %s177, %s191
      %p193 = scmp.eq.s32.totalorder %s36, 0
      %p194 = por %p192, %p193
      %s196 = sadd.s32 %s195, 1
      %p199 = scmp.eq.s32.totalorder %s30, 1
      %p200 = scmp.ne.s32.totalorder %s195, %s197
      %p201 = scmp.eq.s32.totalorder %s30, 0
      %p202 = por %p200, %p201
      %p203 = scmp.ne.s32.totalorder %s195, %s197
      %p204 = scmp.eq.s32.totalorder %s35, 1
      %p205 = por %p203, %p204
      %p206 = scmp.ne.s32.totalorder %s197, %s198
      %p207 = scmp.eq.s32.totalorder %s35, 0
      %p208 = por %p206, %p207
      %p209 = scmp.ne.s32.totalorder %s197, %s198
      %p210 = scmp.eq.s32.totalorder %s36, 1
      %p211 = por %p209, %p210
      %p213 = scmp.ne.s32.totalorder %s198, %s212
      %p214 = scmp.eq.s32.totalorder %s36, 0
      %p215 = por %p213, %p214
      %s217 = sadd.s32 %s216, 1
      %p220 = scmp.eq.s32.totalorder %s30, 1
      %p221 = scmp.ne.s32.totalorder %s216, %s218
      %p222 = scmp.eq.s32.totalorder %s30, 0
      %p223 = por %p221, %p222
      %p224 = scmp.ne.s32.totalorder %s216, %s218
      %p225 = scmp.eq.s32.totalorder %s35, 1
      %p226 = por %p224, %p225
      %p227 = scmp.ne.s32.totalorder %s218, %s219
      %p228 = scmp.eq.s32.totalorder %s35, 0
      %p229 = por %p227, %p228
      %p230 = scmp.ne.s32.totalorder %s218, %s219
      %p231 = scmp.eq.s32.totalorder %s36, 1
      %p232 = por %p230, %p231
      %p234 = scmp.ne.s32.totalorder %s219, %s233
      %p235 = scmp.eq.s32.totalorder %s36, 0
      %p236 = por %p234, %p235
      %s238 = sadd.s32 %s237, 1
      %p241 = scmp.eq.s32.totalorder %s30, 1
      %p242 = scmp.ne.s32.totalorder %s237, %s239
      %p243 = scmp.eq.s32.totalorder %s30, 0
      %p244 = por %p242, %p243
      %p245 = scmp.ne.s32.totalorder %s237, %s239
      %p246 = scmp.eq.s32.totalorder %s35, 1
      %p247 = por %p245, %p246
      %p248 = scmp.ne.s32.totalorder %s239, %s240
      %p249 = scmp.eq.s32.totalorder %s35, 0
      %p250 = por %p248, %p249
      %p251 = scmp.ne.s32.totalorder %s239, %s240
      %p252 = scmp.eq.s32.totalorder %s36, 1
      %p253 = por %p251, %p252
      %p255 = scmp.ne.s32.totalorder %s240, %s254
      %p256 = scmp.eq.s32.totalorder %s36, 0
      %p257 = por %p255, %p256
      %s259 = sadd.s32 %s258, 1
      %p262 = scmp.eq.s32.totalorder %s30, 1
      %p263 = scmp.ne.s32.totalorder %s258, %s260
      %p264 = scmp.eq.s32.totalorder %s30, 0
      %p265 = por %p263, %p264
      %p266 = scmp.ne.s32.totalorder %s258, %s260
      %p267 = scmp.eq.s32.totalorder %s35, 1
      %p268 = por %p266, %p267
      %p269 = scmp.ne.s32.totalorder %s260, %s261
      %p270 = scmp.eq.s32.totalorder %s35, 0
      %p271 = por %p269, %p270
      %p272 = scmp.ne.s32.totalorder %s260, %s261
      %p273 = scmp.eq.s32.totalorder %s36, 1
      %p274 = por %p272, %p273
      %p276 = scmp.ne.s32.totalorder %s261, %s275
      %p277 = scmp.eq.s32.totalorder %s36, 0
      %p278 = por %p276, %p277
      %s280 = sadd.s32 %s279, 1
      %p283 = scmp.eq.s32.totalorder %s30, 1
      %p284 = scmp.ne.s32.totalorder %s279, %s281
      %p285 = scmp.eq.s32.totalorder %s30, 0
      %p286 = por %p284, %p285
      %p287 = scmp.ne.s32.totalorder %s279, %s281
      %p288 = scmp.eq.s32.totalorder %s35, 1
      %p289 = por %p287, %p288
      %p290 = scmp.ne.s32.totalorder %s281, %s282
      %p291 = scmp.eq.s32.totalorder %s35, 0
      %p292 = por %p290, %p291
      %p293 = scmp.ne.s32.totalorder %s281, %s282
      %p294 = scmp.eq.s32.totalorder %s36, 1
      %p295 = por %p293, %p294
      %p297 = scmp.ne.s32.totalorder %s282, %s296
      %p298 = scmp.eq.s32.totalorder %s36, 0
      %p299 = por %p297, %p298
      %s301 = sadd.s32 %s300, 1
      %p304 = scmp.eq.s32.totalorder %s30, 1
      %p305 = scmp.ne.s32.totalorder %s300, %s302
      %p306 = scmp.eq.s32.totalorder %s30, 0
      %p307 = por %p305, %p306
      %p308 = scmp.ne.s32.totalorder %s300, %s302
      %p309 = scmp.eq.s32.totalorder %s35, 1
      %p310 = por %p308, %p309
      %p311 = scmp.ne.s32.totalorder %s302, %s303
      %p312 = scmp.eq.s32.totalorder %s35, 0
      %p313 = por %p311, %p312
      %p314 = scmp.ne.s32.totalorder %s302, %s303
      %p315 = scmp.eq.s32.totalorder %s36, 1
      %p316 = por %p314, %p315
      %p318 = scmp.ne.s32.totalorder %s303, %s317
      %p319 = scmp.eq.s32.totalorder %s36, 0
      %p320 = por %p318, %p319
      %s321 = ssub.s32 %s30, %s37
      %p322 = scmp.eq.s32.totalorder %s321, 0
      %s324 = sadd.s32 %s323, 1
      %s325 = scalar_select %p322, %s323, %s324
      %p328 = pneg %p322
      %p329 = scmp.eq.s32.totalorder %s30, 1
      %p330 = por %p328, %p329
      %p331 = scmp.ne.s32.totalorder %s323, %s326
      %p332 = scmp.eq.s32.totalorder %s30, 0
      %p333 = por %p331, %p332
      %p334 = scmp.ne.s32.totalorder %s323, %s326
      %p335 = scmp.eq.s32.totalorder %s35, 1
      %p336 = por %p334, %p335
      %p337 = scmp.ne.s32.totalorder %s326, %s327
      %p338 = scmp.eq.s32.totalorder %s35, 0
      %p339 = por %p337, %p338
      %p340 = scmp.ne.s32.totalorder %s326, %s327
      %p341 = scmp.eq.s32.totalorder %s36, 1
      %p342 = por %p340, %p341
      %p344 = scmp.ne.s32.totalorder %s327, %s343
      %p345 = scmp.eq.s32.totalorder %s36, 0
      %p346 = por %p344, %p345
      %p347 = scmp.le.s32.totalorder 1, %s30
      %p348 = scmp.lt.s32.totalorder %s30, 3
      %p349 = pnand %p347, %p348
      %p350 = pneg %p349
      // Predicated region
      $region9: #{tpu_custom_call.1} parent=5 // pred_check
        _
      $region10: #{tpu_custom_call.1} parent=5 // pred_check_branch
        %352 = sbr.rel (%p349) target = $region12
      $region11: #{tpu_custom_call.1} parent=5 // pred_region
        %s353 = ssub.s32 %s30, 1
        // Predicated region
        $region13: #{tpu_custom_call.1} parent=11 // pred_check
          %p354 = pneg %p103
        $region14: #{tpu_custom_call.1} parent=11 // pred_check_branch
          %356 = sbr.rel (%p354) target = $region16
        $region15: #{tpu_custom_call.1} parent=11 // pred_region
          %s358 = ssub.s32 2048, 2048
          %359 = vsyncadd [#allocation6], %s358
          %s360 = sshll.u32 [#allocation7], 4
          %s361 = int_to_ptr.vmem [resolvable:$true] %s360
          %366 = dma.hbm_to_vmem [thread:$0]  %s2, 2048, %s361, [#allocation6], 128, 128, 8
        $region16: #{tpu_custom_call.1} parent=11 // pred_fallthru
          _
        // Predicated region
        $region17: #{tpu_custom_call.1} parent=11 // pred_check
          %p367 = pneg %p124
        $region18: #{tpu_custom_call.1} parent=11 // pred_check_branch
          %369 = sbr.rel (%p367) target = $region20
        $region19: #{tpu_custom_call.1} parent=11 // pred_region
          %s371 = ssub.s32 2048, 2048
          %372 = vsyncadd [#allocation9], %s371
          %s373 = sshll.u32 [#allocation8], 4
          %s374 = int_to_ptr.vmem [resolvable:$true] %s373
          %379 = dma.hbm_to_vmem [thread:$0]  %s3, 2048, %s374, [#allocation9], 128, 128, 8
        $region20: #{tpu_custom_call.1} parent=11 // pred_fallthru
          _
        // Predicated region
        $region21: #{tpu_custom_call.1} parent=11 // pred_check
          %p380 = pneg %p145
        $region22: #{tpu_custom_call.1} parent=11 // pred_check_branch
          %382 = sbr.rel (%p380) target = $region24
        $region23: #{tpu_custom_call.1} parent=11 // pred_region
          _
        $region24: #{tpu_custom_call.1} parent=11 // pred_fallthru
          _
        // Predicated region
        $region25: #{tpu_custom_call.1} parent=11 // pred_check
          %p383 = pneg %p166
        $region26: #{tpu_custom_call.1} parent=11 // pred_check_branch
          %385 = sbr.rel (%p383) target = $region28
        $region27: #{tpu_custom_call.1} parent=11 // pred_region
          _
        $region28: #{tpu_custom_call.1} parent=11 // pred_fallthru
          _
        // Predicated region
        $region29: #{tpu_custom_call.1} parent=11 // pred_check
          %p386 = pneg %p187
        $region30: #{tpu_custom_call.1} parent=11 // pred_check_branch
          %388 = sbr.rel (%p386) target = $region32
        $region31: #{tpu_custom_call.1} parent=11 // pred_region
          _
        $region32: #{tpu_custom_call.1} parent=11 // pred_fallthru
          _
        // Predicated region
        $region33: #{tpu_custom_call.1} parent=11 // pred_check
          %p389 = pneg %p208
        $region34: #{tpu_custom_call.1} parent=11 // pred_check_branch
          %391 = sbr.rel (%p389) target = $region36
        $region35: #{tpu_custom_call.1} parent=11 // pred_region
          %s393 = ssub.s32 8192, 8192
          %394 = vsyncadd [#allocation9], %s393
          %s395 = sshll.u32 [#allocation10], 4
          %s396 = int_to_ptr.vmem [resolvable:$true] %s395
          %401 = dma.hbm_to_vmem [thread:$0]  %s7, 8192, %s396, [#allocation9], 512, 512, 32
        $region36: #{tpu_custom_call.1} parent=11 // pred_fallthru
          _
        // Predicated region
        $region37: #{tpu_custom_call.1} parent=11 // pred_check
          %p402 = pneg %p229
        $region38: #{tpu_custom_call.1} parent=11 // pred_check_branch
          %404 = sbr.rel (%p402) target = $region40
        $region39: #{tpu_custom_call.1} parent=11 // pred_region
          _
        $region40: #{tpu_custom_call.1} parent=11 // pred_fallthru
          _
        // Predicated region
        $region41: #{tpu_custom_call.1} parent=11 // pred_check
          %p405 = pneg %p250
        $region42: #{tpu_custom_call.1} parent=11 // pred_check_branch
          %407 = sbr.rel (%p405) target = $region44
        $region43: #{tpu_custom_call.1} parent=11 // pred_region
          %s409 = ssub.s32 8192, 8192
          %410 = vsyncadd [#allocation12], %s409
          %s411 = sshll.u32 [#allocation11], 4
          %s412 = int_to_ptr.vmem [resolvable:$true] %s411
          %417 = dma.hbm_to_vmem [thread:$0]  %s9, 8192, %s412, [#allocation12], 128, 128, 8
        $region44: #{tpu_custom_call.1} parent=11 // pred_fallthru
          _
        // Predicated region
        $region45: #{tpu_custom_call.1} parent=11 // pred_check
          %p418 = pneg %p271
        $region46: #{tpu_custom_call.1} parent=11 // pred_check_branch
          %420 = sbr.rel (%p418) target = $region48
        $region47: #{tpu_custom_call.1} parent=11 // pred_region
          _
        $region48: #{tpu_custom_call.1} parent=11 // pred_fallthru
          _
        // Predicated region
        $region49: #{tpu_custom_call.1} parent=11 // pred_check
          %p421 = pneg %p292
        $region50: #{tpu_custom_call.1} parent=11 // pred_check_branch
          %423 = sbr.rel (%p421) target = $region52
        $region51: #{tpu_custom_call.1} parent=11 // pred_region
          _
        $region52: #{tpu_custom_call.1} parent=11 // pred_fallthru
          _
        // Predicated region
        $region53: #{tpu_custom_call.1} parent=11 // pred_check
          %p424 = pneg %p313
        $region54: #{tpu_custom_call.1} parent=11 // pred_check_branch
          %426 = sbr.rel (%p424) target = $region56
        $region55: #{tpu_custom_call.1} parent=11 // pred_region
          _
        $region56: #{tpu_custom_call.1} parent=11 // pred_fallthru
          _
      $region12: #{tpu_custom_call.1} parent=5 // pred_fallthru
        _
      %p427 = scmp.lt.s32.totalorder %s30, 2
      // Predicated region
      $region57: #{tpu_custom_call.1} parent=5 // pred_check
        %p428 = pneg %p427
      $region58: #{tpu_custom_call.1} parent=5 // pred_check_branch
        %430 = sbr.rel (%p428) target = $region60
      $region59: #{tpu_custom_call.1} parent=5 // pred_region
        // Predicated region
        $region61: #{tpu_custom_call.1} parent=59 // pred_check
          %p431 = pneg %p50
        $region62: #{tpu_custom_call.1} parent=59 // pred_check_branch
          %433 = sbr.rel (%p431) target = $region64
        $region63: #{tpu_custom_call.1} parent=59 // pred_region
          %s434 = sand.u32 %s40, 1
          %s435 = scalar_lea.sflag [#allocation3], %s434
          %s436 = sand.u32 %s40, 1
          %s437 = smul.addr %s436, 256
          %s438 = scalar_lea.vmem [#allocation2], %s437
          %s439 = smul.u32 32, %s30
          %s441 = ssub.s32 4096, 4096
          %442 = vsyncadd %s435, %s441
          %s443 = smul.addr %s439, 128
          %s444 = scalar_lea.hbm %s0, %s443
          %s445 = sshll.u32 %s438, 4
          %s446 = int_to_ptr.vmem [resolvable:$true] %s445
          %451 = dma.hbm_to_vmem [thread:$0]  %s444, 4096, %s446, %s435, 128, 128, 8
        $region64: #{tpu_custom_call.1} parent=59 // pred_fallthru
          _
        // Predicated region
        $region65: #{tpu_custom_call.1} parent=59 // pred_check
          %p452 = pneg %p76
        $region66: #{tpu_custom_call.1} parent=59 // pred_check_branch
          %454 = sbr.rel (%p452) target = $region68
        $region67: #{tpu_custom_call.1} parent=59 // pred_region
          %s455 = sand.u32 %s30, 1
          %s456 = scalar_lea.sflag [#allocation6], %s455
          %s457 = sand.u32 %s66, 1
          %s458 = smul.addr %s457, 256
          %s459 = scalar_lea.vmem [#allocation5], %s458
          %s460 = smul.u32 32, %s30
          %s462 = ssub.s32 4096, 4096
          %463 = vsyncadd %s456, %s462
          %s464 = smul.addr %s460, 128
          %s465 = scalar_lea.hbm %s1, %s464
          %s466 = sshll.u32 %s459, 4
          %s467 = int_to_ptr.vmem [resolvable:$true] %s466
          %472 = dma.hbm_to_vmem [thread:$0]  %s465, 4096, %s467, %s456, 128, 128, 8
        $region68: #{tpu_custom_call.1} parent=59 // pred_fallthru
          _
      $region60: #{tpu_custom_call.1} parent=5 // pred_fallthru
        _
      %p473 = scmp.le.s32.totalorder 1, %s30
      %p474 = scmp.lt.s32.totalorder %s30, 3
      %p475 = pnand %p473, %p474
      %p476 = pneg %p475
      // Predicated region
      $region69: #{tpu_custom_call.1} parent=5 // pred_check
        _
      $region70: #{tpu_custom_call.1} parent=5 // pred_check_branch
        %478 = sbr.rel (%p475) target = $region72
      $region71: #{tpu_custom_call.1} parent=5 // pred_region
        %s479 = ssub.s32 %s30, 1
        %s480 = sand.u32 %s43, 1
        %s481 = scalar_lea.sflag [#allocation3], %s480
        %s482 = sand.u32 %s43, 1
        %s483 = smul.addr %s482, 256
        %s484 = scalar_lea.vmem [#allocation2], %s483
        // Predicated region
        $region73: #{tpu_custom_call.1} parent=71 // pred_check
          %p485 = pneg %p56
        $region74: #{tpu_custom_call.1} parent=71 // pred_check_branch
          %487 = sbr.rel (%p485) target = $region76
        $region75: #{tpu_custom_call.1} parent=71 // pred_region
          %488 = dma.done %s481, 4096
        $region76: #{tpu_custom_call.1} parent=71 // pred_fallthru
          _
        %s489 = sand.u32 %s35, 1
        %s490 = scalar_lea.sflag [#allocation6], %s489
        %s491 = sand.u32 %s69, 1
        %s492 = smul.addr %s491, 256
        %s493 = scalar_lea.vmem [#allocation5], %s492
        // Predicated region
        $region77: #{tpu_custom_call.1} parent=71 // pred_check
          %p494 = pneg %p82
        $region78: #{tpu_custom_call.1} parent=71 // pred_check_branch
          %496 = sbr.rel (%p494) target = $region80
        $region79: #{tpu_custom_call.1} parent=71 // pred_region
          %497 = dma.done %s490, 4096
        $region80: #{tpu_custom_call.1} parent=71 // pred_fallthru
          _
        // Predicated region
        $region81: #{tpu_custom_call.1} parent=71 // pred_check
          %p498 = pneg %p103
        $region82: #{tpu_custom_call.1} parent=71 // pred_check_branch
          %500 = sbr.rel (%p498) target = $region84
        $region83: #{tpu_custom_call.1} parent=71 // pred_region
          %501 = dma.done [#allocation6], 2048
        $region84: #{tpu_custom_call.1} parent=71 // pred_fallthru
          _
        // Predicated region
        $region85: #{tpu_custom_call.1} parent=71 // pred_check
          %p502 = pneg %p124
        $region86: #{tpu_custom_call.1} parent=71 // pred_check_branch
          %504 = sbr.rel (%p502) target = $region88
        $region87: #{tpu_custom_call.1} parent=71 // pred_region
          %505 = dma.done [#allocation9], 2048
        $region88: #{tpu_custom_call.1} parent=71 // pred_fallthru
          _
        // Predicated region
        $region89: #{tpu_custom_call.1} parent=71 // pred_check
          %p506 = pneg %p208
        $region90: #{tpu_custom_call.1} parent=71 // pred_check_branch
          %508 = sbr.rel (%p506) target = $region92
        $region91: #{tpu_custom_call.1} parent=71 // pred_region
          %509 = dma.done [#allocation9], 8192
        $region92: #{tpu_custom_call.1} parent=71 // pred_fallthru
          _
        // Predicated region
        $region93: #{tpu_custom_call.1} parent=71 // pred_check
          %p510 = pneg %p250
        $region94: #{tpu_custom_call.1} parent=71 // pred_check_branch
          %512 = sbr.rel (%p510) target = $region96
        $region95: #{tpu_custom_call.1} parent=71 // pred_region
          %513 = dma.done [#allocation12], 8192
        $region96: #{tpu_custom_call.1} parent=71 // pred_fallthru
          _
        %s514 = sand.u32 %s43, 1
        %s515 = scalar_lea.sflag [#allocation3], %s514
        %s516 = sand.u32 %s43, 1
        %s517 = smul.addr %s516, 256
        %s518 = scalar_lea.vmem [#allocation2], %s517
        %p519 = pneg %p56
        %p520 = pneg %p53
        %s521 = sand.u32 %s35, 1
        %s522 = scalar_lea.sflag [#allocation6], %s521
        %s523 = sand.u32 %s69, 1
        %s524 = smul.addr %s523, 256
        %s525 = scalar_lea.vmem [#allocation5], %s524
        %p526 = pneg %p82
        %p527 = pneg %p79
        %p528 = pneg %p103
        %p529 = pneg %p100
        %p530 = pneg %p124
        %p531 = pneg %p121
        %p532 = pneg %p145
        %p533 = pneg %p142
        %p534 = pneg %p166
        %p535 = pneg %p163
        %p536 = pneg %p187
        %p537 = pneg %p184
        %p538 = pneg %p208
        %p539 = pneg %p205
        %p540 = pneg %p229
        %p541 = pneg %p226
        %p542 = pneg %p250
        %p543 = pneg %p247
        %p544 = pneg %p271
        %p545 = pneg %p268
        %p546 = pneg %p292
        %p547 = pneg %p289
        %p548 = pneg %p313
        %p549 = pneg %p310
        %p550 = pneg %p339
        %p551 = pneg %p336
        %s552 = sand.u32 %s326, 1
        %s553 = scalar_lea.sflag [#allocation4], %s552
        %s554 = sand.u32 %s326, 1
        %s555 = smul.addr %s554, 256
        %s556 = scalar_lea.vmem [#allocation13], %s555
        %s557 = smul.u32 32, %s35
        %s558 = smul.u32 32, %s35
        %s559 = smul.u32 32, %s35
        %v560 = vld [vmem:[%s493] sm:$0xff]
        %v561 = vld [vmem:[%s493 + $0x8] sm:$0xff]
        %v562 = vld [vmem:[%s493 + $0x10] sm:$0xff]
        %v563 = vld [vmem:[%s493 + $0x18] sm:$0xff]
        %v564 = vld [vmem:[%s493 + $0x20] sm:$0xff]
        %v565 = vld [vmem:[%s493 + $0x28] sm:$0xff]
        %v566 = vld [vmem:[%s493 + $0x30] sm:$0xff]
        %v567 = vld [vmem:[%s493 + $0x38] sm:$0xff]
        %v568 = vld [vmem:[%s493 + $0x40] sm:$0xff]
        %v569 = vld [vmem:[%s493 + $0x48] sm:$0xff]
        %v570 = vld [vmem:[%s493 + $0x50] sm:$0xff]
        %v571 = vld [vmem:[%s493 + $0x58] sm:$0xff]
        %v572 = vld [vmem:[%s493 + $0x60] sm:$0xff]
        %v573 = vld [vmem:[%s493 + $0x68] sm:$0xff]
        %v574 = vld [vmem:[%s493 + $0x70] sm:$0xff]
        %v575 = vld [vmem:[%s493 + $0x78] sm:$0xff]
        %v576 = vld [vmem:[%s493 + $0x80] sm:$0xff]
        %v577 = vld [vmem:[%s493 + $0x88] sm:$0xff]
        %v578 = vld [vmem:[%s493 + $0x90] sm:$0xff]
        %v579 = vld [vmem:[%s493 + $0x98] sm:$0xff]
        %v580 = vld [vmem:[%s493 + $0xa0] sm:$0xff]
        %v581 = vld [vmem:[%s493 + $0xa8] sm:$0xff]
        %v582 = vld [vmem:[%s493 + $0xb0] sm:$0xff]
        %v583 = vld [vmem:[%s493 + $0xb8] sm:$0xff]
        %v584 = vld [vmem:[%s493 + $0xc0] sm:$0xff]
        %v585 = vld [vmem:[%s493 + $0xc8] sm:$0xff]
        %v586 = vld [vmem:[%s493 + $0xd0] sm:$0xff]
        %v587 = vld [vmem:[%s493 + $0xd8] sm:$0xff]
        %v588 = vld [vmem:[%s493 + $0xe0] sm:$0xff]
        %v589 = vld [vmem:[%s493 + $0xe8] sm:$0xff]
        %v590 = vld [vmem:[%s493 + $0xf0] sm:$0xff]
        %v591 = vld [vmem:[%s493 + $0xf8] sm:$0xff]
        %v592 = vld [vmem:[%s484] sm:$0xff]
        %v593 = vld [vmem:[%s484 + $0x8] sm:$0xff]
        %v594 = vld [vmem:[%s484 + $0x10] sm:$0xff]
        %v595 = vld [vmem:[%s484 + $0x18] sm:$0xff]
        %v596 = vld [vmem:[%s484 + $0x20] sm:$0xff]
        %v597 = vld [vmem:[%s484 + $0x28] sm:$0xff]
        %v598 = vld [vmem:[%s484 + $0x30] sm:$0xff]
        %v599 = vld [vmem:[%s484 + $0x38] sm:$0xff]
        %v600 = vld [vmem:[%s484 + $0x40] sm:$0xff]
        %v601 = vld [vmem:[%s484 + $0x48] sm:$0xff]
        %v602 = vld [vmem:[%s484 + $0x50] sm:$0xff]
        %v603 = vld [vmem:[%s484 + $0x58] sm:$0xff]
        %v604 = vld [vmem:[%s484 + $0x60] sm:$0xff]
        %v605 = vld [vmem:[%s484 + $0x68] sm:$0xff]
        %v606 = vld [vmem:[%s484 + $0x70] sm:$0xff]
        %v607 = vld [vmem:[%s484 + $0x78] sm:$0xff]
        %v608 = vld [vmem:[%s484 + $0x80] sm:$0xff]
        %v609 = vld [vmem:[%s484 + $0x88] sm:$0xff]
        %v610 = vld [vmem:[%s484 + $0x90] sm:$0xff]
        %v611 = vld [vmem:[%s484 + $0x98] sm:$0xff]
        %v612 = vld [vmem:[%s484 + $0xa0] sm:$0xff]
        %v613 = vld [vmem:[%s484 + $0xa8] sm:$0xff]
        %v614 = vld [vmem:[%s484 + $0xb0] sm:$0xff]
        %v615 = vld [vmem:[%s484 + $0xb8] sm:$0xff]
        %v616 = vld [vmem:[%s484 + $0xc0] sm:$0xff]
        %v617 = vld [vmem:[%s484 + $0xc8] sm:$0xff]
        %v618 = vld [vmem:[%s484 + $0xd0] sm:$0xff]
        %v619 = vld [vmem:[%s484 + $0xd8] sm:$0xff]
        %v620 = vld [vmem:[%s484 + $0xe0] sm:$0xff]
        %v621 = vld [vmem:[%s484 + $0xe8] sm:$0xff]
        %v622 = vld [vmem:[%s484 + $0xf0] sm:$0xff]
        %v623 = vld [vmem:[%s484 + $0xf8] sm:$0xff]
        %v624 = vld [vmem:[#allocation7] sm:$0xff]
        %v625 = vld [vmem:[#allocation7 + $0x8] sm:$0xff]
        %v626 = vld [vmem:[#allocation7 + $0x10] sm:$0xff]
        %v627 = vld [vmem:[#allocation7 + $0x18] sm:$0xff]
        %v628 = vld [vmem:[#allocation7 + $0x20] sm:$0xff]
        %v629 = vld [vmem:[#allocation7 + $0x28] sm:$0xff]
        %v630 = vld [vmem:[#allocation7 + $0x30] sm:$0xff]
        %v631 = vld [vmem:[#allocation7 + $0x38] sm:$0xff]
        %v632 = vld [vmem:[#allocation7 + $0x40] sm:$0xff]
        %v633 = vld [vmem:[#allocation7 + $0x48] sm:$0xff]
        %v634 = vld [vmem:[#allocation7 + $0x50] sm:$0xff]
        %v635 = vld [vmem:[#allocation7 + $0x58] sm:$0xff]
        %v636 = vld [vmem:[#allocation7 + $0x60] sm:$0xff]
        %v637 = vld [vmem:[#allocation7 + $0x68] sm:$0xff]
        %v638 = vld [vmem:[#allocation7 + $0x70] sm:$0xff]
        %v639 = vld [vmem:[#allocation7 + $0x78] sm:$0xff]
        %640 = vmatprep.subr.mxu0 0.0
        %641 = vmatpush1.msra.mxu0 %v624
        %642 = vmatprep.subr.mxu0 0.0
        %643 = vmatpush1.msra.mxu0 %v625
        %644 = vmatprep.subr.mxu0 0.0
        %645 = vmatpush1.msra.mxu0 %v626
        %646 = vmatprep.subr.mxu0 0.0
        %647 = vmatpush1.msra.mxu0 %v627
        %648 = vmatprep.subr.mxu0 0.0
        %649 = vmatpush1.msra.mxu0 %v628
        %650 = vmatprep.subr.mxu0 0.0
        %651 = vmatpush1.msra.mxu0 %v629
        %652 = vmatprep.subr.mxu0 0.0
        %653 = vmatpush1.msra.mxu0 %v630
        %654 = vmatprep.subr.mxu0 0.0
        %655 = vmatpush1.msra.mxu0 %v631
        %656 = vmatprep.subr.mxu0 0.0
        %657 = vmatpush1.msra.mxu0 %v632
        %658 = vmatprep.subr.mxu0 0.0
        %659 = vmatpush1.msra.mxu0 %v633
        %660 = vmatprep.subr.mxu0 0.0
        %661 = vmatpush1.msra.mxu0 %v634
        %662 = vmatprep.subr.mxu0 0.0
        %663 = vmatpush1.msra.mxu0 %v635
        %664 = vmatprep.subr.mxu0 0.0
        %665 = vmatpush1.msra.mxu0 %v636
        %666 = vmatprep.subr.mxu0 0.0
        %667 = vmatpush1.msra.mxu0 %v637
        %668 = vmatprep.subr.mxu0 0.0
        %669 = vmatpush1.msra.mxu0 %v638
        %670 = vmatprep.subr.mxu0 0.0
        %671 = vmatpush1.msra.mxu0 %v639
        %672 = vmatprep.subr.mxu0 0.0
        %673 = vmatpush1.msra.mxu0 0.0
        %674 = vmatprep.subr.mxu0 0.0
        %675 = vmatpush1.msra.mxu0 0.0
        %676 = vmatprep.subr.mxu0 0.0
        %677 = vmatpush1.msra.mxu0 0.0
        %678 = vmatprep.subr.mxu0 0.0
        %679 = vmatpush1.msra.mxu0 0.0
        %680 = vmatprep.subr.mxu0 0.0
        %681 = vmatpush1.msra.mxu0 0.0
        %682 = vmatprep.subr.mxu0 0.0
        %683 = vmatpush1.msra.mxu0 0.0
        %684 = vmatprep.subr.mxu0 0.0
        %685 = vmatpush1.msra.mxu0 0.0
        %686 = vmatprep.subr.mxu0 0.0
        %687 = vmatpush1.msra.mxu0 0.0
        %688 = vmatprep.subr.mxu0 0.0
        %689 = vmatpush1.msra.mxu0 0.0
        %690 = vmatprep.subr.mxu0 0.0
        %691 = vmatpush1.msra.mxu0 0.0
        %692 = vmatprep.subr.mxu0 0.0
        %693 = vmatpush1.msra.mxu0 0.0
        %694 = vmatprep.subr.mxu0 0.0
        %695 = vmatpush1.msra.mxu0 0.0
        %696 = vmatprep.subr.mxu0 0.0
        %697 = vmatpush1.msra.mxu0 0.0
        %698 = vmatprep.subr.mxu0 0.0
        %699 = vmatpush1.msra.mxu0 0.0
        %700 = vmatprep.subr.mxu0 0.0
        %701 = vmatpush1.msra.mxu0 0.0
        %702 = vmatprep.subr.mxu0 0.0
        %703 = vmatpush1.msra.mxu0 0.0
        %704 = vmatprep.mubr.f32.mxu0 0.0
        %705 = vmatmul.mubr.f32.gmra.mrb[0].mxu0 %v592
        %v706 = vpop.f32.mrb[0].mxu0
        %v707 = vadd.f32 0.0, %v706
        %v708 = vpop.f32.mrb[0].mxu0
        %709 = vmatprep.mubr.f32.mxu0 0.0
        %710 = vmatmul.mubr.f32.gmra.mrb[0].mxu0 %v593
        %v711 = vpop.f32.mrb[0].mxu0
        %v712 = vadd.f32 0.0, %v711
        %v713 = vpop.f32.mrb[0].mxu0
        %714 = vmatprep.mubr.f32.mxu0 0.0
        %715 = vmatmul.mubr.f32.gmra.mrb[0].mxu0 %v594
        %v716 = vpop.f32.mrb[0].mxu0
        %v717 = vadd.f32 0.0, %v716
        %v718 = vpop.f32.mrb[0].mxu0
        %719 = vmatprep.mubr.f32.mxu0 0.0
        %720 = vmatmul.mubr.f32.gmra.mrb[0].mxu0 %v595
        %v721 = vpop.f32.mrb[0].mxu0
        %v722 = vadd.f32 0.0, %v721
        %v723 = vpop.f32.mrb[0].mxu0
        %724 = vmatprep.mubr.f32.mxu0 0.0
        %725 = vmatmul.mubr.f32.gmra.mrb[0].mxu0 %v596
        %v726 = vpop.f32.mrb[0].mxu0
        %v727 = vadd.f32 0.0, %v726
        %v728 = vpop.f32.mrb[0].mxu0
        %729 = vmatprep.mubr.f32.mxu0 0.0
        %730 = vmatmul.mubr.f32.gmra.mrb[0].mxu0 %v597
        %v731 = vpop.f32.mrb[0].mxu0
        %v732 = vadd.f32 0.0, %v731
        %v733 = vpop.f32.mrb[0].mxu0
        %734 = vmatprep.mubr.f32.mxu0 0.0
        %735 = vmatmul.mubr.f32.gmra.mrb[0].mxu0 %v598
        %v736 = vpop.f32.mrb[0].mxu0
        %v737 = vadd.f32 0.0, %v736
        %v738 = vpop.f32.mrb[0].mxu0
        %739 = vmatprep.mubr.f32.mxu0 0.0
        %740 = vmatmul.mubr.f32.gmra.mrb[0].mxu0 %v599
        %v741 = vpop.f32.mrb[0].mxu0
        %v742 = vadd.f32 0.0, %v741
        %v743 = vpop.f32.mrb[0].mxu0
        %744 = vmatprep.mubr.f32.mxu0 0.0
        %745 = vmatmul.mubr.f32.gmra.mrb[0].mxu0 %v600
        %v746 = vpop.f32.mrb[0].mxu0
        %v747 = vadd.f32 0.0, %v746
        %v748 = vpop.f32.mrb[0].mxu0
        %749 = vmatprep.mubr.f32.mxu0 0.0
        %750 = vmatmul.mubr.f32.gmra.mrb[0].mxu0 %v601
        %v751 = vpop.f32.mrb[0].mxu0
        %v752 = vadd.f32 0.0, %v751
        %v753 = vpop.f32.mrb[0].mxu0
        %754 = vmatprep.mubr.f32.mxu0 0.0
        %755 = vmatmul.mubr.f32.gmra.mrb[0].mxu0 %v602
        %v756 = vpop.f32.mrb[0].mxu0
        %v757 = vadd.f32 0.0, %v756
        %v758 = vpop.f32.mrb[0].mxu0
        %759 = vmatprep.mubr.f32.mxu0 0.0
        %760 = vmatmul.mubr.f32.gmra.mrb[0].mxu0 %v603
        %v761 = vpop.f32.mrb[0].mxu0
        %v762 = vadd.f32 0.0, %v761
        %v763 = vpop.f32.mrb[0].mxu0
        %764 = vmatprep.mubr.f32.mxu0 0.0
        %765 = vmatmul.mubr.f32.gmra.mrb[0].mxu0 %v604
        %v766 = vpop.f32.mrb[0].mxu0
        %v767 = vadd.f32 0.0, %v766
        %v768 = vpop.f32.mrb[0].mxu0
        %769 = vmatprep.mubr.f32.mxu0 0.0
        %770 = vmatmul.mubr.f32.gmra.mrb[0].mxu0 %v605
        %v771 = vpop.f32.mrb[0].mxu0
        %v772 = vadd.f32 0.0, %v771
        %v773 = vpop.f32.mrb[0].mxu0
        %774 = vmatprep.mubr.f32.mxu0 0.0
        %775 = vmatmul.mubr.f32.gmra.mrb[0].mxu0 %v606
        %v776 = vpop.f32.mrb[0].mxu0
        %v777 = vadd.f32 0.0, %v776
        %v778 = vpop.f32.mrb[0].mxu0
        %779 = vmatprep.mubr.f32.mxu0 0.0
        %780 = vmatmul.mubr.f32.gmra.mrb[0].mxu0 %v607
        %v781 = vpop.f32.mrb[0].mxu0
        %v782 = vadd.f32 0.0, %v781
        %v783 = vpop.f32.mrb[0].mxu0
        %784 = vmatprep.mubr.f32.mxu0 0.0
        %785 = vmatmul.mubr.f32.gmra.mrb[0].mxu0 %v608
        %v786 = vpop.f32.mrb[0].mxu0
        %v787 = vadd.f32 0.0, %v786
        %v788 = vpop.f32.mrb[0].mxu0
        %789 = vmatprep.mubr.f32.mxu0 0.0
        %790 = vmatmul.mubr.f32.gmra.mrb[0].mxu0 %v609
        %v791 = vpop.f32.mrb[0].mxu0
        %v792 = vadd.f32 0.0, %v791
        %v793 = vpop.f32.mrb[0].mxu0
        %794 = vmatprep.mubr.f32.mxu0 0.0
        %795 = vmatmul.mubr.f32.gmra.mrb[0].mxu0 %v610
        %v796 = vpop.f32.mrb[0].mxu0
        %v797 = vadd.f32 0.0, %v796
        %v798 = vpop.f32.mrb[0].mxu0
        %799 = vmatprep.mubr.f32.mxu0 0.0
        %800 = vmatmul.mubr.f32.gmra.mrb[0].mxu0 %v611
        %v801 = vpop.f32.mrb[0].mxu0
        %v802 = vadd.f32 0.0, %v801
        %v803 = vpop.f32.mrb[0].mxu0
        %804 = vmatprep.mubr.f32.mxu0 0.0
        %805 = vmatmul.mubr.f32.gmra.mrb[0].mxu0 %v612
        %v806 = vpop.f32.mrb[0].mxu0
        %v807 = vadd.f32 0.0, %v806
        %v808 = vpop.f32.mrb[0].mxu0
        %809 = vmatprep.mubr.f32.mxu0 0.0
        %810 = vmatmul.mubr.f32.gmra.mrb[0].mxu0 %v613
        %v811 = vpop.f32.mrb[0].mxu0
        %v812 = vadd.f32 0.0, %v811
        %v813 = vpop.f32.mrb[0].mxu0
        %814 = vmatprep.mubr.f32.mxu0 0.0
        %815 = vmatmul.mubr.f32.gmra.mrb[0].mxu0 %v614
        %v816 = vpop.f32.mrb[0].mxu0
        %v817 = vadd.f32 0.0, %v816
        %v818 = vpop.f32.mrb[0].mxu0
        %819 = vmatprep.mubr.f32.mxu0 0.0
        %820 = vmatmul.mubr.f32.gmra.mrb[0].mxu0 %v615
        %v821 = vpop.f32.mrb[0].mxu0
        %v822 = vadd.f32 0.0, %v821
        %v823 = vpop.f32.mrb[0].mxu0
        %824 = vmatprep.mubr.f32.mxu0 0.0
        %825 = vmatmul.mubr.f32.gmra.mrb[0].mxu0 %v616
        %v826 = vpop.f32.mrb[0].mxu0
        %v827 = vadd.f32 0.0, %v826
        %v828 = vpop.f32.mrb[0].mxu0
        %829 = vmatprep.mubr.f32.mxu0 0.0
        %830 = vmatmul.mubr.f32.gmra.mrb[0].mxu0 %v617
        %v831 = vpop.f32.mrb[0].mxu0
        %v832 = vadd.f32 0.0, %v831
        %v833 = vpop.f32.mrb[0].mxu0
        %834 = vmatprep.mubr.f32.mxu0 0.0
        %835 = vmatmul.mubr.f32.gmra.mrb[0].mxu0 %v618
        %v836 = vpop.f32.mrb[0].mxu0
        %v837 = vadd.f32 0.0, %v836
        %v838 = vpop.f32.mrb[0].mxu0
        %839 = vmatprep.mubr.f32.mxu0 0.0
        %840 = vmatmul.mubr.f32.gmra.mrb[0].mxu0 %v619
        %v841 = vpop.f32.mrb[0].mxu0
        %v842 = vadd.f32 0.0, %v841
        %v843 = vpop.f32.mrb[0].mxu0
        %844 = vmatprep.mubr.f32.mxu0 0.0
        %845 = vmatmul.mubr.f32.gmra.mrb[0].mxu0 %v620
        %v846 = vpop.f32.mrb[0].mxu0
        %v847 = vadd.f32 0.0, %v846
        %v848 = vpop.f32.mrb[0].mxu0
        %849 = vmatprep.mubr.f32.mxu0 0.0
        %850 = vmatmul.mubr.f32.gmra.mrb[0].mxu0 %v621
        %v851 = vpop.f32.mrb[0].mxu0
        %v852 = vadd.f32 0.0, %v851
        %v853 = vpop.f32.mrb[0].mxu0
        %854 = vmatprep.mubr.f32.mxu0 0.0
        %855 = vmatmul.mubr.f32.gmra.mrb[0].mxu0 %v622
        %v856 = vpop.f32.mrb[0].mxu0
        %v857 = vadd.f32 0.0, %v856
        %v858 = vpop.f32.mrb[0].mxu0
        %859 = vmatprep.mubr.f32.mxu0 0.0
        %860 = vmatmul.mubr.f32.gmra.mrb[0].mxu0 %v623
        %v861 = vpop.f32.mrb[0].mxu0
        %v862 = vadd.f32 0.0, %v861
        %v863 = vpop.f32.mrb[0].mxu0
        %864 = vdwg.mxu0
        %v865 = vld [vmem:[#allocation8] sm:$0xff]
        %v866 = vld [vmem:[#allocation8 + $0x8] sm:$0xff]
        %v867 = vld [vmem:[#allocation8 + $0x10] sm:$0xff]
        %v868 = vld [vmem:[#allocation8 + $0x18] sm:$0xff]
        %v869 = vld [vmem:[#allocation8 + $0x20] sm:$0xff]
        %v870 = vld [vmem:[#allocation8 + $0x28] sm:$0xff]
        %v871 = vld [vmem:[#allocation8 + $0x30] sm:$0xff]
        %v872 = vld [vmem:[#allocation8 + $0x38] sm:$0xff]
        %v873 = vld [vmem:[#allocation8 + $0x40] sm:$0xff]
        %v874 = vld [vmem:[#allocation8 + $0x48] sm:$0xff]
        %v875 = vld [vmem:[#allocation8 + $0x50] sm:$0xff]
        %v876 = vld [vmem:[#allocation8 + $0x58] sm:$0xff]
        %v877 = vld [vmem:[#allocation8 + $0x60] sm:$0xff]
        %v878 = vld [vmem:[#allocation8 + $0x68] sm:$0xff]
        %v879 = vld [vmem:[#allocation8 + $0x70] sm:$0xff]
        %v880 = vld [vmem:[#allocation8 + $0x78] sm:$0xff]
        %v881 = vld [vmem:[%s4] sm:$0x1]
        %v883 = vlaneseq
        %v884 = vshrl.u32 %v883, 7
        %v885 = vsub.s32 0, %v884
        %v886 = vrot.slane %v881, %v885
        %888 = vmatprep.subr.mxu0 0.0
        %889 = vmatpush1.msra.mxu0 %v865
        %890 = vmatprep.subr.mxu0 0.0
        %891 = vmatpush1.msra.mxu0 %v866
        %892 = vmatprep.subr.mxu0 0.0
        %893 = vmatpush1.msra.mxu0 %v867
        %894 = vmatprep.subr.mxu0 0.0
        %895 = vmatpush1.msra.mxu0 %v868
        %896 = vmatprep.subr.mxu0 0.0
        %897 = vmatpush1.msra.mxu0 %v869
        %898 = vmatprep.subr.mxu0 0.0
        %899 = vmatpush1.msra.mxu0 %v870
        %900 = vmatprep.subr.mxu0 0.0
        %901 = vmatpush1.msra.mxu0 %v871
        %902 = vmatprep.subr.mxu0 0.0
        %903 = vmatpush1.msra.mxu0 %v872
        %904 = vmatprep.subr.mxu0 0.0
        %905 = vmatpush1.msra.mxu0 %v873
        %906 = vmatprep.subr.mxu0 0.0
        %907 = vmatpush1.msra.mxu0 %v874
        %908 = vmatprep.subr.mxu0 0.0
        %909 = vmatpush1.msra.mxu0 %v875
        %910 = vmatprep.subr.mxu0 0.0
        %911 = vmatpush1.msra.mxu0 %v876
        %912 = vmatprep.subr.mxu0 0.0
        %913 = vmatpush1.msra.mxu0 %v877
        %914 = vmatprep.subr.mxu0 0.0
        %915 = vmatpush1.msra.mxu0 %v878
        %916 = vmatprep.subr.mxu0 0.0
        %917 = vmatpush1.msra.mxu0 %v879
        %918 = vmatprep.subr.mxu0 0.0
        %919 = vmatpush1.msra.mxu0 %v880
        %920 = vmatprep.subr.mxu0 0.0
        %921 = vmatpush1.msra.mxu0 0.0
        %922 = vmatprep.subr.mxu0 0.0
        %923 = vmatpush1.msra.mxu0 0.0
        %924 = vmatprep.subr.mxu0 0.0
        %925 = vmatpush1.msra.mxu0 0.0
        %926 = vmatprep.subr.mxu0 0.0
        %927 = vmatpush1.msra.mxu0 0.0
        %928 = vmatprep.subr.mxu0 0.0
        %929 = vmatpush1.msra.mxu0 0.0
        %930 = vmatprep.subr.mxu0 0.0
        %931 = vmatpush1.msra.mxu0 0.0
        %932 = vmatprep.subr.mxu0 0.0
        %933 = vmatpush1.msra.mxu0 0.0
        %934 = vmatprep.subr.mxu0 0.0
        %935 = vmatpush1.msra.mxu0 0.0
        %936 = vmatprep.subr.mxu0 0.0
        %937 = vmatpush1.msra.mxu0 0.0
        %938 = vmatprep.subr.mxu0 0.0
        %939 = vmatpush1.msra.mxu0 0.0
        %940 = vmatprep.subr.mxu0 0.0
        %941 = vmatpush1.msra.mxu0 0.0
        %942 = vmatprep.subr.mxu0 0.0
        %943 = vmatpush1.msra.mxu0 0.0
        %944 = vmatprep.subr.mxu0 0.0
        %945 = vmatpush1.msra.mxu0 0.0
        %946 = vmatprep.subr.mxu0 0.0
        %947 = vmatpush1.msra.mxu0 0.0
        %948 = vmatprep.subr.mxu0 0.0
        %949 = vmatpush1.msra.mxu0 0.0
        %950 = vmatprep.subr.mxu0 0.0
        %951 = vmatpush1.msra.mxu0 0.0
        %952 = vmatprep.mubr.f32.mxu0 0.0
        %953 = vmatmul.mubr.f32.gmra.mrb[0].mxu0 %v707
        %v954 = vpop.f32.mrb[0].mxu0
        %v955 = vadd.f32 %v886, %v954
        %v956 = vpop.f32.mrb[0].mxu0
        %957 = vmatprep.mubr.f32.mxu0 0.0
        %958 = vmatmul.mubr.f32.gmra.mrb[0].mxu0 %v712
        %v959 = vpop.f32.mrb[0].mxu0
        %v960 = vadd.f32 %v886, %v959
        %v961 = vpop.f32.mrb[0].mxu0
        %962 = vmatprep.mubr.f32.mxu0 0.0
        %963 = vmatmul.mubr.f32.gmra.mrb[0].mxu0 %v717
        %v964 = vpop.f32.mrb[0].mxu0
        %v965 = vadd.f32 %v886, %v964
        %v966 = vpop.f32.mrb[0].mxu0
        %967 = vmatprep.mubr.f32.mxu0 0.0
        %968 = vmatmul.mubr.f32.gmra.mrb[0].mxu0 %v722
        %v969 = vpop.f32.mrb[0].mxu0
        %v970 = vadd.f32 %v886, %v969
        %v971 = vpop.f32.mrb[0].mxu0
        %972 = vmatprep.mubr.f32.mxu0 0.0
        %973 = vmatmul.mubr.f32.gmra.mrb[0].mxu0 %v727
        %v974 = vpop.f32.mrb[0].mxu0
        %v975 = vadd.f32 %v886, %v974
        %v976 = vpop.f32.mrb[0].mxu0
        %977 = vmatprep.mubr.f32.mxu0 0.0
        %978 = vmatmul.mubr.f32.gmra.mrb[0].mxu0 %v732
        %v979 = vpop.f32.mrb[0].mxu0
        %v980 = vadd.f32 %v886, %v979
        %v981 = vpop.f32.mrb[0].mxu0
        %982 = vmatprep.mubr.f32.mxu0 0.0
        %983 = vmatmul.mubr.f32.gmra.mrb[0].mxu0 %v737
        %v984 = vpop.f32.mrb[0].mxu0
        %v985 = vadd.f32 %v886, %v984
        %v986 = vpop.f32.mrb[0].mxu0
        %987 = vmatprep.mubr.f32.mxu0 0.0
        %988 = vmatmul.mubr.f32.gmra.mrb[0].mxu0 %v742
        %v989 = vpop.f32.mrb[0].mxu0
        %v990 = vadd.f32 %v886, %v989
        %v991 = vpop.f32.mrb[0].mxu0
        %992 = vmatprep.mubr.f32.mxu0 0.0
        %993 = vmatmul.mubr.f32.gmra.mrb[0].mxu0 %v747
        %v994 = vpop.f32.mrb[0].mxu0
        %v995 = vadd.f32 %v886, %v994
        %v996 = vpop.f32.mrb[0].mxu0
        %997 = vmatprep.mubr.f32.mxu0 0.0
        %998 = vmatmul.mubr.f32.gmra.mrb[0].mxu0 %v752
        %v999 = vpop.f32.mrb[0].mxu0
        %v1000 = vadd.f32 %v886, %v999
        %v1001 = vpop.f32.mrb[0].mxu0
        %1002 = vmatprep.mubr.f32.mxu0 0.0
        %1003 = vmatmul.mubr.f32.gmra.mrb[0].mxu0 %v757
        %v1004 = vpop.f32.mrb[0].mxu0
        %v1005 = vadd.f32 %v886, %v1004
        %v1006 = vpop.f32.mrb[0].mxu0
        %1007 = vmatprep.mubr.f32.mxu0 0.0
        %1008 = vmatmul.mubr.f32.gmra.mrb[0].mxu0 %v762
        %v1009 = vpop.f32.mrb[0].mxu0
        %v1010 = vadd.f32 %v886, %v1009
        %v1011 = vpop.f32.mrb[0].mxu0
        %1012 = vmatprep.mubr.f32.mxu0 0.0
        %1013 = vmatmul.mubr.f32.gmra.mrb[0].mxu0 %v767
        %v1014 = vpop.f32.mrb[0].mxu0
        %v1015 = vadd.f32 %v886, %v1014
        %v1016 = vpop.f32.mrb[0].mxu0
        %1017 = vmatprep.mubr.f32.mxu0 0.0
        %1018 = vmatmul.mubr.f32.gmra.mrb[0].mxu0 %v772
        %v1019 = vpop.f32.mrb[0].mxu0
        %v1020 = vadd.f32 %v886, %v1019
        %v1021 = vpop.f32.mrb[0].mxu0
        %1022 = vmatprep.mubr.f32.mxu0 0.0
        %1023 = vmatmul.mubr.f32.gmra.mrb[0].mxu0 %v777
        %v1024 = vpop.f32.mrb[0].mxu0
        %v1025 = vadd.f32 %v886, %v1024
        %v1026 = vpop.f32.mrb[0].mxu0
        %1027 = vmatprep.mubr.f32.mxu0 0.0
        %1028 = vmatmul.mubr.f32.gmra.mrb[0].mxu0 %v782
        %v1029 = vpop.f32.mrb[0].mxu0
        %v1030 = vadd.f32 %v886, %v1029
        %v1031 = vpop.f32.mrb[0].mxu0
        %1032 = vmatprep.mubr.f32.mxu0 0.0
        %1033 = vmatmul.mubr.f32.gmra.mrb[0].mxu0 %v787
        %v1034 = vpop.f32.mrb[0].mxu0
        %v1035 = vadd.f32 %v886, %v1034
        %v1036 = vpop.f32.mrb[0].mxu0
        %1037 = vmatprep.mubr.f32.mxu0 0.0
        %1038 = vmatmul.mubr.f32.gmra.mrb[0].mxu0 %v792
        %v1039 = vpop.f32.mrb[0].mxu0
        %v1040 = vadd.f32 %v886, %v1039
        %v1041 = vpop.f32.mrb[0].mxu0
        %1042 = vmatprep.mubr.f32.mxu0 0.0
        %1043 = vmatmul.mubr.f32.gmra.mrb[0].mxu0 %v797
        %v1044 = vpop.f32.mrb[0].mxu0
        %v1045 = vadd.f32 %v886, %v1044
        %v1046 = vpop.f32.mrb[0].mxu0
        %1047 = vmatprep.mubr.f32.mxu0 0.0
        %1048 = vmatmul.mubr.f32.gmra.mrb[0].mxu0 %v802
        %v1049 = vpop.f32.mrb[0].mxu0
        %v1050 = vadd.f32 %v886, %v1049
        %v1051 = vpop.f32.mrb[0].mxu0
        %1052 = vmatprep.mubr.f32.mxu0 0.0
        %1053 = vmatmul.mubr.f32.gmra.mrb[0].mxu0 %v807
        %v1054 = vpop.f32.mrb[0].mxu0
        %v1055 = vadd.f32 %v886, %v1054
        %v1056 = vpop.f32.mrb[0].mxu0
        %1057 = vmatprep.mubr.f32.mxu0 0.0
        %1058 = vmatmul.mubr.f32.gmra.mrb[0].mxu0 %v812
        %v1059 = vpop.f32.mrb[0].mxu0
        %v1060 = vadd.f32 %v886, %v1059
        %v1061 = vpop.f32.mrb[0].mxu0
        %1062 = vmatprep.mubr.f32.mxu0 0.0
        %1063 = vmatmul.mubr.f32.gmra.mrb[0].mxu0 %v817
        %v1064 = vpop.f32.mrb[0].mxu0
        %v1065 = vadd.f32 %v886, %v1064
        %v1066 = vpop.f32.mrb[0].mxu0
        %1067 = vmatprep.mubr.f32.mxu0 0.0
        %1068 = vmatmul.mubr.f32.gmra.mrb[0].mxu0 %v822
        %v1069 = vpop.f32.mrb[0].mxu0
        %v1070 = vadd.f32 %v886, %v1069
        %v1071 = vpop.f32.mrb[0].mxu0
        %1072 = vmatprep.mubr.f32.mxu0 0.0
        %1073 = vmatmul.mubr.f32.gmra.mrb[0].mxu0 %v827
        %v1074 = vpop.f32.mrb[0].mxu0
        %v1075 = vadd.f32 %v886, %v1074
        %v1076 = vpop.f32.mrb[0].mxu0
        %1077 = vmatprep.mubr.f32.mxu0 0.0
        %1078 = vmatmul.mubr.f32.gmra.mrb[0].mxu0 %v832
        %v1079 = vpop.f32.mrb[0].mxu0
        %v1080 = vadd.f32 %v886, %v1079
        %v1081 = vpop.f32.mrb[0].mxu0
        %1082 = vmatprep.mubr.f32.mxu0 0.0
        %1083 = vmatmul.mubr.f32.gmra.mrb[0].mxu0 %v837
        %v1084 = vpop.f32.mrb[0].mxu0
        %v1085 = vadd.f32 %v886, %v1084
        %v1086 = vpop.f32.mrb[0].mxu0
        %1087 = vmatprep.mubr.f32.mxu0 0.0
        %1088 = vmatmul.mubr.f32.gmra.mrb[0].mxu0 %v842
        %v1089 = vpop.f32.mrb[0].mxu0
        %v1090 = vadd.f32 %v886, %v1089
        %v1091 = vpop.f32.mrb[0].mxu0
        %1092 = vmatprep.mubr.f32.mxu0 0.0
        %1093 = vmatmul.mubr.f32.gmra.mrb[0].mxu0 %v847
        %v1094 = vpop.f32.mrb[0].mxu0
        %v1095 = vadd.f32 %v886, %v1094
        %v1096 = vpop.f32.mrb[0].mxu0
        %1097 = vmatprep.mubr.f32.mxu0 0.0
        %1098 = vmatmul.mubr.f32.gmra.mrb[0].mxu0 %v852
        %v1099 = vpop.f32.mrb[0].mxu0
        %v1100 = vadd.f32 %v886, %v1099
        %v1101 = vpop.f32.mrb[0].mxu0
        %1102 = vmatprep.mubr.f32.mxu0 0.0
        %1103 = vmatmul.mubr.f32.gmra.mrb[0].mxu0 %v857
        %v1104 = vpop.f32.mrb[0].mxu0
        %v1105 = vadd.f32 %v886, %v1104
        %v1106 = vpop.f32.mrb[0].mxu0
        %1107 = vmatprep.mubr.f32.mxu0 0.0
        %1108 = vmatmul.mubr.f32.gmra.mrb[0].mxu0 %v862
        %v1109 = vpop.f32.mrb[0].mxu0
        %v1110 = vadd.f32 %v886, %v1109
        %v1111 = vpop.f32.mrb[0].mxu0
        %1112 = vdwg.mxu0
        %v1113 = vadd.f32 %v955, %v560
        %v1114 = vadd.f32 %v960, %v561
        %v1115 = vadd.f32 %v965, %v562
        %v1116 = vadd.f32 %v970, %v563
        %v1117 = vadd.f32 %v975, %v564
        %v1118 = vadd.f32 %v980, %v565
        %v1119 = vadd.f32 %v985, %v566
        %v1120 = vadd.f32 %v990, %v567
        %v1121 = vadd.f32 %v995, %v568
        %v1122 = vadd.f32 %v1000, %v569
        %v1123 = vadd.f32 %v1005, %v570
        %v1124 = vadd.f32 %v1010, %v571
        %v1125 = vadd.f32 %v1015, %v572
        %v1126 = vadd.f32 %v1020, %v573
        %v1127 = vadd.f32 %v1025, %v574
        %v1128 = vadd.f32 %v1030, %v575
        %v1129 = vadd.f32 %v1035, %v576
        %v1130 = vadd.f32 %v1040, %v577
        %v1131 = vadd.f32 %v1045, %v578
        %v1132 = vadd.f32 %v1050, %v579
        %v1133 = vadd.f32 %v1055, %v580
        %v1134 = vadd.f32 %v1060, %v581
        %v1135 = vadd.f32 %v1065, %v582
        %v1136 = vadd.f32 %v1070, %v583
        %v1137 = vadd.f32 %v1075, %v584
        %v1138 = vadd.f32 %v1080, %v585
        %v1139 = vadd.f32 %v1085, %v586
        %v1140 = vadd.f32 %v1090, %v587
        %v1141 = vadd.f32 %v1095, %v588
        %v1142 = vadd.f32 %v1100, %v589
        %v1143 = vadd.f32 %v1105, %v590
        %v1144 = vadd.f32 %v1110, %v591
        %1145 = vadd.xlane.f32.xlu0 %v1113
        %v1146 = vpop.xlane.xlu0 %1145
        %1147 = vadd.xlane.f32.xlu0 %v1114
        %v1148 = vpop.xlane.xlu0 %1147
        %1149 = vadd.xlane.f32.xlu0 %v1115
        %v1150 = vpop.xlane.xlu0 %1149
        %1151 = vadd.xlane.f32.xlu0 %v1116
        %v1152 = vpop.xlane.xlu0 %1151
        %1153 = vadd.xlane.f32.xlu0 %v1117
        %v1154 = vpop.xlane.xlu0 %1153
        %1155 = vadd.xlane.f32.xlu0 %v1118
        %v1156 = vpop.xlane.xlu0 %1155
        %1157 = vadd.xlane.f32.xlu0 %v1119
        %v1158 = vpop.xlane.xlu0 %1157
        %1159 = vadd.xlane.f32.xlu0 %v1120
        %v1160 = vpop.xlane.xlu0 %1159
        %1161 = vadd.xlane.f32.xlu0 %v1121
        %v1162 = vpop.xlane.xlu0 %1161
        %1163 = vadd.xlane.f32.xlu0 %v1122
        %v1164 = vpop.xlane.xlu0 %1163
        %1165 = vadd.xlane.f32.xlu0 %v1123
        %v1166 = vpop.xlane.xlu0 %1165
        %1167 = vadd.xlane.f32.xlu0 %v1124
        %v1168 = vpop.xlane.xlu0 %1167
        %1169 = vadd.xlane.f32.xlu0 %v1125
        %v1170 = vpop.xlane.xlu0 %1169
        %1171 = vadd.xlane.f32.xlu0 %v1126
        %v1172 = vpop.xlane.xlu0 %1171
        %1173 = vadd.xlane.f32.xlu0 %v1127
        %v1174 = vpop.xlane.xlu0 %1173
        %1175 = vadd.xlane.f32.xlu0 %v1128
        %v1176 = vpop.xlane.xlu0 %1175
        %1177 = vadd.xlane.f32.xlu0 %v1129
        %v1178 = vpop.xlane.xlu0 %1177
        %1179 = vadd.xlane.f32.xlu0 %v1130
        %v1180 = vpop.xlane.xlu0 %1179
        %1181 = vadd.xlane.f32.xlu0 %v1131
        %v1182 = vpop.xlane.xlu0 %1181
        %1183 = vadd.xlane.f32.xlu0 %v1132
        %v1184 = vpop.xlane.xlu0 %1183
        %1185 = vadd.xlane.f32.xlu0 %v1133
        %v1186 = vpop.xlane.xlu0 %1185
        %1187 = vadd.xlane.f32.xlu0 %v1134
        %v1188 = vpop.xlane.xlu0 %1187
        %1189 = vadd.xlane.f32.xlu0 %v1135
        %v1190 = vpop.xlane.xlu0 %1189
        %1191 = vadd.xlane.f32.xlu0 %v1136
        %v1192 = vpop.xlane.xlu0 %1191
        %1193 = vadd.xlane.f32.xlu0 %v1137
        %v1194 = vpop.xlane.xlu0 %1193
        %1195 = vadd.xlane.f32.xlu0 %v1138
        %v1196 = vpop.xlane.xlu0 %1195
        %1197 = vadd.xlane.f32.xlu0 %v1139
        %v1198 = vpop.xlane.xlu0 %1197
        %1199 = vadd.xlane.f32.xlu0 %v1140
        %v1200 = vpop.xlane.xlu0 %1199
        %1201 = vadd.xlane.f32.xlu0 %v1141
        %v1202 = vpop.xlane.xlu0 %1201
        %1203 = vadd.xlane.f32.xlu0 %v1142
        %v1204 = vpop.xlane.xlu0 %1203
        %1205 = vadd.xlane.f32.xlu0 %v1143
        %v1206 = vpop.xlane.xlu0 %1205
        %1207 = vadd.xlane.f32.xlu0 %v1144
        %v1208 = vpop.xlane.xlu0 %1207
        %v1209 = vmul.f32 %v1113, %v1113
        %v1210 = vmul.f32 %v1114, %v1114
        %v1211 = vmul.f32 %v1115, %v1115
        %v1212 = vmul.f32 %v1116, %v1116
        %v1213 = vmul.f32 %v1117, %v1117
        %v1214 = vmul.f32 %v1118, %v1118
        %v1215 = vmul.f32 %v1119, %v1119
        %v1216 = vmul.f32 %v1120, %v1120
        %v1217 = vmul.f32 %v1121, %v1121
        %v1218 = vmul.f32 %v1122, %v1122
        %v1219 = vmul.f32 %v1123, %v1123
        %v1220 = vmul.f32 %v1124, %v1124
        %v1221 = vmul.f32 %v1125, %v1125
        %v1222 = vmul.f32 %v1126, %v1126
        %v1223 = vmul.f32 %v1127, %v1127
        %v1224 = vmul.f32 %v1128, %v1128
        %v1225 = vmul.f32 %v1129, %v1129
        %v1226 = vmul.f32 %v1130, %v1130
        %v1227 = vmul.f32 %v1131, %v1131
        %v1228 = vmul.f32 %v1132, %v1132
        %v1229 = vmul.f32 %v1133, %v1133
        %v1230 = vmul.f32 %v1134, %v1134
        %v1231 = vmul.f32 %v1135, %v1135
        %v1232 = vmul.f32 %v1136, %v1136
        %v1233 = vmul.f32 %v1137, %v1137
        %v1234 = vmul.f32 %v1138, %v1138
        %v1235 = vmul.f32 %v1139, %v1139
        %v1236 = vmul.f32 %v1140, %v1140
        %v1237 = vmul.f32 %v1141, %v1141
        %v1238 = vmul.f32 %v1142, %v1142
        %v1239 = vmul.f32 %v1143, %v1143
        %v1240 = vmul.f32 %v1144, %v1144
        %1241 = vadd.xlane.f32.xlu0 %v1209
        %v1242 = vpop.xlane.xlu0 %1241
        %1243 = vadd.xlane.f32.xlu0 %v1210
        %v1244 = vpop.xlane.xlu0 %1243
        %1245 = vadd.xlane.f32.xlu0 %v1211
        %v1246 = vpop.xlane.xlu0 %1245
        %1247 = vadd.xlane.f32.xlu0 %v1212
        %v1248 = vpop.xlane.xlu0 %1247
        %1249 = vadd.xlane.f32.xlu0 %v1213
        %v1250 = vpop.xlane.xlu0 %1249
        %1251 = vadd.xlane.f32.xlu0 %v1214
        %v1252 = vpop.xlane.xlu0 %1251
        %1253 = vadd.xlane.f32.xlu0 %v1215
        %v1254 = vpop.xlane.xlu0 %1253
        %1255 = vadd.xlane.f32.xlu0 %v1216
        %v1256 = vpop.xlane.xlu0 %1255
        %1257 = vadd.xlane.f32.xlu0 %v1217
        %v1258 = vpop.xlane.xlu0 %1257
        %1259 = vadd.xlane.f32.xlu0 %v1218
        %v1260 = vpop.xlane.xlu0 %1259
        %1261 = vadd.xlane.f32.xlu0 %v1219
        %v1262 = vpop.xlane.xlu0 %1261
        %1263 = vadd.xlane.f32.xlu0 %v1220
        %v1264 = vpop.xlane.xlu0 %1263
        %1265 = vadd.xlane.f32.xlu0 %v1221
        %v1266 = vpop.xlane.xlu0 %1265
        %1267 = vadd.xlane.f32.xlu0 %v1222
        %v1268 = vpop.xlane.xlu0 %1267
        %1269 = vadd.xlane.f32.xlu0 %v1223
        %v1270 = vpop.xlane.xlu0 %1269
        %1271 = vadd.xlane.f32.xlu0 %v1224
        %v1272 = vpop.xlane.xlu0 %1271
        %1273 = vadd.xlane.f32.xlu0 %v1225
        %v1274 = vpop.xlane.xlu0 %1273
        %1275 = vadd.xlane.f32.xlu0 %v1226
        %v1276 = vpop.xlane.xlu0 %1275
        %1277 = vadd.xlane.f32.xlu0 %v1227
        %v1278 = vpop.xlane.xlu0 %1277
        %1279 = vadd.xlane.f32.xlu0 %v1228
        %v1280 = vpop.xlane.xlu0 %1279
        %1281 = vadd.xlane.f32.xlu0 %v1229
        %v1282 = vpop.xlane.xlu0 %1281
        %1283 = vadd.xlane.f32.xlu0 %v1230
        %v1284 = vpop.xlane.xlu0 %1283
        %1285 = vadd.xlane.f32.xlu0 %v1231
        %v1286 = vpop.xlane.xlu0 %1285
        %1287 = vadd.xlane.f32.xlu0 %v1232
        %v1288 = vpop.xlane.xlu0 %1287
        %1289 = vadd.xlane.f32.xlu0 %v1233
        %v1290 = vpop.xlane.xlu0 %1289
        %1291 = vadd.xlane.f32.xlu0 %v1234
        %v1292 = vpop.xlane.xlu0 %1291
        %1293 = vadd.xlane.f32.xlu0 %v1235
        %v1294 = vpop.xlane.xlu0 %1293
        %1295 = vadd.xlane.f32.xlu0 %v1236
        %v1296 = vpop.xlane.xlu0 %1295
        %1297 = vadd.xlane.f32.xlu0 %v1237
        %v1298 = vpop.xlane.xlu0 %1297
        %1299 = vadd.xlane.f32.xlu0 %v1238
        %v1300 = vpop.xlane.xlu0 %1299
        %1301 = vadd.xlane.f32.xlu0 %v1239
        %v1302 = vpop.xlane.xlu0 %1301
        %1303 = vadd.xlane.f32.xlu0 %v1240
        %v1304 = vpop.xlane.xlu0 %1303
        %v1305 = vmul.f32 %v1146, 0.0078125
        %v1306 = vmul.f32 %v1148, 0.0078125
        %v1307 = vmul.f32 %v1150, 0.0078125
        %v1308 = vmul.f32 %v1152, 0.0078125
        %v1309 = vmul.f32 %v1154, 0.0078125
        %v1310 = vmul.f32 %v1156, 0.0078125
        %v1311 = vmul.f32 %v1158, 0.0078125
        %v1312 = vmul.f32 %v1160, 0.0078125
        %v1313 = vmul.f32 %v1162, 0.0078125
        %v1314 = vmul.f32 %v1164, 0.0078125
        %v1315 = vmul.f32 %v1166, 0.0078125
        %v1316 = vmul.f32 %v1168, 0.0078125
        %v1317 = vmul.f32 %v1170, 0.0078125
        %v1318 = vmul.f32 %v1172, 0.0078125
        %v1319 = vmul.f32 %v1174, 0.0078125
        %v1320 = vmul.f32 %v1176, 0.0078125
        %v1321 = vmul.f32 %v1178, 0.0078125
        %v1322 = vmul.f32 %v1180, 0.0078125
        %v1323 = vmul.f32 %v1182, 0.0078125
        %v1324 = vmul.f32 %v1184, 0.0078125
        %v1325 = vmul.f32 %v1186, 0.0078125
        %v1326 = vmul.f32 %v1188, 0.0078125
        %v1327 = vmul.f32 %v1190, 0.0078125
        %v1328 = vmul.f32 %v1192, 0.0078125
        %v1329 = vmul.f32 %v1194, 0.0078125
        %v1330 = vmul.f32 %v1196, 0.0078125
        %v1331 = vmul.f32 %v1198, 0.0078125
        %v1332 = vmul.f32 %v1200, 0.0078125
        %v1333 = vmul.f32 %v1202, 0.0078125
        %v1334 = vmul.f32 %v1204, 0.0078125
        %v1335 = vmul.f32 %v1206, 0.0078125
        %v1336 = vmul.f32 %v1208, 0.0078125
        %v1337 = vmul.f32 %v1242, 0.0078125
        %v1338 = vmul.f32 %v1244, 0.0078125
        %v1339 = vmul.f32 %v1246, 0.0078125
        %v1340 = vmul.f32 %v1248, 0.0078125
        %v1341 = vmul.f32 %v1250, 0.0078125
        %v1342 = vmul.f32 %v1252, 0.0078125
        %v1343 = vmul.f32 %v1254, 0.0078125
        %v1344 = vmul.f32 %v1256, 0.0078125
        %v1345 = vmul.f32 %v1258, 0.0078125
        %v1346 = vmul.f32 %v1260, 0.0078125
        %v1347 = vmul.f32 %v1262, 0.0078125
        %v1348 = vmul.f32 %v1264, 0.0078125
        %v1349 = vmul.f32 %v1266, 0.0078125
        %v1350 = vmul.f32 %v1268, 0.0078125
        %v1351 = vmul.f32 %v1270, 0.0078125
        %v1352 = vmul.f32 %v1272, 0.0078125
        %v1353 = vmul.f32 %v1274, 0.0078125
        %v1354 = vmul.f32 %v1276, 0.0078125
        %v1355 = vmul.f32 %v1278, 0.0078125
        %v1356 = vmul.f32 %v1280, 0.0078125
        %v1357 = vmul.f32 %v1282, 0.0078125
        %v1358 = vmul.f32 %v1284, 0.0078125
        %v1359 = vmul.f32 %v1286, 0.0078125
        %v1360 = vmul.f32 %v1288, 0.0078125
        %v1361 = vmul.f32 %v1290, 0.0078125
        %v1362 = vmul.f32 %v1292, 0.0078125
        %v1363 = vmul.f32 %v1294, 0.0078125
        %v1364 = vmul.f32 %v1296, 0.0078125
        %v1365 = vmul.f32 %v1298, 0.0078125
        %v1366 = vmul.f32 %v1300, 0.0078125
        %v1367 = vmul.f32 %v1302, 0.0078125
        %v1368 = vmul.f32 %v1304, 0.0078125
        %v1369 = vmul.f32 %v1305, %v1305
        %v1370 = vmul.f32 %v1306, %v1306
        %v1371 = vmul.f32 %v1307, %v1307
        %v1372 = vmul.f32 %v1308, %v1308
        %v1373 = vmul.f32 %v1309, %v1309
        %v1374 = vmul.f32 %v1310, %v1310
        %v1375 = vmul.f32 %v1311, %v1311
        %v1376 = vmul.f32 %v1312, %v1312
        %v1377 = vmul.f32 %v1313, %v1313
        %v1378 = vmul.f32 %v1314, %v1314
        %v1379 = vmul.f32 %v1315, %v1315
        %v1380 = vmul.f32 %v1316, %v1316
        %v1381 = vmul.f32 %v1317, %v1317
        %v1382 = vmul.f32 %v1318, %v1318
        %v1383 = vmul.f32 %v1319, %v1319
        %v1384 = vmul.f32 %v1320, %v1320
        %v1385 = vmul.f32 %v1321, %v1321
        %v1386 = vmul.f32 %v1322, %v1322
        %v1387 = vmul.f32 %v1323, %v1323
        %v1388 = vmul.f32 %v1324, %v1324
        %v1389 = vmul.f32 %v1325, %v1325
        %v1390 = vmul.f32 %v1326, %v1326
        %v1391 = vmul.f32 %v1327, %v1327
        %v1392 = vmul.f32 %v1328, %v1328
        %v1393 = vmul.f32 %v1329, %v1329
        %v1394 = vmul.f32 %v1330, %v1330
        %v1395 = vmul.f32 %v1331, %v1331
        %v1396 = vmul.f32 %v1332, %v1332
        %v1397 = vmul.f32 %v1333, %v1333
        %v1398 = vmul.f32 %v1334, %v1334
        %v1399 = vmul.f32 %v1335, %v1335
        %v1400 = vmul.f32 %v1336, %v1336
        %v1401 = vsub.f32 %v1337, %v1369
        %v1402 = vsub.f32 %v1338, %v1370
        %v1403 = vsub.f32 %v1339, %v1371
        %v1404 = vsub.f32 %v1340, %v1372
        %v1405 = vsub.f32 %v1341, %v1373
        %v1406 = vsub.f32 %v1342, %v1374
        %v1407 = vsub.f32 %v1343, %v1375
        %v1408 = vsub.f32 %v1344, %v1376
        %v1409 = vsub.f32 %v1345, %v1377
        %v1410 = vsub.f32 %v1346, %v1378
        %v1411 = vsub.f32 %v1347, %v1379
        %v1412 = vsub.f32 %v1348, %v1380
        %v1413 = vsub.f32 %v1349, %v1381
        %v1414 = vsub.f32 %v1350, %v1382
        %v1415 = vsub.f32 %v1351, %v1383
        %v1416 = vsub.f32 %v1352, %v1384
        %v1417 = vsub.f32 %v1353, %v1385
        %v1418 = vsub.f32 %v1354, %v1386
        %v1419 = vsub.f32 %v1355, %v1387
        %v1420 = vsub.f32 %v1356, %v1388
        %v1421 = vsub.f32 %v1357, %v1389
        %v1422 = vsub.f32 %v1358, %v1390
        %v1423 = vsub.f32 %v1359, %v1391
        %v1424 = vsub.f32 %v1360, %v1392
        %v1425 = vsub.f32 %v1361, %v1393
        %v1426 = vsub.f32 %v1362, %v1394
        %v1427 = vsub.f32 %v1363, %v1395
        %v1428 = vsub.f32 %v1364, %v1396
        %v1429 = vsub.f32 %v1365, %v1397
        %v1430 = vsub.f32 %v1366, %v1398
        %v1431 = vsub.f32 %v1367, %v1399
        %v1432 = vsub.f32 %v1368, %v1400
        %v1433 = vsub.f32 %v1113, %v1305
        %v1434 = vsub.f32 %v1114, %v1306
        %v1435 = vsub.f32 %v1115, %v1307
        %v1436 = vsub.f32 %v1116, %v1308
        %v1437 = vsub.f32 %v1117, %v1309
        %v1438 = vsub.f32 %v1118, %v1310
        %v1439 = vsub.f32 %v1119, %v1311
        %v1440 = vsub.f32 %v1120, %v1312
        %v1441 = vsub.f32 %v1121, %v1313
        %v1442 = vsub.f32 %v1122, %v1314
        %v1443 = vsub.f32 %v1123, %v1315
        %v1444 = vsub.f32 %v1124, %v1316
        %v1445 = vsub.f32 %v1125, %v1317
        %v1446 = vsub.f32 %v1126, %v1318
        %v1447 = vsub.f32 %v1127, %v1319
        %v1448 = vsub.f32 %v1128, %v1320
        %v1449 = vsub.f32 %v1129, %v1321
        %v1450 = vsub.f32 %v1130, %v1322
        %v1451 = vsub.f32 %v1131, %v1323
        %v1452 = vsub.f32 %v1132, %v1324
        %v1453 = vsub.f32 %v1133, %v1325
        %v1454 = vsub.f32 %v1134, %v1326
        %v1455 = vsub.f32 %v1135, %v1327
        %v1456 = vsub.f32 %v1136, %v1328
        %v1457 = vsub.f32 %v1137, %v1329
        %v1458 = vsub.f32 %v1138, %v1330
        %v1459 = vsub.f32 %v1139, %v1331
        %v1460 = vsub.f32 %v1140, %v1332
        %v1461 = vsub.f32 %v1141, %v1333
        %v1462 = vsub.f32 %v1142, %v1334
        %v1463 = vsub.f32 %v1143, %v1335
        %v1464 = vsub.f32 %v1144, %v1336
        %v1465 = vadd.f32 %v1401, 1e-05
        %v1466 = vadd.f32 %v1402, 1e-05
        %v1467 = vadd.f32 %v1403, 1e-05
        %v1468 = vadd.f32 %v1404, 1e-05
        %v1469 = vadd.f32 %v1405, 1e-05
        %v1470 = vadd.f32 %v1406, 1e-05
        %v1471 = vadd.f32 %v1407, 1e-05
        %v1472 = vadd.f32 %v1408, 1e-05
        %v1473 = vadd.f32 %v1409, 1e-05
        %v1474 = vadd.f32 %v1410, 1e-05
        %v1475 = vadd.f32 %v1411, 1e-05
        %v1476 = vadd.f32 %v1412, 1e-05
        %v1477 = vadd.f32 %v1413, 1e-05
        %v1478 = vadd.f32 %v1414, 1e-05
        %v1479 = vadd.f32 %v1415, 1e-05
        %v1480 = vadd.f32 %v1416, 1e-05
        %v1481 = vadd.f32 %v1417, 1e-05
        %v1482 = vadd.f32 %v1418, 1e-05
        %v1483 = vadd.f32 %v1419, 1e-05
        %v1484 = vadd.f32 %v1420, 1e-05
        %v1485 = vadd.f32 %v1421, 1e-05
        %v1486 = vadd.f32 %v1422, 1e-05
        %v1487 = vadd.f32 %v1423, 1e-05
        %v1488 = vadd.f32 %v1424, 1e-05
        %v1489 = vadd.f32 %v1425, 1e-05
        %v1490 = vadd.f32 %v1426, 1e-05
        %v1491 = vadd.f32 %v1427, 1e-05
        %v1492 = vadd.f32 %v1428, 1e-05
        %v1493 = vadd.f32 %v1429, 1e-05
        %v1494 = vadd.f32 %v1430, 1e-05
        %v1495 = vadd.f32 %v1431, 1e-05
        %v1496 = vadd.f32 %v1432, 1e-05
        %v1497 = vrsqrt.pop %v1465
        %v1498 = vrsqrt.pop %v1466
        %v1499 = vrsqrt.pop %v1467
        %v1500 = vrsqrt.pop %v1468
        %v1501 = vrsqrt.pop %v1469
        %v1502 = vrsqrt.pop %v1470
        %v1503 = vrsqrt.pop %v1471
        %v1504 = vrsqrt.pop %v1472
        %v1505 = vrsqrt.pop %v1473
        %v1506 = vrsqrt.pop %v1474
        %v1507 = vrsqrt.pop %v1475
        %v1508 = vrsqrt.pop %v1476
        %v1509 = vrsqrt.pop %v1477
        %v1510 = vrsqrt.pop %v1478
        %v1511 = vrsqrt.pop %v1479
        %v1512 = vrsqrt.pop %v1480
        %v1513 = vrsqrt.pop %v1481
        %v1514 = vrsqrt.pop %v1482
        %v1515 = vrsqrt.pop %v1483
        %v1516 = vrsqrt.pop %v1484
        %v1517 = vrsqrt.pop %v1485
        %v1518 = vrsqrt.pop %v1486
        %v1519 = vrsqrt.pop %v1487
        %v1520 = vrsqrt.pop %v1488
        %v1521 = vrsqrt.pop %v1489
        %v1522 = vrsqrt.pop %v1490
        %v1523 = vrsqrt.pop %v1491
        %v1524 = vrsqrt.pop %v1492
        %v1525 = vrsqrt.pop %v1493
        %v1526 = vrsqrt.pop %v1494
        %v1527 = vrsqrt.pop %v1495
        %v1528 = vrsqrt.pop %v1496
        %v1529 = vmul.f32 %v1433, %v1497
        %v1530 = vmul.f32 %v1434, %v1498
        %v1531 = vmul.f32 %v1435, %v1499
        %v1532 = vmul.f32 %v1436, %v1500
        %v1533 = vmul.f32 %v1437, %v1501
        %v1534 = vmul.f32 %v1438, %v1502
        %v1535 = vmul.f32 %v1439, %v1503
        %v1536 = vmul.f32 %v1440, %v1504
        %v1537 = vmul.f32 %v1441, %v1505
        %v1538 = vmul.f32 %v1442, %v1506
        %v1539 = vmul.f32 %v1443, %v1507
        %v1540 = vmul.f32 %v1444, %v1508
        %v1541 = vmul.f32 %v1445, %v1509
        %v1542 = vmul.f32 %v1446, %v1510
        %v1543 = vmul.f32 %v1447, %v1511
        %v1544 = vmul.f32 %v1448, %v1512
        %v1545 = vmul.f32 %v1449, %v1513
        %v1546 = vmul.f32 %v1450, %v1514
        %v1547 = vmul.f32 %v1451, %v1515
        %v1548 = vmul.f32 %v1452, %v1516
        %v1549 = vmul.f32 %v1453, %v1517
        %v1550 = vmul.f32 %v1454, %v1518
        %v1551 = vmul.f32 %v1455, %v1519
        %v1552 = vmul.f32 %v1456, %v1520
        %v1553 = vmul.f32 %v1457, %v1521
        %v1554 = vmul.f32 %v1458, %v1522
        %v1555 = vmul.f32 %v1459, %v1523
        %v1556 = vmul.f32 %v1460, %v1524
        %v1557 = vmul.f32 %v1461, %v1525
        %v1558 = vmul.f32 %v1462, %v1526
        %v1559 = vmul.f32 %v1463, %v1527
        %v1560 = vmul.f32 %v1464, %v1528
        %v1561 = vld [vmem:[%s5] sm:$0x1]
        %v1563 = vlaneseq
        %v1564 = vshrl.u32 %v1563, 7
        %v1565 = vsub.s32 0, %v1564
        %v1566 = vrot.slane %v1561, %v1565
        %v1568 = vmul.f32 %v1529, %v1566
        %v1569 = vmul.f32 %v1530, %v1566
        %v1570 = vmul.f32 %v1531, %v1566
        %v1571 = vmul.f32 %v1532, %v1566
        %v1572 = vmul.f32 %v1533, %v1566
        %v1573 = vmul.f32 %v1534, %v1566
        %v1574 = vmul.f32 %v1535, %v1566
        %v1575 = vmul.f32 %v1536, %v1566
        %v1576 = vmul.f32 %v1537, %v1566
        %v1577 = vmul.f32 %v1538, %v1566
        %v1578 = vmul.f32 %v1539, %v1566
        %v1579 = vmul.f32 %v1540, %v1566
        %v1580 = vmul.f32 %v1541, %v1566
        %v1581 = vmul.f32 %v1542, %v1566
        %v1582 = vmul.f32 %v1543, %v1566
        %v1583 = vmul.f32 %v1544, %v1566
        %v1584 = vmul.f32 %v1545, %v1566
        %v1585 = vmul.f32 %v1546, %v1566
        %v1586 = vmul.f32 %v1547, %v1566
        %v1587 = vmul.f32 %v1548, %v1566
        %v1588 = vmul.f32 %v1549, %v1566
        %v1589 = vmul.f32 %v1550, %v1566
        %v1590 = vmul.f32 %v1551, %v1566
        %v1591 = vmul.f32 %v1552, %v1566
        %v1592 = vmul.f32 %v1553, %v1566
        %v1593 = vmul.f32 %v1554, %v1566
        %v1594 = vmul.f32 %v1555, %v1566
        %v1595 = vmul.f32 %v1556, %v1566
        %v1596 = vmul.f32 %v1557, %v1566
        %v1597 = vmul.f32 %v1558, %v1566
        %v1598 = vmul.f32 %v1559, %v1566
        %v1599 = vmul.f32 %v1560, %v1566
        %v1600 = vld [vmem:[%s6] sm:$0x1]
        %v1602 = vlaneseq
        %v1603 = vshrl.u32 %v1602, 7
        %v1604 = vsub.s32 0, %v1603
        %v1605 = vrot.slane %v1600, %v1604
        %v1607 = vadd.f32 %v1568, %v1605
        %v1608 = vadd.f32 %v1569, %v1605
        %v1609 = vadd.f32 %v1570, %v1605
        %v1610 = vadd.f32 %v1571, %v1605
        %v1611 = vadd.f32 %v1572, %v1605
        %v1612 = vadd.f32 %v1573, %v1605
        %v1613 = vadd.f32 %v1574, %v1605
        %v1614 = vadd.f32 %v1575, %v1605
        %v1615 = vadd.f32 %v1576, %v1605
        %v1616 = vadd.f32 %v1577, %v1605
        %v1617 = vadd.f32 %v1578, %v1605
        %v1618 = vadd.f32 %v1579, %v1605
        %v1619 = vadd.f32 %v1580, %v1605
        %v1620 = vadd.f32 %v1581, %v1605
        %v1621 = vadd.f32 %v1582, %v1605
        %v1622 = vadd.f32 %v1583, %v1605
        %v1623 = vadd.f32 %v1584, %v1605
        %v1624 = vadd.f32 %v1585, %v1605
        %v1625 = vadd.f32 %v1586, %v1605
        %v1626 = vadd.f32 %v1587, %v1605
        %v1627 = vadd.f32 %v1588, %v1605
        %v1628 = vadd.f32 %v1589, %v1605
        %v1629 = vadd.f32 %v1590, %v1605
        %v1630 = vadd.f32 %v1591, %v1605
        %v1631 = vadd.f32 %v1592, %v1605
        %v1632 = vadd.f32 %v1593, %v1605
        %v1633 = vadd.f32 %v1594, %v1605
        %v1634 = vadd.f32 %v1595, %v1605
        %v1635 = vadd.f32 %v1596, %v1605
        %v1636 = vadd.f32 %v1597, %v1605
        %v1637 = vadd.f32 %v1598, %v1605
        %v1638 = vadd.f32 %v1599, %v1605
        %v1639 = vld [vmem:[#allocation10] sm:$0xff]
        %v1640 = vld [vmem:[#allocation10 + $0x8] sm:$0xff]
        %v1641 = vld [vmem:[#allocation10 + $0x10] sm:$0xff]
        %v1642 = vld [vmem:[#allocation10 + $0x18] sm:$0xff]
        %v1643 = vld [vmem:[#allocation10 + $0x20] sm:$0xff]
        %v1644 = vld [vmem:[#allocation10 + $0x28] sm:$0xff]
        %v1645 = vld [vmem:[#allocation10 + $0x30] sm:$0xff]
        %v1646 = vld [vmem:[#allocation10 + $0x38] sm:$0xff]
        %v1647 = vld [vmem:[#allocation10 + $0x40] sm:$0xff]
        %v1648 = vld [vmem:[#allocation10 + $0x48] sm:$0xff]
        %v1649 = vld [vmem:[#allocation10 + $0x50] sm:$0xff]
        %v1650 = vld [vmem:[#allocation10 + $0x58] sm:$0xff]
        %v1651 = vld [vmem:[#allocation10 + $0x60] sm:$0xff]
        %v1652 = vld [vmem:[#allocation10 + $0x68] sm:$0xff]
        %v1653 = vld [vmem:[#allocation10 + $0x70] sm:$0xff]
        %v1654 = vld [vmem:[#allocation10 + $0x78] sm:$0xff]
        %v1655 = vld [vmem:[#allocation10 + $0x80] sm:$0xff]
        %v1656 = vld [vmem:[#allocation10 + $0x88] sm:$0xff]
        %v1657 = vld [vmem:[#allocation10 + $0x90] sm:$0xff]
        %v1658 = vld [vmem:[#allocation10 + $0x98] sm:$0xff]
        %v1659 = vld [vmem:[#allocation10 + $0xa0] sm:$0xff]
        %v1660 = vld [vmem:[#allocation10 + $0xa8] sm:$0xff]
        %v1661 = vld [vmem:[#allocation10 + $0xb0] sm:$0xff]
        %v1662 = vld [vmem:[#allocation10 + $0xb8] sm:$0xff]
        %v1663 = vld [vmem:[#allocation10 + $0xc0] sm:$0xff]
        %v1664 = vld [vmem:[#allocation10 + $0xc8] sm:$0xff]
        %v1665 = vld [vmem:[#allocation10 + $0xd0] sm:$0xff]
        %v1666 = vld [vmem:[#allocation10 + $0xd8] sm:$0xff]
        %v1667 = vld [vmem:[#allocation10 + $0xe0] sm:$0xff]
        %v1668 = vld [vmem:[#allocation10 + $0xe8] sm:$0xff]
        %v1669 = vld [vmem:[#allocation10 + $0xf0] sm:$0xff]
        %v1670 = vld [vmem:[#allocation10 + $0xf8] sm:$0xff]
        %v1671 = vld [vmem:[#allocation10 + $0x100] sm:$0xff]
        %v1672 = vld [vmem:[#allocation10 + $0x108] sm:$0xff]
        %v1673 = vld [vmem:[#allocation10 + $0x110] sm:$0xff]
        %v1674 = vld [vmem:[#allocation10 + $0x118] sm:$0xff]
        %v1675 = vld [vmem:[#allocation10 + $0x120] sm:$0xff]
        %v1676 = vld [vmem:[#allocation10 + $0x128] sm:$0xff]
        %v1677 = vld [vmem:[#allocation10 + $0x130] sm:$0xff]
        %v1678 = vld [vmem:[#allocation10 + $0x138] sm:$0xff]
        %v1679 = vld [vmem:[#allocation10 + $0x140] sm:$0xff]
        %v1680 = vld [vmem:[#allocation10 + $0x148] sm:$0xff]
        %v1681 = vld [vmem:[#allocation10 + $0x150] sm:$0xff]
        %v1682 = vld [vmem:[#allocation10 + $0x158] sm:$0xff]
        %v1683 = vld [vmem:[#allocation10 + $0x160] sm:$0xff]
        %v1684 = vld [vmem:[#allocation10 + $0x168] sm:$0xff]
        %v1685 = vld [vmem:[#allocation10 + $0x170] sm:$0xff]
        %v1686 = vld [vmem:[#allocation10 + $0x178] sm:$0xff]
        %v1687 = vld [vmem:[#allocation10 + $0x180] sm:$0xff]
        %v1688 = vld [vmem:[#allocation10 + $0x188] sm:$0xff]
        %v1689 = vld [vmem:[#allocation10 + $0x190] sm:$0xff]
        %v1690 = vld [vmem:[#allocation10 + $0x198] sm:$0xff]
        %v1691 = vld [vmem:[#allocation10 + $0x1a0] sm:$0xff]
        %v1692 = vld [vmem:[#allocation10 + $0x1a8] sm:$0xff]
        %v1693 = vld [vmem:[#allocation10 + $0x1b0] sm:$0xff]
        %v1694 = vld [vmem:[#allocation10 + $0x1b8] sm:$0xff]
        %v1695 = vld [vmem:[#allocation10 + $0x1c0] sm:$0xff]
        %v1696 = vld [vmem:[#allocation10 + $0x1c8] sm:$0xff]
        %v1697 = vld [vmem:[#allocation10 + $0x1d0] sm:$0xff]
        %v1698 = vld [vmem:[#allocation10 + $0x1d8] sm:$0xff]
        %v1699 = vld [vmem:[#allocation10 + $0x1e0] sm:$0xff]
        %v1700 = vld [vmem:[#allocation10 + $0x1e8] sm:$0xff]
        %v1701 = vld [vmem:[#allocation10 + $0x1f0] sm:$0xff]
        %v1702 = vld [vmem:[#allocation10 + $0x1f8] sm:$0xff]
        %v1703 = vld [vmem:[%s8] sm:$0xf]
        %v1705 = vlaneseq
        %v1706 = vshrl.u32 %v1705, 7
        %v1707 = vsub.s32 0, %v1706
        %v1708 = vrot.slane %v1703, %v1707
        %v1709 = vlaneseq
        %v1710 = vshrl.u32 %v1709, 7
        %v1711 = vsub.s32 1, %v1710
        %v1712 = vrot.slane %v1703, %v1711
        %v1713 = vlaneseq
        %v1714 = vshrl.u32 %v1713, 7
        %v1715 = vsub.s32 2, %v1714
        %v1716 = vrot.slane %v1703, %v1715
        %v1717 = vlaneseq
        %v1718 = vshrl.u32 %v1717, 7
        %v1719 = vsub.s32 3, %v1718
        %v1720 = vrot.slane %v1703, %v1719
        %1725 = vmatprep.subr.mxu0 %v1640
        %1726 = vmatpush1.msra.mxu0 %v1639
        %1727 = vmatprep.subr.mxu0 %v1644
        %1728 = vmatpush1.msra.mxu0 %v1643
        %1729 = vmatprep.subr.mxu0 %v1648
        %1730 = vmatpush1.msra.mxu0 %v1647
        %1731 = vmatprep.subr.mxu0 %v1652
        %1732 = vmatpush1.msra.mxu0 %v1651
        %1733 = vmatprep.subr.mxu0 %v1656
        %1734 = vmatpush1.msra.mxu0 %v1655
        %1735 = vmatprep.subr.mxu0 %v1660
        %1736 = vmatpush1.msra.mxu0 %v1659
        %1737 = vmatprep.subr.mxu0 %v1664
        %1738 = vmatpush1.msra.mxu0 %v1663
        %1739 = vmatprep.subr.mxu0 %v1668
        %1740 = vmatpush1.msra.mxu0 %v1667
        %1741 = vmatprep.subr.mxu0 %v1672
        %1742 = vmatpush1.msra.mxu0 %v1671
        %1743 = vmatprep.subr.mxu0 %v1676
        %1744 = vmatpush1.msra.mxu0 %v1675
        %1745 = vmatprep.subr.mxu0 %v1680
        %1746 = vmatpush1.msra.mxu0 %v1679
        %1747 = vmatprep.subr.mxu0 %v1684
        %1748 = vmatpush1.msra.mxu0 %v1683
        %1749 = vmatprep.subr.mxu0 %v1688
        %1750 = vmatpush1.msra.mxu0 %v1687
        %1751 = vmatprep.subr.mxu0 %v1692
        %1752 = vmatpush1.msra.mxu0 %v1691
        %1753 = vmatprep.subr.mxu0 %v1696
        %1754 = vmatpush1.msra.mxu0 %v1695
        %1755 = vmatprep.subr.mxu0 %v1700
        %1756 = vmatpush1.msra.mxu0 %v1699
        %1757 = vmatprep.subr.mxu0 0.0
        %1758 = vmatpush1.msra.mxu0 0.0
        %1759 = vmatprep.subr.mxu0 0.0
        %1760 = vmatpush1.msra.mxu0 0.0
        %1761 = vmatprep.subr.mxu0 0.0
        %1762 = vmatpush1.msra.mxu0 0.0
        %1763 = vmatprep.subr.mxu0 0.0
        %1764 = vmatpush1.msra.mxu0 0.0
        %1765 = vmatprep.subr.mxu0 0.0
        %1766 = vmatpush1.msra.mxu0 0.0
        %1767 = vmatprep.subr.mxu0 0.0
        %1768 = vmatpush1.msra.mxu0 0.0
        %1769 = vmatprep.subr.mxu0 0.0
        %1770 = vmatpush1.msra.mxu0 0.0
        %1771 = vmatprep.subr.mxu0 0.0
        %1772 = vmatpush1.msra.mxu0 0.0
        %1773 = vmatprep.subr.mxu0 0.0
        %1774 = vmatpush1.msra.mxu0 0.0
        %1775 = vmatprep.subr.mxu0 0.0
        %1776 = vmatpush1.msra.mxu0 0.0
        %1777 = vmatprep.subr.mxu0 0.0
        %1778 = vmatpush1.msra.mxu0 0.0
        %1779 = vmatprep.subr.mxu0 0.0
        %1780 = vmatpush1.msra.mxu0 0.0
        %1781 = vmatprep.subr.mxu0 0.0
        %1782 = vmatpush1.msra.mxu0 0.0
        %1783 = vmatprep.subr.mxu0 0.0
        %1784 = vmatpush1.msra.mxu0 0.0
        %1785 = vmatprep.subr.mxu0 0.0
        %1786 = vmatpush1.msra.mxu0 0.0
        %1787 = vmatprep.subr.mxu0 0.0
        %1788 = vmatpush1.msra.mxu0 0.0
        %1789 = vmatprep.mubr.f32.mxu0 0.0
        %1790 = vmatmul.mubr.f32.gmra.mrb[0].mxu0 %v1607
        %v1791 = vpop.f32.mrb[0].mxu0
        %v1792 = vadd.f32 %v1708, %v1791
        %v1793 = vpop.f32.mrb[0].mxu0
        %v1794 = vadd.f32 %v1712, %v1793
        %1795 = vmatprep.mubr.f32.mxu0 0.0
        %1796 = vmatmul.mubr.f32.gmra.mrb[0].mxu0 %v1608
        %v1797 = vpop.f32.mrb[0].mxu0
        %v1798 = vadd.f32 %v1708, %v1797
        %v1799 = vpop.f32.mrb[0].mxu0
        %v1800 = vadd.f32 %v1712, %v1799
        %1801 = vmatprep.mubr.f32.mxu0 0.0
        %1802 = vmatmul.mubr.f32.gmra.mrb[0].mxu0 %v1609
        %v1803 = vpop.f32.mrb[0].mxu0
        %v1804 = vadd.f32 %v1708, %v1803
        %v1805 = vpop.f32.mrb[0].mxu0
        %v1806 = vadd.f32 %v1712, %v1805
        %1807 = vmatprep.mubr.f32.mxu0 0.0
        %1808 = vmatmul.mubr.f32.gmra.mrb[0].mxu0 %v1610
        %v1809 = vpop.f32.mrb[0].mxu0
        %v1810 = vadd.f32 %v1708, %v1809
        %v1811 = vpop.f32.mrb[0].mxu0
        %v1812 = vadd.f32 %v1712, %v1811
        %1813 = vmatprep.mubr.f32.mxu0 0.0
        %1814 = vmatmul.mubr.f32.gmra.mrb[0].mxu0 %v1611
        %v1815 = vpop.f32.mrb[0].mxu0
        %v1816 = vadd.f32 %v1708, %v1815
        %v1817 = vpop.f32.mrb[0].mxu0
        %v1818 = vadd.f32 %v1712, %v1817
        %1819 = vmatprep.mubr.f32.mxu0 0.0
        %1820 = vmatmul.mubr.f32.gmra.mrb[0].mxu0 %v1612
        %v1821 = vpop.f32.mrb[0].mxu0
        %v1822 = vadd.f32 %v1708, %v1821
        %v1823 = vpop.f32.mrb[0].mxu0
        %v1824 = vadd.f32 %v1712, %v1823
        %1825 = vmatprep.mubr.f32.mxu0 0.0
        %1826 = vmatmul.mubr.f32.gmra.mrb[0].mxu0 %v1613
        %v1827 = vpop.f32.mrb[0].mxu0
        %v1828 = vadd.f32 %v1708, %v1827
        %v1829 = vpop.f32.mrb[0].mxu0
        %v1830 = vadd.f32 %v1712, %v1829
        %1831 = vmatprep.mubr.f32.mxu0 0.0
        %1832 = vmatmul.mubr.f32.gmra.mrb[0].mxu0 %v1614
        %v1833 = vpop.f32.mrb[0].mxu0
        %v1834 = vadd.f32 %v1708, %v1833
        %v1835 = vpop.f32.mrb[0].mxu0
        %v1836 = vadd.f32 %v1712, %v1835
        %1837 = vmatprep.mubr.f32.mxu0 0.0
        %1838 = vmatmul.mubr.f32.gmra.mrb[0].mxu0 %v1615
        %v1839 = vpop.f32.mrb[0].mxu0
        %v1840 = vadd.f32 %v1708, %v1839
        %v1841 = vpop.f32.mrb[0].mxu0
        %v1842 = vadd.f32 %v1712, %v1841
        %1843 = vmatprep.mubr.f32.mxu0 0.0
        %1844 = vmatmul.mubr.f32.gmra.mrb[0].mxu0 %v1616
        %v1845 = vpop.f32.mrb[0].mxu0
        %v1846 = vadd.f32 %v1708, %v1845
        %v1847 = vpop.f32.mrb[0].mxu0
        %v1848 = vadd.f32 %v1712, %v1847
        %1849 = vmatprep.mubr.f32.mxu0 0.0
        %1850 = vmatmul.mubr.f32.gmra.mrb[0].mxu0 %v1617
        %v1851 = vpop.f32.mrb[0].mxu0
        %v1852 = vadd.f32 %v1708, %v1851
        %v1853 = vpop.f32.mrb[0].mxu0
        %v1854 = vadd.f32 %v1712, %v1853
        %1855 = vmatprep.mubr.f32.mxu0 0.0
        %1856 = vmatmul.mubr.f32.gmra.mrb[0].mxu0 %v1618
        %v1857 = vpop.f32.mrb[0].mxu0
        %v1858 = vadd.f32 %v1708, %v1857
        %v1859 = vpop.f32.mrb[0].mxu0
        %v1860 = vadd.f32 %v1712, %v1859
        %1861 = vmatprep.mubr.f32.mxu0 0.0
        %1862 = vmatmul.mubr.f32.gmra.mrb[0].mxu0 %v1619
        %v1863 = vpop.f32.mrb[0].mxu0
        %v1864 = vadd.f32 %v1708, %v1863
        %v1865 = vpop.f32.mrb[0].mxu0
        %v1866 = vadd.f32 %v1712, %v1865
        %1867 = vmatprep.mubr.f32.mxu0 0.0
        %1868 = vmatmul.mubr.f32.gmra.mrb[0].mxu0 %v1620
        %v1869 = vpop.f32.mrb[0].mxu0
        %v1870 = vadd.f32 %v1708, %v1869
        %v1871 = vpop.f32.mrb[0].mxu0
        %v1872 = vadd.f32 %v1712, %v1871
        %1873 = vmatprep.mubr.f32.mxu0 0.0
        %1874 = vmatmul.mubr.f32.gmra.mrb[0].mxu0 %v1621
        %v1875 = vpop.f32.mrb[0].mxu0
        %v1876 = vadd.f32 %v1708, %v1875
        %v1877 = vpop.f32.mrb[0].mxu0
        %v1878 = vadd.f32 %v1712, %v1877
        %1879 = vmatprep.mubr.f32.mxu0 0.0
        %1880 = vmatmul.mubr.f32.gmra.mrb[0].mxu0 %v1622
        %v1881 = vpop.f32.mrb[0].mxu0
        %v1882 = vadd.f32 %v1708, %v1881
        %v1883 = vpop.f32.mrb[0].mxu0
        %v1884 = vadd.f32 %v1712, %v1883
        %1885 = vmatprep.mubr.f32.mxu0 0.0
        %1886 = vmatmul.mubr.f32.gmra.mrb[0].mxu0 %v1623
        %v1887 = vpop.f32.mrb[0].mxu0
        %v1888 = vadd.f32 %v1708, %v1887
        %v1889 = vpop.f32.mrb[0].mxu0
        %v1890 = vadd.f32 %v1712, %v1889
        %1891 = vmatprep.mubr.f32.mxu0 0.0
        %1892 = vmatmul.mubr.f32.gmra.mrb[0].mxu0 %v1624
        %v1893 = vpop.f32.mrb[0].mxu0
        %v1894 = vadd.f32 %v1708, %v1893
        %v1895 = vpop.f32.mrb[0].mxu0
        %v1896 = vadd.f32 %v1712, %v1895
        %1897 = vmatprep.mubr.f32.mxu0 0.0
        %1898 = vmatmul.mubr.f32.gmra.mrb[0].mxu0 %v1625
        %v1899 = vpop.f32.mrb[0].mxu0
        %v1900 = vadd.f32 %v1708, %v1899
        %v1901 = vpop.f32.mrb[0].mxu0
        %v1902 = vadd.f32 %v1712, %v1901
        %1903 = vmatprep.mubr.f32.mxu0 0.0
        %1904 = vmatmul.mubr.f32.gmra.mrb[0].mxu0 %v1626
        %v1905 = vpop.f32.mrb[0].mxu0
        %v1906 = vadd.f32 %v1708, %v1905
        %v1907 = vpop.f32.mrb[0].mxu0
        %v1908 = vadd.f32 %v1712, %v1907
        %1909 = vmatprep.mubr.f32.mxu0 0.0
        %1910 = vmatmul.mubr.f32.gmra.mrb[0].mxu0 %v1627
        %v1911 = vpop.f32.mrb[0].mxu0
        %v1912 = vadd.f32 %v1708, %v1911
        %v1913 = vpop.f32.mrb[0].mxu0
        %v1914 = vadd.f32 %v1712, %v1913
        %1915 = vmatprep.mubr.f32.mxu0 0.0
        %1916 = vmatmul.mubr.f32.gmra.mrb[0].mxu0 %v1628
        %v1917 = vpop.f32.mrb[0].mxu0
        %v1918 = vadd.f32 %v1708, %v1917
        %v1919 = vpop.f32.mrb[0].mxu0
        %v1920 = vadd.f32 %v1712, %v1919
        %1921 = vmatprep.mubr.f32.mxu0 0.0
        %1922 = vmatmul.mubr.f32.gmra.mrb[0].mxu0 %v1629
        %v1923 = vpop.f32.mrb[0].mxu0
        %v1924 = vadd.f32 %v1708, %v1923
        %v1925 = vpop.f32.mrb[0].mxu0
        %v1926 = vadd.f32 %v1712, %v1925
        %1927 = vmatprep.mubr.f32.mxu0 0.0
        %1928 = vmatmul.mubr.f32.gmra.mrb[0].mxu0 %v1630
        %v1929 = vpop.f32.mrb[0].mxu0
        %v1930 = vadd.f32 %v1708, %v1929
        %v1931 = vpop.f32.mrb[0].mxu0
        %v1932 = vadd.f32 %v1712, %v1931
        %1933 = vmatprep.mubr.f32.mxu0 0.0
        %1934 = vmatmul.mubr.f32.gmra.mrb[0].mxu0 %v1631
        %v1935 = vpop.f32.mrb[0].mxu0
        %v1936 = vadd.f32 %v1708, %v1935
        %v1937 = vpop.f32.mrb[0].mxu0
        %v1938 = vadd.f32 %v1712, %v1937
        %1939 = vmatprep.mubr.f32.mxu0 0.0
        %1940 = vmatmul.mubr.f32.gmra.mrb[0].mxu0 %v1632
        %v1941 = vpop.f32.mrb[0].mxu0
        %v1942 = vadd.f32 %v1708, %v1941
        %v1943 = vpop.f32.mrb[0].mxu0
        %v1944 = vadd.f32 %v1712, %v1943
        %1945 = vmatprep.mubr.f32.mxu0 0.0
        %1946 = vmatmul.mubr.f32.gmra.mrb[0].mxu0 %v1633
        %v1947 = vpop.f32.mrb[0].mxu0
        %v1948 = vadd.f32 %v1708, %v1947
        %v1949 = vpop.f32.mrb[0].mxu0
        %v1950 = vadd.f32 %v1712, %v1949
        %1951 = vmatprep.mubr.f32.mxu0 0.0
        %1952 = vmatmul.mubr.f32.gmra.mrb[0].mxu0 %v1634
        %v1953 = vpop.f32.mrb[0].mxu0
        %v1954 = vadd.f32 %v1708, %v1953
        %v1955 = vpop.f32.mrb[0].mxu0
        %v1956 = vadd.f32 %v1712, %v1955
        %1957 = vmatprep.mubr.f32.mxu0 0.0
        %1958 = vmatmul.mubr.f32.gmra.mrb[0].mxu0 %v1635
        %v1959 = vpop.f32.mrb[0].mxu0
        %v1960 = vadd.f32 %v1708, %v1959
        %v1961 = vpop.f32.mrb[0].mxu0
        %v1962 = vadd.f32 %v1712, %v1961
        %1963 = vmatprep.mubr.f32.mxu0 0.0
        %1964 = vmatmul.mubr.f32.gmra.mrb[0].mxu0 %v1636
        %v1965 = vpop.f32.mrb[0].mxu0
        %v1966 = vadd.f32 %v1708, %v1965
        %v1967 = vpop.f32.mrb[0].mxu0
        %v1968 = vadd.f32 %v1712, %v1967
        %1969 = vmatprep.mubr.f32.mxu0 0.0
        %1970 = vmatmul.mubr.f32.gmra.mrb[0].mxu0 %v1637
        %v1971 = vpop.f32.mrb[0].mxu0
        %v1972 = vadd.f32 %v1708, %v1971
        %v1973 = vpop.f32.mrb[0].mxu0
        %v1974 = vadd.f32 %v1712, %v1973
        %1975 = vmatprep.mubr.f32.mxu0 0.0
        %1976 = vmatmul.mubr.f32.gmra.mrb[0].mxu0 %v1638
        %v1977 = vpop.f32.mrb[0].mxu0
        %v1978 = vadd.f32 %v1708, %v1977
        %v1979 = vpop.f32.mrb[0].mxu0
        %v1980 = vadd.f32 %v1712, %v1979
        %1981 = vdwg.mxu0
        %1982 = vmatprep.subr.mxu0 %v1642
        %1983 = vmatpush1.msra.mxu0 %v1641
        %1984 = vmatprep.subr.mxu0 %v1646
        %1985 = vmatpush1.msra.mxu0 %v1645
        %1986 = vmatprep.subr.mxu0 %v1650
        %1987 = vmatpush1.msra.mxu0 %v1649
        %1988 = vmatprep.subr.mxu0 %v1654
        %1989 = vmatpush1.msra.mxu0 %v1653
        %1990 = vmatprep.subr.mxu0 %v1658
        %1991 = vmatpush1.msra.mxu0 %v1657
        %1992 = vmatprep.subr.mxu0 %v1662
        %1993 = vmatpush1.msra.mxu0 %v1661
        %1994 = vmatprep.subr.mxu0 %v1666
        %1995 = vmatpush1.msra.mxu0 %v1665
        %1996 = vmatprep.subr.mxu0 %v1670
        %1997 = vmatpush1.msra.mxu0 %v1669
        %1998 = vmatprep.subr.mxu0 %v1674
        %1999 = vmatpush1.msra.mxu0 %v1673
        %2000 = vmatprep.subr.mxu0 %v1678
        %2001 = vmatpush1.msra.mxu0 %v1677
        %2002 = vmatprep.subr.mxu0 %v1682
        %2003 = vmatpush1.msra.mxu0 %v1681
        %2004 = vmatprep.subr.mxu0 %v1686
        %2005 = vmatpush1.msra.mxu0 %v1685
        %2006 = vmatprep.subr.mxu0 %v1690
        %2007 = vmatpush1.msra.mxu0 %v1689
        %2008 = vmatprep.subr.mxu0 %v1694
        %2009 = vmatpush1.msra.mxu0 %v1693
        %2010 = vmatprep.subr.mxu0 %v1698
        %2011 = vmatpush1.msra.mxu0 %v1697
        %2012 = vmatprep.subr.mxu0 %v1702
        %2013 = vmatpush1.msra.mxu0 %v1701
        %2014 = vmatprep.subr.mxu0 0.0
        %2015 = vmatpush1.msra.mxu0 0.0
        %2016 = vmatprep.subr.mxu0 0.0
        %2017 = vmatpush1.msra.mxu0 0.0
        %2018 = vmatprep.subr.mxu0 0.0
        %2019 = vmatpush1.msra.mxu0 0.0
        %2020 = vmatprep.subr.mxu0 0.0
        %2021 = vmatpush1.msra.mxu0 0.0
        %2022 = vmatprep.subr.mxu0 0.0
        %2023 = vmatpush1.msra.mxu0 0.0
        %2024 = vmatprep.subr.mxu0 0.0
        %2025 = vmatpush1.msra.mxu0 0.0
        %2026 = vmatprep.subr.mxu0 0.0
        %2027 = vmatpush1.msra.mxu0 0.0
        %2028 = vmatprep.subr.mxu0 0.0
        %2029 = vmatpush1.msra.mxu0 0.0
        %2030 = vmatprep.subr.mxu0 0.0
        %2031 = vmatpush1.msra.mxu0 0.0
        %2032 = vmatprep.subr.mxu0 0.0
        %2033 = vmatpush1.msra.mxu0 0.0
        %2034 = vmatprep.subr.mxu0 0.0
        %2035 = vmatpush1.msra.mxu0 0.0
        %2036 = vmatprep.subr.mxu0 0.0
        %2037 = vmatpush1.msra.mxu0 0.0
        %2038 = vmatprep.subr.mxu0 0.0
        %2039 = vmatpush1.msra.mxu0 0.0
        %2040 = vmatprep.subr.mxu0 0.0
        %2041 = vmatpush1.msra.mxu0 0.0
        %2042 = vmatprep.subr.mxu0 0.0
        %2043 = vmatpush1.msra.mxu0 0.0
        %2044 = vmatprep.subr.mxu0 0.0
        %2045 = vmatpush1.msra.mxu0 0.0
        %2046 = vmatprep.mubr.f32.mxu0 0.0
        %2047 = vmatmul.mubr.f32.gmra.mrb[0].mxu0 %v1607
        %v2048 = vpop.f32.mrb[0].mxu0
        %v2049 = vadd.f32 %v1716, %v2048
        %v2050 = vpop.f32.mrb[0].mxu0
        %v2051 = vadd.f32 %v1720, %v2050
        %2052 = vmatprep.mubr.f32.mxu0 0.0
        %2053 = vmatmul.mubr.f32.gmra.mrb[0].mxu0 %v1608
        %v2054 = vpop.f32.mrb[0].mxu0
        %v2055 = vadd.f32 %v1716, %v2054
        %v2056 = vpop.f32.mrb[0].mxu0
        %v2057 = vadd.f32 %v1720, %v2056
        %2058 = vmatprep.mubr.f32.mxu0 0.0
        %2059 = vmatmul.mubr.f32.gmra.mrb[0].mxu0 %v1609
        %v2060 = vpop.f32.mrb[0].mxu0
        %v2061 = vadd.f32 %v1716, %v2060
        %v2062 = vpop.f32.mrb[0].mxu0
        %v2063 = vadd.f32 %v1720, %v2062
        %2064 = vmatprep.mubr.f32.mxu0 0.0
        %2065 = vmatmul.mubr.f32.gmra.mrb[0].mxu0 %v1610
        %v2066 = vpop.f32.mrb[0].mxu0
        %v2067 = vadd.f32 %v1716, %v2066
        %v2068 = vpop.f32.mrb[0].mxu0
        %v2069 = vadd.f32 %v1720, %v2068
        %2070 = vmatprep.mubr.f32.mxu0 0.0
        %2071 = vmatmul.mubr.f32.gmra.mrb[0].mxu0 %v1611
        %v2072 = vpop.f32.mrb[0].mxu0
        %v2073 = vadd.f32 %v1716, %v2072
        %v2074 = vpop.f32.mrb[0].mxu0
        %v2075 = vadd.f32 %v1720, %v2074
        %2076 = vmatprep.mubr.f32.mxu0 0.0
        %2077 = vmatmul.mubr.f32.gmra.mrb[0].mxu0 %v1612
        %v2078 = vpop.f32.mrb[0].mxu0
        %v2079 = vadd.f32 %v1716, %v2078
        %v2080 = vpop.f32.mrb[0].mxu0
        %v2081 = vadd.f32 %v1720, %v2080
        %2082 = vmatprep.mubr.f32.mxu0 0.0
        %2083 = vmatmul.mubr.f32.gmra.mrb[0].mxu0 %v1613
        %v2084 = vpop.f32.mrb[0].mxu0
        %v2085 = vadd.f32 %v1716, %v2084
        %v2086 = vpop.f32.mrb[0].mxu0
        %v2087 = vadd.f32 %v1720, %v2086
        %2088 = vmatprep.mubr.f32.mxu0 0.0
        %2089 = vmatmul.mubr.f32.gmra.mrb[0].mxu0 %v1614
        %v2090 = vpop.f32.mrb[0].mxu0
        %v2091 = vadd.f32 %v1716, %v2090
        %v2092 = vpop.f32.mrb[0].mxu0
        %v2093 = vadd.f32 %v1720, %v2092
        %2094 = vmatprep.mubr.f32.mxu0 0.0
        %2095 = vmatmul.mubr.f32.gmra.mrb[0].mxu0 %v1615
        %v2096 = vpop.f32.mrb[0].mxu0
        %v2097 = vadd.f32 %v1716, %v2096
        %v2098 = vpop.f32.mrb[0].mxu0
        %v2099 = vadd.f32 %v1720, %v2098
        %2100 = vmatprep.mubr.f32.mxu0 0.0
        %2101 = vmatmul.mubr.f32.gmra.mrb[0].mxu0 %v1616
        %v2102 = vpop.f32.mrb[0].mxu0
        %v2103 = vadd.f32 %v1716, %v2102
        %v2104 = vpop.f32.mrb[0].mxu0
        %v2105 = vadd.f32 %v1720, %v2104
        %2106 = vmatprep.mubr.f32.mxu0 0.0
        %2107 = vmatmul.mubr.f32.gmra.mrb[0].mxu0 %v1617
        %v2108 = vpop.f32.mrb[0].mxu0
        %v2109 = vadd.f32 %v1716, %v2108
        %v2110 = vpop.f32.mrb[0].mxu0
        %v2111 = vadd.f32 %v1720, %v2110
        %2112 = vmatprep.mubr.f32.mxu0 0.0
        %2113 = vmatmul.mubr.f32.gmra.mrb[0].mxu0 %v1618
        %v2114 = vpop.f32.mrb[0].mxu0
        %v2115 = vadd.f32 %v1716, %v2114
        %v2116 = vpop.f32.mrb[0].mxu0
        %v2117 = vadd.f32 %v1720, %v2116
        %2118 = vmatprep.mubr.f32.mxu0 0.0
        %2119 = vmatmul.mubr.f32.gmra.mrb[0].mxu0 %v1619
        %v2120 = vpop.f32.mrb[0].mxu0
        %v2121 = vadd.f32 %v1716, %v2120
        %v2122 = vpop.f32.mrb[0].mxu0
        %v2123 = vadd.f32 %v1720, %v2122
        %2124 = vmatprep.mubr.f32.mxu0 0.0
        %2125 = vmatmul.mubr.f32.gmra.mrb[0].mxu0 %v1620
        %v2126 = vpop.f32.mrb[0].mxu0
        %v2127 = vadd.f32 %v1716, %v2126
        %v2128 = vpop.f32.mrb[0].mxu0
        %v2129 = vadd.f32 %v1720, %v2128
        %2130 = vmatprep.mubr.f32.mxu0 0.0
        %2131 = vmatmul.mubr.f32.gmra.mrb[0].mxu0 %v1621
        %v2132 = vpop.f32.mrb[0].mxu0
        %v2133 = vadd.f32 %v1716, %v2132
        %v2134 = vpop.f32.mrb[0].mxu0
        %v2135 = vadd.f32 %v1720, %v2134
        %2136 = vmatprep.mubr.f32.mxu0 0.0
        %2137 = vmatmul.mubr.f32.gmra.mrb[0].mxu0 %v1622
        %v2138 = vpop.f32.mrb[0].mxu0
        %v2139 = vadd.f32 %v1716, %v2138
        %v2140 = vpop.f32.mrb[0].mxu0
        %v2141 = vadd.f32 %v1720, %v2140
        %2142 = vmatprep.mubr.f32.mxu0 0.0
        %2143 = vmatmul.mubr.f32.gmra.mrb[0].mxu0 %v1623
        %v2144 = vpop.f32.mrb[0].mxu0
        %v2145 = vadd.f32 %v1716, %v2144
        %v2146 = vpop.f32.mrb[0].mxu0
        %v2147 = vadd.f32 %v1720, %v2146
        %2148 = vmatprep.mubr.f32.mxu0 0.0
        %2149 = vmatmul.mubr.f32.gmra.mrb[0].mxu0 %v1624
        %v2150 = vpop.f32.mrb[0].mxu0
        %v2151 = vadd.f32 %v1716, %v2150
        %v2152 = vpop.f32.mrb[0].mxu0
        %v2153 = vadd.f32 %v1720, %v2152
        %2154 = vmatprep.mubr.f32.mxu0 0.0
        %2155 = vmatmul.mubr.f32.gmra.mrb[0].mxu0 %v1625
        %v2156 = vpop.f32.mrb[0].mxu0
        %v2157 = vadd.f32 %v1716, %v2156
        %v2158 = vpop.f32.mrb[0].mxu0
        %v2159 = vadd.f32 %v1720, %v2158
        %2160 = vmatprep.mubr.f32.mxu0 0.0
        %2161 = vmatmul.mubr.f32.gmra.mrb[0].mxu0 %v1626
        %v2162 = vpop.f32.mrb[0].mxu0
        %v2163 = vadd.f32 %v1716, %v2162
        %v2164 = vpop.f32.mrb[0].mxu0
        %v2165 = vadd.f32 %v1720, %v2164
        %2166 = vmatprep.mubr.f32.mxu0 0.0
        %2167 = vmatmul.mubr.f32.gmra.mrb[0].mxu0 %v1627
        %v2168 = vpop.f32.mrb[0].mxu0
        %v2169 = vadd.f32 %v1716, %v2168
        %v2170 = vpop.f32.mrb[0].mxu0
        %v2171 = vadd.f32 %v1720, %v2170
        %2172 = vmatprep.mubr.f32.mxu0 0.0
        %2173 = vmatmul.mubr.f32.gmra.mrb[0].mxu0 %v1628
        %v2174 = vpop.f32.mrb[0].mxu0
        %v2175 = vadd.f32 %v1716, %v2174
        %v2176 = vpop.f32.mrb[0].mxu0
        %v2177 = vadd.f32 %v1720, %v2176
        %2178 = vmatprep.mubr.f32.mxu0 0.0
        %2179 = vmatmul.mubr.f32.gmra.mrb[0].mxu0 %v1629
        %v2180 = vpop.f32.mrb[0].mxu0
        %v2181 = vadd.f32 %v1716, %v2180
        %v2182 = vpop.f32.mrb[0].mxu0
        %v2183 = vadd.f32 %v1720, %v2182
        %2184 = vmatprep.mubr.f32.mxu0 0.0
        %2185 = vmatmul.mubr.f32.gmra.mrb[0].mxu0 %v1630
        %v2186 = vpop.f32.mrb[0].mxu0
        %v2187 = vadd.f32 %v1716, %v2186
        %v2188 = vpop.f32.mrb[0].mxu0
        %v2189 = vadd.f32 %v1720, %v2188
        %2190 = vmatprep.mubr.f32.mxu0 0.0
        %2191 = vmatmul.mubr.f32.gmra.mrb[0].mxu0 %v1631
        %v2192 = vpop.f32.mrb[0].mxu0
        %v2193 = vadd.f32 %v1716, %v2192
        %v2194 = vpop.f32.mrb[0].mxu0
        %v2195 = vadd.f32 %v1720, %v2194
        %2196 = vmatprep.mubr.f32.mxu0 0.0
        %2197 = vmatmul.mubr.f32.gmra.mrb[0].mxu0 %v1632
        %v2198 = vpop.f32.mrb[0].mxu0
        %v2199 = vadd.f32 %v1716, %v2198
        %v2200 = vpop.f32.mrb[0].mxu0
        %v2201 = vadd.f32 %v1720, %v2200
        %2202 = vmatprep.mubr.f32.mxu0 0.0
        %2203 = vmatmul.mubr.f32.gmra.mrb[0].mxu0 %v1633
        %v2204 = vpop.f32.mrb[0].mxu0
        %v2205 = vadd.f32 %v1716, %v2204
        %v2206 = vpop.f32.mrb[0].mxu0
        %v2207 = vadd.f32 %v1720, %v2206
        %2208 = vmatprep.mubr.f32.mxu0 0.0
        %2209 = vmatmul.mubr.f32.gmra.mrb[0].mxu0 %v1634
        %v2210 = vpop.f32.mrb[0].mxu0
        %v2211 = vadd.f32 %v1716, %v2210
        %v2212 = vpop.f32.mrb[0].mxu0
        %v2213 = vadd.f32 %v1720, %v2212
        %2214 = vmatprep.mubr.f32.mxu0 0.0
        %2215 = vmatmul.mubr.f32.gmra.mrb[0].mxu0 %v1635
        %v2216 = vpop.f32.mrb[0].mxu0
        %v2217 = vadd.f32 %v1716, %v2216
        %v2218 = vpop.f32.mrb[0].mxu0
        %v2219 = vadd.f32 %v1720, %v2218
        %2220 = vmatprep.mubr.f32.mxu0 0.0
        %2221 = vmatmul.mubr.f32.gmra.mrb[0].mxu0 %v1636
        %v2222 = vpop.f32.mrb[0].mxu0
        %v2223 = vadd.f32 %v1716, %v2222
        %v2224 = vpop.f32.mrb[0].mxu0
        %v2225 = vadd.f32 %v1720, %v2224
        %2226 = vmatprep.mubr.f32.mxu0 0.0
        %2227 = vmatmul.mubr.f32.gmra.mrb[0].mxu0 %v1637
        %v2228 = vpop.f32.mrb[0].mxu0
        %v2229 = vadd.f32 %v1716, %v2228
        %v2230 = vpop.f32.mrb[0].mxu0
        %v2231 = vadd.f32 %v1720, %v2230
        %2232 = vmatprep.mubr.f32.mxu0 0.0
        %2233 = vmatmul.mubr.f32.gmra.mrb[0].mxu0 %v1638
        %v2234 = vpop.f32.mrb[0].mxu0
        %v2235 = vadd.f32 %v1716, %v2234
        %v2236 = vpop.f32.mrb[0].mxu0
        %v2237 = vadd.f32 %v1720, %v2236
        %2238 = vdwg.mxu0
        %v2239 = vmax.f32 %v1792, 0.0
        %v2240 = vmax.f32 %v1794, 0.0
        %v2241 = vmax.f32 %v2049, 0.0
        %v2242 = vmax.f32 %v2051, 0.0
        %v2243 = vmax.f32 %v1798, 0.0
        %v2244 = vmax.f32 %v1800, 0.0
        %v2245 = vmax.f32 %v2055, 0.0
        %v2246 = vmax.f32 %v2057, 0.0
        %v2247 = vmax.f32 %v1804, 0.0
        %v2248 = vmax.f32 %v1806, 0.0
        %v2249 = vmax.f32 %v2061, 0.0
        %v2250 = vmax.f32 %v2063, 0.0
        %v2251 = vmax.f32 %v1810, 0.0
        %v2252 = vmax.f32 %v1812, 0.0
        %v2253 = vmax.f32 %v2067, 0.0
        %v2254 = vmax.f32 %v2069, 0.0
        %v2255 = vmax.f32 %v1816, 0.0
        %v2256 = vmax.f32 %v1818, 0.0
        %v2257 = vmax.f32 %v2073, 0.0
        %v2258 = vmax.f32 %v2075, 0.0
        %v2259 = vmax.f32 %v1822, 0.0
        %v2260 = vmax.f32 %v1824, 0.0
        %v2261 = vmax.f32 %v2079, 0.0
        %v2262 = vmax.f32 %v2081, 0.0
        %v2263 = vmax.f32 %v1828, 0.0
        %v2264 = vmax.f32 %v1830, 0.0
        %v2265 = vmax.f32 %v2085, 0.0
        %v2266 = vmax.f32 %v2087, 0.0
        %v2267 = vmax.f32 %v1834, 0.0
        %v2268 = vmax.f32 %v1836, 0.0
        %v2269 = vmax.f32 %v2091, 0.0
        %v2270 = vmax.f32 %v2093, 0.0
        %v2271 = vmax.f32 %v1840, 0.0
        %v2272 = vmax.f32 %v1842, 0.0
        %v2273 = vmax.f32 %v2097, 0.0
        %v2274 = vmax.f32 %v2099, 0.0
        %v2275 = vmax.f32 %v1846, 0.0
        %v2276 = vmax.f32 %v1848, 0.0
        %v2277 = vmax.f32 %v2103, 0.0
        %v2278 = vmax.f32 %v2105, 0.0
        %v2279 = vmax.f32 %v1852, 0.0
        %v2280 = vmax.f32 %v1854, 0.0
        %v2281 = vmax.f32 %v2109, 0.0
        %v2282 = vmax.f32 %v2111, 0.0
        %v2283 = vmax.f32 %v1858, 0.0
        %v2284 = vmax.f32 %v1860, 0.0
        %v2285 = vmax.f32 %v2115, 0.0
        %v2286 = vmax.f32 %v2117, 0.0
        %v2287 = vmax.f32 %v1864, 0.0
        %v2288 = vmax.f32 %v1866, 0.0
        %v2289 = vmax.f32 %v2121, 0.0
        %v2290 = vmax.f32 %v2123, 0.0
        %v2291 = vmax.f32 %v1870, 0.0
        %v2292 = vmax.f32 %v1872, 0.0
        %v2293 = vmax.f32 %v2127, 0.0
        %v2294 = vmax.f32 %v2129, 0.0
        %v2295 = vmax.f32 %v1876, 0.0
        %v2296 = vmax.f32 %v1878, 0.0
        %v2297 = vmax.f32 %v2133, 0.0
        %v2298 = vmax.f32 %v2135, 0.0
        %v2299 = vmax.f32 %v1882, 0.0
        %v2300 = vmax.f32 %v1884, 0.0
        %v2301 = vmax.f32 %v2139, 0.0
        %v2302 = vmax.f32 %v2141, 0.0
        %v2303 = vmax.f32 %v1888, 0.0
        %v2304 = vmax.f32 %v1890, 0.0
        %v2305 = vmax.f32 %v2145, 0.0
        %v2306 = vmax.f32 %v2147, 0.0
        %v2307 = vmax.f32 %v1894, 0.0
        %v2308 = vmax.f32 %v1896, 0.0
        %v2309 = vmax.f32 %v2151, 0.0
        %v2310 = vmax.f32 %v2153, 0.0
        %v2311 = vmax.f32 %v1900, 0.0
        %v2312 = vmax.f32 %v1902, 0.0
        %v2313 = vmax.f32 %v2157, 0.0
        %v2314 = vmax.f32 %v2159, 0.0
        %v2315 = vmax.f32 %v1906, 0.0
        %v2316 = vmax.f32 %v1908, 0.0
        %v2317 = vmax.f32 %v2163, 0.0
        %v2318 = vmax.f32 %v2165, 0.0
        %v2319 = vmax.f32 %v1912, 0.0
        %v2320 = vmax.f32 %v1914, 0.0
        %v2321 = vmax.f32 %v2169, 0.0
        %v2322 = vmax.f32 %v2171, 0.0
        %v2323 = vmax.f32 %v1918, 0.0
        %v2324 = vmax.f32 %v1920, 0.0
        %v2325 = vmax.f32 %v2175, 0.0
        %v2326 = vmax.f32 %v2177, 0.0
        %v2327 = vmax.f32 %v1924, 0.0
        %v2328 = vmax.f32 %v1926, 0.0
        %v2329 = vmax.f32 %v2181, 0.0
        %v2330 = vmax.f32 %v2183, 0.0
        %v2331 = vmax.f32 %v1930, 0.0
        %v2332 = vmax.f32 %v1932, 0.0
        %v2333 = vmax.f32 %v2187, 0.0
        %v2334 = vmax.f32 %v2189, 0.0
        %v2335 = vmax.f32 %v1936, 0.0
        %v2336 = vmax.f32 %v1938, 0.0
        %v2337 = vmax.f32 %v2193, 0.0
        %v2338 = vmax.f32 %v2195, 0.0
        %v2339 = vmax.f32 %v1942, 0.0
        %v2340 = vmax.f32 %v1944, 0.0
        %v2341 = vmax.f32 %v2199, 0.0
        %v2342 = vmax.f32 %v2201, 0.0
        %v2343 = vmax.f32 %v1948, 0.0
        %v2344 = vmax.f32 %v1950, 0.0
        %v2345 = vmax.f32 %v2205, 0.0
        %v2346 = vmax.f32 %v2207, 0.0
        %v2347 = vmax.f32 %v1954, 0.0
        %v2348 = vmax.f32 %v1956, 0.0
        %v2349 = vmax.f32 %v2211, 0.0
        %v2350 = vmax.f32 %v2213, 0.0
        %v2351 = vmax.f32 %v1960, 0.0
        %v2352 = vmax.f32 %v1962, 0.0
        %v2353 = vmax.f32 %v2217, 0.0
        %v2354 = vmax.f32 %v2219, 0.0
        %v2355 = vmax.f32 %v1966, 0.0
        %v2356 = vmax.f32 %v1968, 0.0
        %v2357 = vmax.f32 %v2223, 0.0
        %v2358 = vmax.f32 %v2225, 0.0
        %v2359 = vmax.f32 %v1972, 0.0
        %v2360 = vmax.f32 %v1974, 0.0
        %v2361 = vmax.f32 %v2229, 0.0
        %v2362 = vmax.f32 %v2231, 0.0
        %v2363 = vmax.f32 %v1978, 0.0
        %v2364 = vmax.f32 %v1980, 0.0
        %v2365 = vmax.f32 %v2235, 0.0
        %v2366 = vmax.f32 %v2237, 0.0
        %v2367 = vld [vmem:[#allocation11] sm:$0xff]
        %v2368 = vld [vmem:[#allocation11 + $0x8] sm:$0xff]
        %v2369 = vld [vmem:[#allocation11 + $0x10] sm:$0xff]
        %v2370 = vld [vmem:[#allocation11 + $0x18] sm:$0xff]
        %v2371 = vld [vmem:[#allocation11 + $0x20] sm:$0xff]
        %v2372 = vld [vmem:[#allocation11 + $0x28] sm:$0xff]
        %v2373 = vld [vmem:[#allocation11 + $0x30] sm:$0xff]
        %v2374 = vld [vmem:[#allocation11 + $0x38] sm:$0xff]
        %v2375 = vld [vmem:[#allocation11 + $0x40] sm:$0xff]
        %v2376 = vld [vmem:[#allocation11 + $0x48] sm:$0xff]
        %v2377 = vld [vmem:[#allocation11 + $0x50] sm:$0xff]
        %v2378 = vld [vmem:[#allocation11 + $0x58] sm:$0xff]
        %v2379 = vld [vmem:[#allocation11 + $0x60] sm:$0xff]
        %v2380 = vld [vmem:[#allocation11 + $0x68] sm:$0xff]
        %v2381 = vld [vmem:[#allocation11 + $0x70] sm:$0xff]
        %v2382 = vld [vmem:[#allocation11 + $0x78] sm:$0xff]
        %v2383 = vld [vmem:[#allocation11 + $0x80] sm:$0xff]
        %v2384 = vld [vmem:[#allocation11 + $0x88] sm:$0xff]
        %v2385 = vld [vmem:[#allocation11 + $0x90] sm:$0xff]
        %v2386 = vld [vmem:[#allocation11 + $0x98] sm:$0xff]
        %v2387 = vld [vmem:[#allocation11 + $0xa0] sm:$0xff]
        %v2388 = vld [vmem:[#allocation11 + $0xa8] sm:$0xff]
        %v2389 = vld [vmem:[#allocation11 + $0xb0] sm:$0xff]
        %v2390 = vld [vmem:[#allocation11 + $0xb8] sm:$0xff]
        %v2391 = vld [vmem:[#allocation11 + $0xc0] sm:$0xff]
        %v2392 = vld [vmem:[#allocation11 + $0xc8] sm:$0xff]
        %v2393 = vld [vmem:[#allocation11 + $0xd0] sm:$0xff]
        %v2394 = vld [vmem:[#allocation11 + $0xd8] sm:$0xff]
        %v2395 = vld [vmem:[#allocation11 + $0xe0] sm:$0xff]
        %v2396 = vld [vmem:[#allocation11 + $0xe8] sm:$0xff]
        %v2397 = vld [vmem:[#allocation11 + $0xf0] sm:$0xff]
        %v2398 = vld [vmem:[#allocation11 + $0xf8] sm:$0xff]
        %v2399 = vld [vmem:[#allocation11 + $0x100] sm:$0xff]
        %v2400 = vld [vmem:[#allocation11 + $0x108] sm:$0xff]
        %v2401 = vld [vmem:[#allocation11 + $0x110] sm:$0xff]
        %v2402 = vld [vmem:[#allocation11 + $0x118] sm:$0xff]
        %v2403 = vld [vmem:[#allocation11 + $0x120] sm:$0xff]
        %v2404 = vld [vmem:[#allocation11 + $0x128] sm:$0xff]
        %v2405 = vld [vmem:[#allocation11 + $0x130] sm:$0xff]
        %v2406 = vld [vmem:[#allocation11 + $0x138] sm:$0xff]
        %v2407 = vld [vmem:[#allocation11 + $0x140] sm:$0xff]
        %v2408 = vld [vmem:[#allocation11 + $0x148] sm:$0xff]
        %v2409 = vld [vmem:[#allocation11 + $0x150] sm:$0xff]
        %v2410 = vld [vmem:[#allocation11 + $0x158] sm:$0xff]
        %v2411 = vld [vmem:[#allocation11 + $0x160] sm:$0xff]
        %v2412 = vld [vmem:[#allocation11 + $0x168] sm:$0xff]
        %v2413 = vld [vmem:[#allocation11 + $0x170] sm:$0xff]
        %v2414 = vld [vmem:[#allocation11 + $0x178] sm:$0xff]
        %v2415 = vld [vmem:[#allocation11 + $0x180] sm:$0xff]
        %v2416 = vld [vmem:[#allocation11 + $0x188] sm:$0xff]
        %v2417 = vld [vmem:[#allocation11 + $0x190] sm:$0xff]
        %v2418 = vld [vmem:[#allocation11 + $0x198] sm:$0xff]
        %v2419 = vld [vmem:[#allocation11 + $0x1a0] sm:$0xff]
        %v2420 = vld [vmem:[#allocation11 + $0x1a8] sm:$0xff]
        %v2421 = vld [vmem:[#allocation11 + $0x1b0] sm:$0xff]
        %v2422 = vld [vmem:[#allocation11 + $0x1b8] sm:$0xff]
        %v2423 = vld [vmem:[#allocation11 + $0x1c0] sm:$0xff]
        %v2424 = vld [vmem:[#allocation11 + $0x1c8] sm:$0xff]
        %v2425 = vld [vmem:[#allocation11 + $0x1d0] sm:$0xff]
        %v2426 = vld [vmem:[#allocation11 + $0x1d8] sm:$0xff]
        %v2427 = vld [vmem:[#allocation11 + $0x1e0] sm:$0xff]
        %v2428 = vld [vmem:[#allocation11 + $0x1e8] sm:$0xff]
        %v2429 = vld [vmem:[#allocation11 + $0x1f0] sm:$0xff]
        %v2430 = vld [vmem:[#allocation11 + $0x1f8] sm:$0xff]
        %v2431 = vld [vmem:[%s10] sm:$0x1]
        %v2433 = vlaneseq
        %v2434 = vshrl.u32 %v2433, 7
        %v2435 = vsub.s32 0, %v2434
        %v2436 = vrot.slane %v2431, %v2435
        %2438 = vmatprep.subr.mxu0 0.0
        %2439 = vmatpush1.msra.mxu0 %v2367
        %2440 = vmatprep.subr.mxu0 0.0
        %2441 = vmatpush1.msra.mxu0 %v2368
        %2442 = vmatprep.subr.mxu0 0.0
        %2443 = vmatpush1.msra.mxu0 %v2369
        %2444 = vmatprep.subr.mxu0 0.0
        %2445 = vmatpush1.msra.mxu0 %v2370
        %2446 = vmatprep.subr.mxu0 0.0
        %2447 = vmatpush1.msra.mxu0 %v2371
        %2448 = vmatprep.subr.mxu0 0.0
        %2449 = vmatpush1.msra.mxu0 %v2372
        %2450 = vmatprep.subr.mxu0 0.0
        %2451 = vmatpush1.msra.mxu0 %v2373
        %2452 = vmatprep.subr.mxu0 0.0
        %2453 = vmatpush1.msra.mxu0 %v2374
        %2454 = vmatprep.subr.mxu0 0.0
        %2455 = vmatpush1.msra.mxu0 %v2375
        %2456 = vmatprep.subr.mxu0 0.0
        %2457 = vmatpush1.msra.mxu0 %v2376
        %2458 = vmatprep.subr.mxu0 0.0
        %2459 = vmatpush1.msra.mxu0 %v2377
        %2460 = vmatprep.subr.mxu0 0.0
        %2461 = vmatpush1.msra.mxu0 %v2378
        %2462 = vmatprep.subr.mxu0 0.0
        %2463 = vmatpush1.msra.mxu0 %v2379
        %2464 = vmatprep.subr.mxu0 0.0
        %2465 = vmatpush1.msra.mxu0 %v2380
        %2466 = vmatprep.subr.mxu0 0.0
        %2467 = vmatpush1.msra.mxu0 %v2381
        %2468 = vmatprep.subr.mxu0 0.0
        %2469 = vmatpush1.msra.mxu0 %v2382
        %2470 = vmatprep.subr.mxu0 0.0
        %2471 = vmatpush1.msra.mxu0 %v2383
        %2472 = vmatprep.subr.mxu0 0.0
        %2473 = vmatpush1.msra.mxu0 %v2384
        %2474 = vmatprep.subr.mxu0 0.0
        %2475 = vmatpush1.msra.mxu0 %v2385
        %2476 = vmatprep.subr.mxu0 0.0
        %2477 = vmatpush1.msra.mxu0 %v2386
        %2478 = vmatprep.subr.mxu0 0.0
        %2479 = vmatpush1.msra.mxu0 %v2387
        %2480 = vmatprep.subr.mxu0 0.0
        %2481 = vmatpush1.msra.mxu0 %v2388
        %2482 = vmatprep.subr.mxu0 0.0
        %2483 = vmatpush1.msra.mxu0 %v2389
        %2484 = vmatprep.subr.mxu0 0.0
        %2485 = vmatpush1.msra.mxu0 %v2390
        %2486 = vmatprep.subr.mxu0 0.0
        %2487 = vmatpush1.msra.mxu0 %v2391
        %2488 = vmatprep.subr.mxu0 0.0
        %2489 = vmatpush1.msra.mxu0 %v2392
        %2490 = vmatprep.subr.mxu0 0.0
        %2491 = vmatpush1.msra.mxu0 %v2393
        %2492 = vmatprep.subr.mxu0 0.0
        %2493 = vmatpush1.msra.mxu0 %v2394
        %2494 = vmatprep.subr.mxu0 0.0
        %2495 = vmatpush1.msra.mxu0 %v2395
        %2496 = vmatprep.subr.mxu0 0.0
        %2497 = vmatpush1.msra.mxu0 %v2396
        %2498 = vmatprep.subr.mxu0 0.0
        %2499 = vmatpush1.msra.mxu0 %v2397
        %2500 = vmatprep.subr.mxu0 0.0
        %2501 = vmatpush1.msra.mxu0 %v2398
        %2502 = vmatprep.mubr.f32.mxu0 %v2240
        %2503 = vmatmul.mubr.f32.gmra.mrb[0].mxu0 %v2239
        %v2504 = vpop.f32.mrb[0].mxu0
        %v2505 = vadd.f32 %v2436, %v2504
        %v2506 = vpop.f32.mrb[0].mxu0
        %2507 = vmatprep.mubr.f32.mxu0 %v2244
        %2508 = vmatmul.mubr.f32.gmra.mrb[0].mxu0 %v2243
        %v2509 = vpop.f32.mrb[0].mxu0
        %v2510 = vadd.f32 %v2436, %v2509
        %v2511 = vpop.f32.mrb[0].mxu0
        %2512 = vmatprep.mubr.f32.mxu0 %v2248
        %2513 = vmatmul.mubr.f32.gmra.mrb[0].mxu0 %v2247
        %v2514 = vpop.f32.mrb[0].mxu0
        %v2515 = vadd.f32 %v2436, %v2514
        %v2516 = vpop.f32.mrb[0].mxu0
        %2517 = vmatprep.mubr.f32.mxu0 %v2252
        %2518 = vmatmul.mubr.f32.gmra.mrb[0].mxu0 %v2251
        %v2519 = vpop.f32.mrb[0].mxu0
        %v2520 = vadd.f32 %v2436, %v2519
        %v2521 = vpop.f32.mrb[0].mxu0
        %2522 = vmatprep.mubr.f32.mxu0 %v2256
        %2523 = vmatmul.mubr.f32.gmra.mrb[0].mxu0 %v2255
        %v2524 = vpop.f32.mrb[0].mxu0
        %v2525 = vadd.f32 %v2436, %v2524
        %v2526 = vpop.f32.mrb[0].mxu0
        %2527 = vmatprep.mubr.f32.mxu0 %v2260
        %2528 = vmatmul.mubr.f32.gmra.mrb[0].mxu0 %v2259
        %v2529 = vpop.f32.mrb[0].mxu0
        %v2530 = vadd.f32 %v2436, %v2529
        %v2531 = vpop.f32.mrb[0].mxu0
        %2532 = vmatprep.mubr.f32.mxu0 %v2264
        %2533 = vmatmul.mubr.f32.gmra.mrb[0].mxu0 %v2263
        %v2534 = vpop.f32.mrb[0].mxu0
        %v2535 = vadd.f32 %v2436, %v2534
        %v2536 = vpop.f32.mrb[0].mxu0
        %2537 = vmatprep.mubr.f32.mxu0 %v2268
        %2538 = vmatmul.mubr.f32.gmra.mrb[0].mxu0 %v2267
        %v2539 = vpop.f32.mrb[0].mxu0
        %v2540 = vadd.f32 %v2436, %v2539
        %v2541 = vpop.f32.mrb[0].mxu0
        %2542 = vmatprep.mubr.f32.mxu0 %v2272
        %2543 = vmatmul.mubr.f32.gmra.mrb[0].mxu0 %v2271
        %v2544 = vpop.f32.mrb[0].mxu0
        %v2545 = vadd.f32 %v2436, %v2544
        %v2546 = vpop.f32.mrb[0].mxu0
        %2547 = vmatprep.mubr.f32.mxu0 %v2276
        %2548 = vmatmul.mubr.f32.gmra.mrb[0].mxu0 %v2275
        %v2549 = vpop.f32.mrb[0].mxu0
        %v2550 = vadd.f32 %v2436, %v2549
        %v2551 = vpop.f32.mrb[0].mxu0
        %2552 = vmatprep.mubr.f32.mxu0 %v2280
        %2553 = vmatmul.mubr.f32.gmra.mrb[0].mxu0 %v2279
        %v2554 = vpop.f32.mrb[0].mxu0
        %v2555 = vadd.f32 %v2436, %v2554
        %v2556 = vpop.f32.mrb[0].mxu0
        %2557 = vmatprep.mubr.f32.mxu0 %v2284
        %2558 = vmatmul.mubr.f32.gmra.mrb[0].mxu0 %v2283
        %v2559 = vpop.f32.mrb[0].mxu0
        %v2560 = vadd.f32 %v2436, %v2559
        %v2561 = vpop.f32.mrb[0].mxu0
        %2562 = vmatprep.mubr.f32.mxu0 %v2288
        %2563 = vmatmul.mubr.f32.gmra.mrb[0].mxu0 %v2287
        %v2564 = vpop.f32.mrb[0].mxu0
        %v2565 = vadd.f32 %v2436, %v2564
        %v2566 = vpop.f32.mrb[0].mxu0
        %2567 = vmatprep.mubr.f32.mxu0 %v2292
        %2568 = vmatmul.mubr.f32.gmra.mrb[0].mxu0 %v2291
        %v2569 = vpop.f32.mrb[0].mxu0
        %v2570 = vadd.f32 %v2436, %v2569
        %v2571 = vpop.f32.mrb[0].mxu0
        %2572 = vmatprep.mubr.f32.mxu0 %v2296
        %2573 = vmatmul.mubr.f32.gmra.mrb[0].mxu0 %v2295
        %v2574 = vpop.f32.mrb[0].mxu0
        %v2575 = vadd.f32 %v2436, %v2574
        %v2576 = vpop.f32.mrb[0].mxu0
        %2577 = vmatprep.mubr.f32.mxu0 %v2300
        %2578 = vmatmul.mubr.f32.gmra.mrb[0].mxu0 %v2299
        %v2579 = vpop.f32.mrb[0].mxu0
        %v2580 = vadd.f32 %v2436, %v2579
        %v2581 = vpop.f32.mrb[0].mxu0
        %2582 = vmatprep.mubr.f32.mxu0 %v2304
        %2583 = vmatmul.mubr.f32.gmra.mrb[0].mxu0 %v2303
        %v2584 = vpop.f32.mrb[0].mxu0
        %v2585 = vadd.f32 %v2436, %v2584
        %v2586 = vpop.f32.mrb[0].mxu0
        %2587 = vmatprep.mubr.f32.mxu0 %v2308
        %2588 = vmatmul.mubr.f32.gmra.mrb[0].mxu0 %v2307
        %v2589 = vpop.f32.mrb[0].mxu0
        %v2590 = vadd.f32 %v2436, %v2589
        %v2591 = vpop.f32.mrb[0].mxu0
        %2592 = vmatprep.mubr.f32.mxu0 %v2312
        %2593 = vmatmul.mubr.f32.gmra.mrb[0].mxu0 %v2311
        %v2594 = vpop.f32.mrb[0].mxu0
        %v2595 = vadd.f32 %v2436, %v2594
        %v2596 = vpop.f32.mrb[0].mxu0
        %2597 = vmatprep.mubr.f32.mxu0 %v2316
        %2598 = vmatmul.mubr.f32.gmra.mrb[0].mxu0 %v2315
        %v2599 = vpop.f32.mrb[0].mxu0
        %v2600 = vadd.f32 %v2436, %v2599
        %v2601 = vpop.f32.mrb[0].mxu0
        %2602 = vmatprep.mubr.f32.mxu0 %v2320
        %2603 = vmatmul.mubr.f32.gmra.mrb[0].mxu0 %v2319
        %v2604 = vpop.f32.mrb[0].mxu0
        %v2605 = vadd.f32 %v2436, %v2604
        %v2606 = vpop.f32.mrb[0].mxu0
        %2607 = vmatprep.mubr.f32.mxu0 %v2324
        %2608 = vmatmul.mubr.f32.gmra.mrb[0].mxu0 %v2323
        %v2609 = vpop.f32.mrb[0].mxu0
        %v2610 = vadd.f32 %v2436, %v2609
        %v2611 = vpop.f32.mrb[0].mxu0
        %2612 = vmatprep.mubr.f32.mxu0 %v2328
        %2613 = vmatmul.mubr.f32.gmra.mrb[0].mxu0 %v2327
        %v2614 = vpop.f32.mrb[0].mxu0
        %v2615 = vadd.f32 %v2436, %v2614
        %v2616 = vpop.f32.mrb[0].mxu0
        %2617 = vmatprep.mubr.f32.mxu0 %v2332
        %2618 = vmatmul.mubr.f32.gmra.mrb[0].mxu0 %v2331
        %v2619 = vpop.f32.mrb[0].mxu0
        %v2620 = vadd.f32 %v2436, %v2619
        %v2621 = vpop.f32.mrb[0].mxu0
        %2622 = vmatprep.mubr.f32.mxu0 %v2336
        %2623 = vmatmul.mubr.f32.gmra.mrb[0].mxu0 %v2335
        %v2624 = vpop.f32.mrb[0].mxu0
        %v2625 = vadd.f32 %v2436, %v2624
        %v2626 = vpop.f32.mrb[0].mxu0
        %2627 = vmatprep.mubr.f32.mxu0 %v2340
        %2628 = vmatmul.mubr.f32.gmra.mrb[0].mxu0 %v2339
        %v2629 = vpop.f32.mrb[0].mxu0
        %v2630 = vadd.f32 %v2436, %v2629
        %v2631 = vpop.f32.mrb[0].mxu0
        %2632 = vmatprep.mubr.f32.mxu0 %v2344
        %2633 = vmatmul.mubr.f32.gmra.mrb[0].mxu0 %v2343
        %v2634 = vpop.f32.mrb[0].mxu0
        %v2635 = vadd.f32 %v2436, %v2634
        %v2636 = vpop.f32.mrb[0].mxu0
        %2637 = vmatprep.mubr.f32.mxu0 %v2348
        %2638 = vmatmul.mubr.f32.gmra.mrb[0].mxu0 %v2347
        %v2639 = vpop.f32.mrb[0].mxu0
        %v2640 = vadd.f32 %v2436, %v2639
        %v2641 = vpop.f32.mrb[0].mxu0
        %2642 = vmatprep.mubr.f32.mxu0 %v2352
        %2643 = vmatmul.mubr.f32.gmra.mrb[0].mxu0 %v2351
        %v2644 = vpop.f32.mrb[0].mxu0
        %v2645 = vadd.f32 %v2436, %v2644
        %v2646 = vpop.f32.mrb[0].mxu0
        %2647 = vmatprep.mubr.f32.mxu0 %v2356
        %2648 = vmatmul.mubr.f32.gmra.mrb[0].mxu0 %v2355
        %v2649 = vpop.f32.mrb[0].mxu0
        %v2650 = vadd.f32 %v2436, %v2649
        %v2651 = vpop.f32.mrb[0].mxu0
        %2652 = vmatprep.mubr.f32.mxu0 %v2360
        %2653 = vmatmul.mubr.f32.gmra.mrb[0].mxu0 %v2359
        %v2654 = vpop.f32.mrb[0].mxu0
        %v2655 = vadd.f32 %v2436, %v2654
        %v2656 = vpop.f32.mrb[0].mxu0
        %2657 = vmatprep.mubr.f32.mxu0 %v2364
        %2658 = vmatmul.mubr.f32.gmra.mrb[0].mxu0 %v2363
        %v2659 = vpop.f32.mrb[0].mxu0
        %v2660 = vadd.f32 %v2436, %v2659
        %v2661 = vpop.f32.mrb[0].mxu0
        %2662 = vdwg.mxu0
        %2663 = vmatprep.subr.mxu0 0.0
        %2664 = vmatpush1.msra.mxu0 %v2399
        %2665 = vmatprep.subr.mxu0 0.0
        %2666 = vmatpush1.msra.mxu0 %v2400
        %2667 = vmatprep.subr.mxu0 0.0
        %2668 = vmatpush1.msra.mxu0 %v2401
        %2669 = vmatprep.subr.mxu0 0.0
        %2670 = vmatpush1.msra.mxu0 %v2402
        %2671 = vmatprep.subr.mxu0 0.0
        %2672 = vmatpush1.msra.mxu0 %v2403
        %2673 = vmatprep.subr.mxu0 0.0
        %2674 = vmatpush1.msra.mxu0 %v2404
        %2675 = vmatprep.subr.mxu0 0.0
        %2676 = vmatpush1.msra.mxu0 %v2405
        %2677 = vmatprep.subr.mxu0 0.0
        %2678 = vmatpush1.msra.mxu0 %v2406
        %2679 = vmatprep.subr.mxu0 0.0
        %2680 = vmatpush1.msra.mxu0 %v2407
        %2681 = vmatprep.subr.mxu0 0.0
        %2682 = vmatpush1.msra.mxu0 %v2408
        %2683 = vmatprep.subr.mxu0 0.0
        %2684 = vmatpush1.msra.mxu0 %v2409
        %2685 = vmatprep.subr.mxu0 0.0
        %2686 = vmatpush1.msra.mxu0 %v2410
        %2687 = vmatprep.subr.mxu0 0.0
        %2688 = vmatpush1.msra.mxu0 %v2411
        %2689 = vmatprep.subr.mxu0 0.0
        %2690 = vmatpush1.msra.mxu0 %v2412
        %2691 = vmatprep.subr.mxu0 0.0
        %2692 = vmatpush1.msra.mxu0 %v2413
        %2693 = vmatprep.subr.mxu0 0.0
        %2694 = vmatpush1.msra.mxu0 %v2414
        %2695 = vmatprep.subr.mxu0 0.0
        %2696 = vmatpush1.msra.mxu0 %v2415
        %2697 = vmatprep.subr.mxu0 0.0
        %2698 = vmatpush1.msra.mxu0 %v2416
        %2699 = vmatprep.subr.mxu0 0.0
        %2700 = vmatpush1.msra.mxu0 %v2417
        %2701 = vmatprep.subr.mxu0 0.0
        %2702 = vmatpush1.msra.mxu0 %v2418
        %2703 = vmatprep.subr.mxu0 0.0
        %2704 = vmatpush1.msra.mxu0 %v2419
        %2705 = vmatprep.subr.mxu0 0.0
        %2706 = vmatpush1.msra.mxu0 %v2420
        %2707 = vmatprep.subr.mxu0 0.0
        %2708 = vmatpush1.msra.mxu0 %v2421
        %2709 = vmatprep.subr.mxu0 0.0
        %2710 = vmatpush1.msra.mxu0 %v2422
        %2711 = vmatprep.subr.mxu0 0.0
        %2712 = vmatpush1.msra.mxu0 %v2423
        %2713 = vmatprep.subr.mxu0 0.0
        %2714 = vmatpush1.msra.mxu0 %v2424
        %2715 = vmatprep.subr.mxu0 0.0
        %2716 = vmatpush1.msra.mxu0 %v2425
        %2717 = vmatprep.subr.mxu0 0.0
        %2718 = vmatpush1.msra.mxu0 %v2426
        %2719 = vmatprep.subr.mxu0 0.0
        %2720 = vmatpush1.msra.mxu0 %v2427
        %2721 = vmatprep.subr.mxu0 0.0
        %2722 = vmatpush1.msra.mxu0 %v2428
        %2723 = vmatprep.subr.mxu0 0.0
        %2724 = vmatpush1.msra.mxu0 %v2429
        %2725 = vmatprep.subr.mxu0 0.0
        %2726 = vmatpush1.msra.mxu0 %v2430
        %2727 = vmatprep.mubr.f32.mxu0 %v2242
        %2728 = vmatmul.mubr.f32.gmra.mrb[0].mxu0 %v2241
        %v2729 = vpop.f32.mrb[0].mxu0
        %v2730 = vadd.f32 %v2505, %v2729
        %v2731 = vpop.f32.mrb[0].mxu0
        %2732 = vmatprep.mubr.f32.mxu0 %v2246
        %2733 = vmatmul.mubr.f32.gmra.mrb[0].mxu0 %v2245
        %v2734 = vpop.f32.mrb[0].mxu0
        %v2735 = vadd.f32 %v2510, %v2734
        %v2736 = vpop.f32.mrb[0].mxu0
        %2737 = vmatprep.mubr.f32.mxu0 %v2250
        %2738 = vmatmul.mubr.f32.gmra.mrb[0].mxu0 %v2249
        %v2739 = vpop.f32.mrb[0].mxu0
        %v2740 = vadd.f32 %v2515, %v2739
        %v2741 = vpop.f32.mrb[0].mxu0
        %2742 = vmatprep.mubr.f32.mxu0 %v2254
        %2743 = vmatmul.mubr.f32.gmra.mrb[0].mxu0 %v2253
        %v2744 = vpop.f32.mrb[0].mxu0
        %v2745 = vadd.f32 %v2520, %v2744
        %v2746 = vpop.f32.mrb[0].mxu0
        %2747 = vmatprep.mubr.f32.mxu0 %v2258
        %2748 = vmatmul.mubr.f32.gmra.mrb[0].mxu0 %v2257
        %v2749 = vpop.f32.mrb[0].mxu0
        %v2750 = vadd.f32 %v2525, %v2749
        %v2751 = vpop.f32.mrb[0].mxu0
        %2752 = vmatprep.mubr.f32.mxu0 %v2262
        %2753 = vmatmul.mubr.f32.gmra.mrb[0].mxu0 %v2261
        %v2754 = vpop.f32.mrb[0].mxu0
        %v2755 = vadd.f32 %v2530, %v2754
        %v2756 = vpop.f32.mrb[0].mxu0
        %2757 = vmatprep.mubr.f32.mxu0 %v2266
        %2758 = vmatmul.mubr.f32.gmra.mrb[0].mxu0 %v2265
        %v2759 = vpop.f32.mrb[0].mxu0
        %v2760 = vadd.f32 %v2535, %v2759
        %v2761 = vpop.f32.mrb[0].mxu0
        %2762 = vmatprep.mubr.f32.mxu0 %v2270
        %2763 = vmatmul.mubr.f32.gmra.mrb[0].mxu0 %v2269
        %v2764 = vpop.f32.mrb[0].mxu0
        %v2765 = vadd.f32 %v2540, %v2764
        %v2766 = vpop.f32.mrb[0].mxu0
        %2767 = vmatprep.mubr.f32.mxu0 %v2274
        %2768 = vmatmul.mubr.f32.gmra.mrb[0].mxu0 %v2273
        %v2769 = vpop.f32.mrb[0].mxu0
        %v2770 = vadd.f32 %v2545, %v2769
        %v2771 = vpop.f32.mrb[0].mxu0
        %2772 = vmatprep.mubr.f32.mxu0 %v2278
        %2773 = vmatmul.mubr.f32.gmra.mrb[0].mxu0 %v2277
        %v2774 = vpop.f32.mrb[0].mxu0
        %v2775 = vadd.f32 %v2550, %v2774
        %v2776 = vpop.f32.mrb[0].mxu0
        %2777 = vmatprep.mubr.f32.mxu0 %v2282
        %2778 = vmatmul.mubr.f32.gmra.mrb[0].mxu0 %v2281
        %v2779 = vpop.f32.mrb[0].mxu0
        %v2780 = vadd.f32 %v2555, %v2779
        %v2781 = vpop.f32.mrb[0].mxu0
        %2782 = vmatprep.mubr.f32.mxu0 %v2286
        %2783 = vmatmul.mubr.f32.gmra.mrb[0].mxu0 %v2285
        %v2784 = vpop.f32.mrb[0].mxu0
        %v2785 = vadd.f32 %v2560, %v2784
        %v2786 = vpop.f32.mrb[0].mxu0
        %2787 = vmatprep.mubr.f32.mxu0 %v2290
        %2788 = vmatmul.mubr.f32.gmra.mrb[0].mxu0 %v2289
        %v2789 = vpop.f32.mrb[0].mxu0
        %v2790 = vadd.f32 %v2565, %v2789
        %v2791 = vpop.f32.mrb[0].mxu0
        %2792 = vmatprep.mubr.f32.mxu0 %v2294
        %2793 = vmatmul.mubr.f32.gmra.mrb[0].mxu0 %v2293
        %v2794 = vpop.f32.mrb[0].mxu0
        %v2795 = vadd.f32 %v2570, %v2794
        %v2796 = vpop.f32.mrb[0].mxu0
        %2797 = vmatprep.mubr.f32.mxu0 %v2298
        %2798 = vmatmul.mubr.f32.gmra.mrb[0].mxu0 %v2297
        %v2799 = vpop.f32.mrb[0].mxu0
        %v2800 = vadd.f32 %v2575, %v2799
        %v2801 = vpop.f32.mrb[0].mxu0
        %2802 = vmatprep.mubr.f32.mxu0 %v2302
        %2803 = vmatmul.mubr.f32.gmra.mrb[0].mxu0 %v2301
        %v2804 = vpop.f32.mrb[0].mxu0
        %v2805 = vadd.f32 %v2580, %v2804
        %v2806 = vpop.f32.mrb[0].mxu0
        %2807 = vmatprep.mubr.f32.mxu0 %v2306
        %2808 = vmatmul.mubr.f32.gmra.mrb[0].mxu0 %v2305
        %v2809 = vpop.f32.mrb[0].mxu0
        %v2810 = vadd.f32 %v2585, %v2809
        %v2811 = vpop.f32.mrb[0].mxu0
        %2812 = vmatprep.mubr.f32.mxu0 %v2310
        %2813 = vmatmul.mubr.f32.gmra.mrb[0].mxu0 %v2309
        %v2814 = vpop.f32.mrb[0].mxu0
        %v2815 = vadd.f32 %v2590, %v2814
        %v2816 = vpop.f32.mrb[0].mxu0
        %2817 = vmatprep.mubr.f32.mxu0 %v2314
        %2818 = vmatmul.mubr.f32.gmra.mrb[0].mxu0 %v2313
        %v2819 = vpop.f32.mrb[0].mxu0
        %v2820 = vadd.f32 %v2595, %v2819
        %v2821 = vpop.f32.mrb[0].mxu0
        %2822 = vmatprep.mubr.f32.mxu0 %v2318
        %2823 = vmatmul.mubr.f32.gmra.mrb[0].mxu0 %v2317
        %v2824 = vpop.f32.mrb[0].mxu0
        %v2825 = vadd.f32 %v2600, %v2824
        %v2826 = vpop.f32.mrb[0].mxu0
        %2827 = vmatprep.mubr.f32.mxu0 %v2322
        %2828 = vmatmul.mubr.f32.gmra.mrb[0].mxu0 %v2321
        %v2829 = vpop.f32.mrb[0].mxu0
        %v2830 = vadd.f32 %v2605, %v2829
        %v2831 = vpop.f32.mrb[0].mxu0
        %2832 = vmatprep.mubr.f32.mxu0 %v2326
        %2833 = vmatmul.mubr.f32.gmra.mrb[0].mxu0 %v2325
        %v2834 = vpop.f32.mrb[0].mxu0
        %v2835 = vadd.f32 %v2610, %v2834
        %v2836 = vpop.f32.mrb[0].mxu0
        %2837 = vmatprep.mubr.f32.mxu0 %v2330
        %2838 = vmatmul.mubr.f32.gmra.mrb[0].mxu0 %v2329
        %v2839 = vpop.f32.mrb[0].mxu0
        %v2840 = vadd.f32 %v2615, %v2839
        %v2841 = vpop.f32.mrb[0].mxu0
        %2842 = vmatprep.mubr.f32.mxu0 %v2334
        %2843 = vmatmul.mubr.f32.gmra.mrb[0].mxu0 %v2333
        %v2844 = vpop.f32.mrb[0].mxu0
        %v2845 = vadd.f32 %v2620, %v2844
        %v2846 = vpop.f32.mrb[0].mxu0
        %2847 = vmatprep.mubr.f32.mxu0 %v2338
        %2848 = vmatmul.mubr.f32.gmra.mrb[0].mxu0 %v2337
        %v2849 = vpop.f32.mrb[0].mxu0
        %v2850 = vadd.f32 %v2625, %v2849
        %v2851 = vpop.f32.mrb[0].mxu0
        %2852 = vmatprep.mubr.f32.mxu0 %v2342
        %2853 = vmatmul.mubr.f32.gmra.mrb[0].mxu0 %v2341
        %v2854 = vpop.f32.mrb[0].mxu0
        %v2855 = vadd.f32 %v2630, %v2854
        %v2856 = vpop.f32.mrb[0].mxu0
        %2857 = vmatprep.mubr.f32.mxu0 %v2346
        %2858 = vmatmul.mubr.f32.gmra.mrb[0].mxu0 %v2345
        %v2859 = vpop.f32.mrb[0].mxu0
        %v2860 = vadd.f32 %v2635, %v2859
        %v2861 = vpop.f32.mrb[0].mxu0
        %2862 = vmatprep.mubr.f32.mxu0 %v2350
        %2863 = vmatmul.mubr.f32.gmra.mrb[0].mxu0 %v2349
        %v2864 = vpop.f32.mrb[0].mxu0
        %v2865 = vadd.f32 %v2640, %v2864
        %v2866 = vpop.f32.mrb[0].mxu0
        %2867 = vmatprep.mubr.f32.mxu0 %v2354
        %2868 = vmatmul.mubr.f32.gmra.mrb[0].mxu0 %v2353
        %v2869 = vpop.f32.mrb[0].mxu0
        %v2870 = vadd.f32 %v2645, %v2869
        %v2871 = vpop.f32.mrb[0].mxu0
        %2872 = vmatprep.mubr.f32.mxu0 %v2358
        %2873 = vmatmul.mubr.f32.gmra.mrb[0].mxu0 %v2357
        %v2874 = vpop.f32.mrb[0].mxu0
        %v2875 = vadd.f32 %v2650, %v2874
        %v2876 = vpop.f32.mrb[0].mxu0
        %2877 = vmatprep.mubr.f32.mxu0 %v2362
        %2878 = vmatmul.mubr.f32.gmra.mrb[0].mxu0 %v2361
        %v2879 = vpop.f32.mrb[0].mxu0
        %v2880 = vadd.f32 %v2655, %v2879
        %v2881 = vpop.f32.mrb[0].mxu0
        %2882 = vmatprep.mubr.f32.mxu0 %v2366
        %2883 = vmatmul.mubr.f32.gmra.mrb[0].mxu0 %v2365
        %v2884 = vpop.f32.mrb[0].mxu0
        %v2885 = vadd.f32 %v2660, %v2884
        %v2886 = vpop.f32.mrb[0].mxu0
        %2887 = vdwg.mxu0
        %v2888 = vadd.f32 %v2730, %v1607
        %v2889 = vadd.f32 %v2735, %v1608
        %v2890 = vadd.f32 %v2740, %v1609
        %v2891 = vadd.f32 %v2745, %v1610
        %v2892 = vadd.f32 %v2750, %v1611
        %v2893 = vadd.f32 %v2755, %v1612
        %v2894 = vadd.f32 %v2760, %v1613
        %v2895 = vadd.f32 %v2765, %v1614
        %v2896 = vadd.f32 %v2770, %v1615
        %v2897 = vadd.f32 %v2775, %v1616
        %v2898 = vadd.f32 %v2780, %v1617
        %v2899 = vadd.f32 %v2785, %v1618
        %v2900 = vadd.f32 %v2790, %v1619
        %v2901 = vadd.f32 %v2795, %v1620
        %v2902 = vadd.f32 %v2800, %v1621
        %v2903 = vadd.f32 %v2805, %v1622
        %v2904 = vadd.f32 %v2810, %v1623
        %v2905 = vadd.f32 %v2815, %v1624
        %v2906 = vadd.f32 %v2820, %v1625
        %v2907 = vadd.f32 %v2825, %v1626
        %v2908 = vadd.f32 %v2830, %v1627
        %v2909 = vadd.f32 %v2835, %v1628
        %v2910 = vadd.f32 %v2840, %v1629
        %v2911 = vadd.f32 %v2845, %v1630
        %v2912 = vadd.f32 %v2850, %v1631
        %v2913 = vadd.f32 %v2855, %v1632
        %v2914 = vadd.f32 %v2860, %v1633
        %v2915 = vadd.f32 %v2865, %v1634
        %v2916 = vadd.f32 %v2870, %v1635
        %v2917 = vadd.f32 %v2875, %v1636
        %v2918 = vadd.f32 %v2880, %v1637
        %v2919 = vadd.f32 %v2885, %v1638
        %2920 = vadd.xlane.f32.xlu0 %v2888
        %v2921 = vpop.xlane.xlu0 %2920
        %2922 = vadd.xlane.f32.xlu0 %v2889
        %v2923 = vpop.xlane.xlu0 %2922
        %2924 = vadd.xlane.f32.xlu0 %v2890
        %v2925 = vpop.xlane.xlu0 %2924
        %2926 = vadd.xlane.f32.xlu0 %v2891
        %v2927 = vpop.xlane.xlu0 %2926
        %2928 = vadd.xlane.f32.xlu0 %v2892
        %v2929 = vpop.xlane.xlu0 %2928
        %2930 = vadd.xlane.f32.xlu0 %v2893
        %v2931 = vpop.xlane.xlu0 %2930
        %2932 = vadd.xlane.f32.xlu0 %v2894
        %v2933 = vpop.xlane.xlu0 %2932
        %2934 = vadd.xlane.f32.xlu0 %v2895
        %v2935 = vpop.xlane.xlu0 %2934
        %2936 = vadd.xlane.f32.xlu0 %v2896
        %v2937 = vpop.xlane.xlu0 %2936
        %2938 = vadd.xlane.f32.xlu0 %v2897
        %v2939 = vpop.xlane.xlu0 %2938
        %2940 = vadd.xlane.f32.xlu0 %v2898
        %v2941 = vpop.xlane.xlu0 %2940
        %2942 = vadd.xlane.f32.xlu0 %v2899
        %v2943 = vpop.xlane.xlu0 %2942
        %2944 = vadd.xlane.f32.xlu0 %v2900
        %v2945 = vpop.xlane.xlu0 %2944
        %2946 = vadd.xlane.f32.xlu0 %v2901
        %v2947 = vpop.xlane.xlu0 %2946
        %2948 = vadd.xlane.f32.xlu0 %v2902
        %v2949 = vpop.xlane.xlu0 %2948
        %2950 = vadd.xlane.f32.xlu0 %v2903
        %v2951 = vpop.xlane.xlu0 %2950
        %2952 = vadd.xlane.f32.xlu0 %v2904
        %v2953 = vpop.xlane.xlu0 %2952
        %2954 = vadd.xlane.f32.xlu0 %v2905
        %v2955 = vpop.xlane.xlu0 %2954
        %2956 = vadd.xlane.f32.xlu0 %v2906
        %v2957 = vpop.xlane.xlu0 %2956
        %2958 = vadd.xlane.f32.xlu0 %v2907
        %v2959 = vpop.xlane.xlu0 %2958
        %2960 = vadd.xlane.f32.xlu0 %v2908
        %v2961 = vpop.xlane.xlu0 %2960
        %2962 = vadd.xlane.f32.xlu0 %v2909
        %v2963 = vpop.xlane.xlu0 %2962
        %2964 = vadd.xlane.f32.xlu0 %v2910
        %v2965 = vpop.xlane.xlu0 %2964
        %2966 = vadd.xlane.f32.xlu0 %v2911
        %v2967 = vpop.xlane.xlu0 %2966
        %2968 = vadd.xlane.f32.xlu0 %v2912
        %v2969 = vpop.xlane.xlu0 %2968
        %2970 = vadd.xlane.f32.xlu0 %v2913
        %v2971 = vpop.xlane.xlu0 %2970
        %2972 = vadd.xlane.f32.xlu0 %v2914
        %v2973 = vpop.xlane.xlu0 %2972
        %2974 = vadd.xlane.f32.xlu0 %v2915
        %v2975 = vpop.xlane.xlu0 %2974
        %2976 = vadd.xlane.f32.xlu0 %v2916
        %v2977 = vpop.xlane.xlu0 %2976
        %2978 = vadd.xlane.f32.xlu0 %v2917
        %v2979 = vpop.xlane.xlu0 %2978
        %2980 = vadd.xlane.f32.xlu0 %v2918
        %v2981 = vpop.xlane.xlu0 %2980
        %2982 = vadd.xlane.f32.xlu0 %v2919
        %v2983 = vpop.xlane.xlu0 %2982
        %v2984 = vmul.f32 %v2888, %v2888
        %v2985 = vmul.f32 %v2889, %v2889
        %v2986 = vmul.f32 %v2890, %v2890
        %v2987 = vmul.f32 %v2891, %v2891
        %v2988 = vmul.f32 %v2892, %v2892
        %v2989 = vmul.f32 %v2893, %v2893
        %v2990 = vmul.f32 %v2894, %v2894
        %v2991 = vmul.f32 %v2895, %v2895
        %v2992 = vmul.f32 %v2896, %v2896
        %v2993 = vmul.f32 %v2897, %v2897
        %v2994 = vmul.f32 %v2898, %v2898
        %v2995 = vmul.f32 %v2899, %v2899
        %v2996 = vmul.f32 %v2900, %v2900
        %v2997 = vmul.f32 %v2901, %v2901
        %v2998 = vmul.f32 %v2902, %v2902
        %v2999 = vmul.f32 %v2903, %v2903
        %v3000 = vmul.f32 %v2904, %v2904
        %v3001 = vmul.f32 %v2905, %v2905
        %v3002 = vmul.f32 %v2906, %v2906
        %v3003 = vmul.f32 %v2907, %v2907
        %v3004 = vmul.f32 %v2908, %v2908
        %v3005 = vmul.f32 %v2909, %v2909
        %v3006 = vmul.f32 %v2910, %v2910
        %v3007 = vmul.f32 %v2911, %v2911
        %v3008 = vmul.f32 %v2912, %v2912
        %v3009 = vmul.f32 %v2913, %v2913
        %v3010 = vmul.f32 %v2914, %v2914
        %v3011 = vmul.f32 %v2915, %v2915
        %v3012 = vmul.f32 %v2916, %v2916
        %v3013 = vmul.f32 %v2917, %v2917
        %v3014 = vmul.f32 %v2918, %v2918
        %v3015 = vmul.f32 %v2919, %v2919
        %3016 = vadd.xlane.f32.xlu0 %v2984
        %v3017 = vpop.xlane.xlu0 %3016
        %3018 = vadd.xlane.f32.xlu0 %v2985
        %v3019 = vpop.xlane.xlu0 %3018
        %3020 = vadd.xlane.f32.xlu0 %v2986
        %v3021 = vpop.xlane.xlu0 %3020
        %3022 = vadd.xlane.f32.xlu0 %v2987
        %v3023 = vpop.xlane.xlu0 %3022
        %3024 = vadd.xlane.f32.xlu0 %v2988
        %v3025 = vpop.xlane.xlu0 %3024
        %3026 = vadd.xlane.f32.xlu0 %v2989
        %v3027 = vpop.xlane.xlu0 %3026
        %3028 = vadd.xlane.f32.xlu0 %v2990
        %v3029 = vpop.xlane.xlu0 %3028
        %3030 = vadd.xlane.f32.xlu0 %v2991
        %v3031 = vpop.xlane.xlu0 %3030
        %3032 = vadd.xlane.f32.xlu0 %v2992
        %v3033 = vpop.xlane.xlu0 %3032
        %3034 = vadd.xlane.f32.xlu0 %v2993
        %v3035 = vpop.xlane.xlu0 %3034
        %3036 = vadd.xlane.f32.xlu0 %v2994
        %v3037 = vpop.xlane.xlu0 %3036
        %3038 = vadd.xlane.f32.xlu0 %v2995
        %v3039 = vpop.xlane.xlu0 %3038
        %3040 = vadd.xlane.f32.xlu0 %v2996
        %v3041 = vpop.xlane.xlu0 %3040
        %3042 = vadd.xlane.f32.xlu0 %v2997
        %v3043 = vpop.xlane.xlu0 %3042
        %3044 = vadd.xlane.f32.xlu0 %v2998
        %v3045 = vpop.xlane.xlu0 %3044
        %3046 = vadd.xlane.f32.xlu0 %v2999
        %v3047 = vpop.xlane.xlu0 %3046
        %3048 = vadd.xlane.f32.xlu0 %v3000
        %v3049 = vpop.xlane.xlu0 %3048
        %3050 = vadd.xlane.f32.xlu0 %v3001
        %v3051 = vpop.xlane.xlu0 %3050
        %3052 = vadd.xlane.f32.xlu0 %v3002
        %v3053 = vpop.xlane.xlu0 %3052
        %3054 = vadd.xlane.f32.xlu0 %v3003
        %v3055 = vpop.xlane.xlu0 %3054
        %3056 = vadd.xlane.f32.xlu0 %v3004
        %v3057 = vpop.xlane.xlu0 %3056
        %3058 = vadd.xlane.f32.xlu0 %v3005
        %v3059 = vpop.xlane.xlu0 %3058
        %3060 = vadd.xlane.f32.xlu0 %v3006
        %v3061 = vpop.xlane.xlu0 %3060
        %3062 = vadd.xlane.f32.xlu0 %v3007
        %v3063 = vpop.xlane.xlu0 %3062
        %3064 = vadd.xlane.f32.xlu0 %v3008
        %v3065 = vpop.xlane.xlu0 %3064
        %3066 = vadd.xlane.f32.xlu0 %v3009
        %v3067 = vpop.xlane.xlu0 %3066
        %3068 = vadd.xlane.f32.xlu0 %v3010
        %v3069 = vpop.xlane.xlu0 %3068
        %3070 = vadd.xlane.f32.xlu0 %v3011
        %v3071 = vpop.xlane.xlu0 %3070
        %3072 = vadd.xlane.f32.xlu0 %v3012
        %v3073 = vpop.xlane.xlu0 %3072
        %3074 = vadd.xlane.f32.xlu0 %v3013
        %v3075 = vpop.xlane.xlu0 %3074
        %3076 = vadd.xlane.f32.xlu0 %v3014
        %v3077 = vpop.xlane.xlu0 %3076
        %3078 = vadd.xlane.f32.xlu0 %v3015
        %v3079 = vpop.xlane.xlu0 %3078
        %v3080 = vmul.f32 %v2921, 0.0078125
        %v3081 = vmul.f32 %v2923, 0.0078125
        %v3082 = vmul.f32 %v2925, 0.0078125
        %v3083 = vmul.f32 %v2927, 0.0078125
        %v3084 = vmul.f32 %v2929, 0.0078125
        %v3085 = vmul.f32 %v2931, 0.0078125
        %v3086 = vmul.f32 %v2933, 0.0078125
        %v3087 = vmul.f32 %v2935, 0.0078125
        %v3088 = vmul.f32 %v2937, 0.0078125
        %v3089 = vmul.f32 %v2939, 0.0078125
        %v3090 = vmul.f32 %v2941, 0.0078125
        %v3091 = vmul.f32 %v2943, 0.0078125
        %v3092 = vmul.f32 %v2945, 0.0078125
        %v3093 = vmul.f32 %v2947, 0.0078125
        %v3094 = vmul.f32 %v2949, 0.0078125
        %v3095 = vmul.f32 %v2951, 0.0078125
        %v3096 = vmul.f32 %v2953, 0.0078125
        %v3097 = vmul.f32 %v2955, 0.0078125
        %v3098 = vmul.f32 %v2957, 0.0078125
        %v3099 = vmul.f32 %v2959, 0.0078125
        %v3100 = vmul.f32 %v2961, 0.0078125
        %v3101 = vmul.f32 %v2963, 0.0078125
        %v3102 = vmul.f32 %v2965, 0.0078125
        %v3103 = vmul.f32 %v2967, 0.0078125
        %v3104 = vmul.f32 %v2969, 0.0078125
        %v3105 = vmul.f32 %v2971, 0.0078125
        %v3106 = vmul.f32 %v2973, 0.0078125
        %v3107 = vmul.f32 %v2975, 0.0078125
        %v3108 = vmul.f32 %v2977, 0.0078125
        %v3109 = vmul.f32 %v2979, 0.0078125
        %v3110 = vmul.f32 %v2981, 0.0078125
        %v3111 = vmul.f32 %v2983, 0.0078125
        %v3112 = vmul.f32 %v3017, 0.0078125
        %v3113 = vmul.f32 %v3019, 0.0078125
        %v3114 = vmul.f32 %v3021, 0.0078125
        %v3115 = vmul.f32 %v3023, 0.0078125
        %v3116 = vmul.f32 %v3025, 0.0078125
        %v3117 = vmul.f32 %v3027, 0.0078125
        %v3118 = vmul.f32 %v3029, 0.0078125
        %v3119 = vmul.f32 %v3031, 0.0078125
        %v3120 = vmul.f32 %v3033, 0.0078125
        %v3121 = vmul.f32 %v3035, 0.0078125
        %v3122 = vmul.f32 %v3037, 0.0078125
        %v3123 = vmul.f32 %v3039, 0.0078125
        %v3124 = vmul.f32 %v3041, 0.0078125
        %v3125 = vmul.f32 %v3043, 0.0078125
        %v3126 = vmul.f32 %v3045, 0.0078125
        %v3127 = vmul.f32 %v3047, 0.0078125
        %v3128 = vmul.f32 %v3049, 0.0078125
        %v3129 = vmul.f32 %v3051, 0.0078125
        %v3130 = vmul.f32 %v3053, 0.0078125
        %v3131 = vmul.f32 %v3055, 0.0078125
        %v3132 = vmul.f32 %v3057, 0.0078125
        %v3133 = vmul.f32 %v3059, 0.0078125
        %v3134 = vmul.f32 %v3061, 0.0078125
        %v3135 = vmul.f32 %v3063, 0.0078125
        %v3136 = vmul.f32 %v3065, 0.0078125
        %v3137 = vmul.f32 %v3067, 0.0078125
        %v3138 = vmul.f32 %v3069, 0.0078125
        %v3139 = vmul.f32 %v3071, 0.0078125
        %v3140 = vmul.f32 %v3073, 0.0078125
        %v3141 = vmul.f32 %v3075, 0.0078125
        %v3142 = vmul.f32 %v3077, 0.0078125
        %v3143 = vmul.f32 %v3079, 0.0078125
        %v3144 = vmul.f32 %v3080, %v3080
        %v3145 = vmul.f32 %v3081, %v3081
        %v3146 = vmul.f32 %v3082, %v3082
        %v3147 = vmul.f32 %v3083, %v3083
        %v3148 = vmul.f32 %v3084, %v3084
        %v3149 = vmul.f32 %v3085, %v3085
        %v3150 = vmul.f32 %v3086, %v3086
        %v3151 = vmul.f32 %v3087, %v3087
        %v3152 = vmul.f32 %v3088, %v3088
        %v3153 = vmul.f32 %v3089, %v3089
        %v3154 = vmul.f32 %v3090, %v3090
        %v3155 = vmul.f32 %v3091, %v3091
        %v3156 = vmul.f32 %v3092, %v3092
        %v3157 = vmul.f32 %v3093, %v3093
        %v3158 = vmul.f32 %v3094, %v3094
        %v3159 = vmul.f32 %v3095, %v3095
        %v3160 = vmul.f32 %v3096, %v3096
        %v3161 = vmul.f32 %v3097, %v3097
        %v3162 = vmul.f32 %v3098, %v3098
        %v3163 = vmul.f32 %v3099, %v3099
        %v3164 = vmul.f32 %v3100, %v3100
        %v3165 = vmul.f32 %v3101, %v3101
        %v3166 = vmul.f32 %v3102, %v3102
        %v3167 = vmul.f32 %v3103, %v3103
        %v3168 = vmul.f32 %v3104, %v3104
        %v3169 = vmul.f32 %v3105, %v3105
        %v3170 = vmul.f32 %v3106, %v3106
        %v3171 = vmul.f32 %v3107, %v3107
        %v3172 = vmul.f32 %v3108, %v3108
        %v3173 = vmul.f32 %v3109, %v3109
        %v3174 = vmul.f32 %v3110, %v3110
        %v3175 = vmul.f32 %v3111, %v3111
        %v3176 = vsub.f32 %v3112, %v3144
        %v3177 = vsub.f32 %v3113, %v3145
        %v3178 = vsub.f32 %v3114, %v3146
        %v3179 = vsub.f32 %v3115, %v3147
        %v3180 = vsub.f32 %v3116, %v3148
        %v3181 = vsub.f32 %v3117, %v3149
        %v3182 = vsub.f32 %v3118, %v3150
        %v3183 = vsub.f32 %v3119, %v3151
        %v3184 = vsub.f32 %v3120, %v3152
        %v3185 = vsub.f32 %v3121, %v3153
        %v3186 = vsub.f32 %v3122, %v3154
        %v3187 = vsub.f32 %v3123, %v3155
        %v3188 = vsub.f32 %v3124, %v3156
        %v3189 = vsub.f32 %v3125, %v3157
        %v3190 = vsub.f32 %v3126, %v3158
        %v3191 = vsub.f32 %v3127, %v3159
        %v3192 = vsub.f32 %v3128, %v3160
        %v3193 = vsub.f32 %v3129, %v3161
        %v3194 = vsub.f32 %v3130, %v3162
        %v3195 = vsub.f32 %v3131, %v3163
        %v3196 = vsub.f32 %v3132, %v3164
        %v3197 = vsub.f32 %v3133, %v3165
        %v3198 = vsub.f32 %v3134, %v3166
        %v3199 = vsub.f32 %v3135, %v3167
        %v3200 = vsub.f32 %v3136, %v3168
        %v3201 = vsub.f32 %v3137, %v3169
        %v3202 = vsub.f32 %v3138, %v3170
        %v3203 = vsub.f32 %v3139, %v3171
        %v3204 = vsub.f32 %v3140, %v3172
        %v3205 = vsub.f32 %v3141, %v3173
        %v3206 = vsub.f32 %v3142, %v3174
        %v3207 = vsub.f32 %v3143, %v3175
        %v3208 = vsub.f32 %v2888, %v3080
        %v3209 = vsub.f32 %v2889, %v3081
        %v3210 = vsub.f32 %v2890, %v3082
        %v3211 = vsub.f32 %v2891, %v3083
        %v3212 = vsub.f32 %v2892, %v3084
        %v3213 = vsub.f32 %v2893, %v3085
        %v3214 = vsub.f32 %v2894, %v3086
        %v3215 = vsub.f32 %v2895, %v3087
        %v3216 = vsub.f32 %v2896, %v3088
        %v3217 = vsub.f32 %v2897, %v3089
        %v3218 = vsub.f32 %v2898, %v3090
        %v3219 = vsub.f32 %v2899, %v3091
        %v3220 = vsub.f32 %v2900, %v3092
        %v3221 = vsub.f32 %v2901, %v3093
        %v3222 = vsub.f32 %v2902, %v3094
        %v3223 = vsub.f32 %v2903, %v3095
        %v3224 = vsub.f32 %v2904, %v3096
        %v3225 = vsub.f32 %v2905, %v3097
        %v3226 = vsub.f32 %v2906, %v3098
        %v3227 = vsub.f32 %v2907, %v3099
        %v3228 = vsub.f32 %v2908, %v3100
        %v3229 = vsub.f32 %v2909, %v3101
        %v3230 = vsub.f32 %v2910, %v3102
        %v3231 = vsub.f32 %v2911, %v3103
        %v3232 = vsub.f32 %v2912, %v3104
        %v3233 = vsub.f32 %v2913, %v3105
        %v3234 = vsub.f32 %v2914, %v3106
        %v3235 = vsub.f32 %v2915, %v3107
        %v3236 = vsub.f32 %v2916, %v3108
        %v3237 = vsub.f32 %v2917, %v3109
        %v3238 = vsub.f32 %v2918, %v3110
        %v3239 = vsub.f32 %v2919, %v3111
        %v3240 = vadd.f32 %v3176, 1e-05
        %v3241 = vadd.f32 %v3177, 1e-05
        %v3242 = vadd.f32 %v3178, 1e-05
        %v3243 = vadd.f32 %v3179, 1e-05
        %v3244 = vadd.f32 %v3180, 1e-05
        %v3245 = vadd.f32 %v3181, 1e-05
        %v3246 = vadd.f32 %v3182, 1e-05
        %v3247 = vadd.f32 %v3183, 1e-05
        %v3248 = vadd.f32 %v3184, 1e-05
        %v3249 = vadd.f32 %v3185, 1e-05
        %v3250 = vadd.f32 %v3186, 1e-05
        %v3251 = vadd.f32 %v3187, 1e-05
        %v3252 = vadd.f32 %v3188, 1e-05
        %v3253 = vadd.f32 %v3189, 1e-05
        %v3254 = vadd.f32 %v3190, 1e-05
        %v3255 = vadd.f32 %v3191, 1e-05
        %v3256 = vadd.f32 %v3192, 1e-05
        %v3257 = vadd.f32 %v3193, 1e-05
        %v3258 = vadd.f32 %v3194, 1e-05
        %v3259 = vadd.f32 %v3195, 1e-05
        %v3260 = vadd.f32 %v3196, 1e-05
        %v3261 = vadd.f32 %v3197, 1e-05
        %v3262 = vadd.f32 %v3198, 1e-05
        %v3263 = vadd.f32 %v3199, 1e-05
        %v3264 = vadd.f32 %v3200, 1e-05
        %v3265 = vadd.f32 %v3201, 1e-05
        %v3266 = vadd.f32 %v3202, 1e-05
        %v3267 = vadd.f32 %v3203, 1e-05
        %v3268 = vadd.f32 %v3204, 1e-05
        %v3269 = vadd.f32 %v3205, 1e-05
        %v3270 = vadd.f32 %v3206, 1e-05
        %v3271 = vadd.f32 %v3207, 1e-05
        %v3272 = vrsqrt.pop %v3240
        %v3273 = vrsqrt.pop %v3241
        %v3274 = vrsqrt.pop %v3242
        %v3275 = vrsqrt.pop %v3243
        %v3276 = vrsqrt.pop %v3244
        %v3277 = vrsqrt.pop %v3245
        %v3278 = vrsqrt.pop %v3246
        %v3279 = vrsqrt.pop %v3247
        %v3280 = vrsqrt.pop %v3248
        %v3281 = vrsqrt.pop %v3249
        %v3282 = vrsqrt.pop %v3250
        %v3283 = vrsqrt.pop %v3251
        %v3284 = vrsqrt.pop %v3252
        %v3285 = vrsqrt.pop %v3253
        %v3286 = vrsqrt.pop %v3254
        %v3287 = vrsqrt.pop %v3255
        %v3288 = vrsqrt.pop %v3256
        %v3289 = vrsqrt.pop %v3257
        %v3290 = vrsqrt.pop %v3258
        %v3291 = vrsqrt.pop %v3259
        %v3292 = vrsqrt.pop %v3260
        %v3293 = vrsqrt.pop %v3261
        %v3294 = vrsqrt.pop %v3262
        %v3295 = vrsqrt.pop %v3263
        %v3296 = vrsqrt.pop %v3264
        %v3297 = vrsqrt.pop %v3265
        %v3298 = vrsqrt.pop %v3266
        %v3299 = vrsqrt.pop %v3267
        %v3300 = vrsqrt.pop %v3268
        %v3301 = vrsqrt.pop %v3269
        %v3302 = vrsqrt.pop %v3270
        %v3303 = vrsqrt.pop %v3271
        %v3304 = vmul.f32 %v3208, %v3272
        %v3305 = vmul.f32 %v3209, %v3273
        %v3306 = vmul.f32 %v3210, %v3274
        %v3307 = vmul.f32 %v3211, %v3275
        %v3308 = vmul.f32 %v3212, %v3276
        %v3309 = vmul.f32 %v3213, %v3277
        %v3310 = vmul.f32 %v3214, %v3278
        %v3311 = vmul.f32 %v3215, %v3279
        %v3312 = vmul.f32 %v3216, %v3280
        %v3313 = vmul.f32 %v3217, %v3281
        %v3314 = vmul.f32 %v3218, %v3282
        %v3315 = vmul.f32 %v3219, %v3283
        %v3316 = vmul.f32 %v3220, %v3284
        %v3317 = vmul.f32 %v3221, %v3285
        %v3318 = vmul.f32 %v3222, %v3286
        %v3319 = vmul.f32 %v3223, %v3287
        %v3320 = vmul.f32 %v3224, %v3288
        %v3321 = vmul.f32 %v3225, %v3289
        %v3322 = vmul.f32 %v3226, %v3290
        %v3323 = vmul.f32 %v3227, %v3291
        %v3324 = vmul.f32 %v3228, %v3292
        %v3325 = vmul.f32 %v3229, %v3293
        %v3326 = vmul.f32 %v3230, %v3294
        %v3327 = vmul.f32 %v3231, %v3295
        %v3328 = vmul.f32 %v3232, %v3296
        %v3329 = vmul.f32 %v3233, %v3297
        %v3330 = vmul.f32 %v3234, %v3298
        %v3331 = vmul.f32 %v3235, %v3299
        %v3332 = vmul.f32 %v3236, %v3300
        %v3333 = vmul.f32 %v3237, %v3301
        %v3334 = vmul.f32 %v3238, %v3302
        %v3335 = vmul.f32 %v3239, %v3303
        %v3336 = vld [vmem:[%s11] sm:$0x1]
        %v3338 = vlaneseq
        %v3339 = vshrl.u32 %v3338, 7
        %v3340 = vsub.s32 0, %v3339
        %v3341 = vrot.slane %v3336, %v3340
        %v3343 = vmul.f32 %v3304, %v3341
        %v3344 = vmul.f32 %v3305, %v3341
        %v3345 = vmul.f32 %v3306, %v3341
        %v3346 = vmul.f32 %v3307, %v3341
        %v3347 = vmul.f32 %v3308, %v3341
        %v3348 = vmul.f32 %v3309, %v3341
        %v3349 = vmul.f32 %v3310, %v3341
        %v3350 = vmul.f32 %v3311, %v3341
        %v3351 = vmul.f32 %v3312, %v3341
        %v3352 = vmul.f32 %v3313, %v3341
        %v3353 = vmul.f32 %v3314, %v3341
        %v3354 = vmul.f32 %v3315, %v3341
        %v3355 = vmul.f32 %v3316, %v3341
        %v3356 = vmul.f32 %v3317, %v3341
        %v3357 = vmul.f32 %v3318, %v3341
        %v3358 = vmul.f32 %v3319, %v3341
        %v3359 = vmul.f32 %v3320, %v3341
        %v3360 = vmul.f32 %v3321, %v3341
        %v3361 = vmul.f32 %v3322, %v3341
        %v3362 = vmul.f32 %v3323, %v3341
        %v3363 = vmul.f32 %v3324, %v3341
        %v3364 = vmul.f32 %v3325, %v3341
        %v3365 = vmul.f32 %v3326, %v3341
        %v3366 = vmul.f32 %v3327, %v3341
        %v3367 = vmul.f32 %v3328, %v3341
        %v3368 = vmul.f32 %v3329, %v3341
        %v3369 = vmul.f32 %v3330, %v3341
        %v3370 = vmul.f32 %v3331, %v3341
        %v3371 = vmul.f32 %v3332, %v3341
        %v3372 = vmul.f32 %v3333, %v3341
        %v3373 = vmul.f32 %v3334, %v3341
        %v3374 = vmul.f32 %v3335, %v3341
        %v3375 = vld [vmem:[%s12] sm:$0x1]
        %v3377 = vlaneseq
        %v3378 = vshrl.u32 %v3377, 7
        %v3379 = vsub.s32 0, %v3378
        %v3380 = vrot.slane %v3375, %v3379
        %v3382 = vadd.f32 %v3343, %v3380
        %v3383 = vadd.f32 %v3344, %v3380
        %v3384 = vadd.f32 %v3345, %v3380
        %v3385 = vadd.f32 %v3346, %v3380
        %v3386 = vadd.f32 %v3347, %v3380
        %v3387 = vadd.f32 %v3348, %v3380
        %v3388 = vadd.f32 %v3349, %v3380
        %v3389 = vadd.f32 %v3350, %v3380
        %v3390 = vadd.f32 %v3351, %v3380
        %v3391 = vadd.f32 %v3352, %v3380
        %v3392 = vadd.f32 %v3353, %v3380
        %v3393 = vadd.f32 %v3354, %v3380
        %v3394 = vadd.f32 %v3355, %v3380
        %v3395 = vadd.f32 %v3356, %v3380
        %v3396 = vadd.f32 %v3357, %v3380
        %v3397 = vadd.f32 %v3358, %v3380
        %v3398 = vadd.f32 %v3359, %v3380
        %v3399 = vadd.f32 %v3360, %v3380
        %v3400 = vadd.f32 %v3361, %v3380
        %v3401 = vadd.f32 %v3362, %v3380
        %v3402 = vadd.f32 %v3363, %v3380
        %v3403 = vadd.f32 %v3364, %v3380
        %v3404 = vadd.f32 %v3365, %v3380
        %v3405 = vadd.f32 %v3366, %v3380
        %v3406 = vadd.f32 %v3367, %v3380
        %v3407 = vadd.f32 %v3368, %v3380
        %v3408 = vadd.f32 %v3369, %v3380
        %v3409 = vadd.f32 %v3370, %v3380
        %v3410 = vadd.f32 %v3371, %v3380
        %v3411 = vadd.f32 %v3372, %v3380
        %v3412 = vadd.f32 %v3373, %v3380
        %v3413 = vadd.f32 %v3374, %v3380
        %3414 = vst [vmem:[%s556] sm:$0xff] %v3382
        %3415 = vst [vmem:[%s556 + $0x8] sm:$0xff] %v3383
        %3416 = vst [vmem:[%s556 + $0x10] sm:$0xff] %v3384
        %3417 = vst [vmem:[%s556 + $0x18] sm:$0xff] %v3385
        %3418 = vst [vmem:[%s556 + $0x20] sm:$0xff] %v3386
        %3419 = vst [vmem:[%s556 + $0x28] sm:$0xff] %v3387
        %3420 = vst [vmem:[%s556 + $0x30] sm:$0xff] %v3388
        %3421 = vst [vmem:[%s556 + $0x38] sm:$0xff] %v3389
        %3422 = vst [vmem:[%s556 + $0x40] sm:$0xff] %v3390
        %3423 = vst [vmem:[%s556 + $0x48] sm:$0xff] %v3391
        %3424 = vst [vmem:[%s556 + $0x50] sm:$0xff] %v3392
        %3425 = vst [vmem:[%s556 + $0x58] sm:$0xff] %v3393
        %3426 = vst [vmem:[%s556 + $0x60] sm:$0xff] %v3394
        %3427 = vst [vmem:[%s556 + $0x68] sm:$0xff] %v3395
        %3428 = vst [vmem:[%s556 + $0x70] sm:$0xff] %v3396
        %3429 = vst [vmem:[%s556 + $0x78] sm:$0xff] %v3397
        %3430 = vst [vmem:[%s556 + $0x80] sm:$0xff] %v3398
        %3431 = vst [vmem:[%s556 + $0x88] sm:$0xff] %v3399
        %3432 = vst [vmem:[%s556 + $0x90] sm:$0xff] %v3400
        %3433 = vst [vmem:[%s556 + $0x98] sm:$0xff] %v3401
        %3434 = vst [vmem:[%s556 + $0xa0] sm:$0xff] %v3402
        %3435 = vst [vmem:[%s556 + $0xa8] sm:$0xff] %v3403
        %3436 = vst [vmem:[%s556 + $0xb0] sm:$0xff] %v3404
        %3437 = vst [vmem:[%s556 + $0xb8] sm:$0xff] %v3405
        %3438 = vst [vmem:[%s556 + $0xc0] sm:$0xff] %v3406
        %3439 = vst [vmem:[%s556 + $0xc8] sm:$0xff] %v3407
        %3440 = vst [vmem:[%s556 + $0xd0] sm:$0xff] %v3408
        %3441 = vst [vmem:[%s556 + $0xd8] sm:$0xff] %v3409
        %3442 = vst [vmem:[%s556 + $0xe0] sm:$0xff] %v3410
        %3443 = vst [vmem:[%s556 + $0xe8] sm:$0xff] %v3411
        %3444 = vst [vmem:[%s556 + $0xf0] sm:$0xff] %v3412
        %3445 = vst [vmem:[%s556 + $0xf8] sm:$0xff] %v3413
        %s3446 = sand.u32 %s326, 1
        %s3447 = scalar_lea.sflag [#allocation4], %s3446
        %s3448 = sand.u32 %s326, 1
        %s3449 = smul.addr %s3448, 256
        %s3450 = scalar_lea.vmem [#allocation13], %s3449
        // Predicated region
        $region97: #{tpu_custom_call.1} parent=71 // pred_check
          %p3451 = pneg %p336
        $region98: #{tpu_custom_call.1} parent=71 // pred_check_branch
          %3453 = sbr.rel (%p3451) target = $region100
        $region99: #{tpu_custom_call.1} parent=71 // pred_region
          %s3454 = smul.u32 32, %s35
          %s3456 = ssub.s32 4096, 4096
          %3457 = vsyncadd %s3447, %s3456
          %s3458 = smul.addr %s3454, 128
          %s3459 = scalar_lea.hbm %s13, %s3458
          %s3460 = sshll.u32 %s3450, 4
          %s3461 = int_to_ptr.vmem [resolvable:$true] %s3460
          %3466 = dma.vmem_to_hbm [thread:$0]  %s3461, 4096, %s3459, %s3447, 128, 128, 8
        $region100: #{tpu_custom_call.1} parent=71 // pred_fallthru
          _
      $region72: #{tpu_custom_call.1} parent=5 // pred_fallthru
        _
      %p3467 = scmp.le.s32.totalorder 2, %s30
      // Predicated region
      $region101: #{tpu_custom_call.1} parent=5 // pred_check
        %p3468 = pneg %p3467
      $region102: #{tpu_custom_call.1} parent=5 // pred_check_branch
        %3470 = sbr.rel (%p3468) target = $region104
      $region103: #{tpu_custom_call.1} parent=5 // pred_region
        %s3471 = ssub.s32 %s30, 2
        // Predicated region
        $region105: #{tpu_custom_call.1} parent=103 // pred_check
          %p3472 = pneg %p342
        $region106: #{tpu_custom_call.1} parent=103 // pred_check_branch
          %3474 = sbr.rel (%p3472) target = $region108
        $region107: #{tpu_custom_call.1} parent=103 // pred_region
          %s3475 = sand.u32 %s327, 1
          %s3476 = scalar_lea.sflag [#allocation4], %s3475
          %s3477 = sand.u32 %s327, 1
          %s3478 = smul.addr %s3477, 256
          %s3479 = scalar_lea.vmem [#allocation13], %s3478
          %3480 = dma.done %s3476, 4096
        $region108: #{tpu_custom_call.1} parent=103 // pred_fallthru
          _
      $region104: #{tpu_custom_call.1} parent=5 // pred_fallthru
        _
    $region6: #{tpu_custom_call.1} parent=1 // loop_footer
      %s34 = sadd.s32 1, %s30
    $region7: #{tpu_custom_call.1} parent=1 // loop_footer_branch
      %29 = sbr.rel target = $region3
    $region8: #{tpu_custom_call.1} parent=1 // loop_exit
      _
    %3481 = vsyncpa [#allocation3], 1
    %s3482 = scalar_lea.sflag [#allocation3], 1
    %3483 = vsyncpa %s3482, 1
    %3484 = vsyncpa [#allocation6], 1
    %s3485 = scalar_lea.sflag [#allocation6], 1
    %3486 = vsyncpa %s3485, 1
    %3487 = vsyncpa [#allocation9], 1
    %3488 = vsyncpa [#allocation12], 1
    %3489 = vsyncpa [#allocation4], 1
    %s3490 = scalar_lea.sflag [#allocation4], 1
    %3491 = vsyncpa %s3490, 1

</llo_original>
